<compile_context>
chip_gen: v5e
topology: v5e:2x2
jax: 0.10.0
libtpu: 0.0.40
codegen_flags: <defaults>
</compile_context>

<pallas_src>
import jax
import jax.numpy as jnp
import numpy as np
from jax.experimental import pallas as pl
from jax.experimental.pallas import tpu as pltpu

# Hyperparameters consistent with the module's __init__.
NZ = 8
NGF = 4
NC = 1
K = 4            # kernel_size of every ConvTranspose1d
EPS = 1e-5       # BatchNorm1d default eps
NEG_SLOPE = 1.0  # nn.LeakyReLU(TRUE) with TRUE == 1  ->  negative_slope = 1.0 (identity)

# (C_in, C_out, stride, padding, has_bn_and_act)
LAYER_CFG = [
    (NZ,       NGF * 32, 1, 0, True),
    (NGF * 32, NGF * 16, 2, 1, True),
    (NGF * 16, NGF * 8,  2, 1, True),
    (NGF * 8,  NGF * 4,  2, 1, True),
    (NGF * 4,  NGF * 2,  2, 1, True),
    (NGF * 2,  NGF,      2, 1, True),
    (NGF,      NC,       2, 1, False),
]


def _layer_lengths():
    lens = []
    l = 1
    for (_ci, _co, stride, pad, _bn) in LAYER_CFG:
        l_out = (l - 1) * stride + K - 2 * pad
        lens.append((l, l_out))
        l = l_out
    return lens


_LENGTHS = _layer_lengths()
L_FINAL = _LENGTHS[-1][1]                                   # 256
_N_KERNEL_INPUTS = 1 + sum(5 if cfg[4] else 1 for cfg in LAYER_CFG)   # z + per-layer tensors


# ----------------------------- fused Pallas kernel ------------------------------

def _generator_kernel(*refs):
    # refs = [z, then per layer: W  (+ E, ET, gamma, beta when BN follows), out]
    assert len(refs) == _N_KERNEL_INPUTS + 1
    out_ref = refs[-1]
    idx = 0
    x = refs[idx][...]                                      # (N, NZ)  packed (L_in=1)
    idx += 1
    inv_n = 1.0 / x.shape[0]                                # 1/N (1/L is folded into E)

    for (_c_in, _c_out, _stride, _pad, has_bn) in LAYER_CFG:
        w = refs[idx][...]; idx += 1                        # (L_in*C_in, L_out*C_out)
        # ConvTranspose1d layer == one dense matmul in the packed layout.
        x = jnp.dot(x, w, preferred_element_type=jnp.float32)   # (N, L_out*C_out)

        if has_bn:
            e = refs[idx][...];     idx += 1                # (L_out*C_out, C_out)  pooling (1/L folded in)
            et = refs[idx][...];    idx += 1                # (C_out, L_out*C_out)  0/1 expansion
            gamma = refs[idx][...]; idx += 1                # (1, C_out)
            beta = refs[idx][...];  idx += 1                # (1, C_out)

            # Single-pass batch statistics (training-mode BN, biased variance).
            s1 = jnp.sum(x, axis=0, keepdims=True)          # (1, L*C)
            s2 = jnp.sum(x * x, axis=0, keepdims=True)      # (1, L*C)
            s12 = jnp.concatenate([s1, s2], axis=0)         # (2, L*C)
            stats = jnp.dot(s12, e, preferred_element_type=jnp.float32) * inv_n   # (2, C)
            mean = stats[0:1, :]                            # (1, C)
            var = stats[1:2, :] - mean * mean               # (1, C)  biased variance
            scale = gamma * jax.lax.rsqrt(var + EPS)        # (1, C)
            shift = beta - mean * scale                     # (1, C)
            # Expand per-channel affine back to the packed lane layout via one matmul.
            ss = jnp.concatenate([scale, shift], axis=0)    # (2, C)
            ss_p = jnp.dot(ss, et, preferred_element_type=jnp.float32)            # (2, L*C)
            x = x * ss_p[0:1, :] + ss_p[1:2, :]
            # LeakyReLU(negative_slope = 1.0) is the identity -> intentionally omitted.

    out_ref[...] = x.astype(out_ref.dtype)                  # lane-dense (N, 256) store


# ----------------------------- params & preparation ------------------------------

def init_params(key):
    params = []
    for (c_in, c_out, _s, _p, has_bn) in LAYER_CFG:
        key, wk = jax.random.split(key)
        # PyTorch ConvTranspose1d weight layout: (in_channels, out_channels, K)
        w = 0.02 * jax.random.normal(wk, (c_in, c_out, K), jnp.float32)
        gamma = jnp.ones((c_out,), jnp.float32) if has_bn else None   # BatchNorm1d default init
        beta = jnp.zeros((c_out,), jnp.float32) if has_bn else None
        params.append((w, gamma, beta))
    # TODO(synk): BatchNorm1d running_mean/var momentum buffers are a training-only
    # side effect and do not affect this forward pass; not modeled.
    return params


def _dense_convt_matrix(w, stride, padding, l_in, l_out):
    """Dense (L_in*C_in, L_out*C_out) matrix of a ConvTranspose1d in packed layout.

    out[n, l, co] = sum_{j, ci} x[n, j, ci] * w[ci, co, l + padding - stride*j]
    """
    c_in, c_out, k = w.shape
    m = np.zeros((l_in * c_in, l_out * c_out), np.float32)
    for j in range(l_in):
        for l in range(l_out):
            kk = l + padding - stride * j
            if 0 <= kk < k:
                m[j * c_in:(j + 1) * c_in, l * c_out:(l + 1) * c_out] = w[:, :, kk]
    return m


def prepare_params(params):
    """One-time weight preprocessing (runs outside the jitted forward)."""
    flat = []
    for (w, gamma, beta), (c_in, c_out, stride, pad, has_bn), (l_in, l_out) in zip(
            params, LAYER_CFG, _LENGTHS):
        m = _dense_convt_matrix(np.asarray(w), stride, pad, l_in, l_out)
        flat.append(jnp.asarray(m))
        if has_bn:
            # Pooling matrix packed lane (l*C + c) -> channel c, with 1/L_out folded in,
            # and the 0/1 expansion matrix (its un-scaled transpose).
            e01 = np.tile(np.eye(c_out, dtype=np.float32), (l_out, 1))   # (l_out*c_out, c_out)
            flat.append(jnp.asarray(e01 * (1.0 / l_out)))
            flat.append(jnp.asarray(np.ascontiguousarray(e01.T)))
            flat.append(jnp.reshape(gamma, (1, c_out)))
            flat.append(jnp.reshape(beta, (1, c_out)))
    assert len(flat) == _N_KERNEL_INPUTS - 1
    return flat


# ------------------------------ forward pass ---------------------------------

def generator_forward(z_ncl, flat_params):
    # z_ncl: (N, NZ, 1) in PyTorch NCL layout.
    n = z_ncl.shape[0]
    x = z_ncl.reshape(n, NZ)                                # L_in == 1 -> packed (N, NZ)
    out = pl.pallas_call(
        _generator_kernel,
        out_shape=jax.ShapeDtypeStruct((n, L_FINAL * NC), jnp.float32),
        compiler_params=pltpu.CompilerParams(vmem_limit_bytes=32 * 1024 * 1024),
    )(x, *flat_params)
    out = out.reshape(n, L_FINAL, NC)                       # packed -> NLC
    return jnp.transpose(out, (0, 2, 1))                    # -> NCL: (N, NC, 256)


# ------------------- pure-JAX reference (no Pallas) for checking -------------------

def _conv_transpose1d_ref(x, w_t, stride, padding):
    n, l_in, c_in = x.shape
    _, c_out, k_ = w_t.shape
    l_out = (l_in - 1) * stride + k_ - 2 * padding
    l_dil = (l_in - 1) * stride + 1
    x_dil = jnp.zeros((n, l_dil, c_in), x.dtype).at[:, ::stride, :].set(x)
    pad = k_ - 1 - padding
    x_pad = jnp.pad(x_dil, ((0, 0), (pad, pad), (0, 0)))
    w_conv = jnp.transpose(w_t[:, :, ::-1], (2, 0, 1))
    out = jnp.zeros((n, l_out, c_out), jnp.float32)
    for k in range(k_):
        out = out + jnp.einsum('nlc,cd->nld', x_pad[:, k:k + l_out, :], w_conv[k])
    return out.astype(x.dtype)


def generator_forward_ref(z_ncl, params):
    x = jnp.transpose(z_ncl, (0, 2, 1))
    for (w, gamma, beta), (_ci, _co, stride, pad, has_bn) in zip(params, LAYER_CFG):
        x = _conv_transpose1d_ref(x, w, stride, pad)
        if has_bn:
            xf = x.astype(jnp.float32)
            mean = jnp.mean(xf, axis=(0, 1), keepdims=True)
            var = jnp.mean((xf - mean) ** 2, axis=(0, 1), keepdims=True)
            y = (xf - mean) * jax.lax.rsqrt(var + EPS)
            y = y * gamma.reshape(1, 1, -1) + beta.reshape(1, 1, -1)
            x = jnp.where(y >= 0, y, NEG_SLOPE * y).astype(x.dtype)   # identity for slope 1.0
    return jnp.transpose(x, (0, 2, 1))


if __name__ == "__main__":
    key = jax.random.PRNGKey(0)
    pkey, zkey = jax.random.split(key)
    params = init_params(pkey)
    flat_params = prepare_params(params)     # one-time weight prep, outside jit

    batch = 2
    z = jax.random.normal(zkey, (batch, NZ, 1), jnp.float32)   # PyTorch input: (N, nz, 1)

    out = jax.jit(generator_forward)(z, flat_params)
    out = jax.block_until_ready(out)

    assert out.shape == (batch, NC, 256), out.shape
    ref = generator_forward_ref(z, params)
    np.testing.assert_allclose(np.asarray(out), np.asarray(ref), rtol=2e-3, atol=2e-3)

    print("KERNEL_OK")
</pallas_src>

<mosaic_0001>
module attributes {stable_mosaic.version = 11 : i64} {
  func.func @_generator_kernel(%arg0: memref<2x8xf32, #tpu.memory_space<vmem>>, %arg1: memref<8x512xf32, #tpu.memory_space<vmem>>, %arg2: memref<512x128xf32, #tpu.memory_space<vmem>>, %arg3: memref<128x512xf32, #tpu.memory_space<vmem>>, %arg4: memref<1x128xf32, #tpu.memory_space<vmem>>, %arg5: memref<1x128xf32, #tpu.memory_space<vmem>>, %arg6: memref<512x512xf32, #tpu.memory_space<vmem>>, %arg7: memref<512x64xf32, #tpu.memory_space<vmem>>, %arg8: memref<64x512xf32, #tpu.memory_space<vmem>>, %arg9: memref<1x64xf32, #tpu.memory_space<vmem>>, %arg10: memref<1x64xf32, #tpu.memory_space<vmem>>, %arg11: memref<512x512xf32, #tpu.memory_space<vmem>>, %arg12: memref<512x32xf32, #tpu.memory_space<vmem>>, %arg13: memref<32x512xf32, #tpu.memory_space<vmem>>, %arg14: memref<1x32xf32, #tpu.memory_space<vmem>>, %arg15: memref<1x32xf32, #tpu.memory_space<vmem>>, %arg16: memref<512x512xf32, #tpu.memory_space<vmem>>, %arg17: memref<512x16xf32, #tpu.memory_space<vmem>>, %arg18: memref<16x512xf32, #tpu.memory_space<vmem>>, %arg19: memref<1x16xf32, #tpu.memory_space<vmem>>, %arg20: memref<1x16xf32, #tpu.memory_space<vmem>>, %arg21: memref<512x512xf32, #tpu.memory_space<vmem>>, %arg22: memref<512x8xf32, #tpu.memory_space<vmem>>, %arg23: memref<8x512xf32, #tpu.memory_space<vmem>>, %arg24: memref<1x8xf32, #tpu.memory_space<vmem>>, %arg25: memref<1x8xf32, #tpu.memory_space<vmem>>, %arg26: memref<512x512xf32, #tpu.memory_space<vmem>>, %arg27: memref<512x4xf32, #tpu.memory_space<vmem>>, %arg28: memref<4x512xf32, #tpu.memory_space<vmem>>, %arg29: memref<1x4xf32, #tpu.memory_space<vmem>>, %arg30: memref<1x4xf32, #tpu.memory_space<vmem>>, %arg31: memref<512x256xf32, #tpu.memory_space<vmem>>, %arg32: memref<2x256xf32, #tpu.memory_space<vmem>>) attributes {dimension_semantics = [], scalar_prefetch = 0 : i64, scratch_operands = 0 : i64, tpu.core_type = #tpu.core_type<tc>} {
    %c0 = arith.constant 0 : index
    %c0_0 = arith.constant 0 : index
    %0 = vector.load %arg0[%c0, %c0_0] : memref<2x8xf32, #tpu.memory_space<vmem>>, vector<2x8xf32>
    %c0_1 = arith.constant 0 : index
    %c0_2 = arith.constant 0 : index
    %1 = vector.load %arg1[%c0_1, %c0_2] : memref<8x512xf32, #tpu.memory_space<vmem>>, vector<8x512xf32>
    %cst = arith.constant dense<0.000000e+00> : vector<2x512xf32>
    %2 = tpu.matmul %0, %1, %cst {dimension_numbers = #tpu.dot_dimension_numbers<[1], [0], [0], [1], [0, 0, 1, 1], [], []>} : vector<2x8xf32>, vector<8x512xf32>, vector<2x512xf32> -> vector<2x512xf32>
    %c0_3 = arith.constant 0 : index
    %c0_4 = arith.constant 0 : index
    %3 = vector.load %arg2[%c0_3, %c0_4] : memref<512x128xf32, #tpu.memory_space<vmem>>, vector<512x128xf32>
    %c0_5 = arith.constant 0 : index
    %c0_6 = arith.constant 0 : index
    %4 = vector.load %arg3[%c0_5, %c0_6] : memref<128x512xf32, #tpu.memory_space<vmem>>, vector<128x512xf32>
    %c0_7 = arith.constant 0 : index
    %c0_8 = arith.constant 0 : index
    %5 = vector.load %arg4[%c0_7, %c0_8] : memref<1x128xf32, #tpu.memory_space<vmem>>, vector<1x128xf32>
    %c0_9 = arith.constant 0 : index
    %c0_10 = arith.constant 0 : index
    %6 = vector.load %arg5[%c0_9, %c0_10] : memref<1x128xf32, #tpu.memory_space<vmem>>, vector<1x128xf32>
    %cst_11 = arith.constant dense<0.000000e+00> : vector<512xf32>
    %7 = vector.multi_reduction <add>, %2, %cst_11 [0] : vector<2x512xf32> to vector<512xf32>
    %8 = vector.shape_cast %7 : vector<512xf32> to vector<1x512xf32>
    %9 = arith.mulf %2, %2 : vector<2x512xf32>
    %cst_12 = arith.constant dense<0.000000e+00> : vector<512xf32>
    %10 = vector.multi_reduction <add>, %9, %cst_12 [0] : vector<2x512xf32> to vector<512xf32>
    %11 = vector.shape_cast %10 : vector<512xf32> to vector<1x512xf32>
    %12 = tpu.concatenate %8, %11 in 0 : vector<1x512xf32>, vector<1x512xf32> -> vector<2x512xf32>
    %cst_13 = arith.constant dense<0.000000e+00> : vector<2x128xf32>
    %13 = tpu.matmul %12, %3, %cst_13 {dimension_numbers = #tpu.dot_dimension_numbers<[1], [0], [0], [1], [0, 0, 1, 1], [], []>} : vector<2x512xf32>, vector<512x128xf32>, vector<2x128xf32> -> vector<2x128xf32>
    %cst_14 = arith.constant 5.000000e-01 : f32
    %14 = vector.broadcast %cst_14 : f32 to vector<2x128xf32>
    %15 = arith.mulf %13, %14 : vector<2x128xf32>
    %16 = vector.extract_strided_slice %15 {offsets = [0, 0], sizes = [1, 128], strides = [1, 1]} : vector<2x128xf32> to vector<1x128xf32>
    %17 = vector.extract_strided_slice %15 {offsets = [1, 0], sizes = [1, 128], strides = [1, 1]} : vector<2x128xf32> to vector<1x128xf32>
    %18 = arith.mulf %16, %16 : vector<1x128xf32>
    %19 = arith.subf %17, %18 : vector<1x128xf32>
    %cst_15 = arith.constant 9.99999974E-6 : f32
    %20 = vector.broadcast %cst_15 : f32 to vector<1x128xf32>
    %21 = arith.addf %19, %20 : vector<1x128xf32>
    %22 = math.rsqrt %21 : vector<1x128xf32>
    %23 = arith.mulf %5, %22 : vector<1x128xf32>
    %24 = arith.mulf %16, %23 : vector<1x128xf32>
    %25 = arith.subf %6, %24 : vector<1x128xf32>
    %26 = tpu.concatenate %23, %25 in 0 : vector<1x128xf32>, vector<1x128xf32> -> vector<2x128xf32>
    %cst_16 = arith.constant dense<0.000000e+00> : vector<2x512xf32>
    %27 = tpu.matmul %26, %4, %cst_16 {dimension_numbers = #tpu.dot_dimension_numbers<[1], [0], [0], [1], [0, 0, 1, 1], [], []>} : vector<2x128xf32>, vector<128x512xf32>, vector<2x512xf32> -> vector<2x512xf32>
    %28 = vector.extract_strided_slice %27 {offsets = [0, 0], sizes = [1, 512], strides = [1, 1]} : vector<2x512xf32> to vector<1x512xf32>
    %29 = vector.broadcast %28 : vector<1x512xf32> to vector<2x512xf32>
    %30 = arith.mulf %2, %29 : vector<2x512xf32>
    %31 = vector.extract_strided_slice %27 {offsets = [1, 0], sizes = [1, 512], strides = [1, 1]} : vector<2x512xf32> to vector<1x512xf32>
    %32 = vector.broadcast %31 : vector<1x512xf32> to vector<2x512xf32>
    %33 = arith.addf %30, %32 : vector<2x512xf32>
    %c0_17 = arith.constant 0 : index
    %c0_18 = arith.constant 0 : index
    %34 = vector.load %arg6[%c0_17, %c0_18] : memref<512x512xf32, #tpu.memory_space<vmem>>, vector<512x512xf32>
    %cst_19 = arith.constant dense<0.000000e+00> : vector<2x512xf32>
    %35 = tpu.matmul %33, %34, %cst_19 {dimension_numbers = #tpu.dot_dimension_numbers<[1], [0], [0], [1], [0, 0, 1, 1], [], []>} : vector<2x512xf32>, vector<512x512xf32>, vector<2x512xf32> -> vector<2x512xf32>
    %c0_20 = arith.constant 0 : index
    %c0_21 = arith.constant 0 : index
    %36 = vector.load %arg7[%c0_20, %c0_21] : memref<512x64xf32, #tpu.memory_space<vmem>>, vector<512x64xf32>
    %c0_22 = arith.constant 0 : index
    %c0_23 = arith.constant 0 : index
    %37 = vector.load %arg8[%c0_22, %c0_23] : memref<64x512xf32, #tpu.memory_space<vmem>>, vector<64x512xf32>
    %c0_24 = arith.constant 0 : index
    %c0_25 = arith.constant 0 : index
    %38 = vector.load %arg9[%c0_24, %c0_25] : memref<1x64xf32, #tpu.memory_space<vmem>>, vector<1x64xf32>
    %c0_26 = arith.constant 0 : index
    %c0_27 = arith.constant 0 : index
    %39 = vector.load %arg10[%c0_26, %c0_27] : memref<1x64xf32, #tpu.memory_space<vmem>>, vector<1x64xf32>
    %cst_28 = arith.constant dense<0.000000e+00> : vector<512xf32>
    %40 = vector.multi_reduction <add>, %35, %cst_28 [0] : vector<2x512xf32> to vector<512xf32>
    %41 = vector.shape_cast %40 : vector<512xf32> to vector<1x512xf32>
    %42 = arith.mulf %35, %35 : vector<2x512xf32>
    %cst_29 = arith.constant dense<0.000000e+00> : vector<512xf32>
    %43 = vector.multi_reduction <add>, %42, %cst_29 [0] : vector<2x512xf32> to vector<512xf32>
    %44 = vector.shape_cast %43 : vector<512xf32> to vector<1x512xf32>
    %45 = tpu.concatenate %41, %44 in 0 : vector<1x512xf32>, vector<1x512xf32> -> vector<2x512xf32>
    %cst_30 = arith.constant dense<0.000000e+00> : vector<2x64xf32>
    %46 = tpu.matmul %45, %36, %cst_30 {dimension_numbers = #tpu.dot_dimension_numbers<[1], [0], [0], [1], [0, 0, 1, 1], [], []>} : vector<2x512xf32>, vector<512x64xf32>, vector<2x64xf32> -> vector<2x64xf32>
    %cst_31 = arith.constant 5.000000e-01 : f32
    %47 = vector.broadcast %cst_31 : f32 to vector<2x64xf32>
    %48 = arith.mulf %46, %47 : vector<2x64xf32>
    %49 = vector.extract_strided_slice %48 {offsets = [0, 0], sizes = [1, 64], strides = [1, 1]} : vector<2x64xf32> to vector<1x64xf32>
    %50 = vector.extract_strided_slice %48 {offsets = [1, 0], sizes = [1, 64], strides = [1, 1]} : vector<2x64xf32> to vector<1x64xf32>
    %51 = arith.mulf %49, %49 : vector<1x64xf32>
    %52 = arith.subf %50, %51 : vector<1x64xf32>
    %cst_32 = arith.constant 9.99999974E-6 : f32
    %53 = vector.broadcast %cst_32 : f32 to vector<1x64xf32>
    %54 = arith.addf %52, %53 : vector<1x64xf32>
    %55 = math.rsqrt %54 : vector<1x64xf32>
    %56 = arith.mulf %38, %55 : vector<1x64xf32>
    %57 = arith.mulf %49, %56 : vector<1x64xf32>
    %58 = arith.subf %39, %57 : vector<1x64xf32>
    %59 = tpu.concatenate %56, %58 in 0 : vector<1x64xf32>, vector<1x64xf32> -> vector<2x64xf32>
    %cst_33 = arith.constant dense<0.000000e+00> : vector<2x512xf32>
    %60 = tpu.matmul %59, %37, %cst_33 {dimension_numbers = #tpu.dot_dimension_numbers<[1], [0], [0], [1], [0, 0, 1, 1], [], []>} : vector<2x64xf32>, vector<64x512xf32>, vector<2x512xf32> -> vector<2x512xf32>
    %61 = vector.extract_strided_slice %60 {offsets = [0, 0], sizes = [1, 512], strides = [1, 1]} : vector<2x512xf32> to vector<1x512xf32>
    %62 = vector.broadcast %61 : vector<1x512xf32> to vector<2x512xf32>
    %63 = arith.mulf %35, %62 : vector<2x512xf32>
    %64 = vector.extract_strided_slice %60 {offsets = [1, 0], sizes = [1, 512], strides = [1, 1]} : vector<2x512xf32> to vector<1x512xf32>
    %65 = vector.broadcast %64 : vector<1x512xf32> to vector<2x512xf32>
    %66 = arith.addf %63, %65 : vector<2x512xf32>
    %c0_34 = arith.constant 0 : index
    %c0_35 = arith.constant 0 : index
    %67 = vector.load %arg11[%c0_34, %c0_35] : memref<512x512xf32, #tpu.memory_space<vmem>>, vector<512x512xf32>
    %cst_36 = arith.constant dense<0.000000e+00> : vector<2x512xf32>
    %68 = tpu.matmul %66, %67, %cst_36 {dimension_numbers = #tpu.dot_dimension_numbers<[1], [0], [0], [1], [0, 0, 1, 1], [], []>} : vector<2x512xf32>, vector<512x512xf32>, vector<2x512xf32> -> vector<2x512xf32>
    %c0_37 = arith.constant 0 : index
    %c0_38 = arith.constant 0 : index
    %69 = vector.load %arg12[%c0_37, %c0_38] : memref<512x32xf32, #tpu.memory_space<vmem>>, vector<512x32xf32>
    %c0_39 = arith.constant 0 : index
    %c0_40 = arith.constant 0 : index
    %70 = vector.load %arg13[%c0_39, %c0_40] : memref<32x512xf32, #tpu.memory_space<vmem>>, vector<32x512xf32>
    %c0_41 = arith.constant 0 : index
    %c0_42 = arith.constant 0 : index
    %71 = vector.load %arg14[%c0_41, %c0_42] : memref<1x32xf32, #tpu.memory_space<vmem>>, vector<1x32xf32>
    %c0_43 = arith.constant 0 : index
    %c0_44 = arith.constant 0 : index
    %72 = vector.load %arg15[%c0_43, %c0_44] : memref<1x32xf32, #tpu.memory_space<vmem>>, vector<1x32xf32>
    %cst_45 = arith.constant dense<0.000000e+00> : vector<512xf32>
    %73 = vector.multi_reduction <add>, %68, %cst_45 [0] : vector<2x512xf32> to vector<512xf32>
    %74 = vector.shape_cast %73 : vector<512xf32> to vector<1x512xf32>
    %75 = arith.mulf %68, %68 : vector<2x512xf32>
    %cst_46 = arith.constant dense<0.000000e+00> : vector<512xf32>
    %76 = vector.multi_reduction <add>, %75, %cst_46 [0] : vector<2x512xf32> to vector<512xf32>
    %77 = vector.shape_cast %76 : vector<512xf32> to vector<1x512xf32>
    %78 = tpu.concatenate %74, %77 in 0 : vector<1x512xf32>, vector<1x512xf32> -> vector<2x512xf32>
    %cst_47 = arith.constant dense<0.000000e+00> : vector<2x32xf32>
    %79 = tpu.matmul %78, %69, %cst_47 {dimension_numbers = #tpu.dot_dimension_numbers<[1], [0], [0], [1], [0, 0, 1, 1], [], []>} : vector<2x512xf32>, vector<512x32xf32>, vector<2x32xf32> -> vector<2x32xf32>
    %cst_48 = arith.constant 5.000000e-01 : f32
    %80 = vector.broadcast %cst_48 : f32 to vector<2x32xf32>
    %81 = arith.mulf %79, %80 : vector<2x32xf32>
    %82 = vector.extract_strided_slice %81 {offsets = [0, 0], sizes = [1, 32], strides = [1, 1]} : vector<2x32xf32> to vector<1x32xf32>
    %83 = vector.extract_strided_slice %81 {offsets = [1, 0], sizes = [1, 32], strides = [1, 1]} : vector<2x32xf32> to vector<1x32xf32>
    %84 = arith.mulf %82, %82 : vector<1x32xf32>
    %85 = arith.subf %83, %84 : vector<1x32xf32>
    %cst_49 = arith.constant 9.99999974E-6 : f32
    %86 = vector.broadcast %cst_49 : f32 to vector<1x32xf32>
    %87 = arith.addf %85, %86 : vector<1x32xf32>
    %88 = math.rsqrt %87 : vector<1x32xf32>
    %89 = arith.mulf %71, %88 : vector<1x32xf32>
    %90 = arith.mulf %82, %89 : vector<1x32xf32>
    %91 = arith.subf %72, %90 : vector<1x32xf32>
    %92 = tpu.concatenate %89, %91 in 0 : vector<1x32xf32>, vector<1x32xf32> -> vector<2x32xf32>
    %cst_50 = arith.constant dense<0.000000e+00> : vector<2x512xf32>
    %93 = tpu.matmul %92, %70, %cst_50 {dimension_numbers = #tpu.dot_dimension_numbers<[1], [0], [0], [1], [0, 0, 1, 1], [], []>} : vector<2x32xf32>, vector<32x512xf32>, vector<2x512xf32> -> vector<2x512xf32>
    %94 = vector.extract_strided_slice %93 {offsets = [0, 0], sizes = [1, 512], strides = [1, 1]} : vector<2x512xf32> to vector<1x512xf32>
    %95 = vector.broadcast %94 : vector<1x512xf32> to vector<2x512xf32>
    %96 = arith.mulf %68, %95 : vector<2x512xf32>
    %97 = vector.extract_strided_slice %93 {offsets = [1, 0], sizes = [1, 512], strides = [1, 1]} : vector<2x512xf32> to vector<1x512xf32>
    %98 = vector.broadcast %97 : vector<1x512xf32> to vector<2x512xf32>
    %99 = arith.addf %96, %98 : vector<2x512xf32>
    %c0_51 = arith.constant 0 : index
    %c0_52 = arith.constant 0 : index
    %100 = vector.load %arg16[%c0_51, %c0_52] : memref<512x512xf32, #tpu.memory_space<vmem>>, vector<512x512xf32>
    %cst_53 = arith.constant dense<0.000000e+00> : vector<2x512xf32>
    %101 = tpu.matmul %99, %100, %cst_53 {dimension_numbers = #tpu.dot_dimension_numbers<[1], [0], [0], [1], [0, 0, 1, 1], [], []>} : vector<2x512xf32>, vector<512x512xf32>, vector<2x512xf32> -> vector<2x512xf32>
    %c0_54 = arith.constant 0 : index
    %c0_55 = arith.constant 0 : index
    %102 = vector.load %arg17[%c0_54, %c0_55] : memref<512x16xf32, #tpu.memory_space<vmem>>, vector<512x16xf32>
    %c0_56 = arith.constant 0 : index
    %c0_57 = arith.constant 0 : index
    %103 = vector.load %arg18[%c0_56, %c0_57] : memref<16x512xf32, #tpu.memory_space<vmem>>, vector<16x512xf32>
    %c0_58 = arith.constant 0 : index
    %c0_59 = arith.constant 0 : index
    %104 = vector.load %arg19[%c0_58, %c0_59] : memref<1x16xf32, #tpu.memory_space<vmem>>, vector<1x16xf32>
    %c0_60 = arith.constant 0 : index
    %c0_61 = arith.constant 0 : index
    %105 = vector.load %arg20[%c0_60, %c0_61] : memref<1x16xf32, #tpu.memory_space<vmem>>, vector<1x16xf32>
    %cst_62 = arith.constant dense<0.000000e+00> : vector<512xf32>
    %106 = vector.multi_reduction <add>, %101, %cst_62 [0] : vector<2x512xf32> to vector<512xf32>
    %107 = vector.shape_cast %106 : vector<512xf32> to vector<1x512xf32>
    %108 = arith.mulf %101, %101 : vector<2x512xf32>
    %cst_63 = arith.constant dense<0.000000e+00> : vector<512xf32>
    %109 = vector.multi_reduction <add>, %108, %cst_63 [0] : vector<2x512xf32> to vector<512xf32>
    %110 = vector.shape_cast %109 : vector<512xf32> to vector<1x512xf32>
    %111 = tpu.concatenate %107, %110 in 0 : vector<1x512xf32>, vector<1x512xf32> -> vector<2x512xf32>
    %cst_64 = arith.constant dense<0.000000e+00> : vector<2x16xf32>
    %112 = tpu.matmul %111, %102, %cst_64 {dimension_numbers = #tpu.dot_dimension_numbers<[1], [0], [0], [1], [0, 0, 1, 1], [], []>} : vector<2x512xf32>, vector<512x16xf32>, vector<2x16xf32> -> vector<2x16xf32>
    %cst_65 = arith.constant 5.000000e-01 : f32
    %113 = vector.broadcast %cst_65 : f32 to vector<2x16xf32>
    %114 = arith.mulf %112, %113 : vector<2x16xf32>
    %115 = vector.extract_strided_slice %114 {offsets = [0, 0], sizes = [1, 16], strides = [1, 1]} : vector<2x16xf32> to vector<1x16xf32>
    %116 = vector.extract_strided_slice %114 {offsets = [1, 0], sizes = [1, 16], strides = [1, 1]} : vector<2x16xf32> to vector<1x16xf32>
    %117 = arith.mulf %115, %115 : vector<1x16xf32>
    %118 = arith.subf %116, %117 : vector<1x16xf32>
    %cst_66 = arith.constant 9.99999974E-6 : f32
    %119 = vector.broadcast %cst_66 : f32 to vector<1x16xf32>
    %120 = arith.addf %118, %119 : vector<1x16xf32>
    %121 = math.rsqrt %120 : vector<1x16xf32>
    %122 = arith.mulf %104, %121 : vector<1x16xf32>
    %123 = arith.mulf %115, %122 : vector<1x16xf32>
    %124 = arith.subf %105, %123 : vector<1x16xf32>
    %125 = tpu.concatenate %122, %124 in 0 : vector<1x16xf32>, vector<1x16xf32> -> vector<2x16xf32>
    %cst_67 = arith.constant dense<0.000000e+00> : vector<2x512xf32>
    %126 = tpu.matmul %125, %103, %cst_67 {dimension_numbers = #tpu.dot_dimension_numbers<[1], [0], [0], [1], [0, 0, 1, 1], [], []>} : vector<2x16xf32>, vector<16x512xf32>, vector<2x512xf32> -> vector<2x512xf32>
    %127 = vector.extract_strided_slice %126 {offsets = [0, 0], sizes = [1, 512], strides = [1, 1]} : vector<2x512xf32> to vector<1x512xf32>
    %128 = vector.broadcast %127 : vector<1x512xf32> to vector<2x512xf32>
    %129 = arith.mulf %101, %128 : vector<2x512xf32>
    %130 = vector.extract_strided_slice %126 {offsets = [1, 0], sizes = [1, 512], strides = [1, 1]} : vector<2x512xf32> to vector<1x512xf32>
    %131 = vector.broadcast %130 : vector<1x512xf32> to vector<2x512xf32>
    %132 = arith.addf %129, %131 : vector<2x512xf32>
    %c0_68 = arith.constant 0 : index
    %c0_69 = arith.constant 0 : index
    %133 = vector.load %arg21[%c0_68, %c0_69] : memref<512x512xf32, #tpu.memory_space<vmem>>, vector<512x512xf32>
    %cst_70 = arith.constant dense<0.000000e+00> : vector<2x512xf32>
    %134 = tpu.matmul %132, %133, %cst_70 {dimension_numbers = #tpu.dot_dimension_numbers<[1], [0], [0], [1], [0, 0, 1, 1], [], []>} : vector<2x512xf32>, vector<512x512xf32>, vector<2x512xf32> -> vector<2x512xf32>
    %c0_71 = arith.constant 0 : index
    %c0_72 = arith.constant 0 : index
    %135 = vector.load %arg22[%c0_71, %c0_72] : memref<512x8xf32, #tpu.memory_space<vmem>>, vector<512x8xf32>
    %c0_73 = arith.constant 0 : index
    %c0_74 = arith.constant 0 : index
    %136 = vector.load %arg23[%c0_73, %c0_74] : memref<8x512xf32, #tpu.memory_space<vmem>>, vector<8x512xf32>
    %c0_75 = arith.constant 0 : index
    %c0_76 = arith.constant 0 : index
    %137 = vector.load %arg24[%c0_75, %c0_76] : memref<1x8xf32, #tpu.memory_space<vmem>>, vector<1x8xf32>
    %c0_77 = arith.constant 0 : index
    %c0_78 = arith.constant 0 : index
    %138 = vector.load %arg25[%c0_77, %c0_78] : memref<1x8xf32, #tpu.memory_space<vmem>>, vector<1x8xf32>
    %cst_79 = arith.constant dense<0.000000e+00> : vector<512xf32>
    %139 = vector.multi_reduction <add>, %134, %cst_79 [0] : vector<2x512xf32> to vector<512xf32>
    %140 = vector.shape_cast %139 : vector<512xf32> to vector<1x512xf32>
    %141 = arith.mulf %134, %134 : vector<2x512xf32>
    %cst_80 = arith.constant dense<0.000000e+00> : vector<512xf32>
    %142 = vector.multi_reduction <add>, %141, %cst_80 [0] : vector<2x512xf32> to vector<512xf32>
    %143 = vector.shape_cast %142 : vector<512xf32> to vector<1x512xf32>
    %144 = tpu.concatenate %140, %143 in 0 : vector<1x512xf32>, vector<1x512xf32> -> vector<2x512xf32>
    %cst_81 = arith.constant dense<0.000000e+00> : vector<2x8xf32>
    %145 = tpu.matmul %144, %135, %cst_81 {dimension_numbers = #tpu.dot_dimension_numbers<[1], [0], [0], [1], [0, 0, 1, 1], [], []>} : vector<2x512xf32>, vector<512x8xf32>, vector<2x8xf32> -> vector<2x8xf32>
    %cst_82 = arith.constant 5.000000e-01 : f32
    %146 = vector.broadcast %cst_82 : f32 to vector<2x8xf32>
    %147 = arith.mulf %145, %146 : vector<2x8xf32>
    %148 = vector.extract_strided_slice %147 {offsets = [0, 0], sizes = [1, 8], strides = [1, 1]} : vector<2x8xf32> to vector<1x8xf32>
    %149 = vector.extract_strided_slice %147 {offsets = [1, 0], sizes = [1, 8], strides = [1, 1]} : vector<2x8xf32> to vector<1x8xf32>
    %150 = arith.mulf %148, %148 : vector<1x8xf32>
    %151 = arith.subf %149, %150 : vector<1x8xf32>
    %cst_83 = arith.constant 9.99999974E-6 : f32
    %152 = vector.broadcast %cst_83 : f32 to vector<1x8xf32>
    %153 = arith.addf %151, %152 : vector<1x8xf32>
    %154 = math.rsqrt %153 : vector<1x8xf32>
    %155 = arith.mulf %137, %154 : vector<1x8xf32>
    %156 = arith.mulf %148, %155 : vector<1x8xf32>
    %157 = arith.subf %138, %156 : vector<1x8xf32>
    %158 = tpu.concatenate %155, %157 in 0 : vector<1x8xf32>, vector<1x8xf32> -> vector<2x8xf32>
    %cst_84 = arith.constant dense<0.000000e+00> : vector<2x512xf32>
    %159 = tpu.matmul %158, %136, %cst_84 {dimension_numbers = #tpu.dot_dimension_numbers<[1], [0], [0], [1], [0, 0, 1, 1], [], []>} : vector<2x8xf32>, vector<8x512xf32>, vector<2x512xf32> -> vector<2x512xf32>
    %160 = vector.extract_strided_slice %159 {offsets = [0, 0], sizes = [1, 512], strides = [1, 1]} : vector<2x512xf32> to vector<1x512xf32>
    %161 = vector.broadcast %160 : vector<1x512xf32> to vector<2x512xf32>
    %162 = arith.mulf %134, %161 : vector<2x512xf32>
    %163 = vector.extract_strided_slice %159 {offsets = [1, 0], sizes = [1, 512], strides = [1, 1]} : vector<2x512xf32> to vector<1x512xf32>
    %164 = vector.broadcast %163 : vector<1x512xf32> to vector<2x512xf32>
    %165 = arith.addf %162, %164 : vector<2x512xf32>
    %c0_85 = arith.constant 0 : index
    %c0_86 = arith.constant 0 : index
    %166 = vector.load %arg26[%c0_85, %c0_86] : memref<512x512xf32, #tpu.memory_space<vmem>>, vector<512x512xf32>
    %cst_87 = arith.constant dense<0.000000e+00> : vector<2x512xf32>
    %167 = tpu.matmul %165, %166, %cst_87 {dimension_numbers = #tpu.dot_dimension_numbers<[1], [0], [0], [1], [0, 0, 1, 1], [], []>} : vector<2x512xf32>, vector<512x512xf32>, vector<2x512xf32> -> vector<2x512xf32>
    %c0_88 = arith.constant 0 : index
    %c0_89 = arith.constant 0 : index
    %168 = vector.load %arg27[%c0_88, %c0_89] : memref<512x4xf32, #tpu.memory_space<vmem>>, vector<512x4xf32>
    %c0_90 = arith.constant 0 : index
    %c0_91 = arith.constant 0 : index
    %169 = vector.load %arg28[%c0_90, %c0_91] : memref<4x512xf32, #tpu.memory_space<vmem>>, vector<4x512xf32>
    %c0_92 = arith.constant 0 : index
    %c0_93 = arith.constant 0 : index
    %170 = vector.load %arg29[%c0_92, %c0_93] : memref<1x4xf32, #tpu.memory_space<vmem>>, vector<1x4xf32>
    %c0_94 = arith.constant 0 : index
    %c0_95 = arith.constant 0 : index
    %171 = vector.load %arg30[%c0_94, %c0_95] : memref<1x4xf32, #tpu.memory_space<vmem>>, vector<1x4xf32>
    %cst_96 = arith.constant dense<0.000000e+00> : vector<512xf32>
    %172 = vector.multi_reduction <add>, %167, %cst_96 [0] : vector<2x512xf32> to vector<512xf32>
    %173 = vector.shape_cast %172 : vector<512xf32> to vector<1x512xf32>
    %174 = arith.mulf %167, %167 : vector<2x512xf32>
    %cst_97 = arith.constant dense<0.000000e+00> : vector<512xf32>
    %175 = vector.multi_reduction <add>, %174, %cst_97 [0] : vector<2x512xf32> to vector<512xf32>
    %176 = vector.shape_cast %175 : vector<512xf32> to vector<1x512xf32>
    %177 = tpu.concatenate %173, %176 in 0 : vector<1x512xf32>, vector<1x512xf32> -> vector<2x512xf32>
    %cst_98 = arith.constant dense<0.000000e+00> : vector<2x4xf32>
    %178 = tpu.matmul %177, %168, %cst_98 {dimension_numbers = #tpu.dot_dimension_numbers<[1], [0], [0], [1], [0, 0, 1, 1], [], []>} : vector<2x512xf32>, vector<512x4xf32>, vector<2x4xf32> -> vector<2x4xf32>
    %cst_99 = arith.constant 5.000000e-01 : f32
    %179 = vector.broadcast %cst_99 : f32 to vector<2x4xf32>
    %180 = arith.mulf %178, %179 : vector<2x4xf32>
    %181 = vector.extract_strided_slice %180 {offsets = [0, 0], sizes = [1, 4], strides = [1, 1]} : vector<2x4xf32> to vector<1x4xf32>
    %182 = vector.extract_strided_slice %180 {offsets = [1, 0], sizes = [1, 4], strides = [1, 1]} : vector<2x4xf32> to vector<1x4xf32>
    %183 = arith.mulf %181, %181 : vector<1x4xf32>
    %184 = arith.subf %182, %183 : vector<1x4xf32>
    %cst_100 = arith.constant 9.99999974E-6 : f32
    %185 = vector.broadcast %cst_100 : f32 to vector<1x4xf32>
    %186 = arith.addf %184, %185 : vector<1x4xf32>
    %187 = math.rsqrt %186 : vector<1x4xf32>
    %188 = arith.mulf %170, %187 : vector<1x4xf32>
    %189 = arith.mulf %181, %188 : vector<1x4xf32>
    %190 = arith.subf %171, %189 : vector<1x4xf32>
    %191 = tpu.concatenate %188, %190 in 0 : vector<1x4xf32>, vector<1x4xf32> -> vector<2x4xf32>
    %cst_101 = arith.constant dense<0.000000e+00> : vector<2x512xf32>
    %192 = tpu.matmul %191, %169, %cst_101 {dimension_numbers = #tpu.dot_dimension_numbers<[1], [0], [0], [1], [0, 0, 1, 1], [], []>} : vector<2x4xf32>, vector<4x512xf32>, vector<2x512xf32> -> vector<2x512xf32>
    %193 = vector.extract_strided_slice %192 {offsets = [0, 0], sizes = [1, 512], strides = [1, 1]} : vector<2x512xf32> to vector<1x512xf32>
    %194 = vector.broadcast %193 : vector<1x512xf32> to vector<2x512xf32>
    %195 = arith.mulf %167, %194 : vector<2x512xf32>
    %196 = vector.extract_strided_slice %192 {offsets = [1, 0], sizes = [1, 512], strides = [1, 1]} : vector<2x512xf32> to vector<1x512xf32>
    %197 = vector.broadcast %196 : vector<1x512xf32> to vector<2x512xf32>
    %198 = arith.addf %195, %197 : vector<2x512xf32>
    %c0_102 = arith.constant 0 : index
    %c0_103 = arith.constant 0 : index
    %199 = vector.load %arg31[%c0_102, %c0_103] : memref<512x256xf32, #tpu.memory_space<vmem>>, vector<512x256xf32>
    %cst_104 = arith.constant dense<0.000000e+00> : vector<2x256xf32>
    %200 = tpu.matmul %198, %199, %cst_104 {dimension_numbers = #tpu.dot_dimension_numbers<[1], [0], [0], [1], [0, 0, 1, 1], [], []>} : vector<2x512xf32>, vector<512x256xf32>, vector<2x256xf32> -> vector<2x256xf32>
    %c0_105 = arith.constant 0 : index
    %c0_106 = arith.constant 0 : index
    %201 = vector.load %arg32[%c0_105, %c0_106] : memref<2x256xf32, #tpu.memory_space<vmem>>, vector<2x256xf32>
    tpu.vector_store %arg32[%c0_105, %c0_106], %200 {strides = array<i32>} : memref<2x256xf32, #tpu.memory_space<vmem>>, vector<2x256xf32>,
    return
  }
}

</mosaic_0001>

<llo_original>
// kernel: generator_forward.1
$region0: #{generator_forward.1}
  #allocation0 [shape = 'u32[]', space=smem, size = 0x4, offset = 0x4, fixed_abs, tag = 'smem constant byte address 0x4 - core index']
  #allocation1 [shape = 'u32[72,128]{1,0:T(1,128)}', space=vmem, size = 0x9000, scoped, tag = 'internal scratch']
  %s0 = inlined_call_operand.smem [shape: u32[33], index: -1, kind: input, shape index: {}]
  %s1 = sld [smem:[%s0]]
  %s2 = scalar_lea.smem %s0, 1
  %s3 = sld [smem:[%s2]]
  %s4 = scalar_lea.smem %s0, 2
  %s5 = sld [smem:[%s4]]
  %s6 = scalar_lea.smem %s0, 3
  %s7 = sld [smem:[%s6]]
  %s8 = scalar_lea.smem %s0, 4
  %s9 = sld [smem:[%s8]]
  %s10 = scalar_lea.smem %s0, 5
  %s11 = sld [smem:[%s10]]
  %s12 = scalar_lea.smem %s0, 6
  %s13 = sld [smem:[%s12]]
  %s14 = scalar_lea.smem %s0, 7
  %s15 = sld [smem:[%s14]]
  %s16 = scalar_lea.smem %s0, 8
  %s17 = sld [smem:[%s16]]
  %s18 = scalar_lea.smem %s0, 9
  %s19 = sld [smem:[%s18]]
  %s20 = scalar_lea.smem %s0, 10
  %s21 = sld [smem:[%s20]]
  %s22 = scalar_lea.smem %s0, 11
  %s23 = sld [smem:[%s22]]
  %s24 = scalar_lea.smem %s0, 12
  %s25 = sld [smem:[%s24]]
  %s26 = scalar_lea.smem %s0, 13
  %s27 = sld [smem:[%s26]]
  %s28 = scalar_lea.smem %s0, 14
  %s29 = sld [smem:[%s28]]
  %s30 = scalar_lea.smem %s0, 15
  %s31 = sld [smem:[%s30]]
  %s32 = scalar_lea.smem %s0, 16
  %s33 = sld [smem:[%s32]]
  %s34 = scalar_lea.smem %s0, 17
  %s35 = sld [smem:[%s34]]
  %s36 = scalar_lea.smem %s0, 18
  %s37 = sld [smem:[%s36]]
  %s38 = scalar_lea.smem %s0, 19
  %s39 = sld [smem:[%s38]]
  %s40 = scalar_lea.smem %s0, 20
  %s41 = sld [smem:[%s40]]
  %s42 = scalar_lea.smem %s0, 21
  %s43 = sld [smem:[%s42]]
  %s44 = scalar_lea.smem %s0, 22
  %s45 = sld [smem:[%s44]]
  %s46 = scalar_lea.smem %s0, 23
  %s47 = sld [smem:[%s46]]
  %s48 = scalar_lea.smem %s0, 24
  %s49 = sld [smem:[%s48]]
  %s50 = scalar_lea.smem %s0, 25
  %s51 = sld [smem:[%s50]]
  %s52 = scalar_lea.smem %s0, 26
  %s53 = sld [smem:[%s52]]
  %s54 = scalar_lea.smem %s0, 27
  %s55 = sld [smem:[%s54]]
  %s56 = scalar_lea.smem %s0, 28
  %s57 = sld [smem:[%s56]]
  %s58 = scalar_lea.smem %s0, 29
  %s59 = sld [smem:[%s58]]
  %s60 = scalar_lea.smem %s0, 30
  %s61 = sld [smem:[%s60]]
  %s62 = scalar_lea.smem %s0, 31
  %s63 = sld [smem:[%s62]]
  %s64 = scalar_lea.smem %s0, 32
  %s65 = sld [smem:[%s64]]
  %s66 = sld [smem:[#allocation0]]
  $region158: #{generator_forward.1} parent=0
    _
  %s68 = ssub.s32 1, %s66
  %s69 = scalar_select 0, %s68, %s66
  $region1: #{generator_forward.1} parent=0
    #allocation2 [shape = 'u8[1048576]{0}', space=vmem, size = 0x100000, scoped, tag = 'input window, operand 6, single buffered']
    #allocation3 [shape = 's32[1]{0}', space=sflag, size = 0x4, scoped, tag = 'scoped memory for generator_forward.1']
    #allocation4 [shape = 'u8[1048576]{0}', space=vmem, size = 0x100000, scoped, tag = 'input window, operand 11, single buffered']
    #allocation5 [shape = 's32[1]{0}', space=sflag, size = 0x4, scoped, tag = 'scoped memory for generator_forward.1']
    #allocation6 [shape = 'u8[1048576]{0}', space=vmem, size = 0x100000, scoped, tag = 'input window, operand 16, single buffered']
    #allocation7 [shape = 'u8[1048576]{0}', space=vmem, size = 0x100000, scoped, tag = 'input window, operand 21, single buffered']
    #allocation8 [shape = 's32[1]{0}', space=sflag, size = 0x4, scoped, tag = 'scoped memory for generator_forward.1']
    #allocation9 [shape = 'u8[1048576]{0}', space=vmem, size = 0x100000, scoped, tag = 'input window, operand 26, single buffered']
    %70 = vsyncpa [#allocation3], 0
    %71 = vsyncpa [#allocation5], 0
    %72 = vsyncpa [#allocation8], 0
    // Predicated region
    $region2: #{generator_forward.1} parent=1 // pred_check
      _
    $region3: #{generator_forward.1} parent=1 // pred_check_branch
      %74 = sbr.rel (0) target = $region5
    $region4: #{generator_forward.1} parent=1 // pred_region
      _
    $region5: #{generator_forward.1} parent=1 // pred_fallthru
      _
    // Predicated region
    $region6: #{generator_forward.1} parent=1 // pred_check
      _
    $region7: #{generator_forward.1} parent=1 // pred_check_branch
      %76 = sbr.rel (0) target = $region9
    $region8: #{generator_forward.1} parent=1 // pred_region
      _
    $region9: #{generator_forward.1} parent=1 // pred_fallthru
      _
    // Predicated region
    $region10: #{generator_forward.1} parent=1 // pred_check
      _
    $region11: #{generator_forward.1} parent=1 // pred_check_branch
      %78 = sbr.rel (0) target = $region13
    $region12: #{generator_forward.1} parent=1 // pred_region
      _
    $region13: #{generator_forward.1} parent=1 // pred_fallthru
      _
    // Predicated region
    $region14: #{generator_forward.1} parent=1 // pred_check
      _
    $region15: #{generator_forward.1} parent=1 // pred_check_branch
      %80 = sbr.rel (0) target = $region17
    $region16: #{generator_forward.1} parent=1 // pred_region
      _
    $region17: #{generator_forward.1} parent=1 // pred_fallthru
      _
    // Predicated region
    $region18: #{generator_forward.1} parent=1 // pred_check
      _
    $region19: #{generator_forward.1} parent=1 // pred_check_branch
      %82 = sbr.rel (0) target = $region21
    $region20: #{generator_forward.1} parent=1 // pred_region
      _
    $region21: #{generator_forward.1} parent=1 // pred_fallthru
      _
    // Predicated region
    $region22: #{generator_forward.1} parent=1 // pred_check
      _
    $region23: #{generator_forward.1} parent=1 // pred_check_branch
      %84 = sbr.rel (0) target = $region25
    $region24: #{generator_forward.1} parent=1 // pred_region
      _
    $region25: #{generator_forward.1} parent=1 // pred_fallthru
      _
    // Predicated region
    $region26: #{generator_forward.1} parent=1 // pred_check
      _
    $region27: #{generator_forward.1} parent=1 // pred_check_branch
      %86 = sbr.rel (0) target = $region29
    $region28: #{generator_forward.1} parent=1 // pred_region
      %88 = vsyncadd [#allocation3], 0
      %s89 = sshll.u32 %s13, 4
      %s90 = int_to_ptr.hbm [resolvable:$true] %s89
      %s91 = sshll.u32 [#allocation2], 4
      %s92 = int_to_ptr.vmem [resolvable:$true] %s91
      %97 = dma.hbm_to_vmem [thread:$0]  %s90, 32768, %s92, [#allocation3], 512, 512, 32
    $region29: #{generator_forward.1} parent=1 // pred_fallthru
      _
    // Predicated region
    $region30: #{generator_forward.1} parent=1 // pred_check
      _
    $region31: #{generator_forward.1} parent=1 // pred_check_branch
      %99 = sbr.rel (0) target = $region33
    $region32: #{generator_forward.1} parent=1 // pred_region
      _
    $region33: #{generator_forward.1} parent=1 // pred_fallthru
      _
    // Predicated region
    $region34: #{generator_forward.1} parent=1 // pred_check
      _
    $region35: #{generator_forward.1} parent=1 // pred_check_branch
      %101 = sbr.rel (0) target = $region37
    $region36: #{generator_forward.1} parent=1 // pred_region
      _
    $region37: #{generator_forward.1} parent=1 // pred_fallthru
      _
    // Predicated region
    $region38: #{generator_forward.1} parent=1 // pred_check
      _
    $region39: #{generator_forward.1} parent=1 // pred_check_branch
      %103 = sbr.rel (0) target = $region41
    $region40: #{generator_forward.1} parent=1 // pred_region
      _
    $region41: #{generator_forward.1} parent=1 // pred_fallthru
      _
    // Predicated region
    $region42: #{generator_forward.1} parent=1 // pred_check
      _
    $region43: #{generator_forward.1} parent=1 // pred_check_branch
      %105 = sbr.rel (0) target = $region45
    $region44: #{generator_forward.1} parent=1 // pred_region
      _
    $region45: #{generator_forward.1} parent=1 // pred_fallthru
      _
    // Predicated region
    $region46: #{generator_forward.1} parent=1 // pred_check
      _
    $region47: #{generator_forward.1} parent=1 // pred_check_branch
      %107 = sbr.rel (0) target = $region49
    $region48: #{generator_forward.1} parent=1 // pred_region
      %109 = vsyncadd [#allocation5], 0
      %s110 = sshll.u32 %s23, 4
      %s111 = int_to_ptr.hbm [resolvable:$true] %s110
      %s112 = sshll.u32 [#allocation4], 4
      %s113 = int_to_ptr.vmem [resolvable:$true] %s112
      %118 = dma.hbm_to_vmem [thread:$0]  %s111, 32768, %s113, [#allocation5], 512, 512, 32
    $region49: #{generator_forward.1} parent=1 // pred_fallthru
      _
    // Predicated region
    $region50: #{generator_forward.1} parent=1 // pred_check
      _
    $region51: #{generator_forward.1} parent=1 // pred_check_branch
      %120 = sbr.rel (0) target = $region53
    $region52: #{generator_forward.1} parent=1 // pred_region
      _
    $region53: #{generator_forward.1} parent=1 // pred_fallthru
      _
    // Predicated region
    $region54: #{generator_forward.1} parent=1 // pred_check
      _
    $region55: #{generator_forward.1} parent=1 // pred_check_branch
      %122 = sbr.rel (0) target = $region57
    $region56: #{generator_forward.1} parent=1 // pred_region
      _
    $region57: #{generator_forward.1} parent=1 // pred_fallthru
      _
    // Predicated region
    $region58: #{generator_forward.1} parent=1 // pred_check
      _
    $region59: #{generator_forward.1} parent=1 // pred_check_branch
      %124 = sbr.rel (0) target = $region61
    $region60: #{generator_forward.1} parent=1 // pred_region
      _
    $region61: #{generator_forward.1} parent=1 // pred_fallthru
      _
    // Predicated region
    $region62: #{generator_forward.1} parent=1 // pred_check
      _
    $region63: #{generator_forward.1} parent=1 // pred_check_branch
      %126 = sbr.rel (0) target = $region65
    $region64: #{generator_forward.1} parent=1 // pred_region
      _
    $region65: #{generator_forward.1} parent=1 // pred_fallthru
      _
    // Predicated region
    $region66: #{generator_forward.1} parent=1 // pred_check
      _
    $region67: #{generator_forward.1} parent=1 // pred_check_branch
      %128 = sbr.rel (0) target = $region69
    $region68: #{generator_forward.1} parent=1 // pred_region
      %130 = vsyncadd [#allocation5], 0
      %s131 = sshll.u32 %s33, 4
      %s132 = int_to_ptr.hbm [resolvable:$true] %s131
      %s133 = sshll.u32 [#allocation6], 4
      %s134 = int_to_ptr.vmem [resolvable:$true] %s133
      %139 = dma.hbm_to_vmem [thread:$0]  %s132, 32768, %s134, [#allocation5], 512, 512, 32
    $region69: #{generator_forward.1} parent=1 // pred_fallthru
      _
    // Predicated region
    $region70: #{generator_forward.1} parent=1 // pred_check
      _
    $region71: #{generator_forward.1} parent=1 // pred_check_branch
      %141 = sbr.rel (0) target = $region73
    $region72: #{generator_forward.1} parent=1 // pred_region
      _
    $region73: #{generator_forward.1} parent=1 // pred_fallthru
      _
    // Predicated region
    $region74: #{generator_forward.1} parent=1 // pred_check
      _
    $region75: #{generator_forward.1} parent=1 // pred_check_branch
      %143 = sbr.rel (0) target = $region77
    $region76: #{generator_forward.1} parent=1 // pred_region
      _
    $region77: #{generator_forward.1} parent=1 // pred_fallthru
      _
    // Predicated region
    $region78: #{generator_forward.1} parent=1 // pred_check
      _
    $region79: #{generator_forward.1} parent=1 // pred_check_branch
      %145 = sbr.rel (0) target = $region81
    $region80: #{generator_forward.1} parent=1 // pred_region
      _
    $region81: #{generator_forward.1} parent=1 // pred_fallthru
      _
    // Predicated region
    $region82: #{generator_forward.1} parent=1 // pred_check
      _
    $region83: #{generator_forward.1} parent=1 // pred_check_branch
      %147 = sbr.rel (0) target = $region85
    $region84: #{generator_forward.1} parent=1 // pred_region
      _
    $region85: #{generator_forward.1} parent=1 // pred_fallthru
      _
    // Predicated region
    $region86: #{generator_forward.1} parent=1 // pred_check
      _
    $region87: #{generator_forward.1} parent=1 // pred_check_branch
      %149 = sbr.rel (0) target = $region89
    $region88: #{generator_forward.1} parent=1 // pred_region
      %151 = vsyncadd [#allocation8], 0
      %s152 = sshll.u32 %s43, 4
      %s153 = int_to_ptr.hbm [resolvable:$true] %s152
      %s154 = sshll.u32 [#allocation7], 4
      %s155 = int_to_ptr.vmem [resolvable:$true] %s154
      %160 = dma.hbm_to_vmem [thread:$0]  %s153, 32768, %s155, [#allocation8], 512, 512, 32
    $region89: #{generator_forward.1} parent=1 // pred_fallthru
      _
    // Predicated region
    $region90: #{generator_forward.1} parent=1 // pred_check
      _
    $region91: #{generator_forward.1} parent=1 // pred_check_branch
      %162 = sbr.rel (0) target = $region93
    $region92: #{generator_forward.1} parent=1 // pred_region
      _
    $region93: #{generator_forward.1} parent=1 // pred_fallthru
      _
    // Predicated region
    $region94: #{generator_forward.1} parent=1 // pred_check
      _
    $region95: #{generator_forward.1} parent=1 // pred_check_branch
      %164 = sbr.rel (0) target = $region97
    $region96: #{generator_forward.1} parent=1 // pred_region
      _
    $region97: #{generator_forward.1} parent=1 // pred_fallthru
      _
    // Predicated region
    $region98: #{generator_forward.1} parent=1 // pred_check
      _
    $region99: #{generator_forward.1} parent=1 // pred_check_branch
      %166 = sbr.rel (0) target = $region101
    $region100: #{generator_forward.1} parent=1 // pred_region
      _
    $region101: #{generator_forward.1} parent=1 // pred_fallthru
      _
    // Predicated region
    $region102: #{generator_forward.1} parent=1 // pred_check
      _
    $region103: #{generator_forward.1} parent=1 // pred_check_branch
      %168 = sbr.rel (0) target = $region105
    $region104: #{generator_forward.1} parent=1 // pred_region
      _
    $region105: #{generator_forward.1} parent=1 // pred_fallthru
      _
    // Predicated region
    $region106: #{generator_forward.1} parent=1 // pred_check
      _
    $region107: #{generator_forward.1} parent=1 // pred_check_branch
      %170 = sbr.rel (0) target = $region109
    $region108: #{generator_forward.1} parent=1 // pred_region
      %172 = vsyncadd [#allocation8], 0
      %s173 = sshll.u32 %s53, 4
      %s174 = int_to_ptr.hbm [resolvable:$true] %s173
      %s175 = sshll.u32 [#allocation9], 4
      %s176 = int_to_ptr.vmem [resolvable:$true] %s175
      %181 = dma.hbm_to_vmem [thread:$0]  %s174, 32768, %s176, [#allocation8], 512, 512, 32
    $region109: #{generator_forward.1} parent=1 // pred_fallthru
      _
    // Predicated region
    $region110: #{generator_forward.1} parent=1 // pred_check
      _
    $region111: #{generator_forward.1} parent=1 // pred_check_branch
      %183 = sbr.rel (0) target = $region113
    $region112: #{generator_forward.1} parent=1 // pred_region
      _
    $region113: #{generator_forward.1} parent=1 // pred_fallthru
      _
    // Predicated region
    $region114: #{generator_forward.1} parent=1 // pred_check
      _
    $region115: #{generator_forward.1} parent=1 // pred_check_branch
      %185 = sbr.rel (0) target = $region117
    $region116: #{generator_forward.1} parent=1 // pred_region
      _
    $region117: #{generator_forward.1} parent=1 // pred_fallthru
      _
    // Predicated region
    $region118: #{generator_forward.1} parent=1 // pred_check
      _
    $region119: #{generator_forward.1} parent=1 // pred_check_branch
      %187 = sbr.rel (0) target = $region121
    $region120: #{generator_forward.1} parent=1 // pred_region
      _
    $region121: #{generator_forward.1} parent=1 // pred_fallthru
      _
    // Predicated region
    $region122: #{generator_forward.1} parent=1 // pred_check
      _
    $region123: #{generator_forward.1} parent=1 // pred_check_branch
      %189 = sbr.rel (0) target = $region125
    $region124: #{generator_forward.1} parent=1 // pred_region
      _
    $region125: #{generator_forward.1} parent=1 // pred_fallthru
      _
    // Predicated region
    $region126: #{generator_forward.1} parent=1 // pred_check
      _
    $region127: #{generator_forward.1} parent=1 // pred_check_branch
      %191 = sbr.rel (0) target = $region129
    $region128: #{generator_forward.1} parent=1 // pred_region
      _
    $region129: #{generator_forward.1} parent=1 // pred_fallthru
      _
    // Predicated region
    $region130: #{generator_forward.1} parent=1 // pred_check
      _
    $region131: #{generator_forward.1} parent=1 // pred_check_branch
      %193 = sbr.rel (0) target = $region133
    $region132: #{generator_forward.1} parent=1 // pred_region
      %195 = dma.done [#allocation3], 32768
    $region133: #{generator_forward.1} parent=1 // pred_fallthru
      _
    // Predicated region
    $region134: #{generator_forward.1} parent=1 // pred_check
      _
    $region135: #{generator_forward.1} parent=1 // pred_check_branch
      %197 = sbr.rel (0) target = $region137
    $region136: #{generator_forward.1} parent=1 // pred_region
      %199 = dma.done [#allocation5], 32768
    $region137: #{generator_forward.1} parent=1 // pred_fallthru
      _
    // Predicated region
    $region138: #{generator_forward.1} parent=1 // pred_check
      _
    $region139: #{generator_forward.1} parent=1 // pred_check_branch
      %201 = sbr.rel (0) target = $region141
    $region140: #{generator_forward.1} parent=1 // pred_region
      %203 = dma.done [#allocation5], 32768
    $region141: #{generator_forward.1} parent=1 // pred_fallthru
      _
    // Predicated region
    $region142: #{generator_forward.1} parent=1 // pred_check
      _
    $region143: #{generator_forward.1} parent=1 // pred_check_branch
      %205 = sbr.rel (0) target = $region145
    $region144: #{generator_forward.1} parent=1 // pred_region
      %207 = dma.done [#allocation8], 32768
    $region145: #{generator_forward.1} parent=1 // pred_fallthru
      _
    // Predicated region
    $region146: #{generator_forward.1} parent=1 // pred_check
      _
    $region147: #{generator_forward.1} parent=1 // pred_check_branch
      %209 = sbr.rel (0) target = $region149
    $region148: #{generator_forward.1} parent=1 // pred_region
      %211 = dma.done [#allocation8], 32768
    $region149: #{generator_forward.1} parent=1 // pred_fallthru
      _
    %v212 = vld [vmem:[%s1] sm:$0x3]
    %v213 = vld [vmem:[%s3] sm:$0xff]
    %v214 = vld [vmem:[%s3 + $0x8] sm:$0xff]
    %v215 = vld [vmem:[%s3 + $0x10] sm:$0xff]
    %v216 = vld [vmem:[%s3 + $0x18] sm:$0xff]
    %vm217 = vcmask 64512
    %v219 = vsel %vm217, %v212, 0
    %221 = vmatpush.msra.mxu0 0.0
    %222 = vmatpush.msra.mxu0 0.0
    %223 = vmatpush.msra.mxu0 0.0
    %224 = vmatpush.msra.mxu0 0.0
    %225 = vmatpush.msra.mxu0 0.0
    %226 = vmatpush.msra.mxu0 0.0
    %227 = vmatpush.msra.mxu0 0.0
    %228 = vmatpush.msra.mxu0 0.0
    %229 = vmatpush.msra.mxu0 0.0
    %230 = vmatpush.msra.mxu0 0.0
    %231 = vmatpush.msra.mxu0 0.0
    %232 = vmatpush.msra.mxu0 0.0
    %233 = vmatpush.msra.mxu0 0.0
    %234 = vmatpush.msra.mxu0 0.0
    %235 = vmatpush.msra.mxu0 0.0
    %236 = vmatpush.msra.mxu0 %v213
    %237 = vmatmul.f32.gmra.mxu0 %v219
    %v238 = vpop.f32.mrf.mxu0
    %v239 = vadd.f32 0.0, %v238
    %240 = vdwg.mxu0
    %241 = vmatpush.msra.mxu0 0.0
    %242 = vmatpush.msra.mxu0 0.0
    %243 = vmatpush.msra.mxu0 0.0
    %244 = vmatpush.msra.mxu0 0.0
    %245 = vmatpush.msra.mxu0 0.0
    %246 = vmatpush.msra.mxu0 0.0
    %247 = vmatpush.msra.mxu0 0.0
    %248 = vmatpush.msra.mxu0 0.0
    %249 = vmatpush.msra.mxu0 0.0
    %250 = vmatpush.msra.mxu0 0.0
    %251 = vmatpush.msra.mxu0 0.0
    %252 = vmatpush.msra.mxu0 0.0
    %253 = vmatpush.msra.mxu0 0.0
    %254 = vmatpush.msra.mxu0 0.0
    %255 = vmatpush.msra.mxu0 0.0
    %256 = vmatpush.msra.mxu0 %v214
    %257 = vmatmul.f32.gmra.mxu0 %v219
    %v258 = vpop.f32.mrf.mxu0
    %v259 = vadd.f32 0.0, %v258
    %260 = vdwg.mxu0
    %261 = vmatpush.msra.mxu0 0.0
    %262 = vmatpush.msra.mxu0 0.0
    %263 = vmatpush.msra.mxu0 0.0
    %264 = vmatpush.msra.mxu0 0.0
    %265 = vmatpush.msra.mxu0 0.0
    %266 = vmatpush.msra.mxu0 0.0
    %267 = vmatpush.msra.mxu0 0.0
    %268 = vmatpush.msra.mxu0 0.0
    %269 = vmatpush.msra.mxu0 0.0
    %270 = vmatpush.msra.mxu0 0.0
    %271 = vmatpush.msra.mxu0 0.0
    %272 = vmatpush.msra.mxu0 0.0
    %273 = vmatpush.msra.mxu0 0.0
    %274 = vmatpush.msra.mxu0 0.0
    %275 = vmatpush.msra.mxu0 0.0
    %276 = vmatpush.msra.mxu0 %v215
    %277 = vmatmul.f32.gmra.mxu0 %v219
    %v278 = vpop.f32.mrf.mxu0
    %v279 = vadd.f32 0.0, %v278
    %280 = vdwg.mxu0
    %281 = vmatpush.msra.mxu0 0.0
    %282 = vmatpush.msra.mxu0 0.0
    %283 = vmatpush.msra.mxu0 0.0
    %284 = vmatpush.msra.mxu0 0.0
    %285 = vmatpush.msra.mxu0 0.0
    %286 = vmatpush.msra.mxu0 0.0
    %287 = vmatpush.msra.mxu0 0.0
    %288 = vmatpush.msra.mxu0 0.0
    %289 = vmatpush.msra.mxu0 0.0
    %290 = vmatpush.msra.mxu0 0.0
    %291 = vmatpush.msra.mxu0 0.0
    %292 = vmatpush.msra.mxu0 0.0
    %293 = vmatpush.msra.mxu0 0.0
    %294 = vmatpush.msra.mxu0 0.0
    %295 = vmatpush.msra.mxu0 0.0
    %296 = vmatpush.msra.mxu0 %v216
    %297 = vmatmul.f32.gmra.mxu0 %v219
    %v298 = vpop.f32.mrf.mxu0
    %v299 = vadd.f32 0.0, %v298
    %300 = vdwg.mxu0
    %v301 = vld [vmem:[%s5] sm:$0xff]
    %v302 = vld [vmem:[%s5 + $0x8] sm:$0xff]
    %v303 = vld [vmem:[%s5 + $0x10] sm:$0xff]
    %v304 = vld [vmem:[%s5 + $0x18] sm:$0xff]
    %v305 = vld [vmem:[%s5 + $0x20] sm:$0xff]
    %v306 = vld [vmem:[%s5 + $0x28] sm:$0xff]
    %v307 = vld [vmem:[%s5 + $0x30] sm:$0xff]
    %v308 = vld [vmem:[%s5 + $0x38] sm:$0xff]
    %v309 = vld [vmem:[%s5 + $0x40] sm:$0xff]
    %v310 = vld [vmem:[%s5 + $0x48] sm:$0xff]
    %v311 = vld [vmem:[%s5 + $0x50] sm:$0xff]
    %v312 = vld [vmem:[%s5 + $0x58] sm:$0xff]
    %v313 = vld [vmem:[%s5 + $0x60] sm:$0xff]
    %v314 = vld [vmem:[%s5 + $0x68] sm:$0xff]
    %v315 = vld [vmem:[%s5 + $0x70] sm:$0xff]
    %v316 = vld [vmem:[%s5 + $0x78] sm:$0xff]
    %v317 = vld [vmem:[%s5 + $0x80] sm:$0xff]
    %v318 = vld [vmem:[%s5 + $0x88] sm:$0xff]
    %v319 = vld [vmem:[%s5 + $0x90] sm:$0xff]
    %v320 = vld [vmem:[%s5 + $0x98] sm:$0xff]
    %v321 = vld [vmem:[%s5 + $0xa0] sm:$0xff]
    %v322 = vld [vmem:[%s5 + $0xa8] sm:$0xff]
    %v323 = vld [vmem:[%s5 + $0xb0] sm:$0xff]
    %v324 = vld [vmem:[%s5 + $0xb8] sm:$0xff]
    %v325 = vld [vmem:[%s5 + $0xc0] sm:$0xff]
    %v326 = vld [vmem:[%s5 + $0xc8] sm:$0xff]
    %v327 = vld [vmem:[%s5 + $0xd0] sm:$0xff]
    %v328 = vld [vmem:[%s5 + $0xd8] sm:$0xff]
    %v329 = vld [vmem:[%s5 + $0xe0] sm:$0xff]
    %v330 = vld [vmem:[%s5 + $0xe8] sm:$0xff]
    %v331 = vld [vmem:[%s5 + $0xf0] sm:$0xff]
    %v332 = vld [vmem:[%s5 + $0xf8] sm:$0xff]
    %v333 = vld [vmem:[%s5 + $0x100] sm:$0xff]
    %v334 = vld [vmem:[%s5 + $0x108] sm:$0xff]
    %v335 = vld [vmem:[%s5 + $0x110] sm:$0xff]
    %v336 = vld [vmem:[%s5 + $0x118] sm:$0xff]
    %v337 = vld [vmem:[%s5 + $0x120] sm:$0xff]
    %v338 = vld [vmem:[%s5 + $0x128] sm:$0xff]
    %v339 = vld [vmem:[%s5 + $0x130] sm:$0xff]
    %v340 = vld [vmem:[%s5 + $0x138] sm:$0xff]
    %v341 = vld [vmem:[%s5 + $0x140] sm:$0xff]
    %v342 = vld [vmem:[%s5 + $0x148] sm:$0xff]
    %v343 = vld [vmem:[%s5 + $0x150] sm:$0xff]
    %v344 = vld [vmem:[%s5 + $0x158] sm:$0xff]
    %v345 = vld [vmem:[%s5 + $0x160] sm:$0xff]
    %v346 = vld [vmem:[%s5 + $0x168] sm:$0xff]
    %v347 = vld [vmem:[%s5 + $0x170] sm:$0xff]
    %v348 = vld [vmem:[%s5 + $0x178] sm:$0xff]
    %v349 = vld [vmem:[%s5 + $0x180] sm:$0xff]
    %v350 = vld [vmem:[%s5 + $0x188] sm:$0xff]
    %v351 = vld [vmem:[%s5 + $0x190] sm:$0xff]
    %v352 = vld [vmem:[%s5 + $0x198] sm:$0xff]
    %v353 = vld [vmem:[%s5 + $0x1a0] sm:$0xff]
    %v354 = vld [vmem:[%s5 + $0x1a8] sm:$0xff]
    %v355 = vld [vmem:[%s5 + $0x1b0] sm:$0xff]
    %v356 = vld [vmem:[%s5 + $0x1b8] sm:$0xff]
    %v357 = vld [vmem:[%s5 + $0x1c0] sm:$0xff]
    %v358 = vld [vmem:[%s5 + $0x1c8] sm:$0xff]
    %v359 = vld [vmem:[%s5 + $0x1d0] sm:$0xff]
    %v360 = vld [vmem:[%s5 + $0x1d8] sm:$0xff]
    %v361 = vld [vmem:[%s5 + $0x1e0] sm:$0xff]
    %v362 = vld [vmem:[%s5 + $0x1e8] sm:$0xff]
    %v363 = vld [vmem:[%s5 + $0x1f0] sm:$0xff]
    %v364 = vld [vmem:[%s5 + $0x1f8] sm:$0xff]
    %v365 = vld [vmem:[%s7] sm:$0xff]
    %v366 = vld [vmem:[%s7 + $0x8] sm:$0xff]
    %v367 = vld [vmem:[%s7 + $0x10] sm:$0xff]
    %v368 = vld [vmem:[%s7 + $0x18] sm:$0xff]
    %v369 = vld [vmem:[%s7 + $0x20] sm:$0xff]
    %v370 = vld [vmem:[%s7 + $0x28] sm:$0xff]
    %v371 = vld [vmem:[%s7 + $0x30] sm:$0xff]
    %v372 = vld [vmem:[%s7 + $0x38] sm:$0xff]
    %v373 = vld [vmem:[%s7 + $0x40] sm:$0xff]
    %v374 = vld [vmem:[%s7 + $0x48] sm:$0xff]
    %v375 = vld [vmem:[%s7 + $0x50] sm:$0xff]
    %v376 = vld [vmem:[%s7 + $0x58] sm:$0xff]
    %v377 = vld [vmem:[%s7 + $0x60] sm:$0xff]
    %v378 = vld [vmem:[%s7 + $0x68] sm:$0xff]
    %v379 = vld [vmem:[%s7 + $0x70] sm:$0xff]
    %v380 = vld [vmem:[%s7 + $0x78] sm:$0xff]
    %v381 = vld [vmem:[%s7 + $0x80] sm:$0xff]
    %v382 = vld [vmem:[%s7 + $0x88] sm:$0xff]
    %v383 = vld [vmem:[%s7 + $0x90] sm:$0xff]
    %v384 = vld [vmem:[%s7 + $0x98] sm:$0xff]
    %v385 = vld [vmem:[%s7 + $0xa0] sm:$0xff]
    %v386 = vld [vmem:[%s7 + $0xa8] sm:$0xff]
    %v387 = vld [vmem:[%s7 + $0xb0] sm:$0xff]
    %v388 = vld [vmem:[%s7 + $0xb8] sm:$0xff]
    %v389 = vld [vmem:[%s7 + $0xc0] sm:$0xff]
    %v390 = vld [vmem:[%s7 + $0xc8] sm:$0xff]
    %v391 = vld [vmem:[%s7 + $0xd0] sm:$0xff]
    %v392 = vld [vmem:[%s7 + $0xd8] sm:$0xff]
    %v393 = vld [vmem:[%s7 + $0xe0] sm:$0xff]
    %v394 = vld [vmem:[%s7 + $0xe8] sm:$0xff]
    %v395 = vld [vmem:[%s7 + $0xf0] sm:$0xff]
    %v396 = vld [vmem:[%s7 + $0xf8] sm:$0xff]
    %v397 = vld [vmem:[%s7 + $0x100] sm:$0xff]
    %v398 = vld [vmem:[%s7 + $0x108] sm:$0xff]
    %v399 = vld [vmem:[%s7 + $0x110] sm:$0xff]
    %v400 = vld [vmem:[%s7 + $0x118] sm:$0xff]
    %v401 = vld [vmem:[%s7 + $0x120] sm:$0xff]
    %v402 = vld [vmem:[%s7 + $0x128] sm:$0xff]
    %v403 = vld [vmem:[%s7 + $0x130] sm:$0xff]
    %v404 = vld [vmem:[%s7 + $0x138] sm:$0xff]
    %v405 = vld [vmem:[%s7 + $0x140] sm:$0xff]
    %v406 = vld [vmem:[%s7 + $0x148] sm:$0xff]
    %v407 = vld [vmem:[%s7 + $0x150] sm:$0xff]
    %v408 = vld [vmem:[%s7 + $0x158] sm:$0xff]
    %v409 = vld [vmem:[%s7 + $0x160] sm:$0xff]
    %v410 = vld [vmem:[%s7 + $0x168] sm:$0xff]
    %v411 = vld [vmem:[%s7 + $0x170] sm:$0xff]
    %v412 = vld [vmem:[%s7 + $0x178] sm:$0xff]
    %v413 = vld [vmem:[%s7 + $0x180] sm:$0xff]
    %v414 = vld [vmem:[%s7 + $0x188] sm:$0xff]
    %v415 = vld [vmem:[%s7 + $0x190] sm:$0xff]
    %v416 = vld [vmem:[%s7 + $0x198] sm:$0xff]
    %v417 = vld [vmem:[%s7 + $0x1a0] sm:$0xff]
    %v418 = vld [vmem:[%s7 + $0x1a8] sm:$0xff]
    %v419 = vld [vmem:[%s7 + $0x1b0] sm:$0xff]
    %v420 = vld [vmem:[%s7 + $0x1b8] sm:$0xff]
    %v421 = vld [vmem:[%s7 + $0x1c0] sm:$0xff]
    %v422 = vld [vmem:[%s7 + $0x1c8] sm:$0xff]
    %v423 = vld [vmem:[%s7 + $0x1d0] sm:$0xff]
    %v424 = vld [vmem:[%s7 + $0x1d8] sm:$0xff]
    %v425 = vld [vmem:[%s7 + $0x1e0] sm:$0xff]
    %v426 = vld [vmem:[%s7 + $0x1e8] sm:$0xff]
    %v427 = vld [vmem:[%s7 + $0x1f0] sm:$0xff]
    %v428 = vld [vmem:[%s7 + $0x1f8] sm:$0xff]
    %v429 = vld [vmem:[%s9] sm:$0x1]
    %v430 = vld [vmem:[%s11] sm:$0x1]
    %vm431 = vcmask 1041408
    %v432 = vsel %vm431, %v239, 0.0
    %v433 = vrot.slane %v432, 4
    %v434 = vadd.f32 %v432, %v433
    %v435 = vrot.slane %v434, 2
    %v436 = vadd.f32 %v434, %v435
    %v437 = vrot.slane %v436, 1
    %v438 = vadd.f32 %v436, %v437
    %v439 = vsel %vm431, %v259, 0.0
    %v440 = vrot.slane %v439, 4
    %v441 = vadd.f32 %v439, %v440
    %v442 = vrot.slane %v441, 2
    %v443 = vadd.f32 %v441, %v442
    %v444 = vrot.slane %v443, 1
    %v445 = vadd.f32 %v443, %v444
    %v446 = vsel %vm431, %v279, 0.0
    %v447 = vrot.slane %v446, 4
    %v448 = vadd.f32 %v446, %v447
    %v449 = vrot.slane %v448, 2
    %v450 = vadd.f32 %v448, %v449
    %v451 = vrot.slane %v450, 1
    %v452 = vadd.f32 %v450, %v451
    %v453 = vsel %vm431, %v299, 0.0
    %v454 = vrot.slane %v453, 4
    %v455 = vadd.f32 %v453, %v454
    %v456 = vrot.slane %v455, 2
    %v457 = vadd.f32 %v455, %v456
    %v458 = vrot.slane %v457, 1
    %v459 = vadd.f32 %v457, %v458
    %v460 = vmul.f32 %v239, %v239
    %v461 = vmul.f32 %v259, %v259
    %v462 = vmul.f32 %v279, %v279
    %v463 = vmul.f32 %v299, %v299
    %v464 = vsel %vm431, %v460, 0.0
    %v465 = vrot.slane %v464, 4
    %v466 = vadd.f32 %v464, %v465
    %v467 = vrot.slane %v466, 2
    %v468 = vadd.f32 %v466, %v467
    %v469 = vrot.slane %v468, 1
    %v470 = vadd.f32 %v468, %v469
    %v471 = vsel %vm431, %v461, 0.0
    %v472 = vrot.slane %v471, 4
    %v473 = vadd.f32 %v471, %v472
    %v474 = vrot.slane %v473, 2
    %v475 = vadd.f32 %v473, %v474
    %v476 = vrot.slane %v475, 1
    %v477 = vadd.f32 %v475, %v476
    %v478 = vsel %vm431, %v462, 0.0
    %v479 = vrot.slane %v478, 4
    %v480 = vadd.f32 %v478, %v479
    %v481 = vrot.slane %v480, 2
    %v482 = vadd.f32 %v480, %v481
    %v483 = vrot.slane %v482, 1
    %v484 = vadd.f32 %v482, %v483
    %v485 = vsel %vm431, %v463, 0.0
    %v486 = vrot.slane %v485, 4
    %v487 = vadd.f32 %v485, %v486
    %v488 = vrot.slane %v487, 2
    %v489 = vadd.f32 %v487, %v488
    %v490 = vrot.slane %v489, 1
    %v491 = vadd.f32 %v489, %v490
    %vm492 = vcmask 1040384
    %v493 = vsel %vm492, %v438, %v470
    %v494 = vsel %vm492, %v445, %v477
    %v495 = vsel %vm492, %v452, %v484
    %v496 = vsel %vm492, %v459, %v491
    %497 = vmatpush.msra.mxu0 %v316
    %498 = vmatpush.msra.mxu0 %v315
    %499 = vmatpush.msra.mxu0 %v314
    %500 = vmatpush.msra.mxu0 %v313
    %501 = vmatpush.msra.mxu0 %v312
    %502 = vmatpush.msra.mxu0 %v311
    %503 = vmatpush.msra.mxu0 %v310
    %504 = vmatpush.msra.mxu0 %v309
    %505 = vmatpush.msra.mxu0 %v308
    %506 = vmatpush.msra.mxu0 %v307
    %507 = vmatpush.msra.mxu0 %v306
    %508 = vmatpush.msra.mxu0 %v305
    %509 = vmatpush.msra.mxu0 %v304
    %510 = vmatpush.msra.mxu0 %v303
    %511 = vmatpush.msra.mxu0 %v302
    %512 = vmatpush.msra.mxu0 %v301
    %513 = vmatmul.f32.gmra.mxu0 %v493
    %v514 = vpop.f32.mrf.mxu0
    %v515 = vadd.f32 0.0, %v514
    %516 = vdwg.mxu0
    %517 = vmatpush.msra.mxu0 %v332
    %518 = vmatpush.msra.mxu0 %v331
    %519 = vmatpush.msra.mxu0 %v330
    %520 = vmatpush.msra.mxu0 %v329
    %521 = vmatpush.msra.mxu0 %v328
    %522 = vmatpush.msra.mxu0 %v327
    %523 = vmatpush.msra.mxu0 %v326
    %524 = vmatpush.msra.mxu0 %v325
    %525 = vmatpush.msra.mxu0 %v324
    %526 = vmatpush.msra.mxu0 %v323
    %527 = vmatpush.msra.mxu0 %v322
    %528 = vmatpush.msra.mxu0 %v321
    %529 = vmatpush.msra.mxu0 %v320
    %530 = vmatpush.msra.mxu0 %v319
    %531 = vmatpush.msra.mxu0 %v318
    %532 = vmatpush.msra.mxu0 %v317
    %533 = vmatmul.f32.gmra.mxu0 %v494
    %v534 = vpop.f32.mrf.mxu0
    %v535 = vadd.f32 %v515, %v534
    %536 = vdwg.mxu0
    %537 = vmatpush.msra.mxu0 %v348
    %538 = vmatpush.msra.mxu0 %v347
    %539 = vmatpush.msra.mxu0 %v346
    %540 = vmatpush.msra.mxu0 %v345
    %541 = vmatpush.msra.mxu0 %v344
    %542 = vmatpush.msra.mxu0 %v343
    %543 = vmatpush.msra.mxu0 %v342
    %544 = vmatpush.msra.mxu0 %v341
    %545 = vmatpush.msra.mxu0 %v340
    %546 = vmatpush.msra.mxu0 %v339
    %547 = vmatpush.msra.mxu0 %v338
    %548 = vmatpush.msra.mxu0 %v337
    %549 = vmatpush.msra.mxu0 %v336
    %550 = vmatpush.msra.mxu0 %v335
    %551 = vmatpush.msra.mxu0 %v334
    %552 = vmatpush.msra.mxu0 %v333
    %553 = vmatmul.f32.gmra.mxu0 %v495
    %v554 = vpop.f32.mrf.mxu0
    %v555 = vadd.f32 %v535, %v554
    %556 = vdwg.mxu0
    %557 = vmatpush.msra.mxu0 %v364
    %558 = vmatpush.msra.mxu0 %v363
    %559 = vmatpush.msra.mxu0 %v362
    %560 = vmatpush.msra.mxu0 %v361
    %561 = vmatpush.msra.mxu0 %v360
    %562 = vmatpush.msra.mxu0 %v359
    %563 = vmatpush.msra.mxu0 %v358
    %564 = vmatpush.msra.mxu0 %v357
    %565 = vmatpush.msra.mxu0 %v356
    %566 = vmatpush.msra.mxu0 %v355
    %567 = vmatpush.msra.mxu0 %v354
    %568 = vmatpush.msra.mxu0 %v353
    %569 = vmatpush.msra.mxu0 %v352
    %570 = vmatpush.msra.mxu0 %v351
    %571 = vmatpush.msra.mxu0 %v350
    %572 = vmatpush.msra.mxu0 %v349
    %573 = vmatmul.f32.gmra.mxu0 %v496
    %v574 = vpop.f32.mrf.mxu0
    %v575 = vadd.f32 %v555, %v574
    %576 = vdwg.mxu0
    %v577 = vmul.f32 %v575, 0.5
    %v578 = vmul.f32 %v577, %v577
    %v580 = vrot.slane %v578, 7
    %v582 = vsub.f32 %v577, %v580
    %v583 = vadd.f32 %v582, 1e-05
    %v584 = vrsqrt.pop %v583
    %v585 = vmul.f32 %v584, %v583
    %v586 = vmul.f32 %v585, %v584
    %v587 = vmul.f32 0.5, %v586
    %v588 = vsub.f32 1.5, %v587
    %v589 = vmul.f32 %v584, %v588
    %vm590 = vweird.f32 %v583
    %vm591 = vweird.f32 %v584
    %vm592 = vmor %vm590, %vm591
    %v593 = vsel %vm592, %v584, %v589
    %595 = vst [vmem:[#allocation1] sm:$0xff] %v593
    %s596 = scalar_lea.vmem [#allocation1], 1
    %v597 = vld [vmem:[%s596] ss:$9 sm:$0xff]
    %v599 = vmul.f32 %v429, %v597
    %v600 = vmul.f32 %v577, %v599
    %v601 = vsub.f32 %v430, %v600
    %v603 = vperm.slane %v601, 0
    %v605 = vsel %vm492, %v599, %v603
    %606 = vmatpush.msra.mxu0 %v425
    %607 = vmatpush.msra.mxu0 %v421
    %608 = vmatpush.msra.mxu0 %v417
    %609 = vmatpush.msra.mxu0 %v413
    %610 = vmatpush.msra.mxu0 %v409
    %611 = vmatpush.msra.mxu0 %v405
    %612 = vmatpush.msra.mxu0 %v401
    %613 = vmatpush.msra.mxu0 %v397
    %614 = vmatpush.msra.mxu0 %v393
    %615 = vmatpush.msra.mxu0 %v389
    %616 = vmatpush.msra.mxu0 %v385
    %617 = vmatpush.msra.mxu0 %v381
    %618 = vmatpush.msra.mxu0 %v377
    %619 = vmatpush.msra.mxu0 %v373
    %620 = vmatpush.msra.mxu0 %v369
    %621 = vmatpush.msra.mxu0 %v365
    %622 = vmatmul.f32.gmra.mxu0 %v605
    %v623 = vpop.f32.mrf.mxu0
    %v624 = vadd.f32 0.0, %v623
    %625 = vdwg.mxu0
    %626 = vmatpush.msra.mxu0 %v426
    %627 = vmatpush.msra.mxu0 %v422
    %628 = vmatpush.msra.mxu0 %v418
    %629 = vmatpush.msra.mxu0 %v414
    %630 = vmatpush.msra.mxu0 %v410
    %631 = vmatpush.msra.mxu0 %v406
    %632 = vmatpush.msra.mxu0 %v402
    %633 = vmatpush.msra.mxu0 %v398
    %634 = vmatpush.msra.mxu0 %v394
    %635 = vmatpush.msra.mxu0 %v390
    %636 = vmatpush.msra.mxu0 %v386
    %637 = vmatpush.msra.mxu0 %v382
    %638 = vmatpush.msra.mxu0 %v378
    %639 = vmatpush.msra.mxu0 %v374
    %640 = vmatpush.msra.mxu0 %v370
    %641 = vmatpush.msra.mxu0 %v366
    %642 = vmatmul.f32.gmra.mxu0 %v605
    %v643 = vpop.f32.mrf.mxu0
    %v644 = vadd.f32 0.0, %v643
    %645 = vdwg.mxu0
    %646 = vmatpush.msra.mxu0 %v427
    %647 = vmatpush.msra.mxu0 %v423
    %648 = vmatpush.msra.mxu0 %v419
    %649 = vmatpush.msra.mxu0 %v415
    %650 = vmatpush.msra.mxu0 %v411
    %651 = vmatpush.msra.mxu0 %v407
    %652 = vmatpush.msra.mxu0 %v403
    %653 = vmatpush.msra.mxu0 %v399
    %654 = vmatpush.msra.mxu0 %v395
    %655 = vmatpush.msra.mxu0 %v391
    %656 = vmatpush.msra.mxu0 %v387
    %657 = vmatpush.msra.mxu0 %v383
    %658 = vmatpush.msra.mxu0 %v379
    %659 = vmatpush.msra.mxu0 %v375
    %660 = vmatpush.msra.mxu0 %v371
    %661 = vmatpush.msra.mxu0 %v367
    %662 = vmatmul.f32.gmra.mxu0 %v605
    %v663 = vpop.f32.mrf.mxu0
    %v664 = vadd.f32 0.0, %v663
    %665 = vdwg.mxu0
    %666 = vmatpush.msra.mxu0 %v428
    %667 = vmatpush.msra.mxu0 %v424
    %668 = vmatpush.msra.mxu0 %v420
    %669 = vmatpush.msra.mxu0 %v416
    %670 = vmatpush.msra.mxu0 %v412
    %671 = vmatpush.msra.mxu0 %v408
    %672 = vmatpush.msra.mxu0 %v404
    %673 = vmatpush.msra.mxu0 %v400
    %674 = vmatpush.msra.mxu0 %v396
    %675 = vmatpush.msra.mxu0 %v392
    %676 = vmatpush.msra.mxu0 %v388
    %677 = vmatpush.msra.mxu0 %v384
    %678 = vmatpush.msra.mxu0 %v380
    %679 = vmatpush.msra.mxu0 %v376
    %680 = vmatpush.msra.mxu0 %v372
    %681 = vmatpush.msra.mxu0 %v368
    %682 = vmatmul.f32.gmra.mxu0 %v605
    %v683 = vpop.f32.mrf.mxu0
    %v684 = vadd.f32 0.0, %v683
    %685 = vdwg.mxu0
    %v686 = vperm.slane %v624, 0
    %v687 = vperm.slane %v644, 0
    %v688 = vperm.slane %v664, 0
    %v689 = vperm.slane %v684, 0
    %v690 = vmul.f32 %v239, %v686
    %v691 = vmul.f32 %v259, %v687
    %v692 = vmul.f32 %v279, %v688
    %v693 = vmul.f32 %v299, %v689
    %v694 = vperm.slane %v624, 1
    %v695 = vperm.slane %v644, 1
    %v696 = vperm.slane %v664, 1
    %v697 = vperm.slane %v684, 1
    %v698 = vadd.f32 %v690, %v694
    %v699 = vadd.f32 %v691, %v695
    %v700 = vadd.f32 %v692, %v696
    %v701 = vadd.f32 %v693, %v697
    %v702 = vld [vmem:[#allocation2] sm:$0xff]
    %v703 = vld [vmem:[#allocation2 + $0x8] sm:$0xff]
    %v704 = vld [vmem:[#allocation2 + $0x10] sm:$0xff]
    %v705 = vld [vmem:[#allocation2 + $0x18] sm:$0xff]
    %v706 = vld [vmem:[#allocation2 + $0x20] sm:$0xff]
    %v707 = vld [vmem:[#allocation2 + $0x28] sm:$0xff]
    %v708 = vld [vmem:[#allocation2 + $0x30] sm:$0xff]
    %v709 = vld [vmem:[#allocation2 + $0x38] sm:$0xff]
    %v710 = vld [vmem:[#allocation2 + $0x40] sm:$0xff]
    %v711 = vld [vmem:[#allocation2 + $0x48] sm:$0xff]
    %v712 = vld [vmem:[#allocation2 + $0x50] sm:$0xff]
    %v713 = vld [vmem:[#allocation2 + $0x58] sm:$0xff]
    %v714 = vld [vmem:[#allocation2 + $0x60] sm:$0xff]
    %v715 = vld [vmem:[#allocation2 + $0x68] sm:$0xff]
    %v716 = vld [vmem:[#allocation2 + $0x70] sm:$0xff]
    %v717 = vld [vmem:[#allocation2 + $0x78] sm:$0xff]
    %v718 = vld [vmem:[#allocation2 + $0x80] sm:$0xff]
    %v719 = vld [vmem:[#allocation2 + $0x88] sm:$0xff]
    %v720 = vld [vmem:[#allocation2 + $0x90] sm:$0xff]
    %v721 = vld [vmem:[#allocation2 + $0x98] sm:$0xff]
    %v722 = vld [vmem:[#allocation2 + $0xa0] sm:$0xff]
    %v723 = vld [vmem:[#allocation2 + $0xa8] sm:$0xff]
    %v724 = vld [vmem:[#allocation2 + $0xb0] sm:$0xff]
    %v725 = vld [vmem:[#allocation2 + $0xb8] sm:$0xff]
    %v726 = vld [vmem:[#allocation2 + $0xc0] sm:$0xff]
    %v727 = vld [vmem:[#allocation2 + $0xc8] sm:$0xff]
    %v728 = vld [vmem:[#allocation2 + $0xd0] sm:$0xff]
    %v729 = vld [vmem:[#allocation2 + $0xd8] sm:$0xff]
    %v730 = vld [vmem:[#allocation2 + $0xe0] sm:$0xff]
    %v731 = vld [vmem:[#allocation2 + $0xe8] sm:$0xff]
    %v732 = vld [vmem:[#allocation2 + $0xf0] sm:$0xff]
    %v733 = vld [vmem:[#allocation2 + $0xf8] sm:$0xff]
    %v734 = vld [vmem:[#allocation2 + $0x100] sm:$0xff]
    %v735 = vld [vmem:[#allocation2 + $0x108] sm:$0xff]
    %v736 = vld [vmem:[#allocation2 + $0x110] sm:$0xff]
    %v737 = vld [vmem:[#allocation2 + $0x118] sm:$0xff]
    %v738 = vld [vmem:[#allocation2 + $0x120] sm:$0xff]
    %v739 = vld [vmem:[#allocation2 + $0x128] sm:$0xff]
    %v740 = vld [vmem:[#allocation2 + $0x130] sm:$0xff]
    %v741 = vld [vmem:[#allocation2 + $0x138] sm:$0xff]
    %v742 = vld [vmem:[#allocation2 + $0x140] sm:$0xff]
    %v743 = vld [vmem:[#allocation2 + $0x148] sm:$0xff]
    %v744 = vld [vmem:[#allocation2 + $0x150] sm:$0xff]
    %v745 = vld [vmem:[#allocation2 + $0x158] sm:$0xff]
    %v746 = vld [vmem:[#allocation2 + $0x160] sm:$0xff]
    %v747 = vld [vmem:[#allocation2 + $0x168] sm:$0xff]
    %v748 = vld [vmem:[#allocation2 + $0x170] sm:$0xff]
    %v749 = vld [vmem:[#allocation2 + $0x178] sm:$0xff]
    %v750 = vld [vmem:[#allocation2 + $0x180] sm:$0xff]
    %v751 = vld [vmem:[#allocation2 + $0x188] sm:$0xff]
    %v752 = vld [vmem:[#allocation2 + $0x190] sm:$0xff]
    %v753 = vld [vmem:[#allocation2 + $0x198] sm:$0xff]
    %v754 = vld [vmem:[#allocation2 + $0x1a0] sm:$0xff]
    %v755 = vld [vmem:[#allocation2 + $0x1a8] sm:$0xff]
    %v756 = vld [vmem:[#allocation2 + $0x1b0] sm:$0xff]
    %v757 = vld [vmem:[#allocation2 + $0x1b8] sm:$0xff]
    %v758 = vld [vmem:[#allocation2 + $0x1c0] sm:$0xff]
    %v759 = vld [vmem:[#allocation2 + $0x1c8] sm:$0xff]
    %v760 = vld [vmem:[#allocation2 + $0x1d0] sm:$0xff]
    %v761 = vld [vmem:[#allocation2 + $0x1d8] sm:$0xff]
    %v762 = vld [vmem:[#allocation2 + $0x1e0] sm:$0xff]
    %v763 = vld [vmem:[#allocation2 + $0x1e8] sm:$0xff]
    %v764 = vld [vmem:[#allocation2 + $0x1f0] sm:$0xff]
    %v765 = vld [vmem:[#allocation2 + $0x1f8] sm:$0xff]
    %v766 = vld [vmem:[#allocation2 + $0x200] sm:$0xff]
    %v767 = vld [vmem:[#allocation2 + $0x208] sm:$0xff]
    %v768 = vld [vmem:[#allocation2 + $0x210] sm:$0xff]
    %v769 = vld [vmem:[#allocation2 + $0x218] sm:$0xff]
    %v770 = vld [vmem:[#allocation2 + $0x220] sm:$0xff]
    %v771 = vld [vmem:[#allocation2 + $0x228] sm:$0xff]
    %v772 = vld [vmem:[#allocation2 + $0x230] sm:$0xff]
    %v773 = vld [vmem:[#allocation2 + $0x238] sm:$0xff]
    %v774 = vld [vmem:[#allocation2 + $0x240] sm:$0xff]
    %v775 = vld [vmem:[#allocation2 + $0x248] sm:$0xff]
    %v776 = vld [vmem:[#allocation2 + $0x250] sm:$0xff]
    %v777 = vld [vmem:[#allocation2 + $0x258] sm:$0xff]
    %v778 = vld [vmem:[#allocation2 + $0x260] sm:$0xff]
    %v779 = vld [vmem:[#allocation2 + $0x268] sm:$0xff]
    %v780 = vld [vmem:[#allocation2 + $0x270] sm:$0xff]
    %v781 = vld [vmem:[#allocation2 + $0x278] sm:$0xff]
    %v782 = vld [vmem:[#allocation2 + $0x280] sm:$0xff]
    %v783 = vld [vmem:[#allocation2 + $0x288] sm:$0xff]
    %v784 = vld [vmem:[#allocation2 + $0x290] sm:$0xff]
    %v785 = vld [vmem:[#allocation2 + $0x298] sm:$0xff]
    %v786 = vld [vmem:[#allocation2 + $0x2a0] sm:$0xff]
    %v787 = vld [vmem:[#allocation2 + $0x2a8] sm:$0xff]
    %v788 = vld [vmem:[#allocation2 + $0x2b0] sm:$0xff]
    %v789 = vld [vmem:[#allocation2 + $0x2b8] sm:$0xff]
    %v790 = vld [vmem:[#allocation2 + $0x2c0] sm:$0xff]
    %v791 = vld [vmem:[#allocation2 + $0x2c8] sm:$0xff]
    %v792 = vld [vmem:[#allocation2 + $0x2d0] sm:$0xff]
    %v793 = vld [vmem:[#allocation2 + $0x2d8] sm:$0xff]
    %v794 = vld [vmem:[#allocation2 + $0x2e0] sm:$0xff]
    %v795 = vld [vmem:[#allocation2 + $0x2e8] sm:$0xff]
    %v796 = vld [vmem:[#allocation2 + $0x2f0] sm:$0xff]
    %v797 = vld [vmem:[#allocation2 + $0x2f8] sm:$0xff]
    %v798 = vld [vmem:[#allocation2 + $0x300] sm:$0xff]
    %v799 = vld [vmem:[#allocation2 + $0x308] sm:$0xff]
    %v800 = vld [vmem:[#allocation2 + $0x310] sm:$0xff]
    %v801 = vld [vmem:[#allocation2 + $0x318] sm:$0xff]
    %v802 = vld [vmem:[#allocation2 + $0x320] sm:$0xff]
    %v803 = vld [vmem:[#allocation2 + $0x328] sm:$0xff]
    %v804 = vld [vmem:[#allocation2 + $0x330] sm:$0xff]
    %v805 = vld [vmem:[#allocation2 + $0x338] sm:$0xff]
    %v806 = vld [vmem:[#allocation2 + $0x340] sm:$0xff]
    %v807 = vld [vmem:[#allocation2 + $0x348] sm:$0xff]
    %v808 = vld [vmem:[#allocation2 + $0x350] sm:$0xff]
    %v809 = vld [vmem:[#allocation2 + $0x358] sm:$0xff]
    %v810 = vld [vmem:[#allocation2 + $0x360] sm:$0xff]
    %v811 = vld [vmem:[#allocation2 + $0x368] sm:$0xff]
    %v812 = vld [vmem:[#allocation2 + $0x370] sm:$0xff]
    %v813 = vld [vmem:[#allocation2 + $0x378] sm:$0xff]
    %v814 = vld [vmem:[#allocation2 + $0x380] sm:$0xff]
    %v815 = vld [vmem:[#allocation2 + $0x388] sm:$0xff]
    %v816 = vld [vmem:[#allocation2 + $0x390] sm:$0xff]
    %v817 = vld [vmem:[#allocation2 + $0x398] sm:$0xff]
    %v818 = vld [vmem:[#allocation2 + $0x3a0] sm:$0xff]
    %v819 = vld [vmem:[#allocation2 + $0x3a8] sm:$0xff]
    %v820 = vld [vmem:[#allocation2 + $0x3b0] sm:$0xff]
    %v821 = vld [vmem:[#allocation2 + $0x3b8] sm:$0xff]
    %v822 = vld [vmem:[#allocation2 + $0x3c0] sm:$0xff]
    %v823 = vld [vmem:[#allocation2 + $0x3c8] sm:$0xff]
    %v824 = vld [vmem:[#allocation2 + $0x3d0] sm:$0xff]
    %v825 = vld [vmem:[#allocation2 + $0x3d8] sm:$0xff]
    %v826 = vld [vmem:[#allocation2 + $0x3e0] sm:$0xff]
    %v827 = vld [vmem:[#allocation2 + $0x3e8] sm:$0xff]
    %v828 = vld [vmem:[#allocation2 + $0x3f0] sm:$0xff]
    %v829 = vld [vmem:[#allocation2 + $0x3f8] sm:$0xff]
    %v830 = vld [vmem:[#allocation2 + $0x400] sm:$0xff]
    %v831 = vld [vmem:[#allocation2 + $0x408] sm:$0xff]
    %v832 = vld [vmem:[#allocation2 + $0x410] sm:$0xff]
    %v833 = vld [vmem:[#allocation2 + $0x418] sm:$0xff]
    %v834 = vld [vmem:[#allocation2 + $0x420] sm:$0xff]
    %v835 = vld [vmem:[#allocation2 + $0x428] sm:$0xff]
    %v836 = vld [vmem:[#allocation2 + $0x430] sm:$0xff]
    %v837 = vld [vmem:[#allocation2 + $0x438] sm:$0xff]
    %v838 = vld [vmem:[#allocation2 + $0x440] sm:$0xff]
    %v839 = vld [vmem:[#allocation2 + $0x448] sm:$0xff]
    %v840 = vld [vmem:[#allocation2 + $0x450] sm:$0xff]
    %v841 = vld [vmem:[#allocation2 + $0x458] sm:$0xff]
    %v842 = vld [vmem:[#allocation2 + $0x460] sm:$0xff]
    %v843 = vld [vmem:[#allocation2 + $0x468] sm:$0xff]
    %v844 = vld [vmem:[#allocation2 + $0x470] sm:$0xff]
    %v845 = vld [vmem:[#allocation2 + $0x478] sm:$0xff]
    %v846 = vld [vmem:[#allocation2 + $0x480] sm:$0xff]
    %v847 = vld [vmem:[#allocation2 + $0x488] sm:$0xff]
    %v848 = vld [vmem:[#allocation2 + $0x490] sm:$0xff]
    %v849 = vld [vmem:[#allocation2 + $0x498] sm:$0xff]
    %v850 = vld [vmem:[#allocation2 + $0x4a0] sm:$0xff]
    %v851 = vld [vmem:[#allocation2 + $0x4a8] sm:$0xff]
    %v852 = vld [vmem:[#allocation2 + $0x4b0] sm:$0xff]
    %v853 = vld [vmem:[#allocation2 + $0x4b8] sm:$0xff]
    %v854 = vld [vmem:[#allocation2 + $0x4c0] sm:$0xff]
    %v855 = vld [vmem:[#allocation2 + $0x4c8] sm:$0xff]
    %v856 = vld [vmem:[#allocation2 + $0x4d0] sm:$0xff]
    %v857 = vld [vmem:[#allocation2 + $0x4d8] sm:$0xff]
    %v858 = vld [vmem:[#allocation2 + $0x4e0] sm:$0xff]
    %v859 = vld [vmem:[#allocation2 + $0x4e8] sm:$0xff]
    %v860 = vld [vmem:[#allocation2 + $0x4f0] sm:$0xff]
    %v861 = vld [vmem:[#allocation2 + $0x4f8] sm:$0xff]
    %v862 = vld [vmem:[#allocation2 + $0x500] sm:$0xff]
    %v863 = vld [vmem:[#allocation2 + $0x508] sm:$0xff]
    %v864 = vld [vmem:[#allocation2 + $0x510] sm:$0xff]
    %v865 = vld [vmem:[#allocation2 + $0x518] sm:$0xff]
    %v866 = vld [vmem:[#allocation2 + $0x520] sm:$0xff]
    %v867 = vld [vmem:[#allocation2 + $0x528] sm:$0xff]
    %v868 = vld [vmem:[#allocation2 + $0x530] sm:$0xff]
    %v869 = vld [vmem:[#allocation2 + $0x538] sm:$0xff]
    %v870 = vld [vmem:[#allocation2 + $0x540] sm:$0xff]
    %v871 = vld [vmem:[#allocation2 + $0x548] sm:$0xff]
    %v872 = vld [vmem:[#allocation2 + $0x550] sm:$0xff]
    %v873 = vld [vmem:[#allocation2 + $0x558] sm:$0xff]
    %v874 = vld [vmem:[#allocation2 + $0x560] sm:$0xff]
    %v875 = vld [vmem:[#allocation2 + $0x568] sm:$0xff]
    %v876 = vld [vmem:[#allocation2 + $0x570] sm:$0xff]
    %v877 = vld [vmem:[#allocation2 + $0x578] sm:$0xff]
    %v878 = vld [vmem:[#allocation2 + $0x580] sm:$0xff]
    %v879 = vld [vmem:[#allocation2 + $0x588] sm:$0xff]
    %v880 = vld [vmem:[#allocation2 + $0x590] sm:$0xff]
    %v881 = vld [vmem:[#allocation2 + $0x598] sm:$0xff]
    %v882 = vld [vmem:[#allocation2 + $0x5a0] sm:$0xff]
    %v883 = vld [vmem:[#allocation2 + $0x5a8] sm:$0xff]
    %v884 = vld [vmem:[#allocation2 + $0x5b0] sm:$0xff]
    %v885 = vld [vmem:[#allocation2 + $0x5b8] sm:$0xff]
    %v886 = vld [vmem:[#allocation2 + $0x5c0] sm:$0xff]
    %v887 = vld [vmem:[#allocation2 + $0x5c8] sm:$0xff]
    %v888 = vld [vmem:[#allocation2 + $0x5d0] sm:$0xff]
    %v889 = vld [vmem:[#allocation2 + $0x5d8] sm:$0xff]
    %v890 = vld [vmem:[#allocation2 + $0x5e0] sm:$0xff]
    %v891 = vld [vmem:[#allocation2 + $0x5e8] sm:$0xff]
    %v892 = vld [vmem:[#allocation2 + $0x5f0] sm:$0xff]
    %v893 = vld [vmem:[#allocation2 + $0x5f8] sm:$0xff]
    %v894 = vld [vmem:[#allocation2 + $0x600] sm:$0xff]
    %v895 = vld [vmem:[#allocation2 + $0x608] sm:$0xff]
    %v896 = vld [vmem:[#allocation2 + $0x610] sm:$0xff]
    %v897 = vld [vmem:[#allocation2 + $0x618] sm:$0xff]
    %v898 = vld [vmem:[#allocation2 + $0x620] sm:$0xff]
    %v899 = vld [vmem:[#allocation2 + $0x628] sm:$0xff]
    %v900 = vld [vmem:[#allocation2 + $0x630] sm:$0xff]
    %v901 = vld [vmem:[#allocation2 + $0x638] sm:$0xff]
    %v902 = vld [vmem:[#allocation2 + $0x640] sm:$0xff]
    %v903 = vld [vmem:[#allocation2 + $0x648] sm:$0xff]
    %v904 = vld [vmem:[#allocation2 + $0x650] sm:$0xff]
    %v905 = vld [vmem:[#allocation2 + $0x658] sm:$0xff]
    %v906 = vld [vmem:[#allocation2 + $0x660] sm:$0xff]
    %v907 = vld [vmem:[#allocation2 + $0x668] sm:$0xff]
    %v908 = vld [vmem:[#allocation2 + $0x670] sm:$0xff]
    %v909 = vld [vmem:[#allocation2 + $0x678] sm:$0xff]
    %v910 = vld [vmem:[#allocation2 + $0x680] sm:$0xff]
    %v911 = vld [vmem:[#allocation2 + $0x688] sm:$0xff]
    %v912 = vld [vmem:[#allocation2 + $0x690] sm:$0xff]
    %v913 = vld [vmem:[#allocation2 + $0x698] sm:$0xff]
    %v914 = vld [vmem:[#allocation2 + $0x6a0] sm:$0xff]
    %v915 = vld [vmem:[#allocation2 + $0x6a8] sm:$0xff]
    %v916 = vld [vmem:[#allocation2 + $0x6b0] sm:$0xff]
    %v917 = vld [vmem:[#allocation2 + $0x6b8] sm:$0xff]
    %v918 = vld [vmem:[#allocation2 + $0x6c0] sm:$0xff]
    %v919 = vld [vmem:[#allocation2 + $0x6c8] sm:$0xff]
    %v920 = vld [vmem:[#allocation2 + $0x6d0] sm:$0xff]
    %v921 = vld [vmem:[#allocation2 + $0x6d8] sm:$0xff]
    %v922 = vld [vmem:[#allocation2 + $0x6e0] sm:$0xff]
    %v923 = vld [vmem:[#allocation2 + $0x6e8] sm:$0xff]
    %v924 = vld [vmem:[#allocation2 + $0x6f0] sm:$0xff]
    %v925 = vld [vmem:[#allocation2 + $0x6f8] sm:$0xff]
    %v926 = vld [vmem:[#allocation2 + $0x700] sm:$0xff]
    %v927 = vld [vmem:[#allocation2 + $0x708] sm:$0xff]
    %v928 = vld [vmem:[#allocation2 + $0x710] sm:$0xff]
    %v929 = vld [vmem:[#allocation2 + $0x718] sm:$0xff]
    %v930 = vld [vmem:[#allocation2 + $0x720] sm:$0xff]
    %v931 = vld [vmem:[#allocation2 + $0x728] sm:$0xff]
    %v932 = vld [vmem:[#allocation2 + $0x730] sm:$0xff]
    %v933 = vld [vmem:[#allocation2 + $0x738] sm:$0xff]
    %v934 = vld [vmem:[#allocation2 + $0x740] sm:$0xff]
    %v935 = vld [vmem:[#allocation2 + $0x748] sm:$0xff]
    %v936 = vld [vmem:[#allocation2 + $0x750] sm:$0xff]
    %v937 = vld [vmem:[#allocation2 + $0x758] sm:$0xff]
    %v938 = vld [vmem:[#allocation2 + $0x760] sm:$0xff]
    %v939 = vld [vmem:[#allocation2 + $0x768] sm:$0xff]
    %v940 = vld [vmem:[#allocation2 + $0x770] sm:$0xff]
    %v941 = vld [vmem:[#allocation2 + $0x778] sm:$0xff]
    %v942 = vld [vmem:[#allocation2 + $0x780] sm:$0xff]
    %v943 = vld [vmem:[#allocation2 + $0x788] sm:$0xff]
    %v944 = vld [vmem:[#allocation2 + $0x790] sm:$0xff]
    %v945 = vld [vmem:[#allocation2 + $0x798] sm:$0xff]
    %v946 = vld [vmem:[#allocation2 + $0x7a0] sm:$0xff]
    %v947 = vld [vmem:[#allocation2 + $0x7a8] sm:$0xff]
    %v948 = vld [vmem:[#allocation2 + $0x7b0] sm:$0xff]
    %v949 = vld [vmem:[#allocation2 + $0x7b8] sm:$0xff]
    %v950 = vld [vmem:[#allocation2 + $0x7c0] sm:$0xff]
    %v951 = vld [vmem:[#allocation2 + $0x7c8] sm:$0xff]
    %v952 = vld [vmem:[#allocation2 + $0x7d0] sm:$0xff]
    %v953 = vld [vmem:[#allocation2 + $0x7d8] sm:$0xff]
    %v954 = vld [vmem:[#allocation2 + $0x7e0] sm:$0xff]
    %v955 = vld [vmem:[#allocation2 + $0x7e8] sm:$0xff]
    %v956 = vld [vmem:[#allocation2 + $0x7f0] sm:$0xff]
    %v957 = vld [vmem:[#allocation2 + $0x7f8] sm:$0xff]
    %958 = vmatpush.msra.mxu0 %v762
    %959 = vmatpush.msra.mxu0 %v758
    %960 = vmatpush.msra.mxu0 %v754
    %961 = vmatpush.msra.mxu0 %v750
    %962 = vmatpush.msra.mxu0 %v746
    %963 = vmatpush.msra.mxu0 %v742
    %964 = vmatpush.msra.mxu0 %v738
    %965 = vmatpush.msra.mxu0 %v734
    %966 = vmatpush.msra.mxu0 %v730
    %967 = vmatpush.msra.mxu0 %v726
    %968 = vmatpush.msra.mxu0 %v722
    %969 = vmatpush.msra.mxu0 %v718
    %970 = vmatpush.msra.mxu0 %v714
    %971 = vmatpush.msra.mxu0 %v710
    %972 = vmatpush.msra.mxu0 %v706
    %973 = vmatpush.msra.mxu0 %v702
    %974 = vmatmul.f32.gmra.mxu0 %v698
    %v975 = vpop.f32.mrf.mxu0
    %v976 = vadd.f32 0.0, %v975
    %977 = vdwg.mxu0
    %978 = vmatpush.msra.mxu0 %v826
    %979 = vmatpush.msra.mxu0 %v822
    %980 = vmatpush.msra.mxu0 %v818
    %981 = vmatpush.msra.mxu0 %v814
    %982 = vmatpush.msra.mxu0 %v810
    %983 = vmatpush.msra.mxu0 %v806
    %984 = vmatpush.msra.mxu0 %v802
    %985 = vmatpush.msra.mxu0 %v798
    %986 = vmatpush.msra.mxu0 %v794
    %987 = vmatpush.msra.mxu0 %v790
    %988 = vmatpush.msra.mxu0 %v786
    %989 = vmatpush.msra.mxu0 %v782
    %990 = vmatpush.msra.mxu0 %v778
    %991 = vmatpush.msra.mxu0 %v774
    %992 = vmatpush.msra.mxu0 %v770
    %993 = vmatpush.msra.mxu0 %v766
    %994 = vmatmul.f32.gmra.mxu0 %v699
    %v995 = vpop.f32.mrf.mxu0
    %v996 = vadd.f32 %v976, %v995
    %997 = vdwg.mxu0
    %998 = vmatpush.msra.mxu0 %v890
    %999 = vmatpush.msra.mxu0 %v886
    %1000 = vmatpush.msra.mxu0 %v882
    %1001 = vmatpush.msra.mxu0 %v878
    %1002 = vmatpush.msra.mxu0 %v874
    %1003 = vmatpush.msra.mxu0 %v870
    %1004 = vmatpush.msra.mxu0 %v866
    %1005 = vmatpush.msra.mxu0 %v862
    %1006 = vmatpush.msra.mxu0 %v858
    %1007 = vmatpush.msra.mxu0 %v854
    %1008 = vmatpush.msra.mxu0 %v850
    %1009 = vmatpush.msra.mxu0 %v846
    %1010 = vmatpush.msra.mxu0 %v842
    %1011 = vmatpush.msra.mxu0 %v838
    %1012 = vmatpush.msra.mxu0 %v834
    %1013 = vmatpush.msra.mxu0 %v830
    %1014 = vmatmul.f32.gmra.mxu0 %v700
    %v1015 = vpop.f32.mrf.mxu0
    %v1016 = vadd.f32 %v996, %v1015
    %1017 = vdwg.mxu0
    %1018 = vmatpush.msra.mxu0 %v954
    %1019 = vmatpush.msra.mxu0 %v950
    %1020 = vmatpush.msra.mxu0 %v946
    %1021 = vmatpush.msra.mxu0 %v942
    %1022 = vmatpush.msra.mxu0 %v938
    %1023 = vmatpush.msra.mxu0 %v934
    %1024 = vmatpush.msra.mxu0 %v930
    %1025 = vmatpush.msra.mxu0 %v926
    %1026 = vmatpush.msra.mxu0 %v922
    %1027 = vmatpush.msra.mxu0 %v918
    %1028 = vmatpush.msra.mxu0 %v914
    %1029 = vmatpush.msra.mxu0 %v910
    %1030 = vmatpush.msra.mxu0 %v906
    %1031 = vmatpush.msra.mxu0 %v902
    %1032 = vmatpush.msra.mxu0 %v898
    %1033 = vmatpush.msra.mxu0 %v894
    %1034 = vmatmul.f32.gmra.mxu0 %v701
    %v1035 = vpop.f32.mrf.mxu0
    %v1036 = vadd.f32 %v1016, %v1035
    %1037 = vdwg.mxu0
    %1038 = vmatpush.msra.mxu0 %v763
    %1039 = vmatpush.msra.mxu0 %v759
    %1040 = vmatpush.msra.mxu0 %v755
    %1041 = vmatpush.msra.mxu0 %v751
    %1042 = vmatpush.msra.mxu0 %v747
    %1043 = vmatpush.msra.mxu0 %v743
    %1044 = vmatpush.msra.mxu0 %v739
    %1045 = vmatpush.msra.mxu0 %v735
    %1046 = vmatpush.msra.mxu0 %v731
    %1047 = vmatpush.msra.mxu0 %v727
    %1048 = vmatpush.msra.mxu0 %v723
    %1049 = vmatpush.msra.mxu0 %v719
    %1050 = vmatpush.msra.mxu0 %v715
    %1051 = vmatpush.msra.mxu0 %v711
    %1052 = vmatpush.msra.mxu0 %v707
    %1053 = vmatpush.msra.mxu0 %v703
    %1054 = vmatmul.f32.gmra.mxu0 %v698
    %v1055 = vpop.f32.mrf.mxu0
    %v1056 = vadd.f32 0.0, %v1055
    %1057 = vdwg.mxu0
    %1058 = vmatpush.msra.mxu0 %v827
    %1059 = vmatpush.msra.mxu0 %v823
    %1060 = vmatpush.msra.mxu0 %v819
    %1061 = vmatpush.msra.mxu0 %v815
    %1062 = vmatpush.msra.mxu0 %v811
    %1063 = vmatpush.msra.mxu0 %v807
    %1064 = vmatpush.msra.mxu0 %v803
    %1065 = vmatpush.msra.mxu0 %v799
    %1066 = vmatpush.msra.mxu0 %v795
    %1067 = vmatpush.msra.mxu0 %v791
    %1068 = vmatpush.msra.mxu0 %v787
    %1069 = vmatpush.msra.mxu0 %v783
    %1070 = vmatpush.msra.mxu0 %v779
    %1071 = vmatpush.msra.mxu0 %v775
    %1072 = vmatpush.msra.mxu0 %v771
    %1073 = vmatpush.msra.mxu0 %v767
    %1074 = vmatmul.f32.gmra.mxu0 %v699
    %v1075 = vpop.f32.mrf.mxu0
    %v1076 = vadd.f32 %v1056, %v1075
    %1077 = vdwg.mxu0
    %1078 = vmatpush.msra.mxu0 %v891
    %1079 = vmatpush.msra.mxu0 %v887
    %1080 = vmatpush.msra.mxu0 %v883
    %1081 = vmatpush.msra.mxu0 %v879
    %1082 = vmatpush.msra.mxu0 %v875
    %1083 = vmatpush.msra.mxu0 %v871
    %1084 = vmatpush.msra.mxu0 %v867
    %1085 = vmatpush.msra.mxu0 %v863
    %1086 = vmatpush.msra.mxu0 %v859
    %1087 = vmatpush.msra.mxu0 %v855
    %1088 = vmatpush.msra.mxu0 %v851
    %1089 = vmatpush.msra.mxu0 %v847
    %1090 = vmatpush.msra.mxu0 %v843
    %1091 = vmatpush.msra.mxu0 %v839
    %1092 = vmatpush.msra.mxu0 %v835
    %1093 = vmatpush.msra.mxu0 %v831
    %1094 = vmatmul.f32.gmra.mxu0 %v700
    %v1095 = vpop.f32.mrf.mxu0
    %v1096 = vadd.f32 %v1076, %v1095
    %1097 = vdwg.mxu0
    %1098 = vmatpush.msra.mxu0 %v955
    %1099 = vmatpush.msra.mxu0 %v951
    %1100 = vmatpush.msra.mxu0 %v947
    %1101 = vmatpush.msra.mxu0 %v943
    %1102 = vmatpush.msra.mxu0 %v939
    %1103 = vmatpush.msra.mxu0 %v935
    %1104 = vmatpush.msra.mxu0 %v931
    %1105 = vmatpush.msra.mxu0 %v927
    %1106 = vmatpush.msra.mxu0 %v923
    %1107 = vmatpush.msra.mxu0 %v919
    %1108 = vmatpush.msra.mxu0 %v915
    %1109 = vmatpush.msra.mxu0 %v911
    %1110 = vmatpush.msra.mxu0 %v907
    %1111 = vmatpush.msra.mxu0 %v903
    %1112 = vmatpush.msra.mxu0 %v899
    %1113 = vmatpush.msra.mxu0 %v895
    %1114 = vmatmul.f32.gmra.mxu0 %v701
    %v1115 = vpop.f32.mrf.mxu0
    %v1116 = vadd.f32 %v1096, %v1115
    %1117 = vdwg.mxu0
    %1118 = vmatpush.msra.mxu0 %v764
    %1119 = vmatpush.msra.mxu0 %v760
    %1120 = vmatpush.msra.mxu0 %v756
    %1121 = vmatpush.msra.mxu0 %v752
    %1122 = vmatpush.msra.mxu0 %v748
    %1123 = vmatpush.msra.mxu0 %v744
    %1124 = vmatpush.msra.mxu0 %v740
    %1125 = vmatpush.msra.mxu0 %v736
    %1126 = vmatpush.msra.mxu0 %v732
    %1127 = vmatpush.msra.mxu0 %v728
    %1128 = vmatpush.msra.mxu0 %v724
    %1129 = vmatpush.msra.mxu0 %v720
    %1130 = vmatpush.msra.mxu0 %v716
    %1131 = vmatpush.msra.mxu0 %v712
    %1132 = vmatpush.msra.mxu0 %v708
    %1133 = vmatpush.msra.mxu0 %v704
    %1134 = vmatmul.f32.gmra.mxu0 %v698
    %v1135 = vpop.f32.mrf.mxu0
    %v1136 = vadd.f32 0.0, %v1135
    %1137 = vdwg.mxu0
    %1138 = vmatpush.msra.mxu0 %v828
    %1139 = vmatpush.msra.mxu0 %v824
    %1140 = vmatpush.msra.mxu0 %v820
    %1141 = vmatpush.msra.mxu0 %v816
    %1142 = vmatpush.msra.mxu0 %v812
    %1143 = vmatpush.msra.mxu0 %v808
    %1144 = vmatpush.msra.mxu0 %v804
    %1145 = vmatpush.msra.mxu0 %v800
    %1146 = vmatpush.msra.mxu0 %v796
    %1147 = vmatpush.msra.mxu0 %v792
    %1148 = vmatpush.msra.mxu0 %v788
    %1149 = vmatpush.msra.mxu0 %v784
    %1150 = vmatpush.msra.mxu0 %v780
    %1151 = vmatpush.msra.mxu0 %v776
    %1152 = vmatpush.msra.mxu0 %v772
    %1153 = vmatpush.msra.mxu0 %v768
    %1154 = vmatmul.f32.gmra.mxu0 %v699
    %v1155 = vpop.f32.mrf.mxu0
    %v1156 = vadd.f32 %v1136, %v1155
    %1157 = vdwg.mxu0
    %1158 = vmatpush.msra.mxu0 %v892
    %1159 = vmatpush.msra.mxu0 %v888
    %1160 = vmatpush.msra.mxu0 %v884
    %1161 = vmatpush.msra.mxu0 %v880
    %1162 = vmatpush.msra.mxu0 %v876
    %1163 = vmatpush.msra.mxu0 %v872
    %1164 = vmatpush.msra.mxu0 %v868
    %1165 = vmatpush.msra.mxu0 %v864
    %1166 = vmatpush.msra.mxu0 %v860
    %1167 = vmatpush.msra.mxu0 %v856
    %1168 = vmatpush.msra.mxu0 %v852
    %1169 = vmatpush.msra.mxu0 %v848
    %1170 = vmatpush.msra.mxu0 %v844
    %1171 = vmatpush.msra.mxu0 %v840
    %1172 = vmatpush.msra.mxu0 %v836
    %1173 = vmatpush.msra.mxu0 %v832
    %1174 = vmatmul.f32.gmra.mxu0 %v700
    %v1175 = vpop.f32.mrf.mxu0
    %v1176 = vadd.f32 %v1156, %v1175
    %1177 = vdwg.mxu0
    %1178 = vmatpush.msra.mxu0 %v956
    %1179 = vmatpush.msra.mxu0 %v952
    %1180 = vmatpush.msra.mxu0 %v948
    %1181 = vmatpush.msra.mxu0 %v944
    %1182 = vmatpush.msra.mxu0 %v940
    %1183 = vmatpush.msra.mxu0 %v936
    %1184 = vmatpush.msra.mxu0 %v932
    %1185 = vmatpush.msra.mxu0 %v928
    %1186 = vmatpush.msra.mxu0 %v924
    %1187 = vmatpush.msra.mxu0 %v920
    %1188 = vmatpush.msra.mxu0 %v916
    %1189 = vmatpush.msra.mxu0 %v912
    %1190 = vmatpush.msra.mxu0 %v908
    %1191 = vmatpush.msra.mxu0 %v904
    %1192 = vmatpush.msra.mxu0 %v900
    %1193 = vmatpush.msra.mxu0 %v896
    %1194 = vmatmul.f32.gmra.mxu0 %v701
    %v1195 = vpop.f32.mrf.mxu0
    %v1196 = vadd.f32 %v1176, %v1195
    %1197 = vdwg.mxu0
    %1198 = vmatpush.msra.mxu0 %v765
    %1199 = vmatpush.msra.mxu0 %v761
    %1200 = vmatpush.msra.mxu0 %v757
    %1201 = vmatpush.msra.mxu0 %v753
    %1202 = vmatpush.msra.mxu0 %v749
    %1203 = vmatpush.msra.mxu0 %v745
    %1204 = vmatpush.msra.mxu0 %v741
    %1205 = vmatpush.msra.mxu0 %v737
    %1206 = vmatpush.msra.mxu0 %v733
    %1207 = vmatpush.msra.mxu0 %v729
    %1208 = vmatpush.msra.mxu0 %v725
    %1209 = vmatpush.msra.mxu0 %v721
    %1210 = vmatpush.msra.mxu0 %v717
    %1211 = vmatpush.msra.mxu0 %v713
    %1212 = vmatpush.msra.mxu0 %v709
    %1213 = vmatpush.msra.mxu0 %v705
    %1214 = vmatmul.f32.gmra.mxu0 %v698
    %v1215 = vpop.f32.mrf.mxu0
    %v1216 = vadd.f32 0.0, %v1215
    %1217 = vdwg.mxu0
    %1218 = vmatpush.msra.mxu0 %v829
    %1219 = vmatpush.msra.mxu0 %v825
    %1220 = vmatpush.msra.mxu0 %v821
    %1221 = vmatpush.msra.mxu0 %v817
    %1222 = vmatpush.msra.mxu0 %v813
    %1223 = vmatpush.msra.mxu0 %v809
    %1224 = vmatpush.msra.mxu0 %v805
    %1225 = vmatpush.msra.mxu0 %v801
    %1226 = vmatpush.msra.mxu0 %v797
    %1227 = vmatpush.msra.mxu0 %v793
    %1228 = vmatpush.msra.mxu0 %v789
    %1229 = vmatpush.msra.mxu0 %v785
    %1230 = vmatpush.msra.mxu0 %v781
    %1231 = vmatpush.msra.mxu0 %v777
    %1232 = vmatpush.msra.mxu0 %v773
    %1233 = vmatpush.msra.mxu0 %v769
    %1234 = vmatmul.f32.gmra.mxu0 %v699
    %v1235 = vpop.f32.mrf.mxu0
    %v1236 = vadd.f32 %v1216, %v1235
    %1237 = vdwg.mxu0
    %1238 = vmatpush.msra.mxu0 %v893
    %1239 = vmatpush.msra.mxu0 %v889
    %1240 = vmatpush.msra.mxu0 %v885
    %1241 = vmatpush.msra.mxu0 %v881
    %1242 = vmatpush.msra.mxu0 %v877
    %1243 = vmatpush.msra.mxu0 %v873
    %1244 = vmatpush.msra.mxu0 %v869
    %1245 = vmatpush.msra.mxu0 %v865
    %1246 = vmatpush.msra.mxu0 %v861
    %1247 = vmatpush.msra.mxu0 %v857
    %1248 = vmatpush.msra.mxu0 %v853
    %1249 = vmatpush.msra.mxu0 %v849
    %1250 = vmatpush.msra.mxu0 %v845
    %1251 = vmatpush.msra.mxu0 %v841
    %1252 = vmatpush.msra.mxu0 %v837
    %1253 = vmatpush.msra.mxu0 %v833
    %1254 = vmatmul.f32.gmra.mxu0 %v700
    %v1255 = vpop.f32.mrf.mxu0
    %v1256 = vadd.f32 %v1236, %v1255
    %1257 = vdwg.mxu0
    %1258 = vmatpush.msra.mxu0 %v957
    %1259 = vmatpush.msra.mxu0 %v953
    %1260 = vmatpush.msra.mxu0 %v949
    %1261 = vmatpush.msra.mxu0 %v945
    %1262 = vmatpush.msra.mxu0 %v941
    %1263 = vmatpush.msra.mxu0 %v937
    %1264 = vmatpush.msra.mxu0 %v933
    %1265 = vmatpush.msra.mxu0 %v929
    %1266 = vmatpush.msra.mxu0 %v925
    %1267 = vmatpush.msra.mxu0 %v921
    %1268 = vmatpush.msra.mxu0 %v917
    %1269 = vmatpush.msra.mxu0 %v913
    %1270 = vmatpush.msra.mxu0 %v909
    %1271 = vmatpush.msra.mxu0 %v905
    %1272 = vmatpush.msra.mxu0 %v901
    %1273 = vmatpush.msra.mxu0 %v897
    %1274 = vmatmul.f32.gmra.mxu0 %v701
    %v1275 = vpop.f32.mrf.mxu0
    %v1276 = vadd.f32 %v1256, %v1275
    %1277 = vdwg.mxu0
    %v1278 = vld [vmem:[%s15] sm:$0xff]
    %v1279 = vld [vmem:[%s15 + $0x8] sm:$0xff]
    %v1280 = vld [vmem:[%s15 + $0x10] sm:$0xff]
    %v1281 = vld [vmem:[%s15 + $0x18] sm:$0xff]
    %v1282 = vld [vmem:[%s15 + $0x20] sm:$0xff]
    %v1283 = vld [vmem:[%s15 + $0x28] sm:$0xff]
    %v1284 = vld [vmem:[%s15 + $0x30] sm:$0xff]
    %v1285 = vld [vmem:[%s15 + $0x38] sm:$0xff]
    %v1286 = vld [vmem:[%s15 + $0x40] sm:$0xff]
    %v1287 = vld [vmem:[%s15 + $0x48] sm:$0xff]
    %v1288 = vld [vmem:[%s15 + $0x50] sm:$0xff]
    %v1289 = vld [vmem:[%s15 + $0x58] sm:$0xff]
    %v1290 = vld [vmem:[%s15 + $0x60] sm:$0xff]
    %v1291 = vld [vmem:[%s15 + $0x68] sm:$0xff]
    %v1292 = vld [vmem:[%s15 + $0x70] sm:$0xff]
    %v1293 = vld [vmem:[%s15 + $0x78] sm:$0xff]
    %v1294 = vld [vmem:[%s15 + $0x80] sm:$0xff]
    %v1295 = vld [vmem:[%s15 + $0x88] sm:$0xff]
    %v1296 = vld [vmem:[%s15 + $0x90] sm:$0xff]
    %v1297 = vld [vmem:[%s15 + $0x98] sm:$0xff]
    %v1298 = vld [vmem:[%s15 + $0xa0] sm:$0xff]
    %v1299 = vld [vmem:[%s15 + $0xa8] sm:$0xff]
    %v1300 = vld [vmem:[%s15 + $0xb0] sm:$0xff]
    %v1301 = vld [vmem:[%s15 + $0xb8] sm:$0xff]
    %v1302 = vld [vmem:[%s15 + $0xc0] sm:$0xff]
    %v1303 = vld [vmem:[%s15 + $0xc8] sm:$0xff]
    %v1304 = vld [vmem:[%s15 + $0xd0] sm:$0xff]
    %v1305 = vld [vmem:[%s15 + $0xd8] sm:$0xff]
    %v1306 = vld [vmem:[%s15 + $0xe0] sm:$0xff]
    %v1307 = vld [vmem:[%s15 + $0xe8] sm:$0xff]
    %v1308 = vld [vmem:[%s15 + $0xf0] sm:$0xff]
    %v1309 = vld [vmem:[%s15 + $0xf8] sm:$0xff]
    %v1310 = vld [vmem:[%s15 + $0x100] sm:$0xff]
    %v1311 = vld [vmem:[%s15 + $0x108] sm:$0xff]
    %v1312 = vld [vmem:[%s15 + $0x110] sm:$0xff]
    %v1313 = vld [vmem:[%s15 + $0x118] sm:$0xff]
    %v1314 = vld [vmem:[%s15 + $0x120] sm:$0xff]
    %v1315 = vld [vmem:[%s15 + $0x128] sm:$0xff]
    %v1316 = vld [vmem:[%s15 + $0x130] sm:$0xff]
    %v1317 = vld [vmem:[%s15 + $0x138] sm:$0xff]
    %v1318 = vld [vmem:[%s15 + $0x140] sm:$0xff]
    %v1319 = vld [vmem:[%s15 + $0x148] sm:$0xff]
    %v1320 = vld [vmem:[%s15 + $0x150] sm:$0xff]
    %v1321 = vld [vmem:[%s15 + $0x158] sm:$0xff]
    %v1322 = vld [vmem:[%s15 + $0x160] sm:$0xff]
    %v1323 = vld [vmem:[%s15 + $0x168] sm:$0xff]
    %v1324 = vld [vmem:[%s15 + $0x170] sm:$0xff]
    %v1325 = vld [vmem:[%s15 + $0x178] sm:$0xff]
    %v1326 = vld [vmem:[%s15 + $0x180] sm:$0xff]
    %v1327 = vld [vmem:[%s15 + $0x188] sm:$0xff]
    %v1328 = vld [vmem:[%s15 + $0x190] sm:$0xff]
    %v1329 = vld [vmem:[%s15 + $0x198] sm:$0xff]
    %v1330 = vld [vmem:[%s15 + $0x1a0] sm:$0xff]
    %v1331 = vld [vmem:[%s15 + $0x1a8] sm:$0xff]
    %v1332 = vld [vmem:[%s15 + $0x1b0] sm:$0xff]
    %v1333 = vld [vmem:[%s15 + $0x1b8] sm:$0xff]
    %v1334 = vld [vmem:[%s15 + $0x1c0] sm:$0xff]
    %v1335 = vld [vmem:[%s15 + $0x1c8] sm:$0xff]
    %v1336 = vld [vmem:[%s15 + $0x1d0] sm:$0xff]
    %v1337 = vld [vmem:[%s15 + $0x1d8] sm:$0xff]
    %v1338 = vld [vmem:[%s15 + $0x1e0] sm:$0xff]
    %v1339 = vld [vmem:[%s15 + $0x1e8] sm:$0xff]
    %v1340 = vld [vmem:[%s15 + $0x1f0] sm:$0xff]
    %v1341 = vld [vmem:[%s15 + $0x1f8] sm:$0xff]
    %v1342 = vld [vmem:[%s17] sm:$0xff]
    %v1343 = vld [vmem:[%s17 + $0x8] sm:$0xff]
    %v1344 = vld [vmem:[%s17 + $0x10] sm:$0xff]
    %v1345 = vld [vmem:[%s17 + $0x18] sm:$0xff]
    %v1346 = vld [vmem:[%s17 + $0x20] sm:$0xff]
    %v1347 = vld [vmem:[%s17 + $0x28] sm:$0xff]
    %v1348 = vld [vmem:[%s17 + $0x30] sm:$0xff]
    %v1349 = vld [vmem:[%s17 + $0x38] sm:$0xff]
    %v1350 = vld [vmem:[%s17 + $0x40] sm:$0xff]
    %v1351 = vld [vmem:[%s17 + $0x48] sm:$0xff]
    %v1352 = vld [vmem:[%s17 + $0x50] sm:$0xff]
    %v1353 = vld [vmem:[%s17 + $0x58] sm:$0xff]
    %v1354 = vld [vmem:[%s17 + $0x60] sm:$0xff]
    %v1355 = vld [vmem:[%s17 + $0x68] sm:$0xff]
    %v1356 = vld [vmem:[%s17 + $0x70] sm:$0xff]
    %v1357 = vld [vmem:[%s17 + $0x78] sm:$0xff]
    %v1358 = vld [vmem:[%s17 + $0x80] sm:$0xff]
    %v1359 = vld [vmem:[%s17 + $0x88] sm:$0xff]
    %v1360 = vld [vmem:[%s17 + $0x90] sm:$0xff]
    %v1361 = vld [vmem:[%s17 + $0x98] sm:$0xff]
    %v1362 = vld [vmem:[%s17 + $0xa0] sm:$0xff]
    %v1363 = vld [vmem:[%s17 + $0xa8] sm:$0xff]
    %v1364 = vld [vmem:[%s17 + $0xb0] sm:$0xff]
    %v1365 = vld [vmem:[%s17 + $0xb8] sm:$0xff]
    %v1366 = vld [vmem:[%s17 + $0xc0] sm:$0xff]
    %v1367 = vld [vmem:[%s17 + $0xc8] sm:$0xff]
    %v1368 = vld [vmem:[%s17 + $0xd0] sm:$0xff]
    %v1369 = vld [vmem:[%s17 + $0xd8] sm:$0xff]
    %v1370 = vld [vmem:[%s17 + $0xe0] sm:$0xff]
    %v1371 = vld [vmem:[%s17 + $0xe8] sm:$0xff]
    %v1372 = vld [vmem:[%s17 + $0xf0] sm:$0xff]
    %v1373 = vld [vmem:[%s17 + $0xf8] sm:$0xff]
    %v1374 = vld [vmem:[%s19] sm:$0x1]
    %v1375 = vld [vmem:[%s21] sm:$0x1]
    %v1376 = vsel %vm431, %v1036, 0.0
    %v1377 = vrot.slane %v1376, 4
    %v1378 = vadd.f32 %v1376, %v1377
    %v1379 = vrot.slane %v1378, 2
    %v1380 = vadd.f32 %v1378, %v1379
    %v1381 = vrot.slane %v1380, 1
    %v1382 = vadd.f32 %v1380, %v1381
    %v1383 = vsel %vm431, %v1116, 0.0
    %v1384 = vrot.slane %v1383, 4
    %v1385 = vadd.f32 %v1383, %v1384
    %v1386 = vrot.slane %v1385, 2
    %v1387 = vadd.f32 %v1385, %v1386
    %v1388 = vrot.slane %v1387, 1
    %v1389 = vadd.f32 %v1387, %v1388
    %v1390 = vsel %vm431, %v1196, 0.0
    %v1391 = vrot.slane %v1390, 4
    %v1392 = vadd.f32 %v1390, %v1391
    %v1393 = vrot.slane %v1392, 2
    %v1394 = vadd.f32 %v1392, %v1393
    %v1395 = vrot.slane %v1394, 1
    %v1396 = vadd.f32 %v1394, %v1395
    %v1397 = vsel %vm431, %v1276, 0.0
    %v1398 = vrot.slane %v1397, 4
    %v1399 = vadd.f32 %v1397, %v1398
    %v1400 = vrot.slane %v1399, 2
    %v1401 = vadd.f32 %v1399, %v1400
    %v1402 = vrot.slane %v1401, 1
    %v1403 = vadd.f32 %v1401, %v1402
    %v1404 = vmul.f32 %v1036, %v1036
    %v1405 = vmul.f32 %v1116, %v1116
    %v1406 = vmul.f32 %v1196, %v1196
    %v1407 = vmul.f32 %v1276, %v1276
    %v1408 = vsel %vm431, %v1404, 0.0
    %v1409 = vrot.slane %v1408, 4
    %v1410 = vadd.f32 %v1408, %v1409
    %v1411 = vrot.slane %v1410, 2
    %v1412 = vadd.f32 %v1410, %v1411
    %v1413 = vrot.slane %v1412, 1
    %v1414 = vadd.f32 %v1412, %v1413
    %v1415 = vsel %vm431, %v1405, 0.0
    %v1416 = vrot.slane %v1415, 4
    %v1417 = vadd.f32 %v1415, %v1416
    %v1418 = vrot.slane %v1417, 2
    %v1419 = vadd.f32 %v1417, %v1418
    %v1420 = vrot.slane %v1419, 1
    %v1421 = vadd.f32 %v1419, %v1420
    %v1422 = vsel %vm431, %v1406, 0.0
    %v1423 = vrot.slane %v1422, 4
    %v1424 = vadd.f32 %v1422, %v1423
    %v1425 = vrot.slane %v1424, 2
    %v1426 = vadd.f32 %v1424, %v1425
    %v1427 = vrot.slane %v1426, 1
    %v1428 = vadd.f32 %v1426, %v1427
    %v1429 = vsel %vm431, %v1407, 0.0
    %v1430 = vrot.slane %v1429, 4
    %v1431 = vadd.f32 %v1429, %v1430
    %v1432 = vrot.slane %v1431, 2
    %v1433 = vadd.f32 %v1431, %v1432
    %v1434 = vrot.slane %v1433, 1
    %v1435 = vadd.f32 %v1433, %v1434
    %v1436 = vsel %vm492, %v1382, %v1414
    %v1437 = vsel %vm492, %v1389, %v1421
    %v1438 = vsel %vm492, %v1396, %v1428
    %v1439 = vsel %vm492, %v1403, %v1435
    %1440 = vmatpush.msra.mxu0 %v1293
    %1441 = vmatpush.msra.mxu0 %v1292
    %1442 = vmatpush.msra.mxu0 %v1291
    %1443 = vmatpush.msra.mxu0 %v1290
    %1444 = vmatpush.msra.mxu0 %v1289
    %1445 = vmatpush.msra.mxu0 %v1288
    %1446 = vmatpush.msra.mxu0 %v1287
    %1447 = vmatpush.msra.mxu0 %v1286
    %1448 = vmatpush.msra.mxu0 %v1285
    %1449 = vmatpush.msra.mxu0 %v1284
    %1450 = vmatpush.msra.mxu0 %v1283
    %1451 = vmatpush.msra.mxu0 %v1282
    %1452 = vmatpush.msra.mxu0 %v1281
    %1453 = vmatpush.msra.mxu0 %v1280
    %1454 = vmatpush.msra.mxu0 %v1279
    %1455 = vmatpush.msra.mxu0 %v1278
    %1456 = vmatmul.f32.gmra.mxu0 %v1436
    %v1457 = vpop.f32.mrf.mxu0
    %v1458 = vadd.f32 0.0, %v1457
    %1459 = vdwg.mxu0
    %1460 = vmatpush.msra.mxu0 %v1309
    %1461 = vmatpush.msra.mxu0 %v1308
    %1462 = vmatpush.msra.mxu0 %v1307
    %1463 = vmatpush.msra.mxu0 %v1306
    %1464 = vmatpush.msra.mxu0 %v1305
    %1465 = vmatpush.msra.mxu0 %v1304
    %1466 = vmatpush.msra.mxu0 %v1303
    %1467 = vmatpush.msra.mxu0 %v1302
    %1468 = vmatpush.msra.mxu0 %v1301
    %1469 = vmatpush.msra.mxu0 %v1300
    %1470 = vmatpush.msra.mxu0 %v1299
    %1471 = vmatpush.msra.mxu0 %v1298
    %1472 = vmatpush.msra.mxu0 %v1297
    %1473 = vmatpush.msra.mxu0 %v1296
    %1474 = vmatpush.msra.mxu0 %v1295
    %1475 = vmatpush.msra.mxu0 %v1294
    %1476 = vmatmul.f32.gmra.mxu0 %v1437
    %v1477 = vpop.f32.mrf.mxu0
    %v1478 = vadd.f32 %v1458, %v1477
    %1479 = vdwg.mxu0
    %1480 = vmatpush.msra.mxu0 %v1325
    %1481 = vmatpush.msra.mxu0 %v1324
    %1482 = vmatpush.msra.mxu0 %v1323
    %1483 = vmatpush.msra.mxu0 %v1322
    %1484 = vmatpush.msra.mxu0 %v1321
    %1485 = vmatpush.msra.mxu0 %v1320
    %1486 = vmatpush.msra.mxu0 %v1319
    %1487 = vmatpush.msra.mxu0 %v1318
    %1488 = vmatpush.msra.mxu0 %v1317
    %1489 = vmatpush.msra.mxu0 %v1316
    %1490 = vmatpush.msra.mxu0 %v1315
    %1491 = vmatpush.msra.mxu0 %v1314
    %1492 = vmatpush.msra.mxu0 %v1313
    %1493 = vmatpush.msra.mxu0 %v1312
    %1494 = vmatpush.msra.mxu0 %v1311
    %1495 = vmatpush.msra.mxu0 %v1310
    %1496 = vmatmul.f32.gmra.mxu0 %v1438
    %v1497 = vpop.f32.mrf.mxu0
    %v1498 = vadd.f32 %v1478, %v1497
    %1499 = vdwg.mxu0
    %1500 = vmatpush.msra.mxu0 %v1341
    %1501 = vmatpush.msra.mxu0 %v1340
    %1502 = vmatpush.msra.mxu0 %v1339
    %1503 = vmatpush.msra.mxu0 %v1338
    %1504 = vmatpush.msra.mxu0 %v1337
    %1505 = vmatpush.msra.mxu0 %v1336
    %1506 = vmatpush.msra.mxu0 %v1335
    %1507 = vmatpush.msra.mxu0 %v1334
    %1508 = vmatpush.msra.mxu0 %v1333
    %1509 = vmatpush.msra.mxu0 %v1332
    %1510 = vmatpush.msra.mxu0 %v1331
    %1511 = vmatpush.msra.mxu0 %v1330
    %1512 = vmatpush.msra.mxu0 %v1329
    %1513 = vmatpush.msra.mxu0 %v1328
    %1514 = vmatpush.msra.mxu0 %v1327
    %1515 = vmatpush.msra.mxu0 %v1326
    %1516 = vmatmul.f32.gmra.mxu0 %v1439
    %v1517 = vpop.f32.mrf.mxu0
    %v1518 = vadd.f32 %v1498, %v1517
    %1519 = vdwg.mxu0
    %v1520 = vmul.f32 %v1518, 0.5
    %v1521 = vmul.f32 %v1520, %v1520
    %v1523 = vrot.slane %v1521, 7
    %v1525 = vsub.f32 %v1520, %v1523
    %v1526 = vadd.f32 %v1525, 1e-05
    %v1527 = vrsqrt.pop %v1526
    %v1528 = vmul.f32 %v1527, %v1526
    %v1529 = vmul.f32 %v1528, %v1527
    %v1530 = vmul.f32 0.5, %v1529
    %v1531 = vsub.f32 1.5, %v1530
    %v1532 = vmul.f32 %v1527, %v1531
    %vm1533 = vweird.f32 %v1526
    %vm1534 = vweird.f32 %v1527
    %vm1535 = vmor %vm1533, %vm1534
    %v1536 = vsel %vm1535, %v1527, %v1532
    %1538 = vst [vmem:[#allocation1] sm:$0xff] %v1536
    %s1539 = scalar_lea.vmem [#allocation1], 1
    %v1540 = vld [vmem:[%s1539] ss:$9 sm:$0xff]
    %v1542 = vmul.f32 %v1374, %v1540
    %v1543 = vmul.f32 %v1520, %v1542
    %v1544 = vsub.f32 %v1375, %v1543
    %v1546 = vperm.slane %v1544, 0
    %v1548 = vsel %vm492, %v1542, %v1546
    %vm1549 = vcmask 523264
    %v1551 = vsel %vm1549, %v1548, 0
    %1553 = vmatpush.msra.mxu0 0.0
    %1554 = vmatpush.msra.mxu0 0.0
    %1555 = vmatpush.msra.mxu0 0.0
    %1556 = vmatpush.msra.mxu0 0.0
    %1557 = vmatpush.msra.mxu0 0.0
    %1558 = vmatpush.msra.mxu0 0.0
    %1559 = vmatpush.msra.mxu0 0.0
    %1560 = vmatpush.msra.mxu0 0.0
    %1561 = vmatpush.msra.mxu0 %v1370
    %1562 = vmatpush.msra.mxu0 %v1366
    %1563 = vmatpush.msra.mxu0 %v1362
    %1564 = vmatpush.msra.mxu0 %v1358
    %1565 = vmatpush.msra.mxu0 %v1354
    %1566 = vmatpush.msra.mxu0 %v1350
    %1567 = vmatpush.msra.mxu0 %v1346
    %1568 = vmatpush.msra.mxu0 %v1342
    %1569 = vmatmul.f32.gmra.mxu0 %v1551
    %v1570 = vpop.f32.mrf.mxu0
    %v1571 = vadd.f32 0.0, %v1570
    %1572 = vdwg.mxu0
    %1573 = vmatpush.msra.mxu0 0.0
    %1574 = vmatpush.msra.mxu0 0.0
    %1575 = vmatpush.msra.mxu0 0.0
    %1576 = vmatpush.msra.mxu0 0.0
    %1577 = vmatpush.msra.mxu0 0.0
    %1578 = vmatpush.msra.mxu0 0.0
    %1579 = vmatpush.msra.mxu0 0.0
    %1580 = vmatpush.msra.mxu0 0.0
    %1581 = vmatpush.msra.mxu0 %v1371
    %1582 = vmatpush.msra.mxu0 %v1367
    %1583 = vmatpush.msra.mxu0 %v1363
    %1584 = vmatpush.msra.mxu0 %v1359
    %1585 = vmatpush.msra.mxu0 %v1355
    %1586 = vmatpush.msra.mxu0 %v1351
    %1587 = vmatpush.msra.mxu0 %v1347
    %1588 = vmatpush.msra.mxu0 %v1343
    %1589 = vmatmul.f32.gmra.mxu0 %v1551
    %v1590 = vpop.f32.mrf.mxu0
    %v1591 = vadd.f32 0.0, %v1590
    %1592 = vdwg.mxu0
    %1593 = vmatpush.msra.mxu0 0.0
    %1594 = vmatpush.msra.mxu0 0.0
    %1595 = vmatpush.msra.mxu0 0.0
    %1596 = vmatpush.msra.mxu0 0.0
    %1597 = vmatpush.msra.mxu0 0.0
    %1598 = vmatpush.msra.mxu0 0.0
    %1599 = vmatpush.msra.mxu0 0.0
    %1600 = vmatpush.msra.mxu0 0.0
    %1601 = vmatpush.msra.mxu0 %v1372
    %1602 = vmatpush.msra.mxu0 %v1368
    %1603 = vmatpush.msra.mxu0 %v1364
    %1604 = vmatpush.msra.mxu0 %v1360
    %1605 = vmatpush.msra.mxu0 %v1356
    %1606 = vmatpush.msra.mxu0 %v1352
    %1607 = vmatpush.msra.mxu0 %v1348
    %1608 = vmatpush.msra.mxu0 %v1344
    %1609 = vmatmul.f32.gmra.mxu0 %v1551
    %v1610 = vpop.f32.mrf.mxu0
    %v1611 = vadd.f32 0.0, %v1610
    %1612 = vdwg.mxu0
    %1613 = vmatpush.msra.mxu0 0.0
    %1614 = vmatpush.msra.mxu0 0.0
    %1615 = vmatpush.msra.mxu0 0.0
    %1616 = vmatpush.msra.mxu0 0.0
    %1617 = vmatpush.msra.mxu0 0.0
    %1618 = vmatpush.msra.mxu0 0.0
    %1619 = vmatpush.msra.mxu0 0.0
    %1620 = vmatpush.msra.mxu0 0.0
    %1621 = vmatpush.msra.mxu0 %v1373
    %1622 = vmatpush.msra.mxu0 %v1369
    %1623 = vmatpush.msra.mxu0 %v1365
    %1624 = vmatpush.msra.mxu0 %v1361
    %1625 = vmatpush.msra.mxu0 %v1357
    %1626 = vmatpush.msra.mxu0 %v1353
    %1627 = vmatpush.msra.mxu0 %v1349
    %1628 = vmatpush.msra.mxu0 %v1345
    %1629 = vmatmul.f32.gmra.mxu0 %v1551
    %v1630 = vpop.f32.mrf.mxu0
    %v1631 = vadd.f32 0.0, %v1630
    %1632 = vdwg.mxu0
    %v1633 = vperm.slane %v1571, 0
    %v1634 = vperm.slane %v1591, 0
    %v1635 = vperm.slane %v1611, 0
    %v1636 = vperm.slane %v1631, 0
    %v1637 = vmul.f32 %v1036, %v1633
    %v1638 = vmul.f32 %v1116, %v1634
    %v1639 = vmul.f32 %v1196, %v1635
    %v1640 = vmul.f32 %v1276, %v1636
    %v1641 = vperm.slane %v1571, 1
    %v1642 = vperm.slane %v1591, 1
    %v1643 = vperm.slane %v1611, 1
    %v1644 = vperm.slane %v1631, 1
    %v1645 = vadd.f32 %v1637, %v1641
    %v1646 = vadd.f32 %v1638, %v1642
    %v1647 = vadd.f32 %v1639, %v1643
    %v1648 = vadd.f32 %v1640, %v1644
    %v1649 = vld [vmem:[#allocation4] sm:$0xff]
    %v1650 = vld [vmem:[#allocation4 + $0x8] sm:$0xff]
    %v1651 = vld [vmem:[#allocation4 + $0x10] sm:$0xff]
    %v1652 = vld [vmem:[#allocation4 + $0x18] sm:$0xff]
    %v1653 = vld [vmem:[#allocation4 + $0x20] sm:$0xff]
    %v1654 = vld [vmem:[#allocation4 + $0x28] sm:$0xff]
    %v1655 = vld [vmem:[#allocation4 + $0x30] sm:$0xff]
    %v1656 = vld [vmem:[#allocation4 + $0x38] sm:$0xff]
    %v1657 = vld [vmem:[#allocation4 + $0x40] sm:$0xff]
    %v1658 = vld [vmem:[#allocation4 + $0x48] sm:$0xff]
    %v1659 = vld [vmem:[#allocation4 + $0x50] sm:$0xff]
    %v1660 = vld [vmem:[#allocation4 + $0x58] sm:$0xff]
    %v1661 = vld [vmem:[#allocation4 + $0x60] sm:$0xff]
    %v1662 = vld [vmem:[#allocation4 + $0x68] sm:$0xff]
    %v1663 = vld [vmem:[#allocation4 + $0x70] sm:$0xff]
    %v1664 = vld [vmem:[#allocation4 + $0x78] sm:$0xff]
    %v1665 = vld [vmem:[#allocation4 + $0x80] sm:$0xff]
    %v1666 = vld [vmem:[#allocation4 + $0x88] sm:$0xff]
    %v1667 = vld [vmem:[#allocation4 + $0x90] sm:$0xff]
    %v1668 = vld [vmem:[#allocation4 + $0x98] sm:$0xff]
    %v1669 = vld [vmem:[#allocation4 + $0xa0] sm:$0xff]
    %v1670 = vld [vmem:[#allocation4 + $0xa8] sm:$0xff]
    %v1671 = vld [vmem:[#allocation4 + $0xb0] sm:$0xff]
    %v1672 = vld [vmem:[#allocation4 + $0xb8] sm:$0xff]
    %v1673 = vld [vmem:[#allocation4 + $0xc0] sm:$0xff]
    %v1674 = vld [vmem:[#allocation4 + $0xc8] sm:$0xff]
    %v1675 = vld [vmem:[#allocation4 + $0xd0] sm:$0xff]
    %v1676 = vld [vmem:[#allocation4 + $0xd8] sm:$0xff]
    %v1677 = vld [vmem:[#allocation4 + $0xe0] sm:$0xff]
    %v1678 = vld [vmem:[#allocation4 + $0xe8] sm:$0xff]
    %v1679 = vld [vmem:[#allocation4 + $0xf0] sm:$0xff]
    %v1680 = vld [vmem:[#allocation4 + $0xf8] sm:$0xff]
    %v1681 = vld [vmem:[#allocation4 + $0x100] sm:$0xff]
    %v1682 = vld [vmem:[#allocation4 + $0x108] sm:$0xff]
    %v1683 = vld [vmem:[#allocation4 + $0x110] sm:$0xff]
    %v1684 = vld [vmem:[#allocation4 + $0x118] sm:$0xff]
    %v1685 = vld [vmem:[#allocation4 + $0x120] sm:$0xff]
    %v1686 = vld [vmem:[#allocation4 + $0x128] sm:$0xff]
    %v1687 = vld [vmem:[#allocation4 + $0x130] sm:$0xff]
    %v1688 = vld [vmem:[#allocation4 + $0x138] sm:$0xff]
    %v1689 = vld [vmem:[#allocation4 + $0x140] sm:$0xff]
    %v1690 = vld [vmem:[#allocation4 + $0x148] sm:$0xff]
    %v1691 = vld [vmem:[#allocation4 + $0x150] sm:$0xff]
    %v1692 = vld [vmem:[#allocation4 + $0x158] sm:$0xff]
    %v1693 = vld [vmem:[#allocation4 + $0x160] sm:$0xff]
    %v1694 = vld [vmem:[#allocation4 + $0x168] sm:$0xff]
    %v1695 = vld [vmem:[#allocation4 + $0x170] sm:$0xff]
    %v1696 = vld [vmem:[#allocation4 + $0x178] sm:$0xff]
    %v1697 = vld [vmem:[#allocation4 + $0x180] sm:$0xff]
    %v1698 = vld [vmem:[#allocation4 + $0x188] sm:$0xff]
    %v1699 = vld [vmem:[#allocation4 + $0x190] sm:$0xff]
    %v1700 = vld [vmem:[#allocation4 + $0x198] sm:$0xff]
    %v1701 = vld [vmem:[#allocation4 + $0x1a0] sm:$0xff]
    %v1702 = vld [vmem:[#allocation4 + $0x1a8] sm:$0xff]
    %v1703 = vld [vmem:[#allocation4 + $0x1b0] sm:$0xff]
    %v1704 = vld [vmem:[#allocation4 + $0x1b8] sm:$0xff]
    %v1705 = vld [vmem:[#allocation4 + $0x1c0] sm:$0xff]
    %v1706 = vld [vmem:[#allocation4 + $0x1c8] sm:$0xff]
    %v1707 = vld [vmem:[#allocation4 + $0x1d0] sm:$0xff]
    %v1708 = vld [vmem:[#allocation4 + $0x1d8] sm:$0xff]
    %v1709 = vld [vmem:[#allocation4 + $0x1e0] sm:$0xff]
    %v1710 = vld [vmem:[#allocation4 + $0x1e8] sm:$0xff]
    %v1711 = vld [vmem:[#allocation4 + $0x1f0] sm:$0xff]
    %v1712 = vld [vmem:[#allocation4 + $0x1f8] sm:$0xff]
    %v1713 = vld [vmem:[#allocation4 + $0x200] sm:$0xff]
    %v1714 = vld [vmem:[#allocation4 + $0x208] sm:$0xff]
    %v1715 = vld [vmem:[#allocation4 + $0x210] sm:$0xff]
    %v1716 = vld [vmem:[#allocation4 + $0x218] sm:$0xff]
    %v1717 = vld [vmem:[#allocation4 + $0x220] sm:$0xff]
    %v1718 = vld [vmem:[#allocation4 + $0x228] sm:$0xff]
    %v1719 = vld [vmem:[#allocation4 + $0x230] sm:$0xff]
    %v1720 = vld [vmem:[#allocation4 + $0x238] sm:$0xff]
    %v1721 = vld [vmem:[#allocation4 + $0x240] sm:$0xff]
    %v1722 = vld [vmem:[#allocation4 + $0x248] sm:$0xff]
    %v1723 = vld [vmem:[#allocation4 + $0x250] sm:$0xff]
    %v1724 = vld [vmem:[#allocation4 + $0x258] sm:$0xff]
    %v1725 = vld [vmem:[#allocation4 + $0x260] sm:$0xff]
    %v1726 = vld [vmem:[#allocation4 + $0x268] sm:$0xff]
    %v1727 = vld [vmem:[#allocation4 + $0x270] sm:$0xff]
    %v1728 = vld [vmem:[#allocation4 + $0x278] sm:$0xff]
    %v1729 = vld [vmem:[#allocation4 + $0x280] sm:$0xff]
    %v1730 = vld [vmem:[#allocation4 + $0x288] sm:$0xff]
    %v1731 = vld [vmem:[#allocation4 + $0x290] sm:$0xff]
    %v1732 = vld [vmem:[#allocation4 + $0x298] sm:$0xff]
    %v1733 = vld [vmem:[#allocation4 + $0x2a0] sm:$0xff]
    %v1734 = vld [vmem:[#allocation4 + $0x2a8] sm:$0xff]
    %v1735 = vld [vmem:[#allocation4 + $0x2b0] sm:$0xff]
    %v1736 = vld [vmem:[#allocation4 + $0x2b8] sm:$0xff]
    %v1737 = vld [vmem:[#allocation4 + $0x2c0] sm:$0xff]
    %v1738 = vld [vmem:[#allocation4 + $0x2c8] sm:$0xff]
    %v1739 = vld [vmem:[#allocation4 + $0x2d0] sm:$0xff]
    %v1740 = vld [vmem:[#allocation4 + $0x2d8] sm:$0xff]
    %v1741 = vld [vmem:[#allocation4 + $0x2e0] sm:$0xff]
    %v1742 = vld [vmem:[#allocation4 + $0x2e8] sm:$0xff]
    %v1743 = vld [vmem:[#allocation4 + $0x2f0] sm:$0xff]
    %v1744 = vld [vmem:[#allocation4 + $0x2f8] sm:$0xff]
    %v1745 = vld [vmem:[#allocation4 + $0x300] sm:$0xff]
    %v1746 = vld [vmem:[#allocation4 + $0x308] sm:$0xff]
    %v1747 = vld [vmem:[#allocation4 + $0x310] sm:$0xff]
    %v1748 = vld [vmem:[#allocation4 + $0x318] sm:$0xff]
    %v1749 = vld [vmem:[#allocation4 + $0x320] sm:$0xff]
    %v1750 = vld [vmem:[#allocation4 + $0x328] sm:$0xff]
    %v1751 = vld [vmem:[#allocation4 + $0x330] sm:$0xff]
    %v1752 = vld [vmem:[#allocation4 + $0x338] sm:$0xff]
    %v1753 = vld [vmem:[#allocation4 + $0x340] sm:$0xff]
    %v1754 = vld [vmem:[#allocation4 + $0x348] sm:$0xff]
    %v1755 = vld [vmem:[#allocation4 + $0x350] sm:$0xff]
    %v1756 = vld [vmem:[#allocation4 + $0x358] sm:$0xff]
    %v1757 = vld [vmem:[#allocation4 + $0x360] sm:$0xff]
    %v1758 = vld [vmem:[#allocation4 + $0x368] sm:$0xff]
    %v1759 = vld [vmem:[#allocation4 + $0x370] sm:$0xff]
    %v1760 = vld [vmem:[#allocation4 + $0x378] sm:$0xff]
    %v1761 = vld [vmem:[#allocation4 + $0x380] sm:$0xff]
    %v1762 = vld [vmem:[#allocation4 + $0x388] sm:$0xff]
    %v1763 = vld [vmem:[#allocation4 + $0x390] sm:$0xff]
    %v1764 = vld [vmem:[#allocation4 + $0x398] sm:$0xff]
    %v1765 = vld [vmem:[#allocation4 + $0x3a0] sm:$0xff]
    %v1766 = vld [vmem:[#allocation4 + $0x3a8] sm:$0xff]
    %v1767 = vld [vmem:[#allocation4 + $0x3b0] sm:$0xff]
    %v1768 = vld [vmem:[#allocation4 + $0x3b8] sm:$0xff]
    %v1769 = vld [vmem:[#allocation4 + $0x3c0] sm:$0xff]
    %v1770 = vld [vmem:[#allocation4 + $0x3c8] sm:$0xff]
    %v1771 = vld [vmem:[#allocation4 + $0x3d0] sm:$0xff]
    %v1772 = vld [vmem:[#allocation4 + $0x3d8] sm:$0xff]
    %v1773 = vld [vmem:[#allocation4 + $0x3e0] sm:$0xff]
    %v1774 = vld [vmem:[#allocation4 + $0x3e8] sm:$0xff]
    %v1775 = vld [vmem:[#allocation4 + $0x3f0] sm:$0xff]
    %v1776 = vld [vmem:[#allocation4 + $0x3f8] sm:$0xff]
    %v1777 = vld [vmem:[#allocation4 + $0x400] sm:$0xff]
    %v1778 = vld [vmem:[#allocation4 + $0x408] sm:$0xff]
    %v1779 = vld [vmem:[#allocation4 + $0x410] sm:$0xff]
    %v1780 = vld [vmem:[#allocation4 + $0x418] sm:$0xff]
    %v1781 = vld [vmem:[#allocation4 + $0x420] sm:$0xff]
    %v1782 = vld [vmem:[#allocation4 + $0x428] sm:$0xff]
    %v1783 = vld [vmem:[#allocation4 + $0x430] sm:$0xff]
    %v1784 = vld [vmem:[#allocation4 + $0x438] sm:$0xff]
    %v1785 = vld [vmem:[#allocation4 + $0x440] sm:$0xff]
    %v1786 = vld [vmem:[#allocation4 + $0x448] sm:$0xff]
    %v1787 = vld [vmem:[#allocation4 + $0x450] sm:$0xff]
    %v1788 = vld [vmem:[#allocation4 + $0x458] sm:$0xff]
    %v1789 = vld [vmem:[#allocation4 + $0x460] sm:$0xff]
    %v1790 = vld [vmem:[#allocation4 + $0x468] sm:$0xff]
    %v1791 = vld [vmem:[#allocation4 + $0x470] sm:$0xff]
    %v1792 = vld [vmem:[#allocation4 + $0x478] sm:$0xff]
    %v1793 = vld [vmem:[#allocation4 + $0x480] sm:$0xff]
    %v1794 = vld [vmem:[#allocation4 + $0x488] sm:$0xff]
    %v1795 = vld [vmem:[#allocation4 + $0x490] sm:$0xff]
    %v1796 = vld [vmem:[#allocation4 + $0x498] sm:$0xff]
    %v1797 = vld [vmem:[#allocation4 + $0x4a0] sm:$0xff]
    %v1798 = vld [vmem:[#allocation4 + $0x4a8] sm:$0xff]
    %v1799 = vld [vmem:[#allocation4 + $0x4b0] sm:$0xff]
    %v1800 = vld [vmem:[#allocation4 + $0x4b8] sm:$0xff]
    %v1801 = vld [vmem:[#allocation4 + $0x4c0] sm:$0xff]
    %v1802 = vld [vmem:[#allocation4 + $0x4c8] sm:$0xff]
    %v1803 = vld [vmem:[#allocation4 + $0x4d0] sm:$0xff]
    %v1804 = vld [vmem:[#allocation4 + $0x4d8] sm:$0xff]
    %v1805 = vld [vmem:[#allocation4 + $0x4e0] sm:$0xff]
    %v1806 = vld [vmem:[#allocation4 + $0x4e8] sm:$0xff]
    %v1807 = vld [vmem:[#allocation4 + $0x4f0] sm:$0xff]
    %v1808 = vld [vmem:[#allocation4 + $0x4f8] sm:$0xff]
    %v1809 = vld [vmem:[#allocation4 + $0x500] sm:$0xff]
    %v1810 = vld [vmem:[#allocation4 + $0x508] sm:$0xff]
    %v1811 = vld [vmem:[#allocation4 + $0x510] sm:$0xff]
    %v1812 = vld [vmem:[#allocation4 + $0x518] sm:$0xff]
    %v1813 = vld [vmem:[#allocation4 + $0x520] sm:$0xff]
    %v1814 = vld [vmem:[#allocation4 + $0x528] sm:$0xff]
    %v1815 = vld [vmem:[#allocation4 + $0x530] sm:$0xff]
    %v1816 = vld [vmem:[#allocation4 + $0x538] sm:$0xff]
    %v1817 = vld [vmem:[#allocation4 + $0x540] sm:$0xff]
    %v1818 = vld [vmem:[#allocation4 + $0x548] sm:$0xff]
    %v1819 = vld [vmem:[#allocation4 + $0x550] sm:$0xff]
    %v1820 = vld [vmem:[#allocation4 + $0x558] sm:$0xff]
    %v1821 = vld [vmem:[#allocation4 + $0x560] sm:$0xff]
    %v1822 = vld [vmem:[#allocation4 + $0x568] sm:$0xff]
    %v1823 = vld [vmem:[#allocation4 + $0x570] sm:$0xff]
    %v1824 = vld [vmem:[#allocation4 + $0x578] sm:$0xff]
    %v1825 = vld [vmem:[#allocation4 + $0x580] sm:$0xff]
    %v1826 = vld [vmem:[#allocation4 + $0x588] sm:$0xff]
    %v1827 = vld [vmem:[#allocation4 + $0x590] sm:$0xff]
    %v1828 = vld [vmem:[#allocation4 + $0x598] sm:$0xff]
    %v1829 = vld [vmem:[#allocation4 + $0x5a0] sm:$0xff]
    %v1830 = vld [vmem:[#allocation4 + $0x5a8] sm:$0xff]
    %v1831 = vld [vmem:[#allocation4 + $0x5b0] sm:$0xff]
    %v1832 = vld [vmem:[#allocation4 + $0x5b8] sm:$0xff]
    %v1833 = vld [vmem:[#allocation4 + $0x5c0] sm:$0xff]
    %v1834 = vld [vmem:[#allocation4 + $0x5c8] sm:$0xff]
    %v1835 = vld [vmem:[#allocation4 + $0x5d0] sm:$0xff]
    %v1836 = vld [vmem:[#allocation4 + $0x5d8] sm:$0xff]
    %v1837 = vld [vmem:[#allocation4 + $0x5e0] sm:$0xff]
    %v1838 = vld [vmem:[#allocation4 + $0x5e8] sm:$0xff]
    %v1839 = vld [vmem:[#allocation4 + $0x5f0] sm:$0xff]
    %v1840 = vld [vmem:[#allocation4 + $0x5f8] sm:$0xff]
    %v1841 = vld [vmem:[#allocation4 + $0x600] sm:$0xff]
    %v1842 = vld [vmem:[#allocation4 + $0x608] sm:$0xff]
    %v1843 = vld [vmem:[#allocation4 + $0x610] sm:$0xff]
    %v1844 = vld [vmem:[#allocation4 + $0x618] sm:$0xff]
    %v1845 = vld [vmem:[#allocation4 + $0x620] sm:$0xff]
    %v1846 = vld [vmem:[#allocation4 + $0x628] sm:$0xff]
    %v1847 = vld [vmem:[#allocation4 + $0x630] sm:$0xff]
    %v1848 = vld [vmem:[#allocation4 + $0x638] sm:$0xff]
    %v1849 = vld [vmem:[#allocation4 + $0x640] sm:$0xff]
    %v1850 = vld [vmem:[#allocation4 + $0x648] sm:$0xff]
    %v1851 = vld [vmem:[#allocation4 + $0x650] sm:$0xff]
    %v1852 = vld [vmem:[#allocation4 + $0x658] sm:$0xff]
    %v1853 = vld [vmem:[#allocation4 + $0x660] sm:$0xff]
    %v1854 = vld [vmem:[#allocation4 + $0x668] sm:$0xff]
    %v1855 = vld [vmem:[#allocation4 + $0x670] sm:$0xff]
    %v1856 = vld [vmem:[#allocation4 + $0x678] sm:$0xff]
    %v1857 = vld [vmem:[#allocation4 + $0x680] sm:$0xff]
    %v1858 = vld [vmem:[#allocation4 + $0x688] sm:$0xff]
    %v1859 = vld [vmem:[#allocation4 + $0x690] sm:$0xff]
    %v1860 = vld [vmem:[#allocation4 + $0x698] sm:$0xff]
    %v1861 = vld [vmem:[#allocation4 + $0x6a0] sm:$0xff]
    %v1862 = vld [vmem:[#allocation4 + $0x6a8] sm:$0xff]
    %v1863 = vld [vmem:[#allocation4 + $0x6b0] sm:$0xff]
    %v1864 = vld [vmem:[#allocation4 + $0x6b8] sm:$0xff]
    %v1865 = vld [vmem:[#allocation4 + $0x6c0] sm:$0xff]
    %v1866 = vld [vmem:[#allocation4 + $0x6c8] sm:$0xff]
    %v1867 = vld [vmem:[#allocation4 + $0x6d0] sm:$0xff]
    %v1868 = vld [vmem:[#allocation4 + $0x6d8] sm:$0xff]
    %v1869 = vld [vmem:[#allocation4 + $0x6e0] sm:$0xff]
    %v1870 = vld [vmem:[#allocation4 + $0x6e8] sm:$0xff]
    %v1871 = vld [vmem:[#allocation4 + $0x6f0] sm:$0xff]
    %v1872 = vld [vmem:[#allocation4 + $0x6f8] sm:$0xff]
    %v1873 = vld [vmem:[#allocation4 + $0x700] sm:$0xff]
    %v1874 = vld [vmem:[#allocation4 + $0x708] sm:$0xff]
    %v1875 = vld [vmem:[#allocation4 + $0x710] sm:$0xff]
    %v1876 = vld [vmem:[#allocation4 + $0x718] sm:$0xff]
    %v1877 = vld [vmem:[#allocation4 + $0x720] sm:$0xff]
    %v1878 = vld [vmem:[#allocation4 + $0x728] sm:$0xff]
    %v1879 = vld [vmem:[#allocation4 + $0x730] sm:$0xff]
    %v1880 = vld [vmem:[#allocation4 + $0x738] sm:$0xff]
    %v1881 = vld [vmem:[#allocation4 + $0x740] sm:$0xff]
    %v1882 = vld [vmem:[#allocation4 + $0x748] sm:$0xff]
    %v1883 = vld [vmem:[#allocation4 + $0x750] sm:$0xff]
    %v1884 = vld [vmem:[#allocation4 + $0x758] sm:$0xff]
    %v1885 = vld [vmem:[#allocation4 + $0x760] sm:$0xff]
    %v1886 = vld [vmem:[#allocation4 + $0x768] sm:$0xff]
    %v1887 = vld [vmem:[#allocation4 + $0x770] sm:$0xff]
    %v1888 = vld [vmem:[#allocation4 + $0x778] sm:$0xff]
    %v1889 = vld [vmem:[#allocation4 + $0x780] sm:$0xff]
    %v1890 = vld [vmem:[#allocation4 + $0x788] sm:$0xff]
    %v1891 = vld [vmem:[#allocation4 + $0x790] sm:$0xff]
    %v1892 = vld [vmem:[#allocation4 + $0x798] sm:$0xff]
    %v1893 = vld [vmem:[#allocation4 + $0x7a0] sm:$0xff]
    %v1894 = vld [vmem:[#allocation4 + $0x7a8] sm:$0xff]
    %v1895 = vld [vmem:[#allocation4 + $0x7b0] sm:$0xff]
    %v1896 = vld [vmem:[#allocation4 + $0x7b8] sm:$0xff]
    %v1897 = vld [vmem:[#allocation4 + $0x7c0] sm:$0xff]
    %v1898 = vld [vmem:[#allocation4 + $0x7c8] sm:$0xff]
    %v1899 = vld [vmem:[#allocation4 + $0x7d0] sm:$0xff]
    %v1900 = vld [vmem:[#allocation4 + $0x7d8] sm:$0xff]
    %v1901 = vld [vmem:[#allocation4 + $0x7e0] sm:$0xff]
    %v1902 = vld [vmem:[#allocation4 + $0x7e8] sm:$0xff]
    %v1903 = vld [vmem:[#allocation4 + $0x7f0] sm:$0xff]
    %v1904 = vld [vmem:[#allocation4 + $0x7f8] sm:$0xff]
    %1905 = vmatpush.msra.mxu0 %v1709
    %1906 = vmatpush.msra.mxu0 %v1705
    %1907 = vmatpush.msra.mxu0 %v1701
    %1908 = vmatpush.msra.mxu0 %v1697
    %1909 = vmatpush.msra.mxu0 %v1693
    %1910 = vmatpush.msra.mxu0 %v1689
    %1911 = vmatpush.msra.mxu0 %v1685
    %1912 = vmatpush.msra.mxu0 %v1681
    %1913 = vmatpush.msra.mxu0 %v1677
    %1914 = vmatpush.msra.mxu0 %v1673
    %1915 = vmatpush.msra.mxu0 %v1669
    %1916 = vmatpush.msra.mxu0 %v1665
    %1917 = vmatpush.msra.mxu0 %v1661
    %1918 = vmatpush.msra.mxu0 %v1657
    %1919 = vmatpush.msra.mxu0 %v1653
    %1920 = vmatpush.msra.mxu0 %v1649
    %1921 = vmatmul.f32.gmra.mxu0 %v1645
    %v1922 = vpop.f32.mrf.mxu0
    %v1923 = vadd.f32 0.0, %v1922
    %1924 = vdwg.mxu0
    %1925 = vmatpush.msra.mxu0 %v1773
    %1926 = vmatpush.msra.mxu0 %v1769
    %1927 = vmatpush.msra.mxu0 %v1765
    %1928 = vmatpush.msra.mxu0 %v1761
    %1929 = vmatpush.msra.mxu0 %v1757
    %1930 = vmatpush.msra.mxu0 %v1753
    %1931 = vmatpush.msra.mxu0 %v1749
    %1932 = vmatpush.msra.mxu0 %v1745
    %1933 = vmatpush.msra.mxu0 %v1741
    %1934 = vmatpush.msra.mxu0 %v1737
    %1935 = vmatpush.msra.mxu0 %v1733
    %1936 = vmatpush.msra.mxu0 %v1729
    %1937 = vmatpush.msra.mxu0 %v1725
    %1938 = vmatpush.msra.mxu0 %v1721
    %1939 = vmatpush.msra.mxu0 %v1717
    %1940 = vmatpush.msra.mxu0 %v1713
    %1941 = vmatmul.f32.gmra.mxu0 %v1646
    %v1942 = vpop.f32.mrf.mxu0
    %v1943 = vadd.f32 %v1923, %v1942
    %1944 = vdwg.mxu0
    %1945 = vmatpush.msra.mxu0 %v1837
    %1946 = vmatpush.msra.mxu0 %v1833
    %1947 = vmatpush.msra.mxu0 %v1829
    %1948 = vmatpush.msra.mxu0 %v1825
    %1949 = vmatpush.msra.mxu0 %v1821
    %1950 = vmatpush.msra.mxu0 %v1817
    %1951 = vmatpush.msra.mxu0 %v1813
    %1952 = vmatpush.msra.mxu0 %v1809
    %1953 = vmatpush.msra.mxu0 %v1805
    %1954 = vmatpush.msra.mxu0 %v1801
    %1955 = vmatpush.msra.mxu0 %v1797
    %1956 = vmatpush.msra.mxu0 %v1793
    %1957 = vmatpush.msra.mxu0 %v1789
    %1958 = vmatpush.msra.mxu0 %v1785
    %1959 = vmatpush.msra.mxu0 %v1781
    %1960 = vmatpush.msra.mxu0 %v1777
    %1961 = vmatmul.f32.gmra.mxu0 %v1647
    %v1962 = vpop.f32.mrf.mxu0
    %v1963 = vadd.f32 %v1943, %v1962
    %1964 = vdwg.mxu0
    %1965 = vmatpush.msra.mxu0 %v1901
    %1966 = vmatpush.msra.mxu0 %v1897
    %1967 = vmatpush.msra.mxu0 %v1893
    %1968 = vmatpush.msra.mxu0 %v1889
    %1969 = vmatpush.msra.mxu0 %v1885
    %1970 = vmatpush.msra.mxu0 %v1881
    %1971 = vmatpush.msra.mxu0 %v1877
    %1972 = vmatpush.msra.mxu0 %v1873
    %1973 = vmatpush.msra.mxu0 %v1869
    %1974 = vmatpush.msra.mxu0 %v1865
    %1975 = vmatpush.msra.mxu0 %v1861
    %1976 = vmatpush.msra.mxu0 %v1857
    %1977 = vmatpush.msra.mxu0 %v1853
    %1978 = vmatpush.msra.mxu0 %v1849
    %1979 = vmatpush.msra.mxu0 %v1845
    %1980 = vmatpush.msra.mxu0 %v1841
    %1981 = vmatmul.f32.gmra.mxu0 %v1648
    %v1982 = vpop.f32.mrf.mxu0
    %v1983 = vadd.f32 %v1963, %v1982
    %1984 = vdwg.mxu0
    %1985 = vmatpush.msra.mxu0 %v1710
    %1986 = vmatpush.msra.mxu0 %v1706
    %1987 = vmatpush.msra.mxu0 %v1702
    %1988 = vmatpush.msra.mxu0 %v1698
    %1989 = vmatpush.msra.mxu0 %v1694
    %1990 = vmatpush.msra.mxu0 %v1690
    %1991 = vmatpush.msra.mxu0 %v1686
    %1992 = vmatpush.msra.mxu0 %v1682
    %1993 = vmatpush.msra.mxu0 %v1678
    %1994 = vmatpush.msra.mxu0 %v1674
    %1995 = vmatpush.msra.mxu0 %v1670
    %1996 = vmatpush.msra.mxu0 %v1666
    %1997 = vmatpush.msra.mxu0 %v1662
    %1998 = vmatpush.msra.mxu0 %v1658
    %1999 = vmatpush.msra.mxu0 %v1654
    %2000 = vmatpush.msra.mxu0 %v1650
    %2001 = vmatmul.f32.gmra.mxu0 %v1645
    %v2002 = vpop.f32.mrf.mxu0
    %v2003 = vadd.f32 0.0, %v2002
    %2004 = vdwg.mxu0
    %2005 = vmatpush.msra.mxu0 %v1774
    %2006 = vmatpush.msra.mxu0 %v1770
    %2007 = vmatpush.msra.mxu0 %v1766
    %2008 = vmatpush.msra.mxu0 %v1762
    %2009 = vmatpush.msra.mxu0 %v1758
    %2010 = vmatpush.msra.mxu0 %v1754
    %2011 = vmatpush.msra.mxu0 %v1750
    %2012 = vmatpush.msra.mxu0 %v1746
    %2013 = vmatpush.msra.mxu0 %v1742
    %2014 = vmatpush.msra.mxu0 %v1738
    %2015 = vmatpush.msra.mxu0 %v1734
    %2016 = vmatpush.msra.mxu0 %v1730
    %2017 = vmatpush.msra.mxu0 %v1726
    %2018 = vmatpush.msra.mxu0 %v1722
    %2019 = vmatpush.msra.mxu0 %v1718
    %2020 = vmatpush.msra.mxu0 %v1714
    %2021 = vmatmul.f32.gmra.mxu0 %v1646
    %v2022 = vpop.f32.mrf.mxu0
    %v2023 = vadd.f32 %v2003, %v2022
    %2024 = vdwg.mxu0
    %2025 = vmatpush.msra.mxu0 %v1838
    %2026 = vmatpush.msra.mxu0 %v1834
    %2027 = vmatpush.msra.mxu0 %v1830
    %2028 = vmatpush.msra.mxu0 %v1826
    %2029 = vmatpush.msra.mxu0 %v1822
    %2030 = vmatpush.msra.mxu0 %v1818
    %2031 = vmatpush.msra.mxu0 %v1814
    %2032 = vmatpush.msra.mxu0 %v1810
    %2033 = vmatpush.msra.mxu0 %v1806
    %2034 = vmatpush.msra.mxu0 %v1802
    %2035 = vmatpush.msra.mxu0 %v1798
    %2036 = vmatpush.msra.mxu0 %v1794
    %2037 = vmatpush.msra.mxu0 %v1790
    %2038 = vmatpush.msra.mxu0 %v1786
    %2039 = vmatpush.msra.mxu0 %v1782
    %2040 = vmatpush.msra.mxu0 %v1778
    %2041 = vmatmul.f32.gmra.mxu0 %v1647
    %v2042 = vpop.f32.mrf.mxu0
    %v2043 = vadd.f32 %v2023, %v2042
    %2044 = vdwg.mxu0
    %2045 = vmatpush.msra.mxu0 %v1902
    %2046 = vmatpush.msra.mxu0 %v1898
    %2047 = vmatpush.msra.mxu0 %v1894
    %2048 = vmatpush.msra.mxu0 %v1890
    %2049 = vmatpush.msra.mxu0 %v1886
    %2050 = vmatpush.msra.mxu0 %v1882
    %2051 = vmatpush.msra.mxu0 %v1878
    %2052 = vmatpush.msra.mxu0 %v1874
    %2053 = vmatpush.msra.mxu0 %v1870
    %2054 = vmatpush.msra.mxu0 %v1866
    %2055 = vmatpush.msra.mxu0 %v1862
    %2056 = vmatpush.msra.mxu0 %v1858
    %2057 = vmatpush.msra.mxu0 %v1854
    %2058 = vmatpush.msra.mxu0 %v1850
    %2059 = vmatpush.msra.mxu0 %v1846
    %2060 = vmatpush.msra.mxu0 %v1842
    %2061 = vmatmul.f32.gmra.mxu0 %v1648
    %v2062 = vpop.f32.mrf.mxu0
    %v2063 = vadd.f32 %v2043, %v2062
    %2064 = vdwg.mxu0
    %2065 = vmatpush.msra.mxu0 %v1711
    %2066 = vmatpush.msra.mxu0 %v1707
    %2067 = vmatpush.msra.mxu0 %v1703
    %2068 = vmatpush.msra.mxu0 %v1699
    %2069 = vmatpush.msra.mxu0 %v1695
    %2070 = vmatpush.msra.mxu0 %v1691
    %2071 = vmatpush.msra.mxu0 %v1687
    %2072 = vmatpush.msra.mxu0 %v1683
    %2073 = vmatpush.msra.mxu0 %v1679
    %2074 = vmatpush.msra.mxu0 %v1675
    %2075 = vmatpush.msra.mxu0 %v1671
    %2076 = vmatpush.msra.mxu0 %v1667
    %2077 = vmatpush.msra.mxu0 %v1663
    %2078 = vmatpush.msra.mxu0 %v1659
    %2079 = vmatpush.msra.mxu0 %v1655
    %2080 = vmatpush.msra.mxu0 %v1651
    %2081 = vmatmul.f32.gmra.mxu0 %v1645
    %v2082 = vpop.f32.mrf.mxu0
    %v2083 = vadd.f32 0.0, %v2082
    %2084 = vdwg.mxu0
    %2085 = vmatpush.msra.mxu0 %v1775
    %2086 = vmatpush.msra.mxu0 %v1771
    %2087 = vmatpush.msra.mxu0 %v1767
    %2088 = vmatpush.msra.mxu0 %v1763
    %2089 = vmatpush.msra.mxu0 %v1759
    %2090 = vmatpush.msra.mxu0 %v1755
    %2091 = vmatpush.msra.mxu0 %v1751
    %2092 = vmatpush.msra.mxu0 %v1747
    %2093 = vmatpush.msra.mxu0 %v1743
    %2094 = vmatpush.msra.mxu0 %v1739
    %2095 = vmatpush.msra.mxu0 %v1735
    %2096 = vmatpush.msra.mxu0 %v1731
    %2097 = vmatpush.msra.mxu0 %v1727
    %2098 = vmatpush.msra.mxu0 %v1723
    %2099 = vmatpush.msra.mxu0 %v1719
    %2100 = vmatpush.msra.mxu0 %v1715
    %2101 = vmatmul.f32.gmra.mxu0 %v1646
    %v2102 = vpop.f32.mrf.mxu0
    %v2103 = vadd.f32 %v2083, %v2102
    %2104 = vdwg.mxu0
    %2105 = vmatpush.msra.mxu0 %v1839
    %2106 = vmatpush.msra.mxu0 %v1835
    %2107 = vmatpush.msra.mxu0 %v1831
    %2108 = vmatpush.msra.mxu0 %v1827
    %2109 = vmatpush.msra.mxu0 %v1823
    %2110 = vmatpush.msra.mxu0 %v1819
    %2111 = vmatpush.msra.mxu0 %v1815
    %2112 = vmatpush.msra.mxu0 %v1811
    %2113 = vmatpush.msra.mxu0 %v1807
    %2114 = vmatpush.msra.mxu0 %v1803
    %2115 = vmatpush.msra.mxu0 %v1799
    %2116 = vmatpush.msra.mxu0 %v1795
    %2117 = vmatpush.msra.mxu0 %v1791
    %2118 = vmatpush.msra.mxu0 %v1787
    %2119 = vmatpush.msra.mxu0 %v1783
    %2120 = vmatpush.msra.mxu0 %v1779
    %2121 = vmatmul.f32.gmra.mxu0 %v1647
    %v2122 = vpop.f32.mrf.mxu0
    %v2123 = vadd.f32 %v2103, %v2122
    %2124 = vdwg.mxu0
    %2125 = vmatpush.msra.mxu0 %v1903
    %2126 = vmatpush.msra.mxu0 %v1899
    %2127 = vmatpush.msra.mxu0 %v1895
    %2128 = vmatpush.msra.mxu0 %v1891
    %2129 = vmatpush.msra.mxu0 %v1887
    %2130 = vmatpush.msra.mxu0 %v1883
    %2131 = vmatpush.msra.mxu0 %v1879
    %2132 = vmatpush.msra.mxu0 %v1875
    %2133 = vmatpush.msra.mxu0 %v1871
    %2134 = vmatpush.msra.mxu0 %v1867
    %2135 = vmatpush.msra.mxu0 %v1863
    %2136 = vmatpush.msra.mxu0 %v1859
    %2137 = vmatpush.msra.mxu0 %v1855
    %2138 = vmatpush.msra.mxu0 %v1851
    %2139 = vmatpush.msra.mxu0 %v1847
    %2140 = vmatpush.msra.mxu0 %v1843
    %2141 = vmatmul.f32.gmra.mxu0 %v1648
    %v2142 = vpop.f32.mrf.mxu0
    %v2143 = vadd.f32 %v2123, %v2142
    %2144 = vdwg.mxu0
    %2145 = vmatpush.msra.mxu0 %v1712
    %2146 = vmatpush.msra.mxu0 %v1708
    %2147 = vmatpush.msra.mxu0 %v1704
    %2148 = vmatpush.msra.mxu0 %v1700
    %2149 = vmatpush.msra.mxu0 %v1696
    %2150 = vmatpush.msra.mxu0 %v1692
    %2151 = vmatpush.msra.mxu0 %v1688
    %2152 = vmatpush.msra.mxu0 %v1684
    %2153 = vmatpush.msra.mxu0 %v1680
    %2154 = vmatpush.msra.mxu0 %v1676
    %2155 = vmatpush.msra.mxu0 %v1672
    %2156 = vmatpush.msra.mxu0 %v1668
    %2157 = vmatpush.msra.mxu0 %v1664
    %2158 = vmatpush.msra.mxu0 %v1660
    %2159 = vmatpush.msra.mxu0 %v1656
    %2160 = vmatpush.msra.mxu0 %v1652
    %2161 = vmatmul.f32.gmra.mxu0 %v1645
    %v2162 = vpop.f32.mrf.mxu0
    %v2163 = vadd.f32 0.0, %v2162
    %2164 = vdwg.mxu0
    %2165 = vmatpush.msra.mxu0 %v1776
    %2166 = vmatpush.msra.mxu0 %v1772
    %2167 = vmatpush.msra.mxu0 %v1768
    %2168 = vmatpush.msra.mxu0 %v1764
    %2169 = vmatpush.msra.mxu0 %v1760
    %2170 = vmatpush.msra.mxu0 %v1756
    %2171 = vmatpush.msra.mxu0 %v1752
    %2172 = vmatpush.msra.mxu0 %v1748
    %2173 = vmatpush.msra.mxu0 %v1744
    %2174 = vmatpush.msra.mxu0 %v1740
    %2175 = vmatpush.msra.mxu0 %v1736
    %2176 = vmatpush.msra.mxu0 %v1732
    %2177 = vmatpush.msra.mxu0 %v1728
    %2178 = vmatpush.msra.mxu0 %v1724
    %2179 = vmatpush.msra.mxu0 %v1720
    %2180 = vmatpush.msra.mxu0 %v1716
    %2181 = vmatmul.f32.gmra.mxu0 %v1646
    %v2182 = vpop.f32.mrf.mxu0
    %v2183 = vadd.f32 %v2163, %v2182
    %2184 = vdwg.mxu0
    %2185 = vmatpush.msra.mxu0 %v1840
    %2186 = vmatpush.msra.mxu0 %v1836
    %2187 = vmatpush.msra.mxu0 %v1832
    %2188 = vmatpush.msra.mxu0 %v1828
    %2189 = vmatpush.msra.mxu0 %v1824
    %2190 = vmatpush.msra.mxu0 %v1820
    %2191 = vmatpush.msra.mxu0 %v1816
    %2192 = vmatpush.msra.mxu0 %v1812
    %2193 = vmatpush.msra.mxu0 %v1808
    %2194 = vmatpush.msra.mxu0 %v1804
    %2195 = vmatpush.msra.mxu0 %v1800
    %2196 = vmatpush.msra.mxu0 %v1796
    %2197 = vmatpush.msra.mxu0 %v1792
    %2198 = vmatpush.msra.mxu0 %v1788
    %2199 = vmatpush.msra.mxu0 %v1784
    %2200 = vmatpush.msra.mxu0 %v1780
    %2201 = vmatmul.f32.gmra.mxu0 %v1647
    %v2202 = vpop.f32.mrf.mxu0
    %v2203 = vadd.f32 %v2183, %v2202
    %2204 = vdwg.mxu0
    %2205 = vmatpush.msra.mxu0 %v1904
    %2206 = vmatpush.msra.mxu0 %v1900
    %2207 = vmatpush.msra.mxu0 %v1896
    %2208 = vmatpush.msra.mxu0 %v1892
    %2209 = vmatpush.msra.mxu0 %v1888
    %2210 = vmatpush.msra.mxu0 %v1884
    %2211 = vmatpush.msra.mxu0 %v1880
    %2212 = vmatpush.msra.mxu0 %v1876
    %2213 = vmatpush.msra.mxu0 %v1872
    %2214 = vmatpush.msra.mxu0 %v1868
    %2215 = vmatpush.msra.mxu0 %v1864
    %2216 = vmatpush.msra.mxu0 %v1860
    %2217 = vmatpush.msra.mxu0 %v1856
    %2218 = vmatpush.msra.mxu0 %v1852
    %2219 = vmatpush.msra.mxu0 %v1848
    %2220 = vmatpush.msra.mxu0 %v1844
    %2221 = vmatmul.f32.gmra.mxu0 %v1648
    %v2222 = vpop.f32.mrf.mxu0
    %v2223 = vadd.f32 %v2203, %v2222
    %2224 = vdwg.mxu0
    %v2225 = vld [vmem:[%s25] sm:$0xff]
    %v2226 = vld [vmem:[%s25 + $0x8] sm:$0xff]
    %v2227 = vld [vmem:[%s25 + $0x10] sm:$0xff]
    %v2228 = vld [vmem:[%s25 + $0x18] sm:$0xff]
    %v2229 = vld [vmem:[%s25 + $0x20] sm:$0xff]
    %v2230 = vld [vmem:[%s25 + $0x28] sm:$0xff]
    %v2231 = vld [vmem:[%s25 + $0x30] sm:$0xff]
    %v2232 = vld [vmem:[%s25 + $0x38] sm:$0xff]
    %v2233 = vld [vmem:[%s25 + $0x40] sm:$0xff]
    %v2234 = vld [vmem:[%s25 + $0x48] sm:$0xff]
    %v2235 = vld [vmem:[%s25 + $0x50] sm:$0xff]
    %v2236 = vld [vmem:[%s25 + $0x58] sm:$0xff]
    %v2237 = vld [vmem:[%s25 + $0x60] sm:$0xff]
    %v2238 = vld [vmem:[%s25 + $0x68] sm:$0xff]
    %v2239 = vld [vmem:[%s25 + $0x70] sm:$0xff]
    %v2240 = vld [vmem:[%s25 + $0x78] sm:$0xff]
    %v2241 = vld [vmem:[%s25 + $0x80] sm:$0xff]
    %v2242 = vld [vmem:[%s25 + $0x88] sm:$0xff]
    %v2243 = vld [vmem:[%s25 + $0x90] sm:$0xff]
    %v2244 = vld [vmem:[%s25 + $0x98] sm:$0xff]
    %v2245 = vld [vmem:[%s25 + $0xa0] sm:$0xff]
    %v2246 = vld [vmem:[%s25 + $0xa8] sm:$0xff]
    %v2247 = vld [vmem:[%s25 + $0xb0] sm:$0xff]
    %v2248 = vld [vmem:[%s25 + $0xb8] sm:$0xff]
    %v2249 = vld [vmem:[%s25 + $0xc0] sm:$0xff]
    %v2250 = vld [vmem:[%s25 + $0xc8] sm:$0xff]
    %v2251 = vld [vmem:[%s25 + $0xd0] sm:$0xff]
    %v2252 = vld [vmem:[%s25 + $0xd8] sm:$0xff]
    %v2253 = vld [vmem:[%s25 + $0xe0] sm:$0xff]
    %v2254 = vld [vmem:[%s25 + $0xe8] sm:$0xff]
    %v2255 = vld [vmem:[%s25 + $0xf0] sm:$0xff]
    %v2256 = vld [vmem:[%s25 + $0xf8] sm:$0xff]
    %v2257 = vld [vmem:[%s25 + $0x100] sm:$0xff]
    %v2258 = vld [vmem:[%s25 + $0x108] sm:$0xff]
    %v2259 = vld [vmem:[%s25 + $0x110] sm:$0xff]
    %v2260 = vld [vmem:[%s25 + $0x118] sm:$0xff]
    %v2261 = vld [vmem:[%s25 + $0x120] sm:$0xff]
    %v2262 = vld [vmem:[%s25 + $0x128] sm:$0xff]
    %v2263 = vld [vmem:[%s25 + $0x130] sm:$0xff]
    %v2264 = vld [vmem:[%s25 + $0x138] sm:$0xff]
    %v2265 = vld [vmem:[%s25 + $0x140] sm:$0xff]
    %v2266 = vld [vmem:[%s25 + $0x148] sm:$0xff]
    %v2267 = vld [vmem:[%s25 + $0x150] sm:$0xff]
    %v2268 = vld [vmem:[%s25 + $0x158] sm:$0xff]
    %v2269 = vld [vmem:[%s25 + $0x160] sm:$0xff]
    %v2270 = vld [vmem:[%s25 + $0x168] sm:$0xff]
    %v2271 = vld [vmem:[%s25 + $0x170] sm:$0xff]
    %v2272 = vld [vmem:[%s25 + $0x178] sm:$0xff]
    %v2273 = vld [vmem:[%s25 + $0x180] sm:$0xff]
    %v2274 = vld [vmem:[%s25 + $0x188] sm:$0xff]
    %v2275 = vld [vmem:[%s25 + $0x190] sm:$0xff]
    %v2276 = vld [vmem:[%s25 + $0x198] sm:$0xff]
    %v2277 = vld [vmem:[%s25 + $0x1a0] sm:$0xff]
    %v2278 = vld [vmem:[%s25 + $0x1a8] sm:$0xff]
    %v2279 = vld [vmem:[%s25 + $0x1b0] sm:$0xff]
    %v2280 = vld [vmem:[%s25 + $0x1b8] sm:$0xff]
    %v2281 = vld [vmem:[%s25 + $0x1c0] sm:$0xff]
    %v2282 = vld [vmem:[%s25 + $0x1c8] sm:$0xff]
    %v2283 = vld [vmem:[%s25 + $0x1d0] sm:$0xff]
    %v2284 = vld [vmem:[%s25 + $0x1d8] sm:$0xff]
    %v2285 = vld [vmem:[%s25 + $0x1e0] sm:$0xff]
    %v2286 = vld [vmem:[%s25 + $0x1e8] sm:$0xff]
    %v2287 = vld [vmem:[%s25 + $0x1f0] sm:$0xff]
    %v2288 = vld [vmem:[%s25 + $0x1f8] sm:$0xff]
    %v2289 = vld [vmem:[%s27] sm:$0xff]
    %v2290 = vld [vmem:[%s27 + $0x8] sm:$0xff]
    %v2291 = vld [vmem:[%s27 + $0x10] sm:$0xff]
    %v2292 = vld [vmem:[%s27 + $0x18] sm:$0xff]
    %v2293 = vld [vmem:[%s27 + $0x20] sm:$0xff]
    %v2294 = vld [vmem:[%s27 + $0x28] sm:$0xff]
    %v2295 = vld [vmem:[%s27 + $0x30] sm:$0xff]
    %v2296 = vld [vmem:[%s27 + $0x38] sm:$0xff]
    %v2297 = vld [vmem:[%s27 + $0x40] sm:$0xff]
    %v2298 = vld [vmem:[%s27 + $0x48] sm:$0xff]
    %v2299 = vld [vmem:[%s27 + $0x50] sm:$0xff]
    %v2300 = vld [vmem:[%s27 + $0x58] sm:$0xff]
    %v2301 = vld [vmem:[%s27 + $0x60] sm:$0xff]
    %v2302 = vld [vmem:[%s27 + $0x68] sm:$0xff]
    %v2303 = vld [vmem:[%s27 + $0x70] sm:$0xff]
    %v2304 = vld [vmem:[%s27 + $0x78] sm:$0xff]
    %v2305 = vld [vmem:[%s29] sm:$0x1]
    %v2306 = vld [vmem:[%s31] sm:$0x1]
    %v2307 = vsel %vm431, %v1983, 0.0
    %v2308 = vrot.slane %v2307, 4
    %v2309 = vadd.f32 %v2307, %v2308
    %v2310 = vrot.slane %v2309, 2
    %v2311 = vadd.f32 %v2309, %v2310
    %v2312 = vrot.slane %v2311, 1
    %v2313 = vadd.f32 %v2311, %v2312
    %v2314 = vsel %vm431, %v2063, 0.0
    %v2315 = vrot.slane %v2314, 4
    %v2316 = vadd.f32 %v2314, %v2315
    %v2317 = vrot.slane %v2316, 2
    %v2318 = vadd.f32 %v2316, %v2317
    %v2319 = vrot.slane %v2318, 1
    %v2320 = vadd.f32 %v2318, %v2319
    %v2321 = vsel %vm431, %v2143, 0.0
    %v2322 = vrot.slane %v2321, 4
    %v2323 = vadd.f32 %v2321, %v2322
    %v2324 = vrot.slane %v2323, 2
    %v2325 = vadd.f32 %v2323, %v2324
    %v2326 = vrot.slane %v2325, 1
    %v2327 = vadd.f32 %v2325, %v2326
    %v2328 = vsel %vm431, %v2223, 0.0
    %v2329 = vrot.slane %v2328, 4
    %v2330 = vadd.f32 %v2328, %v2329
    %v2331 = vrot.slane %v2330, 2
    %v2332 = vadd.f32 %v2330, %v2331
    %v2333 = vrot.slane %v2332, 1
    %v2334 = vadd.f32 %v2332, %v2333
    %v2335 = vmul.f32 %v1983, %v1983
    %v2336 = vmul.f32 %v2063, %v2063
    %v2337 = vmul.f32 %v2143, %v2143
    %v2338 = vmul.f32 %v2223, %v2223
    %v2339 = vsel %vm431, %v2335, 0.0
    %v2340 = vrot.slane %v2339, 4
    %v2341 = vadd.f32 %v2339, %v2340
    %v2342 = vrot.slane %v2341, 2
    %v2343 = vadd.f32 %v2341, %v2342
    %v2344 = vrot.slane %v2343, 1
    %v2345 = vadd.f32 %v2343, %v2344
    %v2346 = vsel %vm431, %v2336, 0.0
    %v2347 = vrot.slane %v2346, 4
    %v2348 = vadd.f32 %v2346, %v2347
    %v2349 = vrot.slane %v2348, 2
    %v2350 = vadd.f32 %v2348, %v2349
    %v2351 = vrot.slane %v2350, 1
    %v2352 = vadd.f32 %v2350, %v2351
    %v2353 = vsel %vm431, %v2337, 0.0
    %v2354 = vrot.slane %v2353, 4
    %v2355 = vadd.f32 %v2353, %v2354
    %v2356 = vrot.slane %v2355, 2
    %v2357 = vadd.f32 %v2355, %v2356
    %v2358 = vrot.slane %v2357, 1
    %v2359 = vadd.f32 %v2357, %v2358
    %v2360 = vsel %vm431, %v2338, 0.0
    %v2361 = vrot.slane %v2360, 4
    %v2362 = vadd.f32 %v2360, %v2361
    %v2363 = vrot.slane %v2362, 2
    %v2364 = vadd.f32 %v2362, %v2363
    %v2365 = vrot.slane %v2364, 1
    %v2366 = vadd.f32 %v2364, %v2365
    %v2367 = vsel %vm492, %v2313, %v2345
    %v2368 = vsel %vm492, %v2320, %v2352
    %v2369 = vsel %vm492, %v2327, %v2359
    %v2370 = vsel %vm492, %v2334, %v2366
    %2371 = vmatpush.msra.mxu0 %v2240
    %2372 = vmatpush.msra.mxu0 %v2239
    %2373 = vmatpush.msra.mxu0 %v2238
    %2374 = vmatpush.msra.mxu0 %v2237
    %2375 = vmatpush.msra.mxu0 %v2236
    %2376 = vmatpush.msra.mxu0 %v2235
    %2377 = vmatpush.msra.mxu0 %v2234
    %2378 = vmatpush.msra.mxu0 %v2233
    %2379 = vmatpush.msra.mxu0 %v2232
    %2380 = vmatpush.msra.mxu0 %v2231
    %2381 = vmatpush.msra.mxu0 %v2230
    %2382 = vmatpush.msra.mxu0 %v2229
    %2383 = vmatpush.msra.mxu0 %v2228
    %2384 = vmatpush.msra.mxu0 %v2227
    %2385 = vmatpush.msra.mxu0 %v2226
    %2386 = vmatpush.msra.mxu0 %v2225
    %2387 = vmatmul.f32.gmra.mxu0 %v2367
    %v2388 = vpop.f32.mrf.mxu0
    %v2389 = vadd.f32 0.0, %v2388
    %2390 = vdwg.mxu0
    %2391 = vmatpush.msra.mxu0 %v2256
    %2392 = vmatpush.msra.mxu0 %v2255
    %2393 = vmatpush.msra.mxu0 %v2254
    %2394 = vmatpush.msra.mxu0 %v2253
    %2395 = vmatpush.msra.mxu0 %v2252
    %2396 = vmatpush.msra.mxu0 %v2251
    %2397 = vmatpush.msra.mxu0 %v2250
    %2398 = vmatpush.msra.mxu0 %v2249
    %2399 = vmatpush.msra.mxu0 %v2248
    %2400 = vmatpush.msra.mxu0 %v2247
    %2401 = vmatpush.msra.mxu0 %v2246
    %2402 = vmatpush.msra.mxu0 %v2245
    %2403 = vmatpush.msra.mxu0 %v2244
    %2404 = vmatpush.msra.mxu0 %v2243
    %2405 = vmatpush.msra.mxu0 %v2242
    %2406 = vmatpush.msra.mxu0 %v2241
    %2407 = vmatmul.f32.gmra.mxu0 %v2368
    %v2408 = vpop.f32.mrf.mxu0
    %v2409 = vadd.f32 %v2389, %v2408
    %2410 = vdwg.mxu0
    %2411 = vmatpush.msra.mxu0 %v2272
    %2412 = vmatpush.msra.mxu0 %v2271
    %2413 = vmatpush.msra.mxu0 %v2270
    %2414 = vmatpush.msra.mxu0 %v2269
    %2415 = vmatpush.msra.mxu0 %v2268
    %2416 = vmatpush.msra.mxu0 %v2267
    %2417 = vmatpush.msra.mxu0 %v2266
    %2418 = vmatpush.msra.mxu0 %v2265
    %2419 = vmatpush.msra.mxu0 %v2264
    %2420 = vmatpush.msra.mxu0 %v2263
    %2421 = vmatpush.msra.mxu0 %v2262
    %2422 = vmatpush.msra.mxu0 %v2261
    %2423 = vmatpush.msra.mxu0 %v2260
    %2424 = vmatpush.msra.mxu0 %v2259
    %2425 = vmatpush.msra.mxu0 %v2258
    %2426 = vmatpush.msra.mxu0 %v2257
    %2427 = vmatmul.f32.gmra.mxu0 %v2369
    %v2428 = vpop.f32.mrf.mxu0
    %v2429 = vadd.f32 %v2409, %v2428
    %2430 = vdwg.mxu0
    %2431 = vmatpush.msra.mxu0 %v2288
    %2432 = vmatpush.msra.mxu0 %v2287
    %2433 = vmatpush.msra.mxu0 %v2286
    %2434 = vmatpush.msra.mxu0 %v2285
    %2435 = vmatpush.msra.mxu0 %v2284
    %2436 = vmatpush.msra.mxu0 %v2283
    %2437 = vmatpush.msra.mxu0 %v2282
    %2438 = vmatpush.msra.mxu0 %v2281
    %2439 = vmatpush.msra.mxu0 %v2280
    %2440 = vmatpush.msra.mxu0 %v2279
    %2441 = vmatpush.msra.mxu0 %v2278
    %2442 = vmatpush.msra.mxu0 %v2277
    %2443 = vmatpush.msra.mxu0 %v2276
    %2444 = vmatpush.msra.mxu0 %v2275
    %2445 = vmatpush.msra.mxu0 %v2274
    %2446 = vmatpush.msra.mxu0 %v2273
    %2447 = vmatmul.f32.gmra.mxu0 %v2370
    %v2448 = vpop.f32.mrf.mxu0
    %v2449 = vadd.f32 %v2429, %v2448
    %2450 = vdwg.mxu0
    %v2451 = vmul.f32 %v2449, 0.5
    %v2452 = vmul.f32 %v2451, %v2451
    %v2454 = vrot.slane %v2452, 7
    %v2456 = vsub.f32 %v2451, %v2454
    %v2457 = vadd.f32 %v2456, 1e-05
    %v2458 = vrsqrt.pop %v2457
    %v2459 = vmul.f32 %v2458, %v2457
    %v2460 = vmul.f32 %v2459, %v2458
    %v2461 = vmul.f32 0.5, %v2460
    %v2462 = vsub.f32 1.5, %v2461
    %v2463 = vmul.f32 %v2458, %v2462
    %vm2464 = vweird.f32 %v2457
    %vm2465 = vweird.f32 %v2458
    %vm2466 = vmor %vm2464, %vm2465
    %v2467 = vsel %vm2466, %v2458, %v2463
    %2469 = vst [vmem:[#allocation1] sm:$0xff] %v2467
    %s2470 = scalar_lea.vmem [#allocation1], 1
    %v2471 = vld [vmem:[%s2470] ss:$9 sm:$0xff]
    %v2473 = vmul.f32 %v2305, %v2471
    %v2474 = vmul.f32 %v2451, %v2473
    %v2475 = vsub.f32 %v2306, %v2474
    %v2477 = vperm.slane %v2475, 0
    %v2479 = vsel %vm492, %v2473, %v2477
    %vm2480 = vcmask 261120
    %v2482 = vsel %vm2480, %v2479, 0
    %2484 = vmatpush.msra.mxu0 0.0
    %2485 = vmatpush.msra.mxu0 0.0
    %2486 = vmatpush.msra.mxu0 0.0
    %2487 = vmatpush.msra.mxu0 0.0
    %2488 = vmatpush.msra.mxu0 0.0
    %2489 = vmatpush.msra.mxu0 0.0
    %2490 = vmatpush.msra.mxu0 0.0
    %2491 = vmatpush.msra.mxu0 0.0
    %2492 = vmatpush.msra.mxu0 0.0
    %2493 = vmatpush.msra.mxu0 0.0
    %2494 = vmatpush.msra.mxu0 0.0
    %2495 = vmatpush.msra.mxu0 0.0
    %2496 = vmatpush.msra.mxu0 %v2301
    %2497 = vmatpush.msra.mxu0 %v2297
    %2498 = vmatpush.msra.mxu0 %v2293
    %2499 = vmatpush.msra.mxu0 %v2289
    %2500 = vmatmul.f32.gmra.mxu0 %v2482
    %v2501 = vpop.f32.mrf.mxu0
    %v2502 = vadd.f32 0.0, %v2501
    %2503 = vdwg.mxu0
    %2504 = vmatpush.msra.mxu0 0.0
    %2505 = vmatpush.msra.mxu0 0.0
    %2506 = vmatpush.msra.mxu0 0.0
    %2507 = vmatpush.msra.mxu0 0.0
    %2508 = vmatpush.msra.mxu0 0.0
    %2509 = vmatpush.msra.mxu0 0.0
    %2510 = vmatpush.msra.mxu0 0.0
    %2511 = vmatpush.msra.mxu0 0.0
    %2512 = vmatpush.msra.mxu0 0.0
    %2513 = vmatpush.msra.mxu0 0.0
    %2514 = vmatpush.msra.mxu0 0.0
    %2515 = vmatpush.msra.mxu0 0.0
    %2516 = vmatpush.msra.mxu0 %v2302
    %2517 = vmatpush.msra.mxu0 %v2298
    %2518 = vmatpush.msra.mxu0 %v2294
    %2519 = vmatpush.msra.mxu0 %v2290
    %2520 = vmatmul.f32.gmra.mxu0 %v2482
    %v2521 = vpop.f32.mrf.mxu0
    %v2522 = vadd.f32 0.0, %v2521
    %2523 = vdwg.mxu0
    %2524 = vmatpush.msra.mxu0 0.0
    %2525 = vmatpush.msra.mxu0 0.0
    %2526 = vmatpush.msra.mxu0 0.0
    %2527 = vmatpush.msra.mxu0 0.0
    %2528 = vmatpush.msra.mxu0 0.0
    %2529 = vmatpush.msra.mxu0 0.0
    %2530 = vmatpush.msra.mxu0 0.0
    %2531 = vmatpush.msra.mxu0 0.0
    %2532 = vmatpush.msra.mxu0 0.0
    %2533 = vmatpush.msra.mxu0 0.0
    %2534 = vmatpush.msra.mxu0 0.0
    %2535 = vmatpush.msra.mxu0 0.0
    %2536 = vmatpush.msra.mxu0 %v2303
    %2537 = vmatpush.msra.mxu0 %v2299
    %2538 = vmatpush.msra.mxu0 %v2295
    %2539 = vmatpush.msra.mxu0 %v2291
    %2540 = vmatmul.f32.gmra.mxu0 %v2482
    %v2541 = vpop.f32.mrf.mxu0
    %v2542 = vadd.f32 0.0, %v2541
    %2543 = vdwg.mxu0
    %2544 = vmatpush.msra.mxu0 0.0
    %2545 = vmatpush.msra.mxu0 0.0
    %2546 = vmatpush.msra.mxu0 0.0
    %2547 = vmatpush.msra.mxu0 0.0
    %2548 = vmatpush.msra.mxu0 0.0
    %2549 = vmatpush.msra.mxu0 0.0
    %2550 = vmatpush.msra.mxu0 0.0
    %2551 = vmatpush.msra.mxu0 0.0
    %2552 = vmatpush.msra.mxu0 0.0
    %2553 = vmatpush.msra.mxu0 0.0
    %2554 = vmatpush.msra.mxu0 0.0
    %2555 = vmatpush.msra.mxu0 0.0
    %2556 = vmatpush.msra.mxu0 %v2304
    %2557 = vmatpush.msra.mxu0 %v2300
    %2558 = vmatpush.msra.mxu0 %v2296
    %2559 = vmatpush.msra.mxu0 %v2292
    %2560 = vmatmul.f32.gmra.mxu0 %v2482
    %v2561 = vpop.f32.mrf.mxu0
    %v2562 = vadd.f32 0.0, %v2561
    %2563 = vdwg.mxu0
    %v2564 = vperm.slane %v2502, 0
    %v2565 = vperm.slane %v2522, 0
    %v2566 = vperm.slane %v2542, 0
    %v2567 = vperm.slane %v2562, 0
    %v2568 = vmul.f32 %v1983, %v2564
    %v2569 = vmul.f32 %v2063, %v2565
    %v2570 = vmul.f32 %v2143, %v2566
    %v2571 = vmul.f32 %v2223, %v2567
    %v2572 = vperm.slane %v2502, 1
    %v2573 = vperm.slane %v2522, 1
    %v2574 = vperm.slane %v2542, 1
    %v2575 = vperm.slane %v2562, 1
    %v2576 = vadd.f32 %v2568, %v2572
    %v2577 = vadd.f32 %v2569, %v2573
    %v2578 = vadd.f32 %v2570, %v2574
    %v2579 = vadd.f32 %v2571, %v2575
    %v2580 = vld [vmem:[#allocation6] sm:$0xff]
    %v2581 = vld [vmem:[#allocation6 + $0x8] sm:$0xff]
    %v2582 = vld [vmem:[#allocation6 + $0x10] sm:$0xff]
    %v2583 = vld [vmem:[#allocation6 + $0x18] sm:$0xff]
    %v2584 = vld [vmem:[#allocation6 + $0x20] sm:$0xff]
    %v2585 = vld [vmem:[#allocation6 + $0x28] sm:$0xff]
    %v2586 = vld [vmem:[#allocation6 + $0x30] sm:$0xff]
    %v2587 = vld [vmem:[#allocation6 + $0x38] sm:$0xff]
    %v2588 = vld [vmem:[#allocation6 + $0x40] sm:$0xff]
    %v2589 = vld [vmem:[#allocation6 + $0x48] sm:$0xff]
    %v2590 = vld [vmem:[#allocation6 + $0x50] sm:$0xff]
    %v2591 = vld [vmem:[#allocation6 + $0x58] sm:$0xff]
    %v2592 = vld [vmem:[#allocation6 + $0x60] sm:$0xff]
    %v2593 = vld [vmem:[#allocation6 + $0x68] sm:$0xff]
    %v2594 = vld [vmem:[#allocation6 + $0x70] sm:$0xff]
    %v2595 = vld [vmem:[#allocation6 + $0x78] sm:$0xff]
    %v2596 = vld [vmem:[#allocation6 + $0x80] sm:$0xff]
    %v2597 = vld [vmem:[#allocation6 + $0x88] sm:$0xff]
    %v2598 = vld [vmem:[#allocation6 + $0x90] sm:$0xff]
    %v2599 = vld [vmem:[#allocation6 + $0x98] sm:$0xff]
    %v2600 = vld [vmem:[#allocation6 + $0xa0] sm:$0xff]
    %v2601 = vld [vmem:[#allocation6 + $0xa8] sm:$0xff]
    %v2602 = vld [vmem:[#allocation6 + $0xb0] sm:$0xff]
    %v2603 = vld [vmem:[#allocation6 + $0xb8] sm:$0xff]
    %v2604 = vld [vmem:[#allocation6 + $0xc0] sm:$0xff]
    %v2605 = vld [vmem:[#allocation6 + $0xc8] sm:$0xff]
    %v2606 = vld [vmem:[#allocation6 + $0xd0] sm:$0xff]
    %v2607 = vld [vmem:[#allocation6 + $0xd8] sm:$0xff]
    %v2608 = vld [vmem:[#allocation6 + $0xe0] sm:$0xff]
    %v2609 = vld [vmem:[#allocation6 + $0xe8] sm:$0xff]
    %v2610 = vld [vmem:[#allocation6 + $0xf0] sm:$0xff]
    %v2611 = vld [vmem:[#allocation6 + $0xf8] sm:$0xff]
    %v2612 = vld [vmem:[#allocation6 + $0x100] sm:$0xff]
    %v2613 = vld [vmem:[#allocation6 + $0x108] sm:$0xff]
    %v2614 = vld [vmem:[#allocation6 + $0x110] sm:$0xff]
    %v2615 = vld [vmem:[#allocation6 + $0x118] sm:$0xff]
    %v2616 = vld [vmem:[#allocation6 + $0x120] sm:$0xff]
    %v2617 = vld [vmem:[#allocation6 + $0x128] sm:$0xff]
    %v2618 = vld [vmem:[#allocation6 + $0x130] sm:$0xff]
    %v2619 = vld [vmem:[#allocation6 + $0x138] sm:$0xff]
    %v2620 = vld [vmem:[#allocation6 + $0x140] sm:$0xff]
    %v2621 = vld [vmem:[#allocation6 + $0x148] sm:$0xff]
    %v2622 = vld [vmem:[#allocation6 + $0x150] sm:$0xff]
    %v2623 = vld [vmem:[#allocation6 + $0x158] sm:$0xff]
    %v2624 = vld [vmem:[#allocation6 + $0x160] sm:$0xff]
    %v2625 = vld [vmem:[#allocation6 + $0x168] sm:$0xff]
    %v2626 = vld [vmem:[#allocation6 + $0x170] sm:$0xff]
    %v2627 = vld [vmem:[#allocation6 + $0x178] sm:$0xff]
    %v2628 = vld [vmem:[#allocation6 + $0x180] sm:$0xff]
    %v2629 = vld [vmem:[#allocation6 + $0x188] sm:$0xff]
    %v2630 = vld [vmem:[#allocation6 + $0x190] sm:$0xff]
    %v2631 = vld [vmem:[#allocation6 + $0x198] sm:$0xff]
    %v2632 = vld [vmem:[#allocation6 + $0x1a0] sm:$0xff]
    %v2633 = vld [vmem:[#allocation6 + $0x1a8] sm:$0xff]
    %v2634 = vld [vmem:[#allocation6 + $0x1b0] sm:$0xff]
    %v2635 = vld [vmem:[#allocation6 + $0x1b8] sm:$0xff]
    %v2636 = vld [vmem:[#allocation6 + $0x1c0] sm:$0xff]
    %v2637 = vld [vmem:[#allocation6 + $0x1c8] sm:$0xff]
    %v2638 = vld [vmem:[#allocation6 + $0x1d0] sm:$0xff]
    %v2639 = vld [vmem:[#allocation6 + $0x1d8] sm:$0xff]
    %v2640 = vld [vmem:[#allocation6 + $0x1e0] sm:$0xff]
    %v2641 = vld [vmem:[#allocation6 + $0x1e8] sm:$0xff]
    %v2642 = vld [vmem:[#allocation6 + $0x1f0] sm:$0xff]
    %v2643 = vld [vmem:[#allocation6 + $0x1f8] sm:$0xff]
    %v2644 = vld [vmem:[#allocation6 + $0x200] sm:$0xff]
    %v2645 = vld [vmem:[#allocation6 + $0x208] sm:$0xff]
    %v2646 = vld [vmem:[#allocation6 + $0x210] sm:$0xff]
    %v2647 = vld [vmem:[#allocation6 + $0x218] sm:$0xff]
    %v2648 = vld [vmem:[#allocation6 + $0x220] sm:$0xff]
    %v2649 = vld [vmem:[#allocation6 + $0x228] sm:$0xff]
    %v2650 = vld [vmem:[#allocation6 + $0x230] sm:$0xff]
    %v2651 = vld [vmem:[#allocation6 + $0x238] sm:$0xff]
    %v2652 = vld [vmem:[#allocation6 + $0x240] sm:$0xff]
    %v2653 = vld [vmem:[#allocation6 + $0x248] sm:$0xff]
    %v2654 = vld [vmem:[#allocation6 + $0x250] sm:$0xff]
    %v2655 = vld [vmem:[#allocation6 + $0x258] sm:$0xff]
    %v2656 = vld [vmem:[#allocation6 + $0x260] sm:$0xff]
    %v2657 = vld [vmem:[#allocation6 + $0x268] sm:$0xff]
    %v2658 = vld [vmem:[#allocation6 + $0x270] sm:$0xff]
    %v2659 = vld [vmem:[#allocation6 + $0x278] sm:$0xff]
    %v2660 = vld [vmem:[#allocation6 + $0x280] sm:$0xff]
    %v2661 = vld [vmem:[#allocation6 + $0x288] sm:$0xff]
    %v2662 = vld [vmem:[#allocation6 + $0x290] sm:$0xff]
    %v2663 = vld [vmem:[#allocation6 + $0x298] sm:$0xff]
    %v2664 = vld [vmem:[#allocation6 + $0x2a0] sm:$0xff]
    %v2665 = vld [vmem:[#allocation6 + $0x2a8] sm:$0xff]
    %v2666 = vld [vmem:[#allocation6 + $0x2b0] sm:$0xff]
    %v2667 = vld [vmem:[#allocation6 + $0x2b8] sm:$0xff]
    %v2668 = vld [vmem:[#allocation6 + $0x2c0] sm:$0xff]
    %v2669 = vld [vmem:[#allocation6 + $0x2c8] sm:$0xff]
    %v2670 = vld [vmem:[#allocation6 + $0x2d0] sm:$0xff]
    %v2671 = vld [vmem:[#allocation6 + $0x2d8] sm:$0xff]
    %v2672 = vld [vmem:[#allocation6 + $0x2e0] sm:$0xff]
    %v2673 = vld [vmem:[#allocation6 + $0x2e8] sm:$0xff]
    %v2674 = vld [vmem:[#allocation6 + $0x2f0] sm:$0xff]
    %v2675 = vld [vmem:[#allocation6 + $0x2f8] sm:$0xff]
    %v2676 = vld [vmem:[#allocation6 + $0x300] sm:$0xff]
    %v2677 = vld [vmem:[#allocation6 + $0x308] sm:$0xff]
    %v2678 = vld [vmem:[#allocation6 + $0x310] sm:$0xff]
    %v2679 = vld [vmem:[#allocation6 + $0x318] sm:$0xff]
    %v2680 = vld [vmem:[#allocation6 + $0x320] sm:$0xff]
    %v2681 = vld [vmem:[#allocation6 + $0x328] sm:$0xff]
    %v2682 = vld [vmem:[#allocation6 + $0x330] sm:$0xff]
    %v2683 = vld [vmem:[#allocation6 + $0x338] sm:$0xff]
    %v2684 = vld [vmem:[#allocation6 + $0x340] sm:$0xff]
    %v2685 = vld [vmem:[#allocation6 + $0x348] sm:$0xff]
    %v2686 = vld [vmem:[#allocation6 + $0x350] sm:$0xff]
    %v2687 = vld [vmem:[#allocation6 + $0x358] sm:$0xff]
    %v2688 = vld [vmem:[#allocation6 + $0x360] sm:$0xff]
    %v2689 = vld [vmem:[#allocation6 + $0x368] sm:$0xff]
    %v2690 = vld [vmem:[#allocation6 + $0x370] sm:$0xff]
    %v2691 = vld [vmem:[#allocation6 + $0x378] sm:$0xff]
    %v2692 = vld [vmem:[#allocation6 + $0x380] sm:$0xff]
    %v2693 = vld [vmem:[#allocation6 + $0x388] sm:$0xff]
    %v2694 = vld [vmem:[#allocation6 + $0x390] sm:$0xff]
    %v2695 = vld [vmem:[#allocation6 + $0x398] sm:$0xff]
    %v2696 = vld [vmem:[#allocation6 + $0x3a0] sm:$0xff]
    %v2697 = vld [vmem:[#allocation6 + $0x3a8] sm:$0xff]
    %v2698 = vld [vmem:[#allocation6 + $0x3b0] sm:$0xff]
    %v2699 = vld [vmem:[#allocation6 + $0x3b8] sm:$0xff]
    %v2700 = vld [vmem:[#allocation6 + $0x3c0] sm:$0xff]
    %v2701 = vld [vmem:[#allocation6 + $0x3c8] sm:$0xff]
    %v2702 = vld [vmem:[#allocation6 + $0x3d0] sm:$0xff]
    %v2703 = vld [vmem:[#allocation6 + $0x3d8] sm:$0xff]
    %v2704 = vld [vmem:[#allocation6 + $0x3e0] sm:$0xff]
    %v2705 = vld [vmem:[#allocation6 + $0x3e8] sm:$0xff]
    %v2706 = vld [vmem:[#allocation6 + $0x3f0] sm:$0xff]
    %v2707 = vld [vmem:[#allocation6 + $0x3f8] sm:$0xff]
    %v2708 = vld [vmem:[#allocation6 + $0x400] sm:$0xff]
    %v2709 = vld [vmem:[#allocation6 + $0x408] sm:$0xff]
    %v2710 = vld [vmem:[#allocation6 + $0x410] sm:$0xff]
    %v2711 = vld [vmem:[#allocation6 + $0x418] sm:$0xff]
    %v2712 = vld [vmem:[#allocation6 + $0x420] sm:$0xff]
    %v2713 = vld [vmem:[#allocation6 + $0x428] sm:$0xff]
    %v2714 = vld [vmem:[#allocation6 + $0x430] sm:$0xff]
    %v2715 = vld [vmem:[#allocation6 + $0x438] sm:$0xff]
    %v2716 = vld [vmem:[#allocation6 + $0x440] sm:$0xff]
    %v2717 = vld [vmem:[#allocation6 + $0x448] sm:$0xff]
    %v2718 = vld [vmem:[#allocation6 + $0x450] sm:$0xff]
    %v2719 = vld [vmem:[#allocation6 + $0x458] sm:$0xff]
    %v2720 = vld [vmem:[#allocation6 + $0x460] sm:$0xff]
    %v2721 = vld [vmem:[#allocation6 + $0x468] sm:$0xff]
    %v2722 = vld [vmem:[#allocation6 + $0x470] sm:$0xff]
    %v2723 = vld [vmem:[#allocation6 + $0x478] sm:$0xff]
    %v2724 = vld [vmem:[#allocation6 + $0x480] sm:$0xff]
    %v2725 = vld [vmem:[#allocation6 + $0x488] sm:$0xff]
    %v2726 = vld [vmem:[#allocation6 + $0x490] sm:$0xff]
    %v2727 = vld [vmem:[#allocation6 + $0x498] sm:$0xff]
    %v2728 = vld [vmem:[#allocation6 + $0x4a0] sm:$0xff]
    %v2729 = vld [vmem:[#allocation6 + $0x4a8] sm:$0xff]
    %v2730 = vld [vmem:[#allocation6 + $0x4b0] sm:$0xff]
    %v2731 = vld [vmem:[#allocation6 + $0x4b8] sm:$0xff]
    %v2732 = vld [vmem:[#allocation6 + $0x4c0] sm:$0xff]
    %v2733 = vld [vmem:[#allocation6 + $0x4c8] sm:$0xff]
    %v2734 = vld [vmem:[#allocation6 + $0x4d0] sm:$0xff]
    %v2735 = vld [vmem:[#allocation6 + $0x4d8] sm:$0xff]
    %v2736 = vld [vmem:[#allocation6 + $0x4e0] sm:$0xff]
    %v2737 = vld [vmem:[#allocation6 + $0x4e8] sm:$0xff]
    %v2738 = vld [vmem:[#allocation6 + $0x4f0] sm:$0xff]
    %v2739 = vld [vmem:[#allocation6 + $0x4f8] sm:$0xff]
    %v2740 = vld [vmem:[#allocation6 + $0x500] sm:$0xff]
    %v2741 = vld [vmem:[#allocation6 + $0x508] sm:$0xff]
    %v2742 = vld [vmem:[#allocation6 + $0x510] sm:$0xff]
    %v2743 = vld [vmem:[#allocation6 + $0x518] sm:$0xff]
    %v2744 = vld [vmem:[#allocation6 + $0x520] sm:$0xff]
    %v2745 = vld [vmem:[#allocation6 + $0x528] sm:$0xff]
    %v2746 = vld [vmem:[#allocation6 + $0x530] sm:$0xff]
    %v2747 = vld [vmem:[#allocation6 + $0x538] sm:$0xff]
    %v2748 = vld [vmem:[#allocation6 + $0x540] sm:$0xff]
    %v2749 = vld [vmem:[#allocation6 + $0x548] sm:$0xff]
    %v2750 = vld [vmem:[#allocation6 + $0x550] sm:$0xff]
    %v2751 = vld [vmem:[#allocation6 + $0x558] sm:$0xff]
    %v2752 = vld [vmem:[#allocation6 + $0x560] sm:$0xff]
    %v2753 = vld [vmem:[#allocation6 + $0x568] sm:$0xff]
    %v2754 = vld [vmem:[#allocation6 + $0x570] sm:$0xff]
    %v2755 = vld [vmem:[#allocation6 + $0x578] sm:$0xff]
    %v2756 = vld [vmem:[#allocation6 + $0x580] sm:$0xff]
    %v2757 = vld [vmem:[#allocation6 + $0x588] sm:$0xff]
    %v2758 = vld [vmem:[#allocation6 + $0x590] sm:$0xff]
    %v2759 = vld [vmem:[#allocation6 + $0x598] sm:$0xff]
    %v2760 = vld [vmem:[#allocation6 + $0x5a0] sm:$0xff]
    %v2761 = vld [vmem:[#allocation6 + $0x5a8] sm:$0xff]
    %v2762 = vld [vmem:[#allocation6 + $0x5b0] sm:$0xff]
    %v2763 = vld [vmem:[#allocation6 + $0x5b8] sm:$0xff]
    %v2764 = vld [vmem:[#allocation6 + $0x5c0] sm:$0xff]
    %v2765 = vld [vmem:[#allocation6 + $0x5c8] sm:$0xff]
    %v2766 = vld [vmem:[#allocation6 + $0x5d0] sm:$0xff]
    %v2767 = vld [vmem:[#allocation6 + $0x5d8] sm:$0xff]
    %v2768 = vld [vmem:[#allocation6 + $0x5e0] sm:$0xff]
    %v2769 = vld [vmem:[#allocation6 + $0x5e8] sm:$0xff]
    %v2770 = vld [vmem:[#allocation6 + $0x5f0] sm:$0xff]
    %v2771 = vld [vmem:[#allocation6 + $0x5f8] sm:$0xff]
    %v2772 = vld [vmem:[#allocation6 + $0x600] sm:$0xff]
    %v2773 = vld [vmem:[#allocation6 + $0x608] sm:$0xff]
    %v2774 = vld [vmem:[#allocation6 + $0x610] sm:$0xff]
    %v2775 = vld [vmem:[#allocation6 + $0x618] sm:$0xff]
    %v2776 = vld [vmem:[#allocation6 + $0x620] sm:$0xff]
    %v2777 = vld [vmem:[#allocation6 + $0x628] sm:$0xff]
    %v2778 = vld [vmem:[#allocation6 + $0x630] sm:$0xff]
    %v2779 = vld [vmem:[#allocation6 + $0x638] sm:$0xff]
    %v2780 = vld [vmem:[#allocation6 + $0x640] sm:$0xff]
    %v2781 = vld [vmem:[#allocation6 + $0x648] sm:$0xff]
    %v2782 = vld [vmem:[#allocation6 + $0x650] sm:$0xff]
    %v2783 = vld [vmem:[#allocation6 + $0x658] sm:$0xff]
    %v2784 = vld [vmem:[#allocation6 + $0x660] sm:$0xff]
    %v2785 = vld [vmem:[#allocation6 + $0x668] sm:$0xff]
    %v2786 = vld [vmem:[#allocation6 + $0x670] sm:$0xff]
    %v2787 = vld [vmem:[#allocation6 + $0x678] sm:$0xff]
    %v2788 = vld [vmem:[#allocation6 + $0x680] sm:$0xff]
    %v2789 = vld [vmem:[#allocation6 + $0x688] sm:$0xff]
    %v2790 = vld [vmem:[#allocation6 + $0x690] sm:$0xff]
    %v2791 = vld [vmem:[#allocation6 + $0x698] sm:$0xff]
    %v2792 = vld [vmem:[#allocation6 + $0x6a0] sm:$0xff]
    %v2793 = vld [vmem:[#allocation6 + $0x6a8] sm:$0xff]
    %v2794 = vld [vmem:[#allocation6 + $0x6b0] sm:$0xff]
    %v2795 = vld [vmem:[#allocation6 + $0x6b8] sm:$0xff]
    %v2796 = vld [vmem:[#allocation6 + $0x6c0] sm:$0xff]
    %v2797 = vld [vmem:[#allocation6 + $0x6c8] sm:$0xff]
    %v2798 = vld [vmem:[#allocation6 + $0x6d0] sm:$0xff]
    %v2799 = vld [vmem:[#allocation6 + $0x6d8] sm:$0xff]
    %v2800 = vld [vmem:[#allocation6 + $0x6e0] sm:$0xff]
    %v2801 = vld [vmem:[#allocation6 + $0x6e8] sm:$0xff]
    %v2802 = vld [vmem:[#allocation6 + $0x6f0] sm:$0xff]
    %v2803 = vld [vmem:[#allocation6 + $0x6f8] sm:$0xff]
    %v2804 = vld [vmem:[#allocation6 + $0x700] sm:$0xff]
    %v2805 = vld [vmem:[#allocation6 + $0x708] sm:$0xff]
    %v2806 = vld [vmem:[#allocation6 + $0x710] sm:$0xff]
    %v2807 = vld [vmem:[#allocation6 + $0x718] sm:$0xff]
    %v2808 = vld [vmem:[#allocation6 + $0x720] sm:$0xff]
    %v2809 = vld [vmem:[#allocation6 + $0x728] sm:$0xff]
    %v2810 = vld [vmem:[#allocation6 + $0x730] sm:$0xff]
    %v2811 = vld [vmem:[#allocation6 + $0x738] sm:$0xff]
    %v2812 = vld [vmem:[#allocation6 + $0x740] sm:$0xff]
    %v2813 = vld [vmem:[#allocation6 + $0x748] sm:$0xff]
    %v2814 = vld [vmem:[#allocation6 + $0x750] sm:$0xff]
    %v2815 = vld [vmem:[#allocation6 + $0x758] sm:$0xff]
    %v2816 = vld [vmem:[#allocation6 + $0x760] sm:$0xff]
    %v2817 = vld [vmem:[#allocation6 + $0x768] sm:$0xff]
    %v2818 = vld [vmem:[#allocation6 + $0x770] sm:$0xff]
    %v2819 = vld [vmem:[#allocation6 + $0x778] sm:$0xff]
    %v2820 = vld [vmem:[#allocation6 + $0x780] sm:$0xff]
    %v2821 = vld [vmem:[#allocation6 + $0x788] sm:$0xff]
    %v2822 = vld [vmem:[#allocation6 + $0x790] sm:$0xff]
    %v2823 = vld [vmem:[#allocation6 + $0x798] sm:$0xff]
    %v2824 = vld [vmem:[#allocation6 + $0x7a0] sm:$0xff]
    %v2825 = vld [vmem:[#allocation6 + $0x7a8] sm:$0xff]
    %v2826 = vld [vmem:[#allocation6 + $0x7b0] sm:$0xff]
    %v2827 = vld [vmem:[#allocation6 + $0x7b8] sm:$0xff]
    %v2828 = vld [vmem:[#allocation6 + $0x7c0] sm:$0xff]
    %v2829 = vld [vmem:[#allocation6 + $0x7c8] sm:$0xff]
    %v2830 = vld [vmem:[#allocation6 + $0x7d0] sm:$0xff]
    %v2831 = vld [vmem:[#allocation6 + $0x7d8] sm:$0xff]
    %v2832 = vld [vmem:[#allocation6 + $0x7e0] sm:$0xff]
    %v2833 = vld [vmem:[#allocation6 + $0x7e8] sm:$0xff]
    %v2834 = vld [vmem:[#allocation6 + $0x7f0] sm:$0xff]
    %v2835 = vld [vmem:[#allocation6 + $0x7f8] sm:$0xff]
    %2836 = vmatpush.msra.mxu0 %v2640
    %2837 = vmatpush.msra.mxu0 %v2636
    %2838 = vmatpush.msra.mxu0 %v2632
    %2839 = vmatpush.msra.mxu0 %v2628
    %2840 = vmatpush.msra.mxu0 %v2624
    %2841 = vmatpush.msra.mxu0 %v2620
    %2842 = vmatpush.msra.mxu0 %v2616
    %2843 = vmatpush.msra.mxu0 %v2612
    %2844 = vmatpush.msra.mxu0 %v2608
    %2845 = vmatpush.msra.mxu0 %v2604
    %2846 = vmatpush.msra.mxu0 %v2600
    %2847 = vmatpush.msra.mxu0 %v2596
    %2848 = vmatpush.msra.mxu0 %v2592
    %2849 = vmatpush.msra.mxu0 %v2588
    %2850 = vmatpush.msra.mxu0 %v2584
    %2851 = vmatpush.msra.mxu0 %v2580
    %2852 = vmatmul.f32.gmra.mxu0 %v2576
    %v2853 = vpop.f32.mrf.mxu0
    %v2854 = vadd.f32 0.0, %v2853
    %2855 = vdwg.mxu0
    %2856 = vmatpush.msra.mxu0 %v2704
    %2857 = vmatpush.msra.mxu0 %v2700
    %2858 = vmatpush.msra.mxu0 %v2696
    %2859 = vmatpush.msra.mxu0 %v2692
    %2860 = vmatpush.msra.mxu0 %v2688
    %2861 = vmatpush.msra.mxu0 %v2684
    %2862 = vmatpush.msra.mxu0 %v2680
    %2863 = vmatpush.msra.mxu0 %v2676
    %2864 = vmatpush.msra.mxu0 %v2672
    %2865 = vmatpush.msra.mxu0 %v2668
    %2866 = vmatpush.msra.mxu0 %v2664
    %2867 = vmatpush.msra.mxu0 %v2660
    %2868 = vmatpush.msra.mxu0 %v2656
    %2869 = vmatpush.msra.mxu0 %v2652
    %2870 = vmatpush.msra.mxu0 %v2648
    %2871 = vmatpush.msra.mxu0 %v2644
    %2872 = vmatmul.f32.gmra.mxu0 %v2577
    %v2873 = vpop.f32.mrf.mxu0
    %v2874 = vadd.f32 %v2854, %v2873
    %2875 = vdwg.mxu0
    %2876 = vmatpush.msra.mxu0 %v2768
    %2877 = vmatpush.msra.mxu0 %v2764
    %2878 = vmatpush.msra.mxu0 %v2760
    %2879 = vmatpush.msra.mxu0 %v2756
    %2880 = vmatpush.msra.mxu0 %v2752
    %2881 = vmatpush.msra.mxu0 %v2748
    %2882 = vmatpush.msra.mxu0 %v2744
    %2883 = vmatpush.msra.mxu0 %v2740
    %2884 = vmatpush.msra.mxu0 %v2736
    %2885 = vmatpush.msra.mxu0 %v2732
    %2886 = vmatpush.msra.mxu0 %v2728
    %2887 = vmatpush.msra.mxu0 %v2724
    %2888 = vmatpush.msra.mxu0 %v2720
    %2889 = vmatpush.msra.mxu0 %v2716
    %2890 = vmatpush.msra.mxu0 %v2712
    %2891 = vmatpush.msra.mxu0 %v2708
    %2892 = vmatmul.f32.gmra.mxu0 %v2578
    %v2893 = vpop.f32.mrf.mxu0
    %v2894 = vadd.f32 %v2874, %v2893
    %2895 = vdwg.mxu0
    %2896 = vmatpush.msra.mxu0 %v2832
    %2897 = vmatpush.msra.mxu0 %v2828
    %2898 = vmatpush.msra.mxu0 %v2824
    %2899 = vmatpush.msra.mxu0 %v2820
    %2900 = vmatpush.msra.mxu0 %v2816
    %2901 = vmatpush.msra.mxu0 %v2812
    %2902 = vmatpush.msra.mxu0 %v2808
    %2903 = vmatpush.msra.mxu0 %v2804
    %2904 = vmatpush.msra.mxu0 %v2800
    %2905 = vmatpush.msra.mxu0 %v2796
    %2906 = vmatpush.msra.mxu0 %v2792
    %2907 = vmatpush.msra.mxu0 %v2788
    %2908 = vmatpush.msra.mxu0 %v2784
    %2909 = vmatpush.msra.mxu0 %v2780
    %2910 = vmatpush.msra.mxu0 %v2776
    %2911 = vmatpush.msra.mxu0 %v2772
    %2912 = vmatmul.f32.gmra.mxu0 %v2579
    %v2913 = vpop.f32.mrf.mxu0
    %v2914 = vadd.f32 %v2894, %v2913
    %2915 = vdwg.mxu0
    %2916 = vmatpush.msra.mxu0 %v2641
    %2917 = vmatpush.msra.mxu0 %v2637
    %2918 = vmatpush.msra.mxu0 %v2633
    %2919 = vmatpush.msra.mxu0 %v2629
    %2920 = vmatpush.msra.mxu0 %v2625
    %2921 = vmatpush.msra.mxu0 %v2621
    %2922 = vmatpush.msra.mxu0 %v2617
    %2923 = vmatpush.msra.mxu0 %v2613
    %2924 = vmatpush.msra.mxu0 %v2609
    %2925 = vmatpush.msra.mxu0 %v2605
    %2926 = vmatpush.msra.mxu0 %v2601
    %2927 = vmatpush.msra.mxu0 %v2597
    %2928 = vmatpush.msra.mxu0 %v2593
    %2929 = vmatpush.msra.mxu0 %v2589
    %2930 = vmatpush.msra.mxu0 %v2585
    %2931 = vmatpush.msra.mxu0 %v2581
    %2932 = vmatmul.f32.gmra.mxu0 %v2576
    %v2933 = vpop.f32.mrf.mxu0
    %v2934 = vadd.f32 0.0, %v2933
    %2935 = vdwg.mxu0
    %2936 = vmatpush.msra.mxu0 %v2705
    %2937 = vmatpush.msra.mxu0 %v2701
    %2938 = vmatpush.msra.mxu0 %v2697
    %2939 = vmatpush.msra.mxu0 %v2693
    %2940 = vmatpush.msra.mxu0 %v2689
    %2941 = vmatpush.msra.mxu0 %v2685
    %2942 = vmatpush.msra.mxu0 %v2681
    %2943 = vmatpush.msra.mxu0 %v2677
    %2944 = vmatpush.msra.mxu0 %v2673
    %2945 = vmatpush.msra.mxu0 %v2669
    %2946 = vmatpush.msra.mxu0 %v2665
    %2947 = vmatpush.msra.mxu0 %v2661
    %2948 = vmatpush.msra.mxu0 %v2657
    %2949 = vmatpush.msra.mxu0 %v2653
    %2950 = vmatpush.msra.mxu0 %v2649
    %2951 = vmatpush.msra.mxu0 %v2645
    %2952 = vmatmul.f32.gmra.mxu0 %v2577
    %v2953 = vpop.f32.mrf.mxu0
    %v2954 = vadd.f32 %v2934, %v2953
    %2955 = vdwg.mxu0
    %2956 = vmatpush.msra.mxu0 %v2769
    %2957 = vmatpush.msra.mxu0 %v2765
    %2958 = vmatpush.msra.mxu0 %v2761
    %2959 = vmatpush.msra.mxu0 %v2757
    %2960 = vmatpush.msra.mxu0 %v2753
    %2961 = vmatpush.msra.mxu0 %v2749
    %2962 = vmatpush.msra.mxu0 %v2745
    %2963 = vmatpush.msra.mxu0 %v2741
    %2964 = vmatpush.msra.mxu0 %v2737
    %2965 = vmatpush.msra.mxu0 %v2733
    %2966 = vmatpush.msra.mxu0 %v2729
    %2967 = vmatpush.msra.mxu0 %v2725
    %2968 = vmatpush.msra.mxu0 %v2721
    %2969 = vmatpush.msra.mxu0 %v2717
    %2970 = vmatpush.msra.mxu0 %v2713
    %2971 = vmatpush.msra.mxu0 %v2709
    %2972 = vmatmul.f32.gmra.mxu0 %v2578
    %v2973 = vpop.f32.mrf.mxu0
    %v2974 = vadd.f32 %v2954, %v2973
    %2975 = vdwg.mxu0
    %2976 = vmatpush.msra.mxu0 %v2833
    %2977 = vmatpush.msra.mxu0 %v2829
    %2978 = vmatpush.msra.mxu0 %v2825
    %2979 = vmatpush.msra.mxu0 %v2821
    %2980 = vmatpush.msra.mxu0 %v2817
    %2981 = vmatpush.msra.mxu0 %v2813
    %2982 = vmatpush.msra.mxu0 %v2809
    %2983 = vmatpush.msra.mxu0 %v2805
    %2984 = vmatpush.msra.mxu0 %v2801
    %2985 = vmatpush.msra.mxu0 %v2797
    %2986 = vmatpush.msra.mxu0 %v2793
    %2987 = vmatpush.msra.mxu0 %v2789
    %2988 = vmatpush.msra.mxu0 %v2785
    %2989 = vmatpush.msra.mxu0 %v2781
    %2990 = vmatpush.msra.mxu0 %v2777
    %2991 = vmatpush.msra.mxu0 %v2773
    %2992 = vmatmul.f32.gmra.mxu0 %v2579
    %v2993 = vpop.f32.mrf.mxu0
    %v2994 = vadd.f32 %v2974, %v2993
    %2995 = vdwg.mxu0
    %2996 = vmatpush.msra.mxu0 %v2642
    %2997 = vmatpush.msra.mxu0 %v2638
    %2998 = vmatpush.msra.mxu0 %v2634
    %2999 = vmatpush.msra.mxu0 %v2630
    %3000 = vmatpush.msra.mxu0 %v2626
    %3001 = vmatpush.msra.mxu0 %v2622
    %3002 = vmatpush.msra.mxu0 %v2618
    %3003 = vmatpush.msra.mxu0 %v2614
    %3004 = vmatpush.msra.mxu0 %v2610
    %3005 = vmatpush.msra.mxu0 %v2606
    %3006 = vmatpush.msra.mxu0 %v2602
    %3007 = vmatpush.msra.mxu0 %v2598
    %3008 = vmatpush.msra.mxu0 %v2594
    %3009 = vmatpush.msra.mxu0 %v2590
    %3010 = vmatpush.msra.mxu0 %v2586
    %3011 = vmatpush.msra.mxu0 %v2582
    %3012 = vmatmul.f32.gmra.mxu0 %v2576
    %v3013 = vpop.f32.mrf.mxu0
    %v3014 = vadd.f32 0.0, %v3013
    %3015 = vdwg.mxu0
    %3016 = vmatpush.msra.mxu0 %v2706
    %3017 = vmatpush.msra.mxu0 %v2702
    %3018 = vmatpush.msra.mxu0 %v2698
    %3019 = vmatpush.msra.mxu0 %v2694
    %3020 = vmatpush.msra.mxu0 %v2690
    %3021 = vmatpush.msra.mxu0 %v2686
    %3022 = vmatpush.msra.mxu0 %v2682
    %3023 = vmatpush.msra.mxu0 %v2678
    %3024 = vmatpush.msra.mxu0 %v2674
    %3025 = vmatpush.msra.mxu0 %v2670
    %3026 = vmatpush.msra.mxu0 %v2666
    %3027 = vmatpush.msra.mxu0 %v2662
    %3028 = vmatpush.msra.mxu0 %v2658
    %3029 = vmatpush.msra.mxu0 %v2654
    %3030 = vmatpush.msra.mxu0 %v2650
    %3031 = vmatpush.msra.mxu0 %v2646
    %3032 = vmatmul.f32.gmra.mxu0 %v2577
    %v3033 = vpop.f32.mrf.mxu0
    %v3034 = vadd.f32 %v3014, %v3033
    %3035 = vdwg.mxu0
    %3036 = vmatpush.msra.mxu0 %v2770
    %3037 = vmatpush.msra.mxu0 %v2766
    %3038 = vmatpush.msra.mxu0 %v2762
    %3039 = vmatpush.msra.mxu0 %v2758
    %3040 = vmatpush.msra.mxu0 %v2754
    %3041 = vmatpush.msra.mxu0 %v2750
    %3042 = vmatpush.msra.mxu0 %v2746
    %3043 = vmatpush.msra.mxu0 %v2742
    %3044 = vmatpush.msra.mxu0 %v2738
    %3045 = vmatpush.msra.mxu0 %v2734
    %3046 = vmatpush.msra.mxu0 %v2730
    %3047 = vmatpush.msra.mxu0 %v2726
    %3048 = vmatpush.msra.mxu0 %v2722
    %3049 = vmatpush.msra.mxu0 %v2718
    %3050 = vmatpush.msra.mxu0 %v2714
    %3051 = vmatpush.msra.mxu0 %v2710
    %3052 = vmatmul.f32.gmra.mxu0 %v2578
    %v3053 = vpop.f32.mrf.mxu0
    %v3054 = vadd.f32 %v3034, %v3053
    %3055 = vdwg.mxu0
    %3056 = vmatpush.msra.mxu0 %v2834
    %3057 = vmatpush.msra.mxu0 %v2830
    %3058 = vmatpush.msra.mxu0 %v2826
    %3059 = vmatpush.msra.mxu0 %v2822
    %3060 = vmatpush.msra.mxu0 %v2818
    %3061 = vmatpush.msra.mxu0 %v2814
    %3062 = vmatpush.msra.mxu0 %v2810
    %3063 = vmatpush.msra.mxu0 %v2806
    %3064 = vmatpush.msra.mxu0 %v2802
    %3065 = vmatpush.msra.mxu0 %v2798
    %3066 = vmatpush.msra.mxu0 %v2794
    %3067 = vmatpush.msra.mxu0 %v2790
    %3068 = vmatpush.msra.mxu0 %v2786
    %3069 = vmatpush.msra.mxu0 %v2782
    %3070 = vmatpush.msra.mxu0 %v2778
    %3071 = vmatpush.msra.mxu0 %v2774
    %3072 = vmatmul.f32.gmra.mxu0 %v2579
    %v3073 = vpop.f32.mrf.mxu0
    %v3074 = vadd.f32 %v3054, %v3073
    %3075 = vdwg.mxu0
    %3076 = vmatpush.msra.mxu0 %v2643
    %3077 = vmatpush.msra.mxu0 %v2639
    %3078 = vmatpush.msra.mxu0 %v2635
    %3079 = vmatpush.msra.mxu0 %v2631
    %3080 = vmatpush.msra.mxu0 %v2627
    %3081 = vmatpush.msra.mxu0 %v2623
    %3082 = vmatpush.msra.mxu0 %v2619
    %3083 = vmatpush.msra.mxu0 %v2615
    %3084 = vmatpush.msra.mxu0 %v2611
    %3085 = vmatpush.msra.mxu0 %v2607
    %3086 = vmatpush.msra.mxu0 %v2603
    %3087 = vmatpush.msra.mxu0 %v2599
    %3088 = vmatpush.msra.mxu0 %v2595
    %3089 = vmatpush.msra.mxu0 %v2591
    %3090 = vmatpush.msra.mxu0 %v2587
    %3091 = vmatpush.msra.mxu0 %v2583
    %3092 = vmatmul.f32.gmra.mxu0 %v2576
    %v3093 = vpop.f32.mrf.mxu0
    %v3094 = vadd.f32 0.0, %v3093
    %3095 = vdwg.mxu0
    %3096 = vmatpush.msra.mxu0 %v2707
    %3097 = vmatpush.msra.mxu0 %v2703
    %3098 = vmatpush.msra.mxu0 %v2699
    %3099 = vmatpush.msra.mxu0 %v2695
    %3100 = vmatpush.msra.mxu0 %v2691
    %3101 = vmatpush.msra.mxu0 %v2687
    %3102 = vmatpush.msra.mxu0 %v2683
    %3103 = vmatpush.msra.mxu0 %v2679
    %3104 = vmatpush.msra.mxu0 %v2675
    %3105 = vmatpush.msra.mxu0 %v2671
    %3106 = vmatpush.msra.mxu0 %v2667
    %3107 = vmatpush.msra.mxu0 %v2663
    %3108 = vmatpush.msra.mxu0 %v2659
    %3109 = vmatpush.msra.mxu0 %v2655
    %3110 = vmatpush.msra.mxu0 %v2651
    %3111 = vmatpush.msra.mxu0 %v2647
    %3112 = vmatmul.f32.gmra.mxu0 %v2577
    %v3113 = vpop.f32.mrf.mxu0
    %v3114 = vadd.f32 %v3094, %v3113
    %3115 = vdwg.mxu0
    %3116 = vmatpush.msra.mxu0 %v2771
    %3117 = vmatpush.msra.mxu0 %v2767
    %3118 = vmatpush.msra.mxu0 %v2763
    %3119 = vmatpush.msra.mxu0 %v2759
    %3120 = vmatpush.msra.mxu0 %v2755
    %3121 = vmatpush.msra.mxu0 %v2751
    %3122 = vmatpush.msra.mxu0 %v2747
    %3123 = vmatpush.msra.mxu0 %v2743
    %3124 = vmatpush.msra.mxu0 %v2739
    %3125 = vmatpush.msra.mxu0 %v2735
    %3126 = vmatpush.msra.mxu0 %v2731
    %3127 = vmatpush.msra.mxu0 %v2727
    %3128 = vmatpush.msra.mxu0 %v2723
    %3129 = vmatpush.msra.mxu0 %v2719
    %3130 = vmatpush.msra.mxu0 %v2715
    %3131 = vmatpush.msra.mxu0 %v2711
    %3132 = vmatmul.f32.gmra.mxu0 %v2578
    %v3133 = vpop.f32.mrf.mxu0
    %v3134 = vadd.f32 %v3114, %v3133
    %3135 = vdwg.mxu0
    %3136 = vmatpush.msra.mxu0 %v2835
    %3137 = vmatpush.msra.mxu0 %v2831
    %3138 = vmatpush.msra.mxu0 %v2827
    %3139 = vmatpush.msra.mxu0 %v2823
    %3140 = vmatpush.msra.mxu0 %v2819
    %3141 = vmatpush.msra.mxu0 %v2815
    %3142 = vmatpush.msra.mxu0 %v2811
    %3143 = vmatpush.msra.mxu0 %v2807
    %3144 = vmatpush.msra.mxu0 %v2803
    %3145 = vmatpush.msra.mxu0 %v2799
    %3146 = vmatpush.msra.mxu0 %v2795
    %3147 = vmatpush.msra.mxu0 %v2791
    %3148 = vmatpush.msra.mxu0 %v2787
    %3149 = vmatpush.msra.mxu0 %v2783
    %3150 = vmatpush.msra.mxu0 %v2779
    %3151 = vmatpush.msra.mxu0 %v2775
    %3152 = vmatmul.f32.gmra.mxu0 %v2579
    %v3153 = vpop.f32.mrf.mxu0
    %v3154 = vadd.f32 %v3134, %v3153
    %3155 = vdwg.mxu0
    %v3156 = vld [vmem:[%s35] sm:$0xff]
    %v3157 = vld [vmem:[%s35 + $0x8] sm:$0xff]
    %v3158 = vld [vmem:[%s35 + $0x10] sm:$0xff]
    %v3159 = vld [vmem:[%s35 + $0x18] sm:$0xff]
    %v3160 = vld [vmem:[%s35 + $0x20] sm:$0xff]
    %v3161 = vld [vmem:[%s35 + $0x28] sm:$0xff]
    %v3162 = vld [vmem:[%s35 + $0x30] sm:$0xff]
    %v3163 = vld [vmem:[%s35 + $0x38] sm:$0xff]
    %v3164 = vld [vmem:[%s35 + $0x40] sm:$0xff]
    %v3165 = vld [vmem:[%s35 + $0x48] sm:$0xff]
    %v3166 = vld [vmem:[%s35 + $0x50] sm:$0xff]
    %v3167 = vld [vmem:[%s35 + $0x58] sm:$0xff]
    %v3168 = vld [vmem:[%s35 + $0x60] sm:$0xff]
    %v3169 = vld [vmem:[%s35 + $0x68] sm:$0xff]
    %v3170 = vld [vmem:[%s35 + $0x70] sm:$0xff]
    %v3171 = vld [vmem:[%s35 + $0x78] sm:$0xff]
    %v3172 = vld [vmem:[%s35 + $0x80] sm:$0xff]
    %v3173 = vld [vmem:[%s35 + $0x88] sm:$0xff]
    %v3174 = vld [vmem:[%s35 + $0x90] sm:$0xff]
    %v3175 = vld [vmem:[%s35 + $0x98] sm:$0xff]
    %v3176 = vld [vmem:[%s35 + $0xa0] sm:$0xff]
    %v3177 = vld [vmem:[%s35 + $0xa8] sm:$0xff]
    %v3178 = vld [vmem:[%s35 + $0xb0] sm:$0xff]
    %v3179 = vld [vmem:[%s35 + $0xb8] sm:$0xff]
    %v3180 = vld [vmem:[%s35 + $0xc0] sm:$0xff]
    %v3181 = vld [vmem:[%s35 + $0xc8] sm:$0xff]
    %v3182 = vld [vmem:[%s35 + $0xd0] sm:$0xff]
    %v3183 = vld [vmem:[%s35 + $0xd8] sm:$0xff]
    %v3184 = vld [vmem:[%s35 + $0xe0] sm:$0xff]
    %v3185 = vld [vmem:[%s35 + $0xe8] sm:$0xff]
    %v3186 = vld [vmem:[%s35 + $0xf0] sm:$0xff]
    %v3187 = vld [vmem:[%s35 + $0xf8] sm:$0xff]
    %v3188 = vld [vmem:[%s35 + $0x100] sm:$0xff]
    %v3189 = vld [vmem:[%s35 + $0x108] sm:$0xff]
    %v3190 = vld [vmem:[%s35 + $0x110] sm:$0xff]
    %v3191 = vld [vmem:[%s35 + $0x118] sm:$0xff]
    %v3192 = vld [vmem:[%s35 + $0x120] sm:$0xff]
    %v3193 = vld [vmem:[%s35 + $0x128] sm:$0xff]
    %v3194 = vld [vmem:[%s35 + $0x130] sm:$0xff]
    %v3195 = vld [vmem:[%s35 + $0x138] sm:$0xff]
    %v3196 = vld [vmem:[%s35 + $0x140] sm:$0xff]
    %v3197 = vld [vmem:[%s35 + $0x148] sm:$0xff]
    %v3198 = vld [vmem:[%s35 + $0x150] sm:$0xff]
    %v3199 = vld [vmem:[%s35 + $0x158] sm:$0xff]
    %v3200 = vld [vmem:[%s35 + $0x160] sm:$0xff]
    %v3201 = vld [vmem:[%s35 + $0x168] sm:$0xff]
    %v3202 = vld [vmem:[%s35 + $0x170] sm:$0xff]
    %v3203 = vld [vmem:[%s35 + $0x178] sm:$0xff]
    %v3204 = vld [vmem:[%s35 + $0x180] sm:$0xff]
    %v3205 = vld [vmem:[%s35 + $0x188] sm:$0xff]
    %v3206 = vld [vmem:[%s35 + $0x190] sm:$0xff]
    %v3207 = vld [vmem:[%s35 + $0x198] sm:$0xff]
    %v3208 = vld [vmem:[%s35 + $0x1a0] sm:$0xff]
    %v3209 = vld [vmem:[%s35 + $0x1a8] sm:$0xff]
    %v3210 = vld [vmem:[%s35 + $0x1b0] sm:$0xff]
    %v3211 = vld [vmem:[%s35 + $0x1b8] sm:$0xff]
    %v3212 = vld [vmem:[%s35 + $0x1c0] sm:$0xff]
    %v3213 = vld [vmem:[%s35 + $0x1c8] sm:$0xff]
    %v3214 = vld [vmem:[%s35 + $0x1d0] sm:$0xff]
    %v3215 = vld [vmem:[%s35 + $0x1d8] sm:$0xff]
    %v3216 = vld [vmem:[%s35 + $0x1e0] sm:$0xff]
    %v3217 = vld [vmem:[%s35 + $0x1e8] sm:$0xff]
    %v3218 = vld [vmem:[%s35 + $0x1f0] sm:$0xff]
    %v3219 = vld [vmem:[%s35 + $0x1f8] sm:$0xff]
    %v3220 = vld [vmem:[%s37] sm:$0xff]
    %v3221 = vld [vmem:[%s37 + $0x8] sm:$0xff]
    %v3222 = vld [vmem:[%s37 + $0x10] sm:$0xff]
    %v3223 = vld [vmem:[%s37 + $0x18] sm:$0xff]
    %v3224 = vld [vmem:[%s37 + $0x20] sm:$0xff]
    %v3225 = vld [vmem:[%s37 + $0x28] sm:$0xff]
    %v3226 = vld [vmem:[%s37 + $0x30] sm:$0xff]
    %v3227 = vld [vmem:[%s37 + $0x38] sm:$0xff]
    %v3228 = vld [vmem:[%s39] sm:$0x1]
    %v3229 = vld [vmem:[%s41] sm:$0x1]
    %v3230 = vsel %vm431, %v2914, 0.0
    %v3231 = vrot.slane %v3230, 4
    %v3232 = vadd.f32 %v3230, %v3231
    %v3233 = vrot.slane %v3232, 2
    %v3234 = vadd.f32 %v3232, %v3233
    %v3235 = vrot.slane %v3234, 1
    %v3236 = vadd.f32 %v3234, %v3235
    %v3237 = vsel %vm431, %v2994, 0.0
    %v3238 = vrot.slane %v3237, 4
    %v3239 = vadd.f32 %v3237, %v3238
    %v3240 = vrot.slane %v3239, 2
    %v3241 = vadd.f32 %v3239, %v3240
    %v3242 = vrot.slane %v3241, 1
    %v3243 = vadd.f32 %v3241, %v3242
    %v3244 = vsel %vm431, %v3074, 0.0
    %v3245 = vrot.slane %v3244, 4
    %v3246 = vadd.f32 %v3244, %v3245
    %v3247 = vrot.slane %v3246, 2
    %v3248 = vadd.f32 %v3246, %v3247
    %v3249 = vrot.slane %v3248, 1
    %v3250 = vadd.f32 %v3248, %v3249
    %v3251 = vsel %vm431, %v3154, 0.0
    %v3252 = vrot.slane %v3251, 4
    %v3253 = vadd.f32 %v3251, %v3252
    %v3254 = vrot.slane %v3253, 2
    %v3255 = vadd.f32 %v3253, %v3254
    %v3256 = vrot.slane %v3255, 1
    %v3257 = vadd.f32 %v3255, %v3256
    %v3258 = vmul.f32 %v2914, %v2914
    %v3259 = vmul.f32 %v2994, %v2994
    %v3260 = vmul.f32 %v3074, %v3074
    %v3261 = vmul.f32 %v3154, %v3154
    %v3262 = vsel %vm431, %v3258, 0.0
    %v3263 = vrot.slane %v3262, 4
    %v3264 = vadd.f32 %v3262, %v3263
    %v3265 = vrot.slane %v3264, 2
    %v3266 = vadd.f32 %v3264, %v3265
    %v3267 = vrot.slane %v3266, 1
    %v3268 = vadd.f32 %v3266, %v3267
    %v3269 = vsel %vm431, %v3259, 0.0
    %v3270 = vrot.slane %v3269, 4
    %v3271 = vadd.f32 %v3269, %v3270
    %v3272 = vrot.slane %v3271, 2
    %v3273 = vadd.f32 %v3271, %v3272
    %v3274 = vrot.slane %v3273, 1
    %v3275 = vadd.f32 %v3273, %v3274
    %v3276 = vsel %vm431, %v3260, 0.0
    %v3277 = vrot.slane %v3276, 4
    %v3278 = vadd.f32 %v3276, %v3277
    %v3279 = vrot.slane %v3278, 2
    %v3280 = vadd.f32 %v3278, %v3279
    %v3281 = vrot.slane %v3280, 1
    %v3282 = vadd.f32 %v3280, %v3281
    %v3283 = vsel %vm431, %v3261, 0.0
    %v3284 = vrot.slane %v3283, 4
    %v3285 = vadd.f32 %v3283, %v3284
    %v3286 = vrot.slane %v3285, 2
    %v3287 = vadd.f32 %v3285, %v3286
    %v3288 = vrot.slane %v3287, 1
    %v3289 = vadd.f32 %v3287, %v3288
    %v3290 = vsel %vm492, %v3236, %v3268
    %v3291 = vsel %vm492, %v3243, %v3275
    %v3292 = vsel %vm492, %v3250, %v3282
    %v3293 = vsel %vm492, %v3257, %v3289
    %3294 = vmatpush.msra.mxu0 %v3171
    %3295 = vmatpush.msra.mxu0 %v3170
    %3296 = vmatpush.msra.mxu0 %v3169
    %3297 = vmatpush.msra.mxu0 %v3168
    %3298 = vmatpush.msra.mxu0 %v3167
    %3299 = vmatpush.msra.mxu0 %v3166
    %3300 = vmatpush.msra.mxu0 %v3165
    %3301 = vmatpush.msra.mxu0 %v3164
    %3302 = vmatpush.msra.mxu0 %v3163
    %3303 = vmatpush.msra.mxu0 %v3162
    %3304 = vmatpush.msra.mxu0 %v3161
    %3305 = vmatpush.msra.mxu0 %v3160
    %3306 = vmatpush.msra.mxu0 %v3159
    %3307 = vmatpush.msra.mxu0 %v3158
    %3308 = vmatpush.msra.mxu0 %v3157
    %3309 = vmatpush.msra.mxu0 %v3156
    %3310 = vmatmul.f32.gmra.mxu0 %v3290
    %v3311 = vpop.f32.mrf.mxu0
    %v3312 = vadd.f32 0.0, %v3311
    %3313 = vdwg.mxu0
    %3314 = vmatpush.msra.mxu0 %v3187
    %3315 = vmatpush.msra.mxu0 %v3186
    %3316 = vmatpush.msra.mxu0 %v3185
    %3317 = vmatpush.msra.mxu0 %v3184
    %3318 = vmatpush.msra.mxu0 %v3183
    %3319 = vmatpush.msra.mxu0 %v3182
    %3320 = vmatpush.msra.mxu0 %v3181
    %3321 = vmatpush.msra.mxu0 %v3180
    %3322 = vmatpush.msra.mxu0 %v3179
    %3323 = vmatpush.msra.mxu0 %v3178
    %3324 = vmatpush.msra.mxu0 %v3177
    %3325 = vmatpush.msra.mxu0 %v3176
    %3326 = vmatpush.msra.mxu0 %v3175
    %3327 = vmatpush.msra.mxu0 %v3174
    %3328 = vmatpush.msra.mxu0 %v3173
    %3329 = vmatpush.msra.mxu0 %v3172
    %3330 = vmatmul.f32.gmra.mxu0 %v3291
    %v3331 = vpop.f32.mrf.mxu0
    %v3332 = vadd.f32 %v3312, %v3331
    %3333 = vdwg.mxu0
    %3334 = vmatpush.msra.mxu0 %v3203
    %3335 = vmatpush.msra.mxu0 %v3202
    %3336 = vmatpush.msra.mxu0 %v3201
    %3337 = vmatpush.msra.mxu0 %v3200
    %3338 = vmatpush.msra.mxu0 %v3199
    %3339 = vmatpush.msra.mxu0 %v3198
    %3340 = vmatpush.msra.mxu0 %v3197
    %3341 = vmatpush.msra.mxu0 %v3196
    %3342 = vmatpush.msra.mxu0 %v3195
    %3343 = vmatpush.msra.mxu0 %v3194
    %3344 = vmatpush.msra.mxu0 %v3193
    %3345 = vmatpush.msra.mxu0 %v3192
    %3346 = vmatpush.msra.mxu0 %v3191
    %3347 = vmatpush.msra.mxu0 %v3190
    %3348 = vmatpush.msra.mxu0 %v3189
    %3349 = vmatpush.msra.mxu0 %v3188
    %3350 = vmatmul.f32.gmra.mxu0 %v3292
    %v3351 = vpop.f32.mrf.mxu0
    %v3352 = vadd.f32 %v3332, %v3351
    %3353 = vdwg.mxu0
    %3354 = vmatpush.msra.mxu0 %v3219
    %3355 = vmatpush.msra.mxu0 %v3218
    %3356 = vmatpush.msra.mxu0 %v3217
    %3357 = vmatpush.msra.mxu0 %v3216
    %3358 = vmatpush.msra.mxu0 %v3215
    %3359 = vmatpush.msra.mxu0 %v3214
    %3360 = vmatpush.msra.mxu0 %v3213
    %3361 = vmatpush.msra.mxu0 %v3212
    %3362 = vmatpush.msra.mxu0 %v3211
    %3363 = vmatpush.msra.mxu0 %v3210
    %3364 = vmatpush.msra.mxu0 %v3209
    %3365 = vmatpush.msra.mxu0 %v3208
    %3366 = vmatpush.msra.mxu0 %v3207
    %3367 = vmatpush.msra.mxu0 %v3206
    %3368 = vmatpush.msra.mxu0 %v3205
    %3369 = vmatpush.msra.mxu0 %v3204
    %3370 = vmatmul.f32.gmra.mxu0 %v3293
    %v3371 = vpop.f32.mrf.mxu0
    %v3372 = vadd.f32 %v3352, %v3371
    %3373 = vdwg.mxu0
    %v3374 = vmul.f32 %v3372, 0.5
    %v3375 = vmul.f32 %v3374, %v3374
    %v3377 = vrot.slane %v3375, 7
    %v3379 = vsub.f32 %v3374, %v3377
    %v3380 = vadd.f32 %v3379, 1e-05
    %v3381 = vrsqrt.pop %v3380
    %v3382 = vmul.f32 %v3381, %v3380
    %v3383 = vmul.f32 %v3382, %v3381
    %v3384 = vmul.f32 0.5, %v3383
    %v3385 = vsub.f32 1.5, %v3384
    %v3386 = vmul.f32 %v3381, %v3385
    %vm3387 = vweird.f32 %v3380
    %vm3388 = vweird.f32 %v3381
    %vm3389 = vmor %vm3387, %vm3388
    %v3390 = vsel %vm3389, %v3381, %v3386
    %3392 = vst [vmem:[#allocation1] sm:$0xff] %v3390
    %s3393 = scalar_lea.vmem [#allocation1], 1
    %v3394 = vld [vmem:[%s3393] ss:$9 sm:$0xff]
    %v3396 = vmul.f32 %v3228, %v3394
    %v3397 = vmul.f32 %v3374, %v3396
    %v3398 = vsub.f32 %v3229, %v3397
    %v3400 = vperm.slane %v3398, 0
    %v3402 = vsel %vm492, %v3396, %v3400
    %vm3403 = vcmask 130048
    %v3405 = vsel %vm3403, %v3402, 0
    %3407 = vmatpush.msra.mxu0 0.0
    %3408 = vmatpush.msra.mxu0 0.0
    %3409 = vmatpush.msra.mxu0 0.0
    %3410 = vmatpush.msra.mxu0 0.0
    %3411 = vmatpush.msra.mxu0 0.0
    %3412 = vmatpush.msra.mxu0 0.0
    %3413 = vmatpush.msra.mxu0 0.0
    %3414 = vmatpush.msra.mxu0 0.0
    %3415 = vmatpush.msra.mxu0 0.0
    %3416 = vmatpush.msra.mxu0 0.0
    %3417 = vmatpush.msra.mxu0 0.0
    %3418 = vmatpush.msra.mxu0 0.0
    %3419 = vmatpush.msra.mxu0 0.0
    %3420 = vmatpush.msra.mxu0 0.0
    %3421 = vmatpush.msra.mxu0 %v3224
    %3422 = vmatpush.msra.mxu0 %v3220
    %3423 = vmatmul.f32.gmra.mxu0 %v3405
    %v3424 = vpop.f32.mrf.mxu0
    %v3425 = vadd.f32 0.0, %v3424
    %3426 = vdwg.mxu0
    %3427 = vmatpush.msra.mxu0 0.0
    %3428 = vmatpush.msra.mxu0 0.0
    %3429 = vmatpush.msra.mxu0 0.0
    %3430 = vmatpush.msra.mxu0 0.0
    %3431 = vmatpush.msra.mxu0 0.0
    %3432 = vmatpush.msra.mxu0 0.0
    %3433 = vmatpush.msra.mxu0 0.0
    %3434 = vmatpush.msra.mxu0 0.0
    %3435 = vmatpush.msra.mxu0 0.0
    %3436 = vmatpush.msra.mxu0 0.0
    %3437 = vmatpush.msra.mxu0 0.0
    %3438 = vmatpush.msra.mxu0 0.0
    %3439 = vmatpush.msra.mxu0 0.0
    %3440 = vmatpush.msra.mxu0 0.0
    %3441 = vmatpush.msra.mxu0 %v3225
    %3442 = vmatpush.msra.mxu0 %v3221
    %3443 = vmatmul.f32.gmra.mxu0 %v3405
    %v3444 = vpop.f32.mrf.mxu0
    %v3445 = vadd.f32 0.0, %v3444
    %3446 = vdwg.mxu0
    %3447 = vmatpush.msra.mxu0 0.0
    %3448 = vmatpush.msra.mxu0 0.0
    %3449 = vmatpush.msra.mxu0 0.0
    %3450 = vmatpush.msra.mxu0 0.0
    %3451 = vmatpush.msra.mxu0 0.0
    %3452 = vmatpush.msra.mxu0 0.0
    %3453 = vmatpush.msra.mxu0 0.0
    %3454 = vmatpush.msra.mxu0 0.0
    %3455 = vmatpush.msra.mxu0 0.0
    %3456 = vmatpush.msra.mxu0 0.0
    %3457 = vmatpush.msra.mxu0 0.0
    %3458 = vmatpush.msra.mxu0 0.0
    %3459 = vmatpush.msra.mxu0 0.0
    %3460 = vmatpush.msra.mxu0 0.0
    %3461 = vmatpush.msra.mxu0 %v3226
    %3462 = vmatpush.msra.mxu0 %v3222
    %3463 = vmatmul.f32.gmra.mxu0 %v3405
    %v3464 = vpop.f32.mrf.mxu0
    %v3465 = vadd.f32 0.0, %v3464
    %3466 = vdwg.mxu0
    %3467 = vmatpush.msra.mxu0 0.0
    %3468 = vmatpush.msra.mxu0 0.0
    %3469 = vmatpush.msra.mxu0 0.0
    %3470 = vmatpush.msra.mxu0 0.0
    %3471 = vmatpush.msra.mxu0 0.0
    %3472 = vmatpush.msra.mxu0 0.0
    %3473 = vmatpush.msra.mxu0 0.0
    %3474 = vmatpush.msra.mxu0 0.0
    %3475 = vmatpush.msra.mxu0 0.0
    %3476 = vmatpush.msra.mxu0 0.0
    %3477 = vmatpush.msra.mxu0 0.0
    %3478 = vmatpush.msra.mxu0 0.0
    %3479 = vmatpush.msra.mxu0 0.0
    %3480 = vmatpush.msra.mxu0 0.0
    %3481 = vmatpush.msra.mxu0 %v3227
    %3482 = vmatpush.msra.mxu0 %v3223
    %3483 = vmatmul.f32.gmra.mxu0 %v3405
    %v3484 = vpop.f32.mrf.mxu0
    %v3485 = vadd.f32 0.0, %v3484
    %3486 = vdwg.mxu0
    %v3487 = vperm.slane %v3425, 0
    %v3488 = vperm.slane %v3445, 0
    %v3489 = vperm.slane %v3465, 0
    %v3490 = vperm.slane %v3485, 0
    %v3491 = vmul.f32 %v2914, %v3487
    %v3492 = vmul.f32 %v2994, %v3488
    %v3493 = vmul.f32 %v3074, %v3489
    %v3494 = vmul.f32 %v3154, %v3490
    %v3495 = vperm.slane %v3425, 1
    %v3496 = vperm.slane %v3445, 1
    %v3497 = vperm.slane %v3465, 1
    %v3498 = vperm.slane %v3485, 1
    %v3499 = vadd.f32 %v3491, %v3495
    %v3500 = vadd.f32 %v3492, %v3496
    %v3501 = vadd.f32 %v3493, %v3497
    %v3502 = vadd.f32 %v3494, %v3498
    %v3503 = vld [vmem:[#allocation7] sm:$0xff]
    %v3504 = vld [vmem:[#allocation7 + $0x8] sm:$0xff]
    %v3505 = vld [vmem:[#allocation7 + $0x10] sm:$0xff]
    %v3506 = vld [vmem:[#allocation7 + $0x18] sm:$0xff]
    %v3507 = vld [vmem:[#allocation7 + $0x20] sm:$0xff]
    %v3508 = vld [vmem:[#allocation7 + $0x28] sm:$0xff]
    %v3509 = vld [vmem:[#allocation7 + $0x30] sm:$0xff]
    %v3510 = vld [vmem:[#allocation7 + $0x38] sm:$0xff]
    %v3511 = vld [vmem:[#allocation7 + $0x40] sm:$0xff]
    %v3512 = vld [vmem:[#allocation7 + $0x48] sm:$0xff]
    %v3513 = vld [vmem:[#allocation7 + $0x50] sm:$0xff]
    %v3514 = vld [vmem:[#allocation7 + $0x58] sm:$0xff]
    %v3515 = vld [vmem:[#allocation7 + $0x60] sm:$0xff]
    %v3516 = vld [vmem:[#allocation7 + $0x68] sm:$0xff]
    %v3517 = vld [vmem:[#allocation7 + $0x70] sm:$0xff]
    %v3518 = vld [vmem:[#allocation7 + $0x78] sm:$0xff]
    %v3519 = vld [vmem:[#allocation7 + $0x80] sm:$0xff]
    %v3520 = vld [vmem:[#allocation7 + $0x88] sm:$0xff]
    %v3521 = vld [vmem:[#allocation7 + $0x90] sm:$0xff]
    %v3522 = vld [vmem:[#allocation7 + $0x98] sm:$0xff]
    %v3523 = vld [vmem:[#allocation7 + $0xa0] sm:$0xff]
    %v3524 = vld [vmem:[#allocation7 + $0xa8] sm:$0xff]
    %v3525 = vld [vmem:[#allocation7 + $0xb0] sm:$0xff]
    %v3526 = vld [vmem:[#allocation7 + $0xb8] sm:$0xff]
    %v3527 = vld [vmem:[#allocation7 + $0xc0] sm:$0xff]
    %v3528 = vld [vmem:[#allocation7 + $0xc8] sm:$0xff]
    %v3529 = vld [vmem:[#allocation7 + $0xd0] sm:$0xff]
    %v3530 = vld [vmem:[#allocation7 + $0xd8] sm:$0xff]
    %v3531 = vld [vmem:[#allocation7 + $0xe0] sm:$0xff]
    %v3532 = vld [vmem:[#allocation7 + $0xe8] sm:$0xff]
    %v3533 = vld [vmem:[#allocation7 + $0xf0] sm:$0xff]
    %v3534 = vld [vmem:[#allocation7 + $0xf8] sm:$0xff]
    %v3535 = vld [vmem:[#allocation7 + $0x100] sm:$0xff]
    %v3536 = vld [vmem:[#allocation7 + $0x108] sm:$0xff]
    %v3537 = vld [vmem:[#allocation7 + $0x110] sm:$0xff]
    %v3538 = vld [vmem:[#allocation7 + $0x118] sm:$0xff]
    %v3539 = vld [vmem:[#allocation7 + $0x120] sm:$0xff]
    %v3540 = vld [vmem:[#allocation7 + $0x128] sm:$0xff]
    %v3541 = vld [vmem:[#allocation7 + $0x130] sm:$0xff]
    %v3542 = vld [vmem:[#allocation7 + $0x138] sm:$0xff]
    %v3543 = vld [vmem:[#allocation7 + $0x140] sm:$0xff]
    %v3544 = vld [vmem:[#allocation7 + $0x148] sm:$0xff]
    %v3545 = vld [vmem:[#allocation7 + $0x150] sm:$0xff]
    %v3546 = vld [vmem:[#allocation7 + $0x158] sm:$0xff]
    %v3547 = vld [vmem:[#allocation7 + $0x160] sm:$0xff]
    %v3548 = vld [vmem:[#allocation7 + $0x168] sm:$0xff]
    %v3549 = vld [vmem:[#allocation7 + $0x170] sm:$0xff]
    %v3550 = vld [vmem:[#allocation7 + $0x178] sm:$0xff]
    %v3551 = vld [vmem:[#allocation7 + $0x180] sm:$0xff]
    %v3552 = vld [vmem:[#allocation7 + $0x188] sm:$0xff]
    %v3553 = vld [vmem:[#allocation7 + $0x190] sm:$0xff]
    %v3554 = vld [vmem:[#allocation7 + $0x198] sm:$0xff]
    %v3555 = vld [vmem:[#allocation7 + $0x1a0] sm:$0xff]
    %v3556 = vld [vmem:[#allocation7 + $0x1a8] sm:$0xff]
    %v3557 = vld [vmem:[#allocation7 + $0x1b0] sm:$0xff]
    %v3558 = vld [vmem:[#allocation7 + $0x1b8] sm:$0xff]
    %v3559 = vld [vmem:[#allocation7 + $0x1c0] sm:$0xff]
    %v3560 = vld [vmem:[#allocation7 + $0x1c8] sm:$0xff]
    %v3561 = vld [vmem:[#allocation7 + $0x1d0] sm:$0xff]
    %v3562 = vld [vmem:[#allocation7 + $0x1d8] sm:$0xff]
    %v3563 = vld [vmem:[#allocation7 + $0x1e0] sm:$0xff]
    %v3564 = vld [vmem:[#allocation7 + $0x1e8] sm:$0xff]
    %v3565 = vld [vmem:[#allocation7 + $0x1f0] sm:$0xff]
    %v3566 = vld [vmem:[#allocation7 + $0x1f8] sm:$0xff]
    %v3567 = vld [vmem:[#allocation7 + $0x200] sm:$0xff]
    %v3568 = vld [vmem:[#allocation7 + $0x208] sm:$0xff]
    %v3569 = vld [vmem:[#allocation7 + $0x210] sm:$0xff]
    %v3570 = vld [vmem:[#allocation7 + $0x218] sm:$0xff]
    %v3571 = vld [vmem:[#allocation7 + $0x220] sm:$0xff]
    %v3572 = vld [vmem:[#allocation7 + $0x228] sm:$0xff]
    %v3573 = vld [vmem:[#allocation7 + $0x230] sm:$0xff]
    %v3574 = vld [vmem:[#allocation7 + $0x238] sm:$0xff]
    %v3575 = vld [vmem:[#allocation7 + $0x240] sm:$0xff]
    %v3576 = vld [vmem:[#allocation7 + $0x248] sm:$0xff]
    %v3577 = vld [vmem:[#allocation7 + $0x250] sm:$0xff]
    %v3578 = vld [vmem:[#allocation7 + $0x258] sm:$0xff]
    %v3579 = vld [vmem:[#allocation7 + $0x260] sm:$0xff]
    %v3580 = vld [vmem:[#allocation7 + $0x268] sm:$0xff]
    %v3581 = vld [vmem:[#allocation7 + $0x270] sm:$0xff]
    %v3582 = vld [vmem:[#allocation7 + $0x278] sm:$0xff]
    %v3583 = vld [vmem:[#allocation7 + $0x280] sm:$0xff]
    %v3584 = vld [vmem:[#allocation7 + $0x288] sm:$0xff]
    %v3585 = vld [vmem:[#allocation7 + $0x290] sm:$0xff]
    %v3586 = vld [vmem:[#allocation7 + $0x298] sm:$0xff]
    %v3587 = vld [vmem:[#allocation7 + $0x2a0] sm:$0xff]
    %v3588 = vld [vmem:[#allocation7 + $0x2a8] sm:$0xff]
    %v3589 = vld [vmem:[#allocation7 + $0x2b0] sm:$0xff]
    %v3590 = vld [vmem:[#allocation7 + $0x2b8] sm:$0xff]
    %v3591 = vld [vmem:[#allocation7 + $0x2c0] sm:$0xff]
    %v3592 = vld [vmem:[#allocation7 + $0x2c8] sm:$0xff]
    %v3593 = vld [vmem:[#allocation7 + $0x2d0] sm:$0xff]
    %v3594 = vld [vmem:[#allocation7 + $0x2d8] sm:$0xff]
    %v3595 = vld [vmem:[#allocation7 + $0x2e0] sm:$0xff]
    %v3596 = vld [vmem:[#allocation7 + $0x2e8] sm:$0xff]
    %v3597 = vld [vmem:[#allocation7 + $0x2f0] sm:$0xff]
    %v3598 = vld [vmem:[#allocation7 + $0x2f8] sm:$0xff]
    %v3599 = vld [vmem:[#allocation7 + $0x300] sm:$0xff]
    %v3600 = vld [vmem:[#allocation7 + $0x308] sm:$0xff]
    %v3601 = vld [vmem:[#allocation7 + $0x310] sm:$0xff]
    %v3602 = vld [vmem:[#allocation7 + $0x318] sm:$0xff]
    %v3603 = vld [vmem:[#allocation7 + $0x320] sm:$0xff]
    %v3604 = vld [vmem:[#allocation7 + $0x328] sm:$0xff]
    %v3605 = vld [vmem:[#allocation7 + $0x330] sm:$0xff]
    %v3606 = vld [vmem:[#allocation7 + $0x338] sm:$0xff]
    %v3607 = vld [vmem:[#allocation7 + $0x340] sm:$0xff]
    %v3608 = vld [vmem:[#allocation7 + $0x348] sm:$0xff]
    %v3609 = vld [vmem:[#allocation7 + $0x350] sm:$0xff]
    %v3610 = vld [vmem:[#allocation7 + $0x358] sm:$0xff]
    %v3611 = vld [vmem:[#allocation7 + $0x360] sm:$0xff]
    %v3612 = vld [vmem:[#allocation7 + $0x368] sm:$0xff]
    %v3613 = vld [vmem:[#allocation7 + $0x370] sm:$0xff]
    %v3614 = vld [vmem:[#allocation7 + $0x378] sm:$0xff]
    %v3615 = vld [vmem:[#allocation7 + $0x380] sm:$0xff]
    %v3616 = vld [vmem:[#allocation7 + $0x388] sm:$0xff]
    %v3617 = vld [vmem:[#allocation7 + $0x390] sm:$0xff]
    %v3618 = vld [vmem:[#allocation7 + $0x398] sm:$0xff]
    %v3619 = vld [vmem:[#allocation7 + $0x3a0] sm:$0xff]
    %v3620 = vld [vmem:[#allocation7 + $0x3a8] sm:$0xff]
    %v3621 = vld [vmem:[#allocation7 + $0x3b0] sm:$0xff]
    %v3622 = vld [vmem:[#allocation7 + $0x3b8] sm:$0xff]
    %v3623 = vld [vmem:[#allocation7 + $0x3c0] sm:$0xff]
    %v3624 = vld [vmem:[#allocation7 + $0x3c8] sm:$0xff]
    %v3625 = vld [vmem:[#allocation7 + $0x3d0] sm:$0xff]
    %v3626 = vld [vmem:[#allocation7 + $0x3d8] sm:$0xff]
    %v3627 = vld [vmem:[#allocation7 + $0x3e0] sm:$0xff]
    %v3628 = vld [vmem:[#allocation7 + $0x3e8] sm:$0xff]
    %v3629 = vld [vmem:[#allocation7 + $0x3f0] sm:$0xff]
    %v3630 = vld [vmem:[#allocation7 + $0x3f8] sm:$0xff]
    %v3631 = vld [vmem:[#allocation7 + $0x400] sm:$0xff]
    %v3632 = vld [vmem:[#allocation7 + $0x408] sm:$0xff]
    %v3633 = vld [vmem:[#allocation7 + $0x410] sm:$0xff]
    %v3634 = vld [vmem:[#allocation7 + $0x418] sm:$0xff]
    %v3635 = vld [vmem:[#allocation7 + $0x420] sm:$0xff]
    %v3636 = vld [vmem:[#allocation7 + $0x428] sm:$0xff]
    %v3637 = vld [vmem:[#allocation7 + $0x430] sm:$0xff]
    %v3638 = vld [vmem:[#allocation7 + $0x438] sm:$0xff]
    %v3639 = vld [vmem:[#allocation7 + $0x440] sm:$0xff]
    %v3640 = vld [vmem:[#allocation7 + $0x448] sm:$0xff]
    %v3641 = vld [vmem:[#allocation7 + $0x450] sm:$0xff]
    %v3642 = vld [vmem:[#allocation7 + $0x458] sm:$0xff]
    %v3643 = vld [vmem:[#allocation7 + $0x460] sm:$0xff]
    %v3644 = vld [vmem:[#allocation7 + $0x468] sm:$0xff]
    %v3645 = vld [vmem:[#allocation7 + $0x470] sm:$0xff]
    %v3646 = vld [vmem:[#allocation7 + $0x478] sm:$0xff]
    %v3647 = vld [vmem:[#allocation7 + $0x480] sm:$0xff]
    %v3648 = vld [vmem:[#allocation7 + $0x488] sm:$0xff]
    %v3649 = vld [vmem:[#allocation7 + $0x490] sm:$0xff]
    %v3650 = vld [vmem:[#allocation7 + $0x498] sm:$0xff]
    %v3651 = vld [vmem:[#allocation7 + $0x4a0] sm:$0xff]
    %v3652 = vld [vmem:[#allocation7 + $0x4a8] sm:$0xff]
    %v3653 = vld [vmem:[#allocation7 + $0x4b0] sm:$0xff]
    %v3654 = vld [vmem:[#allocation7 + $0x4b8] sm:$0xff]
    %v3655 = vld [vmem:[#allocation7 + $0x4c0] sm:$0xff]
    %v3656 = vld [vmem:[#allocation7 + $0x4c8] sm:$0xff]
    %v3657 = vld [vmem:[#allocation7 + $0x4d0] sm:$0xff]
    %v3658 = vld [vmem:[#allocation7 + $0x4d8] sm:$0xff]
    %v3659 = vld [vmem:[#allocation7 + $0x4e0] sm:$0xff]
    %v3660 = vld [vmem:[#allocation7 + $0x4e8] sm:$0xff]
    %v3661 = vld [vmem:[#allocation7 + $0x4f0] sm:$0xff]
    %v3662 = vld [vmem:[#allocation7 + $0x4f8] sm:$0xff]
    %v3663 = vld [vmem:[#allocation7 + $0x500] sm:$0xff]
    %v3664 = vld [vmem:[#allocation7 + $0x508] sm:$0xff]
    %v3665 = vld [vmem:[#allocation7 + $0x510] sm:$0xff]
    %v3666 = vld [vmem:[#allocation7 + $0x518] sm:$0xff]
    %v3667 = vld [vmem:[#allocation7 + $0x520] sm:$0xff]
    %v3668 = vld [vmem:[#allocation7 + $0x528] sm:$0xff]
    %v3669 = vld [vmem:[#allocation7 + $0x530] sm:$0xff]
    %v3670 = vld [vmem:[#allocation7 + $0x538] sm:$0xff]
    %v3671 = vld [vmem:[#allocation7 + $0x540] sm:$0xff]
    %v3672 = vld [vmem:[#allocation7 + $0x548] sm:$0xff]
    %v3673 = vld [vmem:[#allocation7 + $0x550] sm:$0xff]
    %v3674 = vld [vmem:[#allocation7 + $0x558] sm:$0xff]
    %v3675 = vld [vmem:[#allocation7 + $0x560] sm:$0xff]
    %v3676 = vld [vmem:[#allocation7 + $0x568] sm:$0xff]
    %v3677 = vld [vmem:[#allocation7 + $0x570] sm:$0xff]
    %v3678 = vld [vmem:[#allocation7 + $0x578] sm:$0xff]
    %v3679 = vld [vmem:[#allocation7 + $0x580] sm:$0xff]
    %v3680 = vld [vmem:[#allocation7 + $0x588] sm:$0xff]
    %v3681 = vld [vmem:[#allocation7 + $0x590] sm:$0xff]
    %v3682 = vld [vmem:[#allocation7 + $0x598] sm:$0xff]
    %v3683 = vld [vmem:[#allocation7 + $0x5a0] sm:$0xff]
    %v3684 = vld [vmem:[#allocation7 + $0x5a8] sm:$0xff]
    %v3685 = vld [vmem:[#allocation7 + $0x5b0] sm:$0xff]
    %v3686 = vld [vmem:[#allocation7 + $0x5b8] sm:$0xff]
    %v3687 = vld [vmem:[#allocation7 + $0x5c0] sm:$0xff]
    %v3688 = vld [vmem:[#allocation7 + $0x5c8] sm:$0xff]
    %v3689 = vld [vmem:[#allocation7 + $0x5d0] sm:$0xff]
    %v3690 = vld [vmem:[#allocation7 + $0x5d8] sm:$0xff]
    %v3691 = vld [vmem:[#allocation7 + $0x5e0] sm:$0xff]
    %v3692 = vld [vmem:[#allocation7 + $0x5e8] sm:$0xff]
    %v3693 = vld [vmem:[#allocation7 + $0x5f0] sm:$0xff]
    %v3694 = vld [vmem:[#allocation7 + $0x5f8] sm:$0xff]
    %v3695 = vld [vmem:[#allocation7 + $0x600] sm:$0xff]
    %v3696 = vld [vmem:[#allocation7 + $0x608] sm:$0xff]
    %v3697 = vld [vmem:[#allocation7 + $0x610] sm:$0xff]
    %v3698 = vld [vmem:[#allocation7 + $0x618] sm:$0xff]
    %v3699 = vld [vmem:[#allocation7 + $0x620] sm:$0xff]
    %v3700 = vld [vmem:[#allocation7 + $0x628] sm:$0xff]
    %v3701 = vld [vmem:[#allocation7 + $0x630] sm:$0xff]
    %v3702 = vld [vmem:[#allocation7 + $0x638] sm:$0xff]
    %v3703 = vld [vmem:[#allocation7 + $0x640] sm:$0xff]
    %v3704 = vld [vmem:[#allocation7 + $0x648] sm:$0xff]
    %v3705 = vld [vmem:[#allocation7 + $0x650] sm:$0xff]
    %v3706 = vld [vmem:[#allocation7 + $0x658] sm:$0xff]
    %v3707 = vld [vmem:[#allocation7 + $0x660] sm:$0xff]
    %v3708 = vld [vmem:[#allocation7 + $0x668] sm:$0xff]
    %v3709 = vld [vmem:[#allocation7 + $0x670] sm:$0xff]
    %v3710 = vld [vmem:[#allocation7 + $0x678] sm:$0xff]
    %v3711 = vld [vmem:[#allocation7 + $0x680] sm:$0xff]
    %v3712 = vld [vmem:[#allocation7 + $0x688] sm:$0xff]
    %v3713 = vld [vmem:[#allocation7 + $0x690] sm:$0xff]
    %v3714 = vld [vmem:[#allocation7 + $0x698] sm:$0xff]
    %v3715 = vld [vmem:[#allocation7 + $0x6a0] sm:$0xff]
    %v3716 = vld [vmem:[#allocation7 + $0x6a8] sm:$0xff]
    %v3717 = vld [vmem:[#allocation7 + $0x6b0] sm:$0xff]
    %v3718 = vld [vmem:[#allocation7 + $0x6b8] sm:$0xff]
    %v3719 = vld [vmem:[#allocation7 + $0x6c0] sm:$0xff]
    %v3720 = vld [vmem:[#allocation7 + $0x6c8] sm:$0xff]
    %v3721 = vld [vmem:[#allocation7 + $0x6d0] sm:$0xff]
    %v3722 = vld [vmem:[#allocation7 + $0x6d8] sm:$0xff]
    %v3723 = vld [vmem:[#allocation7 + $0x6e0] sm:$0xff]
    %v3724 = vld [vmem:[#allocation7 + $0x6e8] sm:$0xff]
    %v3725 = vld [vmem:[#allocation7 + $0x6f0] sm:$0xff]
    %v3726 = vld [vmem:[#allocation7 + $0x6f8] sm:$0xff]
    %v3727 = vld [vmem:[#allocation7 + $0x700] sm:$0xff]
    %v3728 = vld [vmem:[#allocation7 + $0x708] sm:$0xff]
    %v3729 = vld [vmem:[#allocation7 + $0x710] sm:$0xff]
    %v3730 = vld [vmem:[#allocation7 + $0x718] sm:$0xff]
    %v3731 = vld [vmem:[#allocation7 + $0x720] sm:$0xff]
    %v3732 = vld [vmem:[#allocation7 + $0x728] sm:$0xff]
    %v3733 = vld [vmem:[#allocation7 + $0x730] sm:$0xff]
    %v3734 = vld [vmem:[#allocation7 + $0x738] sm:$0xff]
    %v3735 = vld [vmem:[#allocation7 + $0x740] sm:$0xff]
    %v3736 = vld [vmem:[#allocation7 + $0x748] sm:$0xff]
    %v3737 = vld [vmem:[#allocation7 + $0x750] sm:$0xff]
    %v3738 = vld [vmem:[#allocation7 + $0x758] sm:$0xff]
    %v3739 = vld [vmem:[#allocation7 + $0x760] sm:$0xff]
    %v3740 = vld [vmem:[#allocation7 + $0x768] sm:$0xff]
    %v3741 = vld [vmem:[#allocation7 + $0x770] sm:$0xff]
    %v3742 = vld [vmem:[#allocation7 + $0x778] sm:$0xff]
    %v3743 = vld [vmem:[#allocation7 + $0x780] sm:$0xff]
    %v3744 = vld [vmem:[#allocation7 + $0x788] sm:$0xff]
    %v3745 = vld [vmem:[#allocation7 + $0x790] sm:$0xff]
    %v3746 = vld [vmem:[#allocation7 + $0x798] sm:$0xff]
    %v3747 = vld [vmem:[#allocation7 + $0x7a0] sm:$0xff]
    %v3748 = vld [vmem:[#allocation7 + $0x7a8] sm:$0xff]
    %v3749 = vld [vmem:[#allocation7 + $0x7b0] sm:$0xff]
    %v3750 = vld [vmem:[#allocation7 + $0x7b8] sm:$0xff]
    %v3751 = vld [vmem:[#allocation7 + $0x7c0] sm:$0xff]
    %v3752 = vld [vmem:[#allocation7 + $0x7c8] sm:$0xff]
    %v3753 = vld [vmem:[#allocation7 + $0x7d0] sm:$0xff]
    %v3754 = vld [vmem:[#allocation7 + $0x7d8] sm:$0xff]
    %v3755 = vld [vmem:[#allocation7 + $0x7e0] sm:$0xff]
    %v3756 = vld [vmem:[#allocation7 + $0x7e8] sm:$0xff]
    %v3757 = vld [vmem:[#allocation7 + $0x7f0] sm:$0xff]
    %v3758 = vld [vmem:[#allocation7 + $0x7f8] sm:$0xff]
    %3759 = vmatpush.msra.mxu0 %v3563
    %3760 = vmatpush.msra.mxu0 %v3559
    %3761 = vmatpush.msra.mxu0 %v3555
    %3762 = vmatpush.msra.mxu0 %v3551
    %3763 = vmatpush.msra.mxu0 %v3547
    %3764 = vmatpush.msra.mxu0 %v3543
    %3765 = vmatpush.msra.mxu0 %v3539
    %3766 = vmatpush.msra.mxu0 %v3535
    %3767 = vmatpush.msra.mxu0 %v3531
    %3768 = vmatpush.msra.mxu0 %v3527
    %3769 = vmatpush.msra.mxu0 %v3523
    %3770 = vmatpush.msra.mxu0 %v3519
    %3771 = vmatpush.msra.mxu0 %v3515
    %3772 = vmatpush.msra.mxu0 %v3511
    %3773 = vmatpush.msra.mxu0 %v3507
    %3774 = vmatpush.msra.mxu0 %v3503
    %3775 = vmatmul.f32.gmra.mxu0 %v3499
    %v3776 = vpop.f32.mrf.mxu0
    %v3777 = vadd.f32 0.0, %v3776
    %3778 = vdwg.mxu0
    %3779 = vmatpush.msra.mxu0 %v3627
    %3780 = vmatpush.msra.mxu0 %v3623
    %3781 = vmatpush.msra.mxu0 %v3619
    %3782 = vmatpush.msra.mxu0 %v3615
    %3783 = vmatpush.msra.mxu0 %v3611
    %3784 = vmatpush.msra.mxu0 %v3607
    %3785 = vmatpush.msra.mxu0 %v3603
    %3786 = vmatpush.msra.mxu0 %v3599
    %3787 = vmatpush.msra.mxu0 %v3595
    %3788 = vmatpush.msra.mxu0 %v3591
    %3789 = vmatpush.msra.mxu0 %v3587
    %3790 = vmatpush.msra.mxu0 %v3583
    %3791 = vmatpush.msra.mxu0 %v3579
    %3792 = vmatpush.msra.mxu0 %v3575
    %3793 = vmatpush.msra.mxu0 %v3571
    %3794 = vmatpush.msra.mxu0 %v3567
    %3795 = vmatmul.f32.gmra.mxu0 %v3500
    %v3796 = vpop.f32.mrf.mxu0
    %v3797 = vadd.f32 %v3777, %v3796
    %3798 = vdwg.mxu0
    %3799 = vmatpush.msra.mxu0 %v3691
    %3800 = vmatpush.msra.mxu0 %v3687
    %3801 = vmatpush.msra.mxu0 %v3683
    %3802 = vmatpush.msra.mxu0 %v3679
    %3803 = vmatpush.msra.mxu0 %v3675
    %3804 = vmatpush.msra.mxu0 %v3671
    %3805 = vmatpush.msra.mxu0 %v3667
    %3806 = vmatpush.msra.mxu0 %v3663
    %3807 = vmatpush.msra.mxu0 %v3659
    %3808 = vmatpush.msra.mxu0 %v3655
    %3809 = vmatpush.msra.mxu0 %v3651
    %3810 = vmatpush.msra.mxu0 %v3647
    %3811 = vmatpush.msra.mxu0 %v3643
    %3812 = vmatpush.msra.mxu0 %v3639
    %3813 = vmatpush.msra.mxu0 %v3635
    %3814 = vmatpush.msra.mxu0 %v3631
    %3815 = vmatmul.f32.gmra.mxu0 %v3501
    %v3816 = vpop.f32.mrf.mxu0
    %v3817 = vadd.f32 %v3797, %v3816
    %3818 = vdwg.mxu0
    %3819 = vmatpush.msra.mxu0 %v3755
    %3820 = vmatpush.msra.mxu0 %v3751
    %3821 = vmatpush.msra.mxu0 %v3747
    %3822 = vmatpush.msra.mxu0 %v3743
    %3823 = vmatpush.msra.mxu0 %v3739
    %3824 = vmatpush.msra.mxu0 %v3735
    %3825 = vmatpush.msra.mxu0 %v3731
    %3826 = vmatpush.msra.mxu0 %v3727
    %3827 = vmatpush.msra.mxu0 %v3723
    %3828 = vmatpush.msra.mxu0 %v3719
    %3829 = vmatpush.msra.mxu0 %v3715
    %3830 = vmatpush.msra.mxu0 %v3711
    %3831 = vmatpush.msra.mxu0 %v3707
    %3832 = vmatpush.msra.mxu0 %v3703
    %3833 = vmatpush.msra.mxu0 %v3699
    %3834 = vmatpush.msra.mxu0 %v3695
    %3835 = vmatmul.f32.gmra.mxu0 %v3502
    %v3836 = vpop.f32.mrf.mxu0
    %v3837 = vadd.f32 %v3817, %v3836
    %3838 = vdwg.mxu0
    %3839 = vmatpush.msra.mxu0 %v3564
    %3840 = vmatpush.msra.mxu0 %v3560
    %3841 = vmatpush.msra.mxu0 %v3556
    %3842 = vmatpush.msra.mxu0 %v3552
    %3843 = vmatpush.msra.mxu0 %v3548
    %3844 = vmatpush.msra.mxu0 %v3544
    %3845 = vmatpush.msra.mxu0 %v3540
    %3846 = vmatpush.msra.mxu0 %v3536
    %3847 = vmatpush.msra.mxu0 %v3532
    %3848 = vmatpush.msra.mxu0 %v3528
    %3849 = vmatpush.msra.mxu0 %v3524
    %3850 = vmatpush.msra.mxu0 %v3520
    %3851 = vmatpush.msra.mxu0 %v3516
    %3852 = vmatpush.msra.mxu0 %v3512
    %3853 = vmatpush.msra.mxu0 %v3508
    %3854 = vmatpush.msra.mxu0 %v3504
    %3855 = vmatmul.f32.gmra.mxu0 %v3499
    %v3856 = vpop.f32.mrf.mxu0
    %v3857 = vadd.f32 0.0, %v3856
    %3858 = vdwg.mxu0
    %3859 = vmatpush.msra.mxu0 %v3628
    %3860 = vmatpush.msra.mxu0 %v3624
    %3861 = vmatpush.msra.mxu0 %v3620
    %3862 = vmatpush.msra.mxu0 %v3616
    %3863 = vmatpush.msra.mxu0 %v3612
    %3864 = vmatpush.msra.mxu0 %v3608
    %3865 = vmatpush.msra.mxu0 %v3604
    %3866 = vmatpush.msra.mxu0 %v3600
    %3867 = vmatpush.msra.mxu0 %v3596
    %3868 = vmatpush.msra.mxu0 %v3592
    %3869 = vmatpush.msra.mxu0 %v3588
    %3870 = vmatpush.msra.mxu0 %v3584
    %3871 = vmatpush.msra.mxu0 %v3580
    %3872 = vmatpush.msra.mxu0 %v3576
    %3873 = vmatpush.msra.mxu0 %v3572
    %3874 = vmatpush.msra.mxu0 %v3568
    %3875 = vmatmul.f32.gmra.mxu0 %v3500
    %v3876 = vpop.f32.mrf.mxu0
    %v3877 = vadd.f32 %v3857, %v3876
    %3878 = vdwg.mxu0
    %3879 = vmatpush.msra.mxu0 %v3692
    %3880 = vmatpush.msra.mxu0 %v3688
    %3881 = vmatpush.msra.mxu0 %v3684
    %3882 = vmatpush.msra.mxu0 %v3680
    %3883 = vmatpush.msra.mxu0 %v3676
    %3884 = vmatpush.msra.mxu0 %v3672
    %3885 = vmatpush.msra.mxu0 %v3668
    %3886 = vmatpush.msra.mxu0 %v3664
    %3887 = vmatpush.msra.mxu0 %v3660
    %3888 = vmatpush.msra.mxu0 %v3656
    %3889 = vmatpush.msra.mxu0 %v3652
    %3890 = vmatpush.msra.mxu0 %v3648
    %3891 = vmatpush.msra.mxu0 %v3644
    %3892 = vmatpush.msra.mxu0 %v3640
    %3893 = vmatpush.msra.mxu0 %v3636
    %3894 = vmatpush.msra.mxu0 %v3632
    %3895 = vmatmul.f32.gmra.mxu0 %v3501
    %v3896 = vpop.f32.mrf.mxu0
    %v3897 = vadd.f32 %v3877, %v3896
    %3898 = vdwg.mxu0
    %3899 = vmatpush.msra.mxu0 %v3756
    %3900 = vmatpush.msra.mxu0 %v3752
    %3901 = vmatpush.msra.mxu0 %v3748
    %3902 = vmatpush.msra.mxu0 %v3744
    %3903 = vmatpush.msra.mxu0 %v3740
    %3904 = vmatpush.msra.mxu0 %v3736
    %3905 = vmatpush.msra.mxu0 %v3732
    %3906 = vmatpush.msra.mxu0 %v3728
    %3907 = vmatpush.msra.mxu0 %v3724
    %3908 = vmatpush.msra.mxu0 %v3720
    %3909 = vmatpush.msra.mxu0 %v3716
    %3910 = vmatpush.msra.mxu0 %v3712
    %3911 = vmatpush.msra.mxu0 %v3708
    %3912 = vmatpush.msra.mxu0 %v3704
    %3913 = vmatpush.msra.mxu0 %v3700
    %3914 = vmatpush.msra.mxu0 %v3696
    %3915 = vmatmul.f32.gmra.mxu0 %v3502
    %v3916 = vpop.f32.mrf.mxu0
    %v3917 = vadd.f32 %v3897, %v3916
    %3918 = vdwg.mxu0
    %3919 = vmatpush.msra.mxu0 %v3565
    %3920 = vmatpush.msra.mxu0 %v3561
    %3921 = vmatpush.msra.mxu0 %v3557
    %3922 = vmatpush.msra.mxu0 %v3553
    %3923 = vmatpush.msra.mxu0 %v3549
    %3924 = vmatpush.msra.mxu0 %v3545
    %3925 = vmatpush.msra.mxu0 %v3541
    %3926 = vmatpush.msra.mxu0 %v3537
    %3927 = vmatpush.msra.mxu0 %v3533
    %3928 = vmatpush.msra.mxu0 %v3529
    %3929 = vmatpush.msra.mxu0 %v3525
    %3930 = vmatpush.msra.mxu0 %v3521
    %3931 = vmatpush.msra.mxu0 %v3517
    %3932 = vmatpush.msra.mxu0 %v3513
    %3933 = vmatpush.msra.mxu0 %v3509
    %3934 = vmatpush.msra.mxu0 %v3505
    %3935 = vmatmul.f32.gmra.mxu0 %v3499
    %v3936 = vpop.f32.mrf.mxu0
    %v3937 = vadd.f32 0.0, %v3936
    %3938 = vdwg.mxu0
    %3939 = vmatpush.msra.mxu0 %v3629
    %3940 = vmatpush.msra.mxu0 %v3625
    %3941 = vmatpush.msra.mxu0 %v3621
    %3942 = vmatpush.msra.mxu0 %v3617
    %3943 = vmatpush.msra.mxu0 %v3613
    %3944 = vmatpush.msra.mxu0 %v3609
    %3945 = vmatpush.msra.mxu0 %v3605
    %3946 = vmatpush.msra.mxu0 %v3601
    %3947 = vmatpush.msra.mxu0 %v3597
    %3948 = vmatpush.msra.mxu0 %v3593
    %3949 = vmatpush.msra.mxu0 %v3589
    %3950 = vmatpush.msra.mxu0 %v3585
    %3951 = vmatpush.msra.mxu0 %v3581
    %3952 = vmatpush.msra.mxu0 %v3577
    %3953 = vmatpush.msra.mxu0 %v3573
    %3954 = vmatpush.msra.mxu0 %v3569
    %3955 = vmatmul.f32.gmra.mxu0 %v3500
    %v3956 = vpop.f32.mrf.mxu0
    %v3957 = vadd.f32 %v3937, %v3956
    %3958 = vdwg.mxu0
    %3959 = vmatpush.msra.mxu0 %v3693
    %3960 = vmatpush.msra.mxu0 %v3689
    %3961 = vmatpush.msra.mxu0 %v3685
    %3962 = vmatpush.msra.mxu0 %v3681
    %3963 = vmatpush.msra.mxu0 %v3677
    %3964 = vmatpush.msra.mxu0 %v3673
    %3965 = vmatpush.msra.mxu0 %v3669
    %3966 = vmatpush.msra.mxu0 %v3665
    %3967 = vmatpush.msra.mxu0 %v3661
    %3968 = vmatpush.msra.mxu0 %v3657
    %3969 = vmatpush.msra.mxu0 %v3653
    %3970 = vmatpush.msra.mxu0 %v3649
    %3971 = vmatpush.msra.mxu0 %v3645
    %3972 = vmatpush.msra.mxu0 %v3641
    %3973 = vmatpush.msra.mxu0 %v3637
    %3974 = vmatpush.msra.mxu0 %v3633
    %3975 = vmatmul.f32.gmra.mxu0 %v3501
    %v3976 = vpop.f32.mrf.mxu0
    %v3977 = vadd.f32 %v3957, %v3976
    %3978 = vdwg.mxu0
    %3979 = vmatpush.msra.mxu0 %v3757
    %3980 = vmatpush.msra.mxu0 %v3753
    %3981 = vmatpush.msra.mxu0 %v3749
    %3982 = vmatpush.msra.mxu0 %v3745
    %3983 = vmatpush.msra.mxu0 %v3741
    %3984 = vmatpush.msra.mxu0 %v3737
    %3985 = vmatpush.msra.mxu0 %v3733
    %3986 = vmatpush.msra.mxu0 %v3729
    %3987 = vmatpush.msra.mxu0 %v3725
    %3988 = vmatpush.msra.mxu0 %v3721
    %3989 = vmatpush.msra.mxu0 %v3717
    %3990 = vmatpush.msra.mxu0 %v3713
    %3991 = vmatpush.msra.mxu0 %v3709
    %3992 = vmatpush.msra.mxu0 %v3705
    %3993 = vmatpush.msra.mxu0 %v3701
    %3994 = vmatpush.msra.mxu0 %v3697
    %3995 = vmatmul.f32.gmra.mxu0 %v3502
    %v3996 = vpop.f32.mrf.mxu0
    %v3997 = vadd.f32 %v3977, %v3996
    %3998 = vdwg.mxu0
    %3999 = vmatpush.msra.mxu0 %v3566
    %4000 = vmatpush.msra.mxu0 %v3562
    %4001 = vmatpush.msra.mxu0 %v3558
    %4002 = vmatpush.msra.mxu0 %v3554
    %4003 = vmatpush.msra.mxu0 %v3550
    %4004 = vmatpush.msra.mxu0 %v3546
    %4005 = vmatpush.msra.mxu0 %v3542
    %4006 = vmatpush.msra.mxu0 %v3538
    %4007 = vmatpush.msra.mxu0 %v3534
    %4008 = vmatpush.msra.mxu0 %v3530
    %4009 = vmatpush.msra.mxu0 %v3526
    %4010 = vmatpush.msra.mxu0 %v3522
    %4011 = vmatpush.msra.mxu0 %v3518
    %4012 = vmatpush.msra.mxu0 %v3514
    %4013 = vmatpush.msra.mxu0 %v3510
    %4014 = vmatpush.msra.mxu0 %v3506
    %4015 = vmatmul.f32.gmra.mxu0 %v3499
    %v4016 = vpop.f32.mrf.mxu0
    %v4017 = vadd.f32 0.0, %v4016
    %4018 = vdwg.mxu0
    %4019 = vmatpush.msra.mxu0 %v3630
    %4020 = vmatpush.msra.mxu0 %v3626
    %4021 = vmatpush.msra.mxu0 %v3622
    %4022 = vmatpush.msra.mxu0 %v3618
    %4023 = vmatpush.msra.mxu0 %v3614
    %4024 = vmatpush.msra.mxu0 %v3610
    %4025 = vmatpush.msra.mxu0 %v3606
    %4026 = vmatpush.msra.mxu0 %v3602
    %4027 = vmatpush.msra.mxu0 %v3598
    %4028 = vmatpush.msra.mxu0 %v3594
    %4029 = vmatpush.msra.mxu0 %v3590
    %4030 = vmatpush.msra.mxu0 %v3586
    %4031 = vmatpush.msra.mxu0 %v3582
    %4032 = vmatpush.msra.mxu0 %v3578
    %4033 = vmatpush.msra.mxu0 %v3574
    %4034 = vmatpush.msra.mxu0 %v3570
    %4035 = vmatmul.f32.gmra.mxu0 %v3500
    %v4036 = vpop.f32.mrf.mxu0
    %v4037 = vadd.f32 %v4017, %v4036
    %4038 = vdwg.mxu0
    %4039 = vmatpush.msra.mxu0 %v3694
    %4040 = vmatpush.msra.mxu0 %v3690
    %4041 = vmatpush.msra.mxu0 %v3686
    %4042 = vmatpush.msra.mxu0 %v3682
    %4043 = vmatpush.msra.mxu0 %v3678
    %4044 = vmatpush.msra.mxu0 %v3674
    %4045 = vmatpush.msra.mxu0 %v3670
    %4046 = vmatpush.msra.mxu0 %v3666
    %4047 = vmatpush.msra.mxu0 %v3662
    %4048 = vmatpush.msra.mxu0 %v3658
    %4049 = vmatpush.msra.mxu0 %v3654
    %4050 = vmatpush.msra.mxu0 %v3650
    %4051 = vmatpush.msra.mxu0 %v3646
    %4052 = vmatpush.msra.mxu0 %v3642
    %4053 = vmatpush.msra.mxu0 %v3638
    %4054 = vmatpush.msra.mxu0 %v3634
    %4055 = vmatmul.f32.gmra.mxu0 %v3501
    %v4056 = vpop.f32.mrf.mxu0
    %v4057 = vadd.f32 %v4037, %v4056
    %4058 = vdwg.mxu0
    %4059 = vmatpush.msra.mxu0 %v3758
    %4060 = vmatpush.msra.mxu0 %v3754
    %4061 = vmatpush.msra.mxu0 %v3750
    %4062 = vmatpush.msra.mxu0 %v3746
    %4063 = vmatpush.msra.mxu0 %v3742
    %4064 = vmatpush.msra.mxu0 %v3738
    %4065 = vmatpush.msra.mxu0 %v3734
    %4066 = vmatpush.msra.mxu0 %v3730
    %4067 = vmatpush.msra.mxu0 %v3726
    %4068 = vmatpush.msra.mxu0 %v3722
    %4069 = vmatpush.msra.mxu0 %v3718
    %4070 = vmatpush.msra.mxu0 %v3714
    %4071 = vmatpush.msra.mxu0 %v3710
    %4072 = vmatpush.msra.mxu0 %v3706
    %4073 = vmatpush.msra.mxu0 %v3702
    %4074 = vmatpush.msra.mxu0 %v3698
    %4075 = vmatmul.f32.gmra.mxu0 %v3502
    %v4076 = vpop.f32.mrf.mxu0
    %v4077 = vadd.f32 %v4057, %v4076
    %4078 = vdwg.mxu0
    %v4079 = vld [vmem:[%s45] sm:$0xff]
    %v4080 = vld [vmem:[%s45 + $0x8] sm:$0xff]
    %v4081 = vld [vmem:[%s45 + $0x10] sm:$0xff]
    %v4082 = vld [vmem:[%s45 + $0x18] sm:$0xff]
    %v4083 = vld [vmem:[%s45 + $0x20] sm:$0xff]
    %v4084 = vld [vmem:[%s45 + $0x28] sm:$0xff]
    %v4085 = vld [vmem:[%s45 + $0x30] sm:$0xff]
    %v4086 = vld [vmem:[%s45 + $0x38] sm:$0xff]
    %v4087 = vld [vmem:[%s45 + $0x40] sm:$0xff]
    %v4088 = vld [vmem:[%s45 + $0x48] sm:$0xff]
    %v4089 = vld [vmem:[%s45 + $0x50] sm:$0xff]
    %v4090 = vld [vmem:[%s45 + $0x58] sm:$0xff]
    %v4091 = vld [vmem:[%s45 + $0x60] sm:$0xff]
    %v4092 = vld [vmem:[%s45 + $0x68] sm:$0xff]
    %v4093 = vld [vmem:[%s45 + $0x70] sm:$0xff]
    %v4094 = vld [vmem:[%s45 + $0x78] sm:$0xff]
    %v4095 = vld [vmem:[%s45 + $0x80] sm:$0xff]
    %v4096 = vld [vmem:[%s45 + $0x88] sm:$0xff]
    %v4097 = vld [vmem:[%s45 + $0x90] sm:$0xff]
    %v4098 = vld [vmem:[%s45 + $0x98] sm:$0xff]
    %v4099 = vld [vmem:[%s45 + $0xa0] sm:$0xff]
    %v4100 = vld [vmem:[%s45 + $0xa8] sm:$0xff]
    %v4101 = vld [vmem:[%s45 + $0xb0] sm:$0xff]
    %v4102 = vld [vmem:[%s45 + $0xb8] sm:$0xff]
    %v4103 = vld [vmem:[%s45 + $0xc0] sm:$0xff]
    %v4104 = vld [vmem:[%s45 + $0xc8] sm:$0xff]
    %v4105 = vld [vmem:[%s45 + $0xd0] sm:$0xff]
    %v4106 = vld [vmem:[%s45 + $0xd8] sm:$0xff]
    %v4107 = vld [vmem:[%s45 + $0xe0] sm:$0xff]
    %v4108 = vld [vmem:[%s45 + $0xe8] sm:$0xff]
    %v4109 = vld [vmem:[%s45 + $0xf0] sm:$0xff]
    %v4110 = vld [vmem:[%s45 + $0xf8] sm:$0xff]
    %v4111 = vld [vmem:[%s45 + $0x100] sm:$0xff]
    %v4112 = vld [vmem:[%s45 + $0x108] sm:$0xff]
    %v4113 = vld [vmem:[%s45 + $0x110] sm:$0xff]
    %v4114 = vld [vmem:[%s45 + $0x118] sm:$0xff]
    %v4115 = vld [vmem:[%s45 + $0x120] sm:$0xff]
    %v4116 = vld [vmem:[%s45 + $0x128] sm:$0xff]
    %v4117 = vld [vmem:[%s45 + $0x130] sm:$0xff]
    %v4118 = vld [vmem:[%s45 + $0x138] sm:$0xff]
    %v4119 = vld [vmem:[%s45 + $0x140] sm:$0xff]
    %v4120 = vld [vmem:[%s45 + $0x148] sm:$0xff]
    %v4121 = vld [vmem:[%s45 + $0x150] sm:$0xff]
    %v4122 = vld [vmem:[%s45 + $0x158] sm:$0xff]
    %v4123 = vld [vmem:[%s45 + $0x160] sm:$0xff]
    %v4124 = vld [vmem:[%s45 + $0x168] sm:$0xff]
    %v4125 = vld [vmem:[%s45 + $0x170] sm:$0xff]
    %v4126 = vld [vmem:[%s45 + $0x178] sm:$0xff]
    %v4127 = vld [vmem:[%s45 + $0x180] sm:$0xff]
    %v4128 = vld [vmem:[%s45 + $0x188] sm:$0xff]
    %v4129 = vld [vmem:[%s45 + $0x190] sm:$0xff]
    %v4130 = vld [vmem:[%s45 + $0x198] sm:$0xff]
    %v4131 = vld [vmem:[%s45 + $0x1a0] sm:$0xff]
    %v4132 = vld [vmem:[%s45 + $0x1a8] sm:$0xff]
    %v4133 = vld [vmem:[%s45 + $0x1b0] sm:$0xff]
    %v4134 = vld [vmem:[%s45 + $0x1b8] sm:$0xff]
    %v4135 = vld [vmem:[%s45 + $0x1c0] sm:$0xff]
    %v4136 = vld [vmem:[%s45 + $0x1c8] sm:$0xff]
    %v4137 = vld [vmem:[%s45 + $0x1d0] sm:$0xff]
    %v4138 = vld [vmem:[%s45 + $0x1d8] sm:$0xff]
    %v4139 = vld [vmem:[%s45 + $0x1e0] sm:$0xff]
    %v4140 = vld [vmem:[%s45 + $0x1e8] sm:$0xff]
    %v4141 = vld [vmem:[%s45 + $0x1f0] sm:$0xff]
    %v4142 = vld [vmem:[%s45 + $0x1f8] sm:$0xff]
    %v4143 = vld [vmem:[%s47] sm:$0xff]
    %v4144 = vld [vmem:[%s47 + $0x8] sm:$0xff]
    %v4145 = vld [vmem:[%s47 + $0x10] sm:$0xff]
    %v4146 = vld [vmem:[%s47 + $0x18] sm:$0xff]
    %v4147 = vld [vmem:[%s49] sm:$0x1]
    %v4148 = vld [vmem:[%s51] sm:$0x1]
    %v4149 = vsel %vm431, %v3837, 0.0
    %v4150 = vrot.slane %v4149, 4
    %v4151 = vadd.f32 %v4149, %v4150
    %v4152 = vrot.slane %v4151, 2
    %v4153 = vadd.f32 %v4151, %v4152
    %v4154 = vrot.slane %v4153, 1
    %v4155 = vadd.f32 %v4153, %v4154
    %v4156 = vsel %vm431, %v3917, 0.0
    %v4157 = vrot.slane %v4156, 4
    %v4158 = vadd.f32 %v4156, %v4157
    %v4159 = vrot.slane %v4158, 2
    %v4160 = vadd.f32 %v4158, %v4159
    %v4161 = vrot.slane %v4160, 1
    %v4162 = vadd.f32 %v4160, %v4161
    %v4163 = vsel %vm431, %v3997, 0.0
    %v4164 = vrot.slane %v4163, 4
    %v4165 = vadd.f32 %v4163, %v4164
    %v4166 = vrot.slane %v4165, 2
    %v4167 = vadd.f32 %v4165, %v4166
    %v4168 = vrot.slane %v4167, 1
    %v4169 = vadd.f32 %v4167, %v4168
    %v4170 = vsel %vm431, %v4077, 0.0
    %v4171 = vrot.slane %v4170, 4
    %v4172 = vadd.f32 %v4170, %v4171
    %v4173 = vrot.slane %v4172, 2
    %v4174 = vadd.f32 %v4172, %v4173
    %v4175 = vrot.slane %v4174, 1
    %v4176 = vadd.f32 %v4174, %v4175
    %v4177 = vmul.f32 %v3837, %v3837
    %v4178 = vmul.f32 %v3917, %v3917
    %v4179 = vmul.f32 %v3997, %v3997
    %v4180 = vmul.f32 %v4077, %v4077
    %v4181 = vsel %vm431, %v4177, 0.0
    %v4182 = vrot.slane %v4181, 4
    %v4183 = vadd.f32 %v4181, %v4182
    %v4184 = vrot.slane %v4183, 2
    %v4185 = vadd.f32 %v4183, %v4184
    %v4186 = vrot.slane %v4185, 1
    %v4187 = vadd.f32 %v4185, %v4186
    %v4188 = vsel %vm431, %v4178, 0.0
    %v4189 = vrot.slane %v4188, 4
    %v4190 = vadd.f32 %v4188, %v4189
    %v4191 = vrot.slane %v4190, 2
    %v4192 = vadd.f32 %v4190, %v4191
    %v4193 = vrot.slane %v4192, 1
    %v4194 = vadd.f32 %v4192, %v4193
    %v4195 = vsel %vm431, %v4179, 0.0
    %v4196 = vrot.slane %v4195, 4
    %v4197 = vadd.f32 %v4195, %v4196
    %v4198 = vrot.slane %v4197, 2
    %v4199 = vadd.f32 %v4197, %v4198
    %v4200 = vrot.slane %v4199, 1
    %v4201 = vadd.f32 %v4199, %v4200
    %v4202 = vsel %vm431, %v4180, 0.0
    %v4203 = vrot.slane %v4202, 4
    %v4204 = vadd.f32 %v4202, %v4203
    %v4205 = vrot.slane %v4204, 2
    %v4206 = vadd.f32 %v4204, %v4205
    %v4207 = vrot.slane %v4206, 1
    %v4208 = vadd.f32 %v4206, %v4207
    %v4209 = vsel %vm492, %v4155, %v4187
    %v4210 = vsel %vm492, %v4162, %v4194
    %v4211 = vsel %vm492, %v4169, %v4201
    %v4212 = vsel %vm492, %v4176, %v4208
    %4213 = vmatpush.msra.mxu0 %v4094
    %4214 = vmatpush.msra.mxu0 %v4093
    %4215 = vmatpush.msra.mxu0 %v4092
    %4216 = vmatpush.msra.mxu0 %v4091
    %4217 = vmatpush.msra.mxu0 %v4090
    %4218 = vmatpush.msra.mxu0 %v4089
    %4219 = vmatpush.msra.mxu0 %v4088
    %4220 = vmatpush.msra.mxu0 %v4087
    %4221 = vmatpush.msra.mxu0 %v4086
    %4222 = vmatpush.msra.mxu0 %v4085
    %4223 = vmatpush.msra.mxu0 %v4084
    %4224 = vmatpush.msra.mxu0 %v4083
    %4225 = vmatpush.msra.mxu0 %v4082
    %4226 = vmatpush.msra.mxu0 %v4081
    %4227 = vmatpush.msra.mxu0 %v4080
    %4228 = vmatpush.msra.mxu0 %v4079
    %4229 = vmatmul.f32.gmra.mxu0 %v4209
    %v4230 = vpop.f32.mrf.mxu0
    %v4231 = vadd.f32 0.0, %v4230
    %4232 = vdwg.mxu0
    %4233 = vmatpush.msra.mxu0 %v4110
    %4234 = vmatpush.msra.mxu0 %v4109
    %4235 = vmatpush.msra.mxu0 %v4108
    %4236 = vmatpush.msra.mxu0 %v4107
    %4237 = vmatpush.msra.mxu0 %v4106
    %4238 = vmatpush.msra.mxu0 %v4105
    %4239 = vmatpush.msra.mxu0 %v4104
    %4240 = vmatpush.msra.mxu0 %v4103
    %4241 = vmatpush.msra.mxu0 %v4102
    %4242 = vmatpush.msra.mxu0 %v4101
    %4243 = vmatpush.msra.mxu0 %v4100
    %4244 = vmatpush.msra.mxu0 %v4099
    %4245 = vmatpush.msra.mxu0 %v4098
    %4246 = vmatpush.msra.mxu0 %v4097
    %4247 = vmatpush.msra.mxu0 %v4096
    %4248 = vmatpush.msra.mxu0 %v4095
    %4249 = vmatmul.f32.gmra.mxu0 %v4210
    %v4250 = vpop.f32.mrf.mxu0
    %v4251 = vadd.f32 %v4231, %v4250
    %4252 = vdwg.mxu0
    %4253 = vmatpush.msra.mxu0 %v4126
    %4254 = vmatpush.msra.mxu0 %v4125
    %4255 = vmatpush.msra.mxu0 %v4124
    %4256 = vmatpush.msra.mxu0 %v4123
    %4257 = vmatpush.msra.mxu0 %v4122
    %4258 = vmatpush.msra.mxu0 %v4121
    %4259 = vmatpush.msra.mxu0 %v4120
    %4260 = vmatpush.msra.mxu0 %v4119
    %4261 = vmatpush.msra.mxu0 %v4118
    %4262 = vmatpush.msra.mxu0 %v4117
    %4263 = vmatpush.msra.mxu0 %v4116
    %4264 = vmatpush.msra.mxu0 %v4115
    %4265 = vmatpush.msra.mxu0 %v4114
    %4266 = vmatpush.msra.mxu0 %v4113
    %4267 = vmatpush.msra.mxu0 %v4112
    %4268 = vmatpush.msra.mxu0 %v4111
    %4269 = vmatmul.f32.gmra.mxu0 %v4211
    %v4270 = vpop.f32.mrf.mxu0
    %v4271 = vadd.f32 %v4251, %v4270
    %4272 = vdwg.mxu0
    %4273 = vmatpush.msra.mxu0 %v4142
    %4274 = vmatpush.msra.mxu0 %v4141
    %4275 = vmatpush.msra.mxu0 %v4140
    %4276 = vmatpush.msra.mxu0 %v4139
    %4277 = vmatpush.msra.mxu0 %v4138
    %4278 = vmatpush.msra.mxu0 %v4137
    %4279 = vmatpush.msra.mxu0 %v4136
    %4280 = vmatpush.msra.mxu0 %v4135
    %4281 = vmatpush.msra.mxu0 %v4134
    %4282 = vmatpush.msra.mxu0 %v4133
    %4283 = vmatpush.msra.mxu0 %v4132
    %4284 = vmatpush.msra.mxu0 %v4131
    %4285 = vmatpush.msra.mxu0 %v4130
    %4286 = vmatpush.msra.mxu0 %v4129
    %4287 = vmatpush.msra.mxu0 %v4128
    %4288 = vmatpush.msra.mxu0 %v4127
    %4289 = vmatmul.f32.gmra.mxu0 %v4212
    %v4290 = vpop.f32.mrf.mxu0
    %v4291 = vadd.f32 %v4271, %v4290
    %4292 = vdwg.mxu0
    %v4293 = vmul.f32 %v4291, 0.5
    %v4294 = vmul.f32 %v4293, %v4293
    %v4296 = vrot.slane %v4294, 7
    %v4298 = vsub.f32 %v4293, %v4296
    %v4299 = vadd.f32 %v4298, 1e-05
    %v4300 = vrsqrt.pop %v4299
    %v4301 = vmul.f32 %v4300, %v4299
    %v4302 = vmul.f32 %v4301, %v4300
    %v4303 = vmul.f32 0.5, %v4302
    %v4304 = vsub.f32 1.5, %v4303
    %v4305 = vmul.f32 %v4300, %v4304
    %vm4306 = vweird.f32 %v4299
    %vm4307 = vweird.f32 %v4300
    %vm4308 = vmor %vm4306, %vm4307
    %v4309 = vsel %vm4308, %v4300, %v4305
    %4311 = vst [vmem:[#allocation1] sm:$0xff] %v4309
    %s4312 = scalar_lea.vmem [#allocation1], 1
    %v4313 = vld [vmem:[%s4312] ss:$9 sm:$0xff]
    %v4315 = vmul.f32 %v4147, %v4313
    %v4316 = vmul.f32 %v4293, %v4315
    %v4317 = vsub.f32 %v4148, %v4316
    %v4319 = vperm.slane %v4317, 0
    %v4321 = vsel %vm492, %v4315, %v4319
    %v4323 = vsel %vm217, %v4321, 0
    %4325 = vmatpush.msra.mxu0 0.0
    %4326 = vmatpush.msra.mxu0 0.0
    %4327 = vmatpush.msra.mxu0 0.0
    %4328 = vmatpush.msra.mxu0 0.0
    %4329 = vmatpush.msra.mxu0 0.0
    %4330 = vmatpush.msra.mxu0 0.0
    %4331 = vmatpush.msra.mxu0 0.0
    %4332 = vmatpush.msra.mxu0 0.0
    %4333 = vmatpush.msra.mxu0 0.0
    %4334 = vmatpush.msra.mxu0 0.0
    %4335 = vmatpush.msra.mxu0 0.0
    %4336 = vmatpush.msra.mxu0 0.0
    %4337 = vmatpush.msra.mxu0 0.0
    %4338 = vmatpush.msra.mxu0 0.0
    %4339 = vmatpush.msra.mxu0 0.0
    %4340 = vmatpush.msra.mxu0 %v4143
    %4341 = vmatmul.f32.gmra.mxu0 %v4323
    %v4342 = vpop.f32.mrf.mxu0
    %v4343 = vadd.f32 0.0, %v4342
    %4344 = vdwg.mxu0
    %4345 = vmatpush.msra.mxu0 0.0
    %4346 = vmatpush.msra.mxu0 0.0
    %4347 = vmatpush.msra.mxu0 0.0
    %4348 = vmatpush.msra.mxu0 0.0
    %4349 = vmatpush.msra.mxu0 0.0
    %4350 = vmatpush.msra.mxu0 0.0
    %4351 = vmatpush.msra.mxu0 0.0
    %4352 = vmatpush.msra.mxu0 0.0
    %4353 = vmatpush.msra.mxu0 0.0
    %4354 = vmatpush.msra.mxu0 0.0
    %4355 = vmatpush.msra.mxu0 0.0
    %4356 = vmatpush.msra.mxu0 0.0
    %4357 = vmatpush.msra.mxu0 0.0
    %4358 = vmatpush.msra.mxu0 0.0
    %4359 = vmatpush.msra.mxu0 0.0
    %4360 = vmatpush.msra.mxu0 %v4144
    %4361 = vmatmul.f32.gmra.mxu0 %v4323
    %v4362 = vpop.f32.mrf.mxu0
    %v4363 = vadd.f32 0.0, %v4362
    %4364 = vdwg.mxu0
    %4365 = vmatpush.msra.mxu0 0.0
    %4366 = vmatpush.msra.mxu0 0.0
    %4367 = vmatpush.msra.mxu0 0.0
    %4368 = vmatpush.msra.mxu0 0.0
    %4369 = vmatpush.msra.mxu0 0.0
    %4370 = vmatpush.msra.mxu0 0.0
    %4371 = vmatpush.msra.mxu0 0.0
    %4372 = vmatpush.msra.mxu0 0.0
    %4373 = vmatpush.msra.mxu0 0.0
    %4374 = vmatpush.msra.mxu0 0.0
    %4375 = vmatpush.msra.mxu0 0.0
    %4376 = vmatpush.msra.mxu0 0.0
    %4377 = vmatpush.msra.mxu0 0.0
    %4378 = vmatpush.msra.mxu0 0.0
    %4379 = vmatpush.msra.mxu0 0.0
    %4380 = vmatpush.msra.mxu0 %v4145
    %4381 = vmatmul.f32.gmra.mxu0 %v4323
    %v4382 = vpop.f32.mrf.mxu0
    %v4383 = vadd.f32 0.0, %v4382
    %4384 = vdwg.mxu0
    %4385 = vmatpush.msra.mxu0 0.0
    %4386 = vmatpush.msra.mxu0 0.0
    %4387 = vmatpush.msra.mxu0 0.0
    %4388 = vmatpush.msra.mxu0 0.0
    %4389 = vmatpush.msra.mxu0 0.0
    %4390 = vmatpush.msra.mxu0 0.0
    %4391 = vmatpush.msra.mxu0 0.0
    %4392 = vmatpush.msra.mxu0 0.0
    %4393 = vmatpush.msra.mxu0 0.0
    %4394 = vmatpush.msra.mxu0 0.0
    %4395 = vmatpush.msra.mxu0 0.0
    %4396 = vmatpush.msra.mxu0 0.0
    %4397 = vmatpush.msra.mxu0 0.0
    %4398 = vmatpush.msra.mxu0 0.0
    %4399 = vmatpush.msra.mxu0 0.0
    %4400 = vmatpush.msra.mxu0 %v4146
    %4401 = vmatmul.f32.gmra.mxu0 %v4323
    %v4402 = vpop.f32.mrf.mxu0
    %v4403 = vadd.f32 0.0, %v4402
    %4404 = vdwg.mxu0
    %v4405 = vperm.slane %v4343, 0
    %v4406 = vperm.slane %v4363, 0
    %v4407 = vperm.slane %v4383, 0
    %v4408 = vperm.slane %v4403, 0
    %v4409 = vmul.f32 %v3837, %v4405
    %v4410 = vmul.f32 %v3917, %v4406
    %v4411 = vmul.f32 %v3997, %v4407
    %v4412 = vmul.f32 %v4077, %v4408
    %v4413 = vperm.slane %v4343, 1
    %v4414 = vperm.slane %v4363, 1
    %v4415 = vperm.slane %v4383, 1
    %v4416 = vperm.slane %v4403, 1
    %v4417 = vadd.f32 %v4409, %v4413
    %v4418 = vadd.f32 %v4410, %v4414
    %v4419 = vadd.f32 %v4411, %v4415
    %v4420 = vadd.f32 %v4412, %v4416
    %v4421 = vld [vmem:[#allocation9] sm:$0xff]
    %v4422 = vld [vmem:[#allocation9 + $0x8] sm:$0xff]
    %v4423 = vld [vmem:[#allocation9 + $0x10] sm:$0xff]
    %v4424 = vld [vmem:[#allocation9 + $0x18] sm:$0xff]
    %v4425 = vld [vmem:[#allocation9 + $0x20] sm:$0xff]
    %v4426 = vld [vmem:[#allocation9 + $0x28] sm:$0xff]
    %v4427 = vld [vmem:[#allocation9 + $0x30] sm:$0xff]
    %v4428 = vld [vmem:[#allocation9 + $0x38] sm:$0xff]
    %v4429 = vld [vmem:[#allocation9 + $0x40] sm:$0xff]
    %v4430 = vld [vmem:[#allocation9 + $0x48] sm:$0xff]
    %v4431 = vld [vmem:[#allocation9 + $0x50] sm:$0xff]
    %v4432 = vld [vmem:[#allocation9 + $0x58] sm:$0xff]
    %v4433 = vld [vmem:[#allocation9 + $0x60] sm:$0xff]
    %v4434 = vld [vmem:[#allocation9 + $0x68] sm:$0xff]
    %v4435 = vld [vmem:[#allocation9 + $0x70] sm:$0xff]
    %v4436 = vld [vmem:[#allocation9 + $0x78] sm:$0xff]
    %v4437 = vld [vmem:[#allocation9 + $0x80] sm:$0xff]
    %v4438 = vld [vmem:[#allocation9 + $0x88] sm:$0xff]
    %v4439 = vld [vmem:[#allocation9 + $0x90] sm:$0xff]
    %v4440 = vld [vmem:[#allocation9 + $0x98] sm:$0xff]
    %v4441 = vld [vmem:[#allocation9 + $0xa0] sm:$0xff]
    %v4442 = vld [vmem:[#allocation9 + $0xa8] sm:$0xff]
    %v4443 = vld [vmem:[#allocation9 + $0xb0] sm:$0xff]
    %v4444 = vld [vmem:[#allocation9 + $0xb8] sm:$0xff]
    %v4445 = vld [vmem:[#allocation9 + $0xc0] sm:$0xff]
    %v4446 = vld [vmem:[#allocation9 + $0xc8] sm:$0xff]
    %v4447 = vld [vmem:[#allocation9 + $0xd0] sm:$0xff]
    %v4448 = vld [vmem:[#allocation9 + $0xd8] sm:$0xff]
    %v4449 = vld [vmem:[#allocation9 + $0xe0] sm:$0xff]
    %v4450 = vld [vmem:[#allocation9 + $0xe8] sm:$0xff]
    %v4451 = vld [vmem:[#allocation9 + $0xf0] sm:$0xff]
    %v4452 = vld [vmem:[#allocation9 + $0xf8] sm:$0xff]
    %v4453 = vld [vmem:[#allocation9 + $0x100] sm:$0xff]
    %v4454 = vld [vmem:[#allocation9 + $0x108] sm:$0xff]
    %v4455 = vld [vmem:[#allocation9 + $0x110] sm:$0xff]
    %v4456 = vld [vmem:[#allocation9 + $0x118] sm:$0xff]
    %v4457 = vld [vmem:[#allocation9 + $0x120] sm:$0xff]
    %v4458 = vld [vmem:[#allocation9 + $0x128] sm:$0xff]
    %v4459 = vld [vmem:[#allocation9 + $0x130] sm:$0xff]
    %v4460 = vld [vmem:[#allocation9 + $0x138] sm:$0xff]
    %v4461 = vld [vmem:[#allocation9 + $0x140] sm:$0xff]
    %v4462 = vld [vmem:[#allocation9 + $0x148] sm:$0xff]
    %v4463 = vld [vmem:[#allocation9 + $0x150] sm:$0xff]
    %v4464 = vld [vmem:[#allocation9 + $0x158] sm:$0xff]
    %v4465 = vld [vmem:[#allocation9 + $0x160] sm:$0xff]
    %v4466 = vld [vmem:[#allocation9 + $0x168] sm:$0xff]
    %v4467 = vld [vmem:[#allocation9 + $0x170] sm:$0xff]
    %v4468 = vld [vmem:[#allocation9 + $0x178] sm:$0xff]
    %v4469 = vld [vmem:[#allocation9 + $0x180] sm:$0xff]
    %v4470 = vld [vmem:[#allocation9 + $0x188] sm:$0xff]
    %v4471 = vld [vmem:[#allocation9 + $0x190] sm:$0xff]
    %v4472 = vld [vmem:[#allocation9 + $0x198] sm:$0xff]
    %v4473 = vld [vmem:[#allocation9 + $0x1a0] sm:$0xff]
    %v4474 = vld [vmem:[#allocation9 + $0x1a8] sm:$0xff]
    %v4475 = vld [vmem:[#allocation9 + $0x1b0] sm:$0xff]
    %v4476 = vld [vmem:[#allocation9 + $0x1b8] sm:$0xff]
    %v4477 = vld [vmem:[#allocation9 + $0x1c0] sm:$0xff]
    %v4478 = vld [vmem:[#allocation9 + $0x1c8] sm:$0xff]
    %v4479 = vld [vmem:[#allocation9 + $0x1d0] sm:$0xff]
    %v4480 = vld [vmem:[#allocation9 + $0x1d8] sm:$0xff]
    %v4481 = vld [vmem:[#allocation9 + $0x1e0] sm:$0xff]
    %v4482 = vld [vmem:[#allocation9 + $0x1e8] sm:$0xff]
    %v4483 = vld [vmem:[#allocation9 + $0x1f0] sm:$0xff]
    %v4484 = vld [vmem:[#allocation9 + $0x1f8] sm:$0xff]
    %v4485 = vld [vmem:[#allocation9 + $0x200] sm:$0xff]
    %v4486 = vld [vmem:[#allocation9 + $0x208] sm:$0xff]
    %v4487 = vld [vmem:[#allocation9 + $0x210] sm:$0xff]
    %v4488 = vld [vmem:[#allocation9 + $0x218] sm:$0xff]
    %v4489 = vld [vmem:[#allocation9 + $0x220] sm:$0xff]
    %v4490 = vld [vmem:[#allocation9 + $0x228] sm:$0xff]
    %v4491 = vld [vmem:[#allocation9 + $0x230] sm:$0xff]
    %v4492 = vld [vmem:[#allocation9 + $0x238] sm:$0xff]
    %v4493 = vld [vmem:[#allocation9 + $0x240] sm:$0xff]
    %v4494 = vld [vmem:[#allocation9 + $0x248] sm:$0xff]
    %v4495 = vld [vmem:[#allocation9 + $0x250] sm:$0xff]
    %v4496 = vld [vmem:[#allocation9 + $0x258] sm:$0xff]
    %v4497 = vld [vmem:[#allocation9 + $0x260] sm:$0xff]
    %v4498 = vld [vmem:[#allocation9 + $0x268] sm:$0xff]
    %v4499 = vld [vmem:[#allocation9 + $0x270] sm:$0xff]
    %v4500 = vld [vmem:[#allocation9 + $0x278] sm:$0xff]
    %v4501 = vld [vmem:[#allocation9 + $0x280] sm:$0xff]
    %v4502 = vld [vmem:[#allocation9 + $0x288] sm:$0xff]
    %v4503 = vld [vmem:[#allocation9 + $0x290] sm:$0xff]
    %v4504 = vld [vmem:[#allocation9 + $0x298] sm:$0xff]
    %v4505 = vld [vmem:[#allocation9 + $0x2a0] sm:$0xff]
    %v4506 = vld [vmem:[#allocation9 + $0x2a8] sm:$0xff]
    %v4507 = vld [vmem:[#allocation9 + $0x2b0] sm:$0xff]
    %v4508 = vld [vmem:[#allocation9 + $0x2b8] sm:$0xff]
    %v4509 = vld [vmem:[#allocation9 + $0x2c0] sm:$0xff]
    %v4510 = vld [vmem:[#allocation9 + $0x2c8] sm:$0xff]
    %v4511 = vld [vmem:[#allocation9 + $0x2d0] sm:$0xff]
    %v4512 = vld [vmem:[#allocation9 + $0x2d8] sm:$0xff]
    %v4513 = vld [vmem:[#allocation9 + $0x2e0] sm:$0xff]
    %v4514 = vld [vmem:[#allocation9 + $0x2e8] sm:$0xff]
    %v4515 = vld [vmem:[#allocation9 + $0x2f0] sm:$0xff]
    %v4516 = vld [vmem:[#allocation9 + $0x2f8] sm:$0xff]
    %v4517 = vld [vmem:[#allocation9 + $0x300] sm:$0xff]
    %v4518 = vld [vmem:[#allocation9 + $0x308] sm:$0xff]
    %v4519 = vld [vmem:[#allocation9 + $0x310] sm:$0xff]
    %v4520 = vld [vmem:[#allocation9 + $0x318] sm:$0xff]
    %v4521 = vld [vmem:[#allocation9 + $0x320] sm:$0xff]
    %v4522 = vld [vmem:[#allocation9 + $0x328] sm:$0xff]
    %v4523 = vld [vmem:[#allocation9 + $0x330] sm:$0xff]
    %v4524 = vld [vmem:[#allocation9 + $0x338] sm:$0xff]
    %v4525 = vld [vmem:[#allocation9 + $0x340] sm:$0xff]
    %v4526 = vld [vmem:[#allocation9 + $0x348] sm:$0xff]
    %v4527 = vld [vmem:[#allocation9 + $0x350] sm:$0xff]
    %v4528 = vld [vmem:[#allocation9 + $0x358] sm:$0xff]
    %v4529 = vld [vmem:[#allocation9 + $0x360] sm:$0xff]
    %v4530 = vld [vmem:[#allocation9 + $0x368] sm:$0xff]
    %v4531 = vld [vmem:[#allocation9 + $0x370] sm:$0xff]
    %v4532 = vld [vmem:[#allocation9 + $0x378] sm:$0xff]
    %v4533 = vld [vmem:[#allocation9 + $0x380] sm:$0xff]
    %v4534 = vld [vmem:[#allocation9 + $0x388] sm:$0xff]
    %v4535 = vld [vmem:[#allocation9 + $0x390] sm:$0xff]
    %v4536 = vld [vmem:[#allocation9 + $0x398] sm:$0xff]
    %v4537 = vld [vmem:[#allocation9 + $0x3a0] sm:$0xff]
    %v4538 = vld [vmem:[#allocation9 + $0x3a8] sm:$0xff]
    %v4539 = vld [vmem:[#allocation9 + $0x3b0] sm:$0xff]
    %v4540 = vld [vmem:[#allocation9 + $0x3b8] sm:$0xff]
    %v4541 = vld [vmem:[#allocation9 + $0x3c0] sm:$0xff]
    %v4542 = vld [vmem:[#allocation9 + $0x3c8] sm:$0xff]
    %v4543 = vld [vmem:[#allocation9 + $0x3d0] sm:$0xff]
    %v4544 = vld [vmem:[#allocation9 + $0x3d8] sm:$0xff]
    %v4545 = vld [vmem:[#allocation9 + $0x3e0] sm:$0xff]
    %v4546 = vld [vmem:[#allocation9 + $0x3e8] sm:$0xff]
    %v4547 = vld [vmem:[#allocation9 + $0x3f0] sm:$0xff]
    %v4548 = vld [vmem:[#allocation9 + $0x3f8] sm:$0xff]
    %v4549 = vld [vmem:[#allocation9 + $0x400] sm:$0xff]
    %v4550 = vld [vmem:[#allocation9 + $0x408] sm:$0xff]
    %v4551 = vld [vmem:[#allocation9 + $0x410] sm:$0xff]
    %v4552 = vld [vmem:[#allocation9 + $0x418] sm:$0xff]
    %v4553 = vld [vmem:[#allocation9 + $0x420] sm:$0xff]
    %v4554 = vld [vmem:[#allocation9 + $0x428] sm:$0xff]
    %v4555 = vld [vmem:[#allocation9 + $0x430] sm:$0xff]
    %v4556 = vld [vmem:[#allocation9 + $0x438] sm:$0xff]
    %v4557 = vld [vmem:[#allocation9 + $0x440] sm:$0xff]
    %v4558 = vld [vmem:[#allocation9 + $0x448] sm:$0xff]
    %v4559 = vld [vmem:[#allocation9 + $0x450] sm:$0xff]
    %v4560 = vld [vmem:[#allocation9 + $0x458] sm:$0xff]
    %v4561 = vld [vmem:[#allocation9 + $0x460] sm:$0xff]
    %v4562 = vld [vmem:[#allocation9 + $0x468] sm:$0xff]
    %v4563 = vld [vmem:[#allocation9 + $0x470] sm:$0xff]
    %v4564 = vld [vmem:[#allocation9 + $0x478] sm:$0xff]
    %v4565 = vld [vmem:[#allocation9 + $0x480] sm:$0xff]
    %v4566 = vld [vmem:[#allocation9 + $0x488] sm:$0xff]
    %v4567 = vld [vmem:[#allocation9 + $0x490] sm:$0xff]
    %v4568 = vld [vmem:[#allocation9 + $0x498] sm:$0xff]
    %v4569 = vld [vmem:[#allocation9 + $0x4a0] sm:$0xff]
    %v4570 = vld [vmem:[#allocation9 + $0x4a8] sm:$0xff]
    %v4571 = vld [vmem:[#allocation9 + $0x4b0] sm:$0xff]
    %v4572 = vld [vmem:[#allocation9 + $0x4b8] sm:$0xff]
    %v4573 = vld [vmem:[#allocation9 + $0x4c0] sm:$0xff]
    %v4574 = vld [vmem:[#allocation9 + $0x4c8] sm:$0xff]
    %v4575 = vld [vmem:[#allocation9 + $0x4d0] sm:$0xff]
    %v4576 = vld [vmem:[#allocation9 + $0x4d8] sm:$0xff]
    %v4577 = vld [vmem:[#allocation9 + $0x4e0] sm:$0xff]
    %v4578 = vld [vmem:[#allocation9 + $0x4e8] sm:$0xff]
    %v4579 = vld [vmem:[#allocation9 + $0x4f0] sm:$0xff]
    %v4580 = vld [vmem:[#allocation9 + $0x4f8] sm:$0xff]
    %v4581 = vld [vmem:[#allocation9 + $0x500] sm:$0xff]
    %v4582 = vld [vmem:[#allocation9 + $0x508] sm:$0xff]
    %v4583 = vld [vmem:[#allocation9 + $0x510] sm:$0xff]
    %v4584 = vld [vmem:[#allocation9 + $0x518] sm:$0xff]
    %v4585 = vld [vmem:[#allocation9 + $0x520] sm:$0xff]
    %v4586 = vld [vmem:[#allocation9 + $0x528] sm:$0xff]
    %v4587 = vld [vmem:[#allocation9 + $0x530] sm:$0xff]
    %v4588 = vld [vmem:[#allocation9 + $0x538] sm:$0xff]
    %v4589 = vld [vmem:[#allocation9 + $0x540] sm:$0xff]
    %v4590 = vld [vmem:[#allocation9 + $0x548] sm:$0xff]
    %v4591 = vld [vmem:[#allocation9 + $0x550] sm:$0xff]
    %v4592 = vld [vmem:[#allocation9 + $0x558] sm:$0xff]
    %v4593 = vld [vmem:[#allocation9 + $0x560] sm:$0xff]
    %v4594 = vld [vmem:[#allocation9 + $0x568] sm:$0xff]
    %v4595 = vld [vmem:[#allocation9 + $0x570] sm:$0xff]
    %v4596 = vld [vmem:[#allocation9 + $0x578] sm:$0xff]
    %v4597 = vld [vmem:[#allocation9 + $0x580] sm:$0xff]
    %v4598 = vld [vmem:[#allocation9 + $0x588] sm:$0xff]
    %v4599 = vld [vmem:[#allocation9 + $0x590] sm:$0xff]
    %v4600 = vld [vmem:[#allocation9 + $0x598] sm:$0xff]
    %v4601 = vld [vmem:[#allocation9 + $0x5a0] sm:$0xff]
    %v4602 = vld [vmem:[#allocation9 + $0x5a8] sm:$0xff]
    %v4603 = vld [vmem:[#allocation9 + $0x5b0] sm:$0xff]
    %v4604 = vld [vmem:[#allocation9 + $0x5b8] sm:$0xff]
    %v4605 = vld [vmem:[#allocation9 + $0x5c0] sm:$0xff]
    %v4606 = vld [vmem:[#allocation9 + $0x5c8] sm:$0xff]
    %v4607 = vld [vmem:[#allocation9 + $0x5d0] sm:$0xff]
    %v4608 = vld [vmem:[#allocation9 + $0x5d8] sm:$0xff]
    %v4609 = vld [vmem:[#allocation9 + $0x5e0] sm:$0xff]
    %v4610 = vld [vmem:[#allocation9 + $0x5e8] sm:$0xff]
    %v4611 = vld [vmem:[#allocation9 + $0x5f0] sm:$0xff]
    %v4612 = vld [vmem:[#allocation9 + $0x5f8] sm:$0xff]
    %v4613 = vld [vmem:[#allocation9 + $0x600] sm:$0xff]
    %v4614 = vld [vmem:[#allocation9 + $0x608] sm:$0xff]
    %v4615 = vld [vmem:[#allocation9 + $0x610] sm:$0xff]
    %v4616 = vld [vmem:[#allocation9 + $0x618] sm:$0xff]
    %v4617 = vld [vmem:[#allocation9 + $0x620] sm:$0xff]
    %v4618 = vld [vmem:[#allocation9 + $0x628] sm:$0xff]
    %v4619 = vld [vmem:[#allocation9 + $0x630] sm:$0xff]
    %v4620 = vld [vmem:[#allocation9 + $0x638] sm:$0xff]
    %v4621 = vld [vmem:[#allocation9 + $0x640] sm:$0xff]
    %v4622 = vld [vmem:[#allocation9 + $0x648] sm:$0xff]
    %v4623 = vld [vmem:[#allocation9 + $0x650] sm:$0xff]
    %v4624 = vld [vmem:[#allocation9 + $0x658] sm:$0xff]
    %v4625 = vld [vmem:[#allocation9 + $0x660] sm:$0xff]
    %v4626 = vld [vmem:[#allocation9 + $0x668] sm:$0xff]
    %v4627 = vld [vmem:[#allocation9 + $0x670] sm:$0xff]
    %v4628 = vld [vmem:[#allocation9 + $0x678] sm:$0xff]
    %v4629 = vld [vmem:[#allocation9 + $0x680] sm:$0xff]
    %v4630 = vld [vmem:[#allocation9 + $0x688] sm:$0xff]
    %v4631 = vld [vmem:[#allocation9 + $0x690] sm:$0xff]
    %v4632 = vld [vmem:[#allocation9 + $0x698] sm:$0xff]
    %v4633 = vld [vmem:[#allocation9 + $0x6a0] sm:$0xff]
    %v4634 = vld [vmem:[#allocation9 + $0x6a8] sm:$0xff]
    %v4635 = vld [vmem:[#allocation9 + $0x6b0] sm:$0xff]
    %v4636 = vld [vmem:[#allocation9 + $0x6b8] sm:$0xff]
    %v4637 = vld [vmem:[#allocation9 + $0x6c0] sm:$0xff]
    %v4638 = vld [vmem:[#allocation9 + $0x6c8] sm:$0xff]
    %v4639 = vld [vmem:[#allocation9 + $0x6d0] sm:$0xff]
    %v4640 = vld [vmem:[#allocation9 + $0x6d8] sm:$0xff]
    %v4641 = vld [vmem:[#allocation9 + $0x6e0] sm:$0xff]
    %v4642 = vld [vmem:[#allocation9 + $0x6e8] sm:$0xff]
    %v4643 = vld [vmem:[#allocation9 + $0x6f0] sm:$0xff]
    %v4644 = vld [vmem:[#allocation9 + $0x6f8] sm:$0xff]
    %v4645 = vld [vmem:[#allocation9 + $0x700] sm:$0xff]
    %v4646 = vld [vmem:[#allocation9 + $0x708] sm:$0xff]
    %v4647 = vld [vmem:[#allocation9 + $0x710] sm:$0xff]
    %v4648 = vld [vmem:[#allocation9 + $0x718] sm:$0xff]
    %v4649 = vld [vmem:[#allocation9 + $0x720] sm:$0xff]
    %v4650 = vld [vmem:[#allocation9 + $0x728] sm:$0xff]
    %v4651 = vld [vmem:[#allocation9 + $0x730] sm:$0xff]
    %v4652 = vld [vmem:[#allocation9 + $0x738] sm:$0xff]
    %v4653 = vld [vmem:[#allocation9 + $0x740] sm:$0xff]
    %v4654 = vld [vmem:[#allocation9 + $0x748] sm:$0xff]
    %v4655 = vld [vmem:[#allocation9 + $0x750] sm:$0xff]
    %v4656 = vld [vmem:[#allocation9 + $0x758] sm:$0xff]
    %v4657 = vld [vmem:[#allocation9 + $0x760] sm:$0xff]
    %v4658 = vld [vmem:[#allocation9 + $0x768] sm:$0xff]
    %v4659 = vld [vmem:[#allocation9 + $0x770] sm:$0xff]
    %v4660 = vld [vmem:[#allocation9 + $0x778] sm:$0xff]
    %v4661 = vld [vmem:[#allocation9 + $0x780] sm:$0xff]
    %v4662 = vld [vmem:[#allocation9 + $0x788] sm:$0xff]
    %v4663 = vld [vmem:[#allocation9 + $0x790] sm:$0xff]
    %v4664 = vld [vmem:[#allocation9 + $0x798] sm:$0xff]
    %v4665 = vld [vmem:[#allocation9 + $0x7a0] sm:$0xff]
    %v4666 = vld [vmem:[#allocation9 + $0x7a8] sm:$0xff]
    %v4667 = vld [vmem:[#allocation9 + $0x7b0] sm:$0xff]
    %v4668 = vld [vmem:[#allocation9 + $0x7b8] sm:$0xff]
    %v4669 = vld [vmem:[#allocation9 + $0x7c0] sm:$0xff]
    %v4670 = vld [vmem:[#allocation9 + $0x7c8] sm:$0xff]
    %v4671 = vld [vmem:[#allocation9 + $0x7d0] sm:$0xff]
    %v4672 = vld [vmem:[#allocation9 + $0x7d8] sm:$0xff]
    %v4673 = vld [vmem:[#allocation9 + $0x7e0] sm:$0xff]
    %v4674 = vld [vmem:[#allocation9 + $0x7e8] sm:$0xff]
    %v4675 = vld [vmem:[#allocation9 + $0x7f0] sm:$0xff]
    %v4676 = vld [vmem:[#allocation9 + $0x7f8] sm:$0xff]
    %4677 = vmatpush.msra.mxu0 %v4481
    %4678 = vmatpush.msra.mxu0 %v4477
    %4679 = vmatpush.msra.mxu0 %v4473
    %4680 = vmatpush.msra.mxu0 %v4469
    %4681 = vmatpush.msra.mxu0 %v4465
    %4682 = vmatpush.msra.mxu0 %v4461
    %4683 = vmatpush.msra.mxu0 %v4457
    %4684 = vmatpush.msra.mxu0 %v4453
    %4685 = vmatpush.msra.mxu0 %v4449
    %4686 = vmatpush.msra.mxu0 %v4445
    %4687 = vmatpush.msra.mxu0 %v4441
    %4688 = vmatpush.msra.mxu0 %v4437
    %4689 = vmatpush.msra.mxu0 %v4433
    %4690 = vmatpush.msra.mxu0 %v4429
    %4691 = vmatpush.msra.mxu0 %v4425
    %4692 = vmatpush.msra.mxu0 %v4421
    %4693 = vmatmul.f32.gmra.mxu0 %v4417
    %v4694 = vpop.f32.mrf.mxu0
    %v4695 = vadd.f32 0.0, %v4694
    %4696 = vdwg.mxu0
    %4697 = vmatpush.msra.mxu0 %v4545
    %4698 = vmatpush.msra.mxu0 %v4541
    %4699 = vmatpush.msra.mxu0 %v4537
    %4700 = vmatpush.msra.mxu0 %v4533
    %4701 = vmatpush.msra.mxu0 %v4529
    %4702 = vmatpush.msra.mxu0 %v4525
    %4703 = vmatpush.msra.mxu0 %v4521
    %4704 = vmatpush.msra.mxu0 %v4517
    %4705 = vmatpush.msra.mxu0 %v4513
    %4706 = vmatpush.msra.mxu0 %v4509
    %4707 = vmatpush.msra.mxu0 %v4505
    %4708 = vmatpush.msra.mxu0 %v4501
    %4709 = vmatpush.msra.mxu0 %v4497
    %4710 = vmatpush.msra.mxu0 %v4493
    %4711 = vmatpush.msra.mxu0 %v4489
    %4712 = vmatpush.msra.mxu0 %v4485
    %4713 = vmatmul.f32.gmra.mxu0 %v4418
    %v4714 = vpop.f32.mrf.mxu0
    %v4715 = vadd.f32 %v4695, %v4714
    %4716 = vdwg.mxu0
    %4717 = vmatpush.msra.mxu0 %v4609
    %4718 = vmatpush.msra.mxu0 %v4605
    %4719 = vmatpush.msra.mxu0 %v4601
    %4720 = vmatpush.msra.mxu0 %v4597
    %4721 = vmatpush.msra.mxu0 %v4593
    %4722 = vmatpush.msra.mxu0 %v4589
    %4723 = vmatpush.msra.mxu0 %v4585
    %4724 = vmatpush.msra.mxu0 %v4581
    %4725 = vmatpush.msra.mxu0 %v4577
    %4726 = vmatpush.msra.mxu0 %v4573
    %4727 = vmatpush.msra.mxu0 %v4569
    %4728 = vmatpush.msra.mxu0 %v4565
    %4729 = vmatpush.msra.mxu0 %v4561
    %4730 = vmatpush.msra.mxu0 %v4557
    %4731 = vmatpush.msra.mxu0 %v4553
    %4732 = vmatpush.msra.mxu0 %v4549
    %4733 = vmatmul.f32.gmra.mxu0 %v4419
    %v4734 = vpop.f32.mrf.mxu0
    %v4735 = vadd.f32 %v4715, %v4734
    %4736 = vdwg.mxu0
    %4737 = vmatpush.msra.mxu0 %v4673
    %4738 = vmatpush.msra.mxu0 %v4669
    %4739 = vmatpush.msra.mxu0 %v4665
    %4740 = vmatpush.msra.mxu0 %v4661
    %4741 = vmatpush.msra.mxu0 %v4657
    %4742 = vmatpush.msra.mxu0 %v4653
    %4743 = vmatpush.msra.mxu0 %v4649
    %4744 = vmatpush.msra.mxu0 %v4645
    %4745 = vmatpush.msra.mxu0 %v4641
    %4746 = vmatpush.msra.mxu0 %v4637
    %4747 = vmatpush.msra.mxu0 %v4633
    %4748 = vmatpush.msra.mxu0 %v4629
    %4749 = vmatpush.msra.mxu0 %v4625
    %4750 = vmatpush.msra.mxu0 %v4621
    %4751 = vmatpush.msra.mxu0 %v4617
    %4752 = vmatpush.msra.mxu0 %v4613
    %4753 = vmatmul.f32.gmra.mxu0 %v4420
    %v4754 = vpop.f32.mrf.mxu0
    %v4755 = vadd.f32 %v4735, %v4754
    %4756 = vdwg.mxu0
    %4757 = vmatpush.msra.mxu0 %v4482
    %4758 = vmatpush.msra.mxu0 %v4478
    %4759 = vmatpush.msra.mxu0 %v4474
    %4760 = vmatpush.msra.mxu0 %v4470
    %4761 = vmatpush.msra.mxu0 %v4466
    %4762 = vmatpush.msra.mxu0 %v4462
    %4763 = vmatpush.msra.mxu0 %v4458
    %4764 = vmatpush.msra.mxu0 %v4454
    %4765 = vmatpush.msra.mxu0 %v4450
    %4766 = vmatpush.msra.mxu0 %v4446
    %4767 = vmatpush.msra.mxu0 %v4442
    %4768 = vmatpush.msra.mxu0 %v4438
    %4769 = vmatpush.msra.mxu0 %v4434
    %4770 = vmatpush.msra.mxu0 %v4430
    %4771 = vmatpush.msra.mxu0 %v4426
    %4772 = vmatpush.msra.mxu0 %v4422
    %4773 = vmatmul.f32.gmra.mxu0 %v4417
    %v4774 = vpop.f32.mrf.mxu0
    %v4775 = vadd.f32 0.0, %v4774
    %4776 = vdwg.mxu0
    %4777 = vmatpush.msra.mxu0 %v4546
    %4778 = vmatpush.msra.mxu0 %v4542
    %4779 = vmatpush.msra.mxu0 %v4538
    %4780 = vmatpush.msra.mxu0 %v4534
    %4781 = vmatpush.msra.mxu0 %v4530
    %4782 = vmatpush.msra.mxu0 %v4526
    %4783 = vmatpush.msra.mxu0 %v4522
    %4784 = vmatpush.msra.mxu0 %v4518
    %4785 = vmatpush.msra.mxu0 %v4514
    %4786 = vmatpush.msra.mxu0 %v4510
    %4787 = vmatpush.msra.mxu0 %v4506
    %4788 = vmatpush.msra.mxu0 %v4502
    %4789 = vmatpush.msra.mxu0 %v4498
    %4790 = vmatpush.msra.mxu0 %v4494
    %4791 = vmatpush.msra.mxu0 %v4490
    %4792 = vmatpush.msra.mxu0 %v4486
    %4793 = vmatmul.f32.gmra.mxu0 %v4418
    %v4794 = vpop.f32.mrf.mxu0
    %v4795 = vadd.f32 %v4775, %v4794
    %4796 = vdwg.mxu0
    %4797 = vmatpush.msra.mxu0 %v4610
    %4798 = vmatpush.msra.mxu0 %v4606
    %4799 = vmatpush.msra.mxu0 %v4602
    %4800 = vmatpush.msra.mxu0 %v4598
    %4801 = vmatpush.msra.mxu0 %v4594
    %4802 = vmatpush.msra.mxu0 %v4590
    %4803 = vmatpush.msra.mxu0 %v4586
    %4804 = vmatpush.msra.mxu0 %v4582
    %4805 = vmatpush.msra.mxu0 %v4578
    %4806 = vmatpush.msra.mxu0 %v4574
    %4807 = vmatpush.msra.mxu0 %v4570
    %4808 = vmatpush.msra.mxu0 %v4566
    %4809 = vmatpush.msra.mxu0 %v4562
    %4810 = vmatpush.msra.mxu0 %v4558
    %4811 = vmatpush.msra.mxu0 %v4554
    %4812 = vmatpush.msra.mxu0 %v4550
    %4813 = vmatmul.f32.gmra.mxu0 %v4419
    %v4814 = vpop.f32.mrf.mxu0
    %v4815 = vadd.f32 %v4795, %v4814
    %4816 = vdwg.mxu0
    %4817 = vmatpush.msra.mxu0 %v4674
    %4818 = vmatpush.msra.mxu0 %v4670
    %4819 = vmatpush.msra.mxu0 %v4666
    %4820 = vmatpush.msra.mxu0 %v4662
    %4821 = vmatpush.msra.mxu0 %v4658
    %4822 = vmatpush.msra.mxu0 %v4654
    %4823 = vmatpush.msra.mxu0 %v4650
    %4824 = vmatpush.msra.mxu0 %v4646
    %4825 = vmatpush.msra.mxu0 %v4642
    %4826 = vmatpush.msra.mxu0 %v4638
    %4827 = vmatpush.msra.mxu0 %v4634
    %4828 = vmatpush.msra.mxu0 %v4630
    %4829 = vmatpush.msra.mxu0 %v4626
    %4830 = vmatpush.msra.mxu0 %v4622
    %4831 = vmatpush.msra.mxu0 %v4618
    %4832 = vmatpush.msra.mxu0 %v4614
    %4833 = vmatmul.f32.gmra.mxu0 %v4420
    %v4834 = vpop.f32.mrf.mxu0
    %v4835 = vadd.f32 %v4815, %v4834
    %4836 = vdwg.mxu0
    %4837 = vmatpush.msra.mxu0 %v4483
    %4838 = vmatpush.msra.mxu0 %v4479
    %4839 = vmatpush.msra.mxu0 %v4475
    %4840 = vmatpush.msra.mxu0 %v4471
    %4841 = vmatpush.msra.mxu0 %v4467
    %4842 = vmatpush.msra.mxu0 %v4463
    %4843 = vmatpush.msra.mxu0 %v4459
    %4844 = vmatpush.msra.mxu0 %v4455
    %4845 = vmatpush.msra.mxu0 %v4451
    %4846 = vmatpush.msra.mxu0 %v4447
    %4847 = vmatpush.msra.mxu0 %v4443
    %4848 = vmatpush.msra.mxu0 %v4439
    %4849 = vmatpush.msra.mxu0 %v4435
    %4850 = vmatpush.msra.mxu0 %v4431
    %4851 = vmatpush.msra.mxu0 %v4427
    %4852 = vmatpush.msra.mxu0 %v4423
    %4853 = vmatmul.f32.gmra.mxu0 %v4417
    %v4854 = vpop.f32.mrf.mxu0
    %v4855 = vadd.f32 0.0, %v4854
    %4856 = vdwg.mxu0
    %4857 = vmatpush.msra.mxu0 %v4547
    %4858 = vmatpush.msra.mxu0 %v4543
    %4859 = vmatpush.msra.mxu0 %v4539
    %4860 = vmatpush.msra.mxu0 %v4535
    %4861 = vmatpush.msra.mxu0 %v4531
    %4862 = vmatpush.msra.mxu0 %v4527
    %4863 = vmatpush.msra.mxu0 %v4523
    %4864 = vmatpush.msra.mxu0 %v4519
    %4865 = vmatpush.msra.mxu0 %v4515
    %4866 = vmatpush.msra.mxu0 %v4511
    %4867 = vmatpush.msra.mxu0 %v4507
    %4868 = vmatpush.msra.mxu0 %v4503
    %4869 = vmatpush.msra.mxu0 %v4499
    %4870 = vmatpush.msra.mxu0 %v4495
    %4871 = vmatpush.msra.mxu0 %v4491
    %4872 = vmatpush.msra.mxu0 %v4487
    %4873 = vmatmul.f32.gmra.mxu0 %v4418
    %v4874 = vpop.f32.mrf.mxu0
    %v4875 = vadd.f32 %v4855, %v4874
    %4876 = vdwg.mxu0
    %4877 = vmatpush.msra.mxu0 %v4611
    %4878 = vmatpush.msra.mxu0 %v4607
    %4879 = vmatpush.msra.mxu0 %v4603
    %4880 = vmatpush.msra.mxu0 %v4599
    %4881 = vmatpush.msra.mxu0 %v4595
    %4882 = vmatpush.msra.mxu0 %v4591
    %4883 = vmatpush.msra.mxu0 %v4587
    %4884 = vmatpush.msra.mxu0 %v4583
    %4885 = vmatpush.msra.mxu0 %v4579
    %4886 = vmatpush.msra.mxu0 %v4575
    %4887 = vmatpush.msra.mxu0 %v4571
    %4888 = vmatpush.msra.mxu0 %v4567
    %4889 = vmatpush.msra.mxu0 %v4563
    %4890 = vmatpush.msra.mxu0 %v4559
    %4891 = vmatpush.msra.mxu0 %v4555
    %4892 = vmatpush.msra.mxu0 %v4551
    %4893 = vmatmul.f32.gmra.mxu0 %v4419
    %v4894 = vpop.f32.mrf.mxu0
    %v4895 = vadd.f32 %v4875, %v4894
    %4896 = vdwg.mxu0
    %4897 = vmatpush.msra.mxu0 %v4675
    %4898 = vmatpush.msra.mxu0 %v4671
    %4899 = vmatpush.msra.mxu0 %v4667
    %4900 = vmatpush.msra.mxu0 %v4663
    %4901 = vmatpush.msra.mxu0 %v4659
    %4902 = vmatpush.msra.mxu0 %v4655
    %4903 = vmatpush.msra.mxu0 %v4651
    %4904 = vmatpush.msra.mxu0 %v4647
    %4905 = vmatpush.msra.mxu0 %v4643
    %4906 = vmatpush.msra.mxu0 %v4639
    %4907 = vmatpush.msra.mxu0 %v4635
    %4908 = vmatpush.msra.mxu0 %v4631
    %4909 = vmatpush.msra.mxu0 %v4627
    %4910 = vmatpush.msra.mxu0 %v4623
    %4911 = vmatpush.msra.mxu0 %v4619
    %4912 = vmatpush.msra.mxu0 %v4615
    %4913 = vmatmul.f32.gmra.mxu0 %v4420
    %v4914 = vpop.f32.mrf.mxu0
    %v4915 = vadd.f32 %v4895, %v4914
    %4916 = vdwg.mxu0
    %4917 = vmatpush.msra.mxu0 %v4484
    %4918 = vmatpush.msra.mxu0 %v4480
    %4919 = vmatpush.msra.mxu0 %v4476
    %4920 = vmatpush.msra.mxu0 %v4472
    %4921 = vmatpush.msra.mxu0 %v4468
    %4922 = vmatpush.msra.mxu0 %v4464
    %4923 = vmatpush.msra.mxu0 %v4460
    %4924 = vmatpush.msra.mxu0 %v4456
    %4925 = vmatpush.msra.mxu0 %v4452
    %4926 = vmatpush.msra.mxu0 %v4448
    %4927 = vmatpush.msra.mxu0 %v4444
    %4928 = vmatpush.msra.mxu0 %v4440
    %4929 = vmatpush.msra.mxu0 %v4436
    %4930 = vmatpush.msra.mxu0 %v4432
    %4931 = vmatpush.msra.mxu0 %v4428
    %4932 = vmatpush.msra.mxu0 %v4424
    %4933 = vmatmul.f32.gmra.mxu0 %v4417
    %v4934 = vpop.f32.mrf.mxu0
    %v4935 = vadd.f32 0.0, %v4934
    %4936 = vdwg.mxu0
    %4937 = vmatpush.msra.mxu0 %v4548
    %4938 = vmatpush.msra.mxu0 %v4544
    %4939 = vmatpush.msra.mxu0 %v4540
    %4940 = vmatpush.msra.mxu0 %v4536
    %4941 = vmatpush.msra.mxu0 %v4532
    %4942 = vmatpush.msra.mxu0 %v4528
    %4943 = vmatpush.msra.mxu0 %v4524
    %4944 = vmatpush.msra.mxu0 %v4520
    %4945 = vmatpush.msra.mxu0 %v4516
    %4946 = vmatpush.msra.mxu0 %v4512
    %4947 = vmatpush.msra.mxu0 %v4508
    %4948 = vmatpush.msra.mxu0 %v4504
    %4949 = vmatpush.msra.mxu0 %v4500
    %4950 = vmatpush.msra.mxu0 %v4496
    %4951 = vmatpush.msra.mxu0 %v4492
    %4952 = vmatpush.msra.mxu0 %v4488
    %4953 = vmatmul.f32.gmra.mxu0 %v4418
    %v4954 = vpop.f32.mrf.mxu0
    %v4955 = vadd.f32 %v4935, %v4954
    %4956 = vdwg.mxu0
    %4957 = vmatpush.msra.mxu0 %v4612
    %4958 = vmatpush.msra.mxu0 %v4608
    %4959 = vmatpush.msra.mxu0 %v4604
    %4960 = vmatpush.msra.mxu0 %v4600
    %4961 = vmatpush.msra.mxu0 %v4596
    %4962 = vmatpush.msra.mxu0 %v4592
    %4963 = vmatpush.msra.mxu0 %v4588
    %4964 = vmatpush.msra.mxu0 %v4584
    %4965 = vmatpush.msra.mxu0 %v4580
    %4966 = vmatpush.msra.mxu0 %v4576
    %4967 = vmatpush.msra.mxu0 %v4572
    %4968 = vmatpush.msra.mxu0 %v4568
    %4969 = vmatpush.msra.mxu0 %v4564
    %4970 = vmatpush.msra.mxu0 %v4560
    %4971 = vmatpush.msra.mxu0 %v4556
    %4972 = vmatpush.msra.mxu0 %v4552
    %4973 = vmatmul.f32.gmra.mxu0 %v4419
    %v4974 = vpop.f32.mrf.mxu0
    %v4975 = vadd.f32 %v4955, %v4974
    %4976 = vdwg.mxu0
    %4977 = vmatpush.msra.mxu0 %v4676
    %4978 = vmatpush.msra.mxu0 %v4672
    %4979 = vmatpush.msra.mxu0 %v4668
    %4980 = vmatpush.msra.mxu0 %v4664
    %4981 = vmatpush.msra.mxu0 %v4660
    %4982 = vmatpush.msra.mxu0 %v4656
    %4983 = vmatpush.msra.mxu0 %v4652
    %4984 = vmatpush.msra.mxu0 %v4648
    %4985 = vmatpush.msra.mxu0 %v4644
    %4986 = vmatpush.msra.mxu0 %v4640
    %4987 = vmatpush.msra.mxu0 %v4636
    %4988 = vmatpush.msra.mxu0 %v4632
    %4989 = vmatpush.msra.mxu0 %v4628
    %4990 = vmatpush.msra.mxu0 %v4624
    %4991 = vmatpush.msra.mxu0 %v4620
    %4992 = vmatpush.msra.mxu0 %v4616
    %4993 = vmatmul.f32.gmra.mxu0 %v4420
    %v4994 = vpop.f32.mrf.mxu0
    %v4995 = vadd.f32 %v4975, %v4994
    %4996 = vdwg.mxu0
    %v4997 = vld [vmem:[%s55] sm:$0xff]
    %v4998 = vld [vmem:[%s55 + $0x8] sm:$0xff]
    %v4999 = vld [vmem:[%s55 + $0x10] sm:$0xff]
    %v5000 = vld [vmem:[%s55 + $0x18] sm:$0xff]
    %v5001 = vld [vmem:[%s55 + $0x20] sm:$0xff]
    %v5002 = vld [vmem:[%s55 + $0x28] sm:$0xff]
    %v5003 = vld [vmem:[%s55 + $0x30] sm:$0xff]
    %v5004 = vld [vmem:[%s55 + $0x38] sm:$0xff]
    %v5005 = vld [vmem:[%s55 + $0x40] sm:$0xff]
    %v5006 = vld [vmem:[%s55 + $0x48] sm:$0xff]
    %v5007 = vld [vmem:[%s55 + $0x50] sm:$0xff]
    %v5008 = vld [vmem:[%s55 + $0x58] sm:$0xff]
    %v5009 = vld [vmem:[%s55 + $0x60] sm:$0xff]
    %v5010 = vld [vmem:[%s55 + $0x68] sm:$0xff]
    %v5011 = vld [vmem:[%s55 + $0x70] sm:$0xff]
    %v5012 = vld [vmem:[%s55 + $0x78] sm:$0xff]
    %v5013 = vld [vmem:[%s55 + $0x80] sm:$0xff]
    %v5014 = vld [vmem:[%s55 + $0x88] sm:$0xff]
    %v5015 = vld [vmem:[%s55 + $0x90] sm:$0xff]
    %v5016 = vld [vmem:[%s55 + $0x98] sm:$0xff]
    %v5017 = vld [vmem:[%s55 + $0xa0] sm:$0xff]
    %v5018 = vld [vmem:[%s55 + $0xa8] sm:$0xff]
    %v5019 = vld [vmem:[%s55 + $0xb0] sm:$0xff]
    %v5020 = vld [vmem:[%s55 + $0xb8] sm:$0xff]
    %v5021 = vld [vmem:[%s55 + $0xc0] sm:$0xff]
    %v5022 = vld [vmem:[%s55 + $0xc8] sm:$0xff]
    %v5023 = vld [vmem:[%s55 + $0xd0] sm:$0xff]
    %v5024 = vld [vmem:[%s55 + $0xd8] sm:$0xff]
    %v5025 = vld [vmem:[%s55 + $0xe0] sm:$0xff]
    %v5026 = vld [vmem:[%s55 + $0xe8] sm:$0xff]
    %v5027 = vld [vmem:[%s55 + $0xf0] sm:$0xff]
    %v5028 = vld [vmem:[%s55 + $0xf8] sm:$0xff]
    %v5029 = vld [vmem:[%s55 + $0x100] sm:$0xff]
    %v5030 = vld [vmem:[%s55 + $0x108] sm:$0xff]
    %v5031 = vld [vmem:[%s55 + $0x110] sm:$0xff]
    %v5032 = vld [vmem:[%s55 + $0x118] sm:$0xff]
    %v5033 = vld [vmem:[%s55 + $0x120] sm:$0xff]
    %v5034 = vld [vmem:[%s55 + $0x128] sm:$0xff]
    %v5035 = vld [vmem:[%s55 + $0x130] sm:$0xff]
    %v5036 = vld [vmem:[%s55 + $0x138] sm:$0xff]
    %v5037 = vld [vmem:[%s55 + $0x140] sm:$0xff]
    %v5038 = vld [vmem:[%s55 + $0x148] sm:$0xff]
    %v5039 = vld [vmem:[%s55 + $0x150] sm:$0xff]
    %v5040 = vld [vmem:[%s55 + $0x158] sm:$0xff]
    %v5041 = vld [vmem:[%s55 + $0x160] sm:$0xff]
    %v5042 = vld [vmem:[%s55 + $0x168] sm:$0xff]
    %v5043 = vld [vmem:[%s55 + $0x170] sm:$0xff]
    %v5044 = vld [vmem:[%s55 + $0x178] sm:$0xff]
    %v5045 = vld [vmem:[%s55 + $0x180] sm:$0xff]
    %v5046 = vld [vmem:[%s55 + $0x188] sm:$0xff]
    %v5047 = vld [vmem:[%s55 + $0x190] sm:$0xff]
    %v5048 = vld [vmem:[%s55 + $0x198] sm:$0xff]
    %v5049 = vld [vmem:[%s55 + $0x1a0] sm:$0xff]
    %v5050 = vld [vmem:[%s55 + $0x1a8] sm:$0xff]
    %v5051 = vld [vmem:[%s55 + $0x1b0] sm:$0xff]
    %v5052 = vld [vmem:[%s55 + $0x1b8] sm:$0xff]
    %v5053 = vld [vmem:[%s55 + $0x1c0] sm:$0xff]
    %v5054 = vld [vmem:[%s55 + $0x1c8] sm:$0xff]
    %v5055 = vld [vmem:[%s55 + $0x1d0] sm:$0xff]
    %v5056 = vld [vmem:[%s55 + $0x1d8] sm:$0xff]
    %v5057 = vld [vmem:[%s55 + $0x1e0] sm:$0xff]
    %v5058 = vld [vmem:[%s55 + $0x1e8] sm:$0xff]
    %v5059 = vld [vmem:[%s55 + $0x1f0] sm:$0xff]
    %v5060 = vld [vmem:[%s55 + $0x1f8] sm:$0xff]
    %v5061 = vld [vmem:[%s57] sm:$0xff]
    %v5062 = vld [vmem:[%s57 + $0x8] sm:$0xff]
    %v5063 = vld [vmem:[%s59] sm:$0x1]
    %v5064 = vld [vmem:[%s61] sm:$0x1]
    %v5065 = vsel %vm431, %v4755, 0.0
    %v5066 = vrot.slane %v5065, 4
    %v5067 = vadd.f32 %v5065, %v5066
    %v5068 = vrot.slane %v5067, 2
    %v5069 = vadd.f32 %v5067, %v5068
    %v5070 = vrot.slane %v5069, 1
    %v5071 = vadd.f32 %v5069, %v5070
    %v5072 = vsel %vm431, %v4835, 0.0
    %v5073 = vrot.slane %v5072, 4
    %v5074 = vadd.f32 %v5072, %v5073
    %v5075 = vrot.slane %v5074, 2
    %v5076 = vadd.f32 %v5074, %v5075
    %v5077 = vrot.slane %v5076, 1
    %v5078 = vadd.f32 %v5076, %v5077
    %v5079 = vsel %vm431, %v4915, 0.0
    %v5080 = vrot.slane %v5079, 4
    %v5081 = vadd.f32 %v5079, %v5080
    %v5082 = vrot.slane %v5081, 2
    %v5083 = vadd.f32 %v5081, %v5082
    %v5084 = vrot.slane %v5083, 1
    %v5085 = vadd.f32 %v5083, %v5084
    %v5086 = vsel %vm431, %v4995, 0.0
    %v5087 = vrot.slane %v5086, 4
    %v5088 = vadd.f32 %v5086, %v5087
    %v5089 = vrot.slane %v5088, 2
    %v5090 = vadd.f32 %v5088, %v5089
    %v5091 = vrot.slane %v5090, 1
    %v5092 = vadd.f32 %v5090, %v5091
    %v5093 = vmul.f32 %v4755, %v4755
    %v5094 = vmul.f32 %v4835, %v4835
    %v5095 = vmul.f32 %v4915, %v4915
    %v5096 = vmul.f32 %v4995, %v4995
    %v5097 = vsel %vm431, %v5093, 0.0
    %v5098 = vrot.slane %v5097, 4
    %v5099 = vadd.f32 %v5097, %v5098
    %v5100 = vrot.slane %v5099, 2
    %v5101 = vadd.f32 %v5099, %v5100
    %v5102 = vrot.slane %v5101, 1
    %v5103 = vadd.f32 %v5101, %v5102
    %v5104 = vsel %vm431, %v5094, 0.0
    %v5105 = vrot.slane %v5104, 4
    %v5106 = vadd.f32 %v5104, %v5105
    %v5107 = vrot.slane %v5106, 2
    %v5108 = vadd.f32 %v5106, %v5107
    %v5109 = vrot.slane %v5108, 1
    %v5110 = vadd.f32 %v5108, %v5109
    %v5111 = vsel %vm431, %v5095, 0.0
    %v5112 = vrot.slane %v5111, 4
    %v5113 = vadd.f32 %v5111, %v5112
    %v5114 = vrot.slane %v5113, 2
    %v5115 = vadd.f32 %v5113, %v5114
    %v5116 = vrot.slane %v5115, 1
    %v5117 = vadd.f32 %v5115, %v5116
    %v5118 = vsel %vm431, %v5096, 0.0
    %v5119 = vrot.slane %v5118, 4
    %v5120 = vadd.f32 %v5118, %v5119
    %v5121 = vrot.slane %v5120, 2
    %v5122 = vadd.f32 %v5120, %v5121
    %v5123 = vrot.slane %v5122, 1
    %v5124 = vadd.f32 %v5122, %v5123
    %v5125 = vsel %vm492, %v5071, %v5103
    %v5126 = vsel %vm492, %v5078, %v5110
    %v5127 = vsel %vm492, %v5085, %v5117
    %v5128 = vsel %vm492, %v5092, %v5124
    %5129 = vmatpush.msra.mxu0 %v5012
    %5130 = vmatpush.msra.mxu0 %v5011
    %5131 = vmatpush.msra.mxu0 %v5010
    %5132 = vmatpush.msra.mxu0 %v5009
    %5133 = vmatpush.msra.mxu0 %v5008
    %5134 = vmatpush.msra.mxu0 %v5007
    %5135 = vmatpush.msra.mxu0 %v5006
    %5136 = vmatpush.msra.mxu0 %v5005
    %5137 = vmatpush.msra.mxu0 %v5004
    %5138 = vmatpush.msra.mxu0 %v5003
    %5139 = vmatpush.msra.mxu0 %v5002
    %5140 = vmatpush.msra.mxu0 %v5001
    %5141 = vmatpush.msra.mxu0 %v5000
    %5142 = vmatpush.msra.mxu0 %v4999
    %5143 = vmatpush.msra.mxu0 %v4998
    %5144 = vmatpush.msra.mxu0 %v4997
    %5145 = vmatmul.f32.gmra.mxu0 %v5125
    %v5146 = vpop.f32.mrf.mxu0
    %v5147 = vadd.f32 0.0, %v5146
    %5148 = vdwg.mxu0
    %5149 = vmatpush.msra.mxu0 %v5028
    %5150 = vmatpush.msra.mxu0 %v5027
    %5151 = vmatpush.msra.mxu0 %v5026
    %5152 = vmatpush.msra.mxu0 %v5025
    %5153 = vmatpush.msra.mxu0 %v5024
    %5154 = vmatpush.msra.mxu0 %v5023
    %5155 = vmatpush.msra.mxu0 %v5022
    %5156 = vmatpush.msra.mxu0 %v5021
    %5157 = vmatpush.msra.mxu0 %v5020
    %5158 = vmatpush.msra.mxu0 %v5019
    %5159 = vmatpush.msra.mxu0 %v5018
    %5160 = vmatpush.msra.mxu0 %v5017
    %5161 = vmatpush.msra.mxu0 %v5016
    %5162 = vmatpush.msra.mxu0 %v5015
    %5163 = vmatpush.msra.mxu0 %v5014
    %5164 = vmatpush.msra.mxu0 %v5013
    %5165 = vmatmul.f32.gmra.mxu0 %v5126
    %v5166 = vpop.f32.mrf.mxu0
    %v5167 = vadd.f32 %v5147, %v5166
    %5168 = vdwg.mxu0
    %5169 = vmatpush.msra.mxu0 %v5044
    %5170 = vmatpush.msra.mxu0 %v5043
    %5171 = vmatpush.msra.mxu0 %v5042
    %5172 = vmatpush.msra.mxu0 %v5041
    %5173 = vmatpush.msra.mxu0 %v5040
    %5174 = vmatpush.msra.mxu0 %v5039
    %5175 = vmatpush.msra.mxu0 %v5038
    %5176 = vmatpush.msra.mxu0 %v5037
    %5177 = vmatpush.msra.mxu0 %v5036
    %5178 = vmatpush.msra.mxu0 %v5035
    %5179 = vmatpush.msra.mxu0 %v5034
    %5180 = vmatpush.msra.mxu0 %v5033
    %5181 = vmatpush.msra.mxu0 %v5032
    %5182 = vmatpush.msra.mxu0 %v5031
    %5183 = vmatpush.msra.mxu0 %v5030
    %5184 = vmatpush.msra.mxu0 %v5029
    %5185 = vmatmul.f32.gmra.mxu0 %v5127
    %v5186 = vpop.f32.mrf.mxu0
    %v5187 = vadd.f32 %v5167, %v5186
    %5188 = vdwg.mxu0
    %5189 = vmatpush.msra.mxu0 %v5060
    %5190 = vmatpush.msra.mxu0 %v5059
    %5191 = vmatpush.msra.mxu0 %v5058
    %5192 = vmatpush.msra.mxu0 %v5057
    %5193 = vmatpush.msra.mxu0 %v5056
    %5194 = vmatpush.msra.mxu0 %v5055
    %5195 = vmatpush.msra.mxu0 %v5054
    %5196 = vmatpush.msra.mxu0 %v5053
    %5197 = vmatpush.msra.mxu0 %v5052
    %5198 = vmatpush.msra.mxu0 %v5051
    %5199 = vmatpush.msra.mxu0 %v5050
    %5200 = vmatpush.msra.mxu0 %v5049
    %5201 = vmatpush.msra.mxu0 %v5048
    %5202 = vmatpush.msra.mxu0 %v5047
    %5203 = vmatpush.msra.mxu0 %v5046
    %5204 = vmatpush.msra.mxu0 %v5045
    %5205 = vmatmul.f32.gmra.mxu0 %v5128
    %v5206 = vpop.f32.mrf.mxu0
    %v5207 = vadd.f32 %v5187, %v5206
    %5208 = vdwg.mxu0
    %v5209 = vmul.f32 %v5207, 0.5
    %v5210 = vmul.f32 %v5209, %v5209
    %v5212 = vrot.slane %v5210, 7
    %v5214 = vsub.f32 %v5209, %v5212
    %v5215 = vadd.f32 %v5214, 1e-05
    %v5216 = vrsqrt.pop %v5215
    %v5217 = vmul.f32 %v5216, %v5215
    %v5218 = vmul.f32 %v5217, %v5216
    %v5219 = vmul.f32 0.5, %v5218
    %v5220 = vsub.f32 1.5, %v5219
    %v5221 = vmul.f32 %v5216, %v5220
    %vm5222 = vweird.f32 %v5215
    %vm5223 = vweird.f32 %v5216
    %vm5224 = vmor %vm5222, %vm5223
    %v5225 = vsel %vm5224, %v5216, %v5221
    %5227 = vst [vmem:[#allocation1] sm:$0xff] %v5225
    %s5228 = scalar_lea.vmem [#allocation1], 1
    %v5229 = vld [vmem:[%s5228] ss:$9 sm:$0xff]
    %v5231 = vmul.f32 %v5063, %v5229
    %v5232 = vmul.f32 %v5209, %v5231
    %v5233 = vsub.f32 %v5064, %v5232
    %v5235 = vperm.slane %v5233, 0
    %v5237 = vsel %vm492, %v5231, %v5235
    %5240 = vst [vmem:[#allocation1] ss:$2 sm:$0xff] %v5061
    %s5241 = scalar_lea.vmem [#allocation1], 16
    %5242 = vst [vmem:[%s5241] ss:$2 sm:$0xff] %v5062
    %v5243 = vld.sshfl [vmem:[#allocation1] sm:$0xff pattern:$0x75316420]
    %v5244 = vld.sshfl [vmem:[#allocation1 + $0x8] sm:$0xff pattern:$0x75316420]
    %v5245 = vld.sshfl [vmem:[#allocation1 + $0x10] sm:$0xff pattern:$0x75316420]
    %v5246 = vld.sshfl [vmem:[#allocation1 + $0x18] sm:$0xff pattern:$0x75316420]
    %vm5247 = vcmask 31744
    %v5249 = vsel %vm5247, %v5237, 0
    %vm5251 = vcmask 1043456
    %v5252 = vsel %vm5251, %v5243, 0
    %v5254 = vsel %vm5251, %v5244, 0
    %v5256 = vsel %vm5251, %v5245, 0
    %v5258 = vsel %vm5251, %v5246, 0
    %5260 = vmatpush.msra.mxu0 0.0
    %5261 = vmatpush.msra.mxu0 0.0
    %5262 = vmatpush.msra.mxu0 0.0
    %5263 = vmatpush.msra.mxu0 0.0
    %5264 = vmatpush.msra.mxu0 0.0
    %5265 = vmatpush.msra.mxu0 0.0
    %5266 = vmatpush.msra.mxu0 0.0
    %5267 = vmatpush.msra.mxu0 0.0
    %5268 = vmatpush.msra.mxu0 0.0
    %5269 = vmatpush.msra.mxu0 0.0
    %5270 = vmatpush.msra.mxu0 0.0
    %5271 = vmatpush.msra.mxu0 0.0
    %5272 = vmatpush.msra.mxu0 0.0
    %5273 = vmatpush.msra.mxu0 0.0
    %5274 = vmatpush.msra.mxu0 0.0
    %5275 = vmatpush.msra.mxu0 %v5252
    %5276 = vmatmul.f32.gmra.mxu0 %v5249
    %v5277 = vpop.f32.mrf.mxu0
    %v5278 = vadd.f32 0.0, %v5277
    %5279 = vdwg.mxu0
    %5280 = vmatpush.msra.mxu0 0.0
    %5281 = vmatpush.msra.mxu0 0.0
    %5282 = vmatpush.msra.mxu0 0.0
    %5283 = vmatpush.msra.mxu0 0.0
    %5284 = vmatpush.msra.mxu0 0.0
    %5285 = vmatpush.msra.mxu0 0.0
    %5286 = vmatpush.msra.mxu0 0.0
    %5287 = vmatpush.msra.mxu0 0.0
    %5288 = vmatpush.msra.mxu0 0.0
    %5289 = vmatpush.msra.mxu0 0.0
    %5290 = vmatpush.msra.mxu0 0.0
    %5291 = vmatpush.msra.mxu0 0.0
    %5292 = vmatpush.msra.mxu0 0.0
    %5293 = vmatpush.msra.mxu0 0.0
    %5294 = vmatpush.msra.mxu0 0.0
    %5295 = vmatpush.msra.mxu0 %v5254
    %5296 = vmatmul.f32.gmra.mxu0 %v5249
    %v5297 = vpop.f32.mrf.mxu0
    %v5298 = vadd.f32 0.0, %v5297
    %5299 = vdwg.mxu0
    %5300 = vmatpush.msra.mxu0 0.0
    %5301 = vmatpush.msra.mxu0 0.0
    %5302 = vmatpush.msra.mxu0 0.0
    %5303 = vmatpush.msra.mxu0 0.0
    %5304 = vmatpush.msra.mxu0 0.0
    %5305 = vmatpush.msra.mxu0 0.0
    %5306 = vmatpush.msra.mxu0 0.0
    %5307 = vmatpush.msra.mxu0 0.0
    %5308 = vmatpush.msra.mxu0 0.0
    %5309 = vmatpush.msra.mxu0 0.0
    %5310 = vmatpush.msra.mxu0 0.0
    %5311 = vmatpush.msra.mxu0 0.0
    %5312 = vmatpush.msra.mxu0 0.0
    %5313 = vmatpush.msra.mxu0 0.0
    %5314 = vmatpush.msra.mxu0 0.0
    %5315 = vmatpush.msra.mxu0 %v5256
    %5316 = vmatmul.f32.gmra.mxu0 %v5249
    %v5317 = vpop.f32.mrf.mxu0
    %v5318 = vadd.f32 0.0, %v5317
    %5319 = vdwg.mxu0
    %5320 = vmatpush.msra.mxu0 0.0
    %5321 = vmatpush.msra.mxu0 0.0
    %5322 = vmatpush.msra.mxu0 0.0
    %5323 = vmatpush.msra.mxu0 0.0
    %5324 = vmatpush.msra.mxu0 0.0
    %5325 = vmatpush.msra.mxu0 0.0
    %5326 = vmatpush.msra.mxu0 0.0
    %5327 = vmatpush.msra.mxu0 0.0
    %5328 = vmatpush.msra.mxu0 0.0
    %5329 = vmatpush.msra.mxu0 0.0
    %5330 = vmatpush.msra.mxu0 0.0
    %5331 = vmatpush.msra.mxu0 0.0
    %5332 = vmatpush.msra.mxu0 0.0
    %5333 = vmatpush.msra.mxu0 0.0
    %5334 = vmatpush.msra.mxu0 0.0
    %5335 = vmatpush.msra.mxu0 %v5258
    %5336 = vmatmul.f32.gmra.mxu0 %v5249
    %v5337 = vpop.f32.mrf.mxu0
    %v5338 = vadd.f32 0.0, %v5337
    %5339 = vdwg.mxu0
    %v5340 = vperm.slane %v5278, 0
    %v5341 = vperm.slane %v5298, 0
    %v5342 = vperm.slane %v5318, 0
    %v5343 = vperm.slane %v5338, 0
    %v5344 = vmul.f32 %v4755, %v5340
    %v5345 = vmul.f32 %v4835, %v5341
    %v5346 = vmul.f32 %v4915, %v5342
    %v5347 = vmul.f32 %v4995, %v5343
    %v5348 = vperm.slane %v5278, 1
    %v5349 = vperm.slane %v5298, 1
    %v5350 = vperm.slane %v5318, 1
    %v5351 = vperm.slane %v5338, 1
    %v5352 = vadd.f32 %v5344, %v5348
    %v5353 = vadd.f32 %v5345, %v5349
    %v5354 = vadd.f32 %v5346, %v5350
    %v5355 = vadd.f32 %v5347, %v5351
    %v5356 = vld [vmem:[%s63] sm:$0xff]
    %v5357 = vld [vmem:[%s63 + $0x8] sm:$0xff]
    %v5358 = vld [vmem:[%s63 + $0x10] sm:$0xff]
    %v5359 = vld [vmem:[%s63 + $0x18] sm:$0xff]
    %v5360 = vld [vmem:[%s63 + $0x20] sm:$0xff]
    %v5361 = vld [vmem:[%s63 + $0x28] sm:$0xff]
    %v5362 = vld [vmem:[%s63 + $0x30] sm:$0xff]
    %v5363 = vld [vmem:[%s63 + $0x38] sm:$0xff]
    %v5364 = vld [vmem:[%s63 + $0x40] sm:$0xff]
    %v5365 = vld [vmem:[%s63 + $0x48] sm:$0xff]
    %v5366 = vld [vmem:[%s63 + $0x50] sm:$0xff]
    %v5367 = vld [vmem:[%s63 + $0x58] sm:$0xff]
    %v5368 = vld [vmem:[%s63 + $0x60] sm:$0xff]
    %v5369 = vld [vmem:[%s63 + $0x68] sm:$0xff]
    %v5370 = vld [vmem:[%s63 + $0x70] sm:$0xff]
    %v5371 = vld [vmem:[%s63 + $0x78] sm:$0xff]
    %v5372 = vld [vmem:[%s63 + $0x80] sm:$0xff]
    %v5373 = vld [vmem:[%s63 + $0x88] sm:$0xff]
    %v5374 = vld [vmem:[%s63 + $0x90] sm:$0xff]
    %v5375 = vld [vmem:[%s63 + $0x98] sm:$0xff]
    %v5376 = vld [vmem:[%s63 + $0xa0] sm:$0xff]
    %v5377 = vld [vmem:[%s63 + $0xa8] sm:$0xff]
    %v5378 = vld [vmem:[%s63 + $0xb0] sm:$0xff]
    %v5379 = vld [vmem:[%s63 + $0xb8] sm:$0xff]
    %v5380 = vld [vmem:[%s63 + $0xc0] sm:$0xff]
    %v5381 = vld [vmem:[%s63 + $0xc8] sm:$0xff]
    %v5382 = vld [vmem:[%s63 + $0xd0] sm:$0xff]
    %v5383 = vld [vmem:[%s63 + $0xd8] sm:$0xff]
    %v5384 = vld [vmem:[%s63 + $0xe0] sm:$0xff]
    %v5385 = vld [vmem:[%s63 + $0xe8] sm:$0xff]
    %v5386 = vld [vmem:[%s63 + $0xf0] sm:$0xff]
    %v5387 = vld [vmem:[%s63 + $0xf8] sm:$0xff]
    %v5388 = vld [vmem:[%s63 + $0x100] sm:$0xff]
    %v5389 = vld [vmem:[%s63 + $0x108] sm:$0xff]
    %v5390 = vld [vmem:[%s63 + $0x110] sm:$0xff]
    %v5391 = vld [vmem:[%s63 + $0x118] sm:$0xff]
    %v5392 = vld [vmem:[%s63 + $0x120] sm:$0xff]
    %v5393 = vld [vmem:[%s63 + $0x128] sm:$0xff]
    %v5394 = vld [vmem:[%s63 + $0x130] sm:$0xff]
    %v5395 = vld [vmem:[%s63 + $0x138] sm:$0xff]
    %v5396 = vld [vmem:[%s63 + $0x140] sm:$0xff]
    %v5397 = vld [vmem:[%s63 + $0x148] sm:$0xff]
    %v5398 = vld [vmem:[%s63 + $0x150] sm:$0xff]
    %v5399 = vld [vmem:[%s63 + $0x158] sm:$0xff]
    %v5400 = vld [vmem:[%s63 + $0x160] sm:$0xff]
    %v5401 = vld [vmem:[%s63 + $0x168] sm:$0xff]
    %v5402 = vld [vmem:[%s63 + $0x170] sm:$0xff]
    %v5403 = vld [vmem:[%s63 + $0x178] sm:$0xff]
    %v5404 = vld [vmem:[%s63 + $0x180] sm:$0xff]
    %v5405 = vld [vmem:[%s63 + $0x188] sm:$0xff]
    %v5406 = vld [vmem:[%s63 + $0x190] sm:$0xff]
    %v5407 = vld [vmem:[%s63 + $0x198] sm:$0xff]
    %v5408 = vld [vmem:[%s63 + $0x1a0] sm:$0xff]
    %v5409 = vld [vmem:[%s63 + $0x1a8] sm:$0xff]
    %v5410 = vld [vmem:[%s63 + $0x1b0] sm:$0xff]
    %v5411 = vld [vmem:[%s63 + $0x1b8] sm:$0xff]
    %v5412 = vld [vmem:[%s63 + $0x1c0] sm:$0xff]
    %v5413 = vld [vmem:[%s63 + $0x1c8] sm:$0xff]
    %v5414 = vld [vmem:[%s63 + $0x1d0] sm:$0xff]
    %v5415 = vld [vmem:[%s63 + $0x1d8] sm:$0xff]
    %v5416 = vld [vmem:[%s63 + $0x1e0] sm:$0xff]
    %v5417 = vld [vmem:[%s63 + $0x1e8] sm:$0xff]
    %v5418 = vld [vmem:[%s63 + $0x1f0] sm:$0xff]
    %v5419 = vld [vmem:[%s63 + $0x1f8] sm:$0xff]
    %v5420 = vld [vmem:[%s63 + $0x200] sm:$0xff]
    %v5421 = vld [vmem:[%s63 + $0x208] sm:$0xff]
    %v5422 = vld [vmem:[%s63 + $0x210] sm:$0xff]
    %v5423 = vld [vmem:[%s63 + $0x218] sm:$0xff]
    %v5424 = vld [vmem:[%s63 + $0x220] sm:$0xff]
    %v5425 = vld [vmem:[%s63 + $0x228] sm:$0xff]
    %v5426 = vld [vmem:[%s63 + $0x230] sm:$0xff]
    %v5427 = vld [vmem:[%s63 + $0x238] sm:$0xff]
    %v5428 = vld [vmem:[%s63 + $0x240] sm:$0xff]
    %v5429 = vld [vmem:[%s63 + $0x248] sm:$0xff]
    %v5430 = vld [vmem:[%s63 + $0x250] sm:$0xff]
    %v5431 = vld [vmem:[%s63 + $0x258] sm:$0xff]
    %v5432 = vld [vmem:[%s63 + $0x260] sm:$0xff]
    %v5433 = vld [vmem:[%s63 + $0x268] sm:$0xff]
    %v5434 = vld [vmem:[%s63 + $0x270] sm:$0xff]
    %v5435 = vld [vmem:[%s63 + $0x278] sm:$0xff]
    %v5436 = vld [vmem:[%s63 + $0x280] sm:$0xff]
    %v5437 = vld [vmem:[%s63 + $0x288] sm:$0xff]
    %v5438 = vld [vmem:[%s63 + $0x290] sm:$0xff]
    %v5439 = vld [vmem:[%s63 + $0x298] sm:$0xff]
    %v5440 = vld [vmem:[%s63 + $0x2a0] sm:$0xff]
    %v5441 = vld [vmem:[%s63 + $0x2a8] sm:$0xff]
    %v5442 = vld [vmem:[%s63 + $0x2b0] sm:$0xff]
    %v5443 = vld [vmem:[%s63 + $0x2b8] sm:$0xff]
    %v5444 = vld [vmem:[%s63 + $0x2c0] sm:$0xff]
    %v5445 = vld [vmem:[%s63 + $0x2c8] sm:$0xff]
    %v5446 = vld [vmem:[%s63 + $0x2d0] sm:$0xff]
    %v5447 = vld [vmem:[%s63 + $0x2d8] sm:$0xff]
    %v5448 = vld [vmem:[%s63 + $0x2e0] sm:$0xff]
    %v5449 = vld [vmem:[%s63 + $0x2e8] sm:$0xff]
    %v5450 = vld [vmem:[%s63 + $0x2f0] sm:$0xff]
    %v5451 = vld [vmem:[%s63 + $0x2f8] sm:$0xff]
    %v5452 = vld [vmem:[%s63 + $0x300] sm:$0xff]
    %v5453 = vld [vmem:[%s63 + $0x308] sm:$0xff]
    %v5454 = vld [vmem:[%s63 + $0x310] sm:$0xff]
    %v5455 = vld [vmem:[%s63 + $0x318] sm:$0xff]
    %v5456 = vld [vmem:[%s63 + $0x320] sm:$0xff]
    %v5457 = vld [vmem:[%s63 + $0x328] sm:$0xff]
    %v5458 = vld [vmem:[%s63 + $0x330] sm:$0xff]
    %v5459 = vld [vmem:[%s63 + $0x338] sm:$0xff]
    %v5460 = vld [vmem:[%s63 + $0x340] sm:$0xff]
    %v5461 = vld [vmem:[%s63 + $0x348] sm:$0xff]
    %v5462 = vld [vmem:[%s63 + $0x350] sm:$0xff]
    %v5463 = vld [vmem:[%s63 + $0x358] sm:$0xff]
    %v5464 = vld [vmem:[%s63 + $0x360] sm:$0xff]
    %v5465 = vld [vmem:[%s63 + $0x368] sm:$0xff]
    %v5466 = vld [vmem:[%s63 + $0x370] sm:$0xff]
    %v5467 = vld [vmem:[%s63 + $0x378] sm:$0xff]
    %v5468 = vld [vmem:[%s63 + $0x380] sm:$0xff]
    %v5469 = vld [vmem:[%s63 + $0x388] sm:$0xff]
    %v5470 = vld [vmem:[%s63 + $0x390] sm:$0xff]
    %v5471 = vld [vmem:[%s63 + $0x398] sm:$0xff]
    %v5472 = vld [vmem:[%s63 + $0x3a0] sm:$0xff]
    %v5473 = vld [vmem:[%s63 + $0x3a8] sm:$0xff]
    %v5474 = vld [vmem:[%s63 + $0x3b0] sm:$0xff]
    %v5475 = vld [vmem:[%s63 + $0x3b8] sm:$0xff]
    %v5476 = vld [vmem:[%s63 + $0x3c0] sm:$0xff]
    %v5477 = vld [vmem:[%s63 + $0x3c8] sm:$0xff]
    %v5478 = vld [vmem:[%s63 + $0x3d0] sm:$0xff]
    %v5479 = vld [vmem:[%s63 + $0x3d8] sm:$0xff]
    %v5480 = vld [vmem:[%s63 + $0x3e0] sm:$0xff]
    %v5481 = vld [vmem:[%s63 + $0x3e8] sm:$0xff]
    %v5482 = vld [vmem:[%s63 + $0x3f0] sm:$0xff]
    %v5483 = vld [vmem:[%s63 + $0x3f8] sm:$0xff]
    %5484 = vmatpush.msra.mxu0 %v5386
    %5485 = vmatpush.msra.mxu0 %v5384
    %5486 = vmatpush.msra.mxu0 %v5382
    %5487 = vmatpush.msra.mxu0 %v5380
    %5488 = vmatpush.msra.mxu0 %v5378
    %5489 = vmatpush.msra.mxu0 %v5376
    %5490 = vmatpush.msra.mxu0 %v5374
    %5491 = vmatpush.msra.mxu0 %v5372
    %5492 = vmatpush.msra.mxu0 %v5370
    %5493 = vmatpush.msra.mxu0 %v5368
    %5494 = vmatpush.msra.mxu0 %v5366
    %5495 = vmatpush.msra.mxu0 %v5364
    %5496 = vmatpush.msra.mxu0 %v5362
    %5497 = vmatpush.msra.mxu0 %v5360
    %5498 = vmatpush.msra.mxu0 %v5358
    %5499 = vmatpush.msra.mxu0 %v5356
    %5500 = vmatmul.f32.gmra.mxu0 %v5352
    %v5501 = vpop.f32.mrf.mxu0
    %v5502 = vadd.f32 0.0, %v5501
    %5503 = vdwg.mxu0
    %5504 = vmatpush.msra.mxu0 %v5418
    %5505 = vmatpush.msra.mxu0 %v5416
    %5506 = vmatpush.msra.mxu0 %v5414
    %5507 = vmatpush.msra.mxu0 %v5412
    %5508 = vmatpush.msra.mxu0 %v5410
    %5509 = vmatpush.msra.mxu0 %v5408
    %5510 = vmatpush.msra.mxu0 %v5406
    %5511 = vmatpush.msra.mxu0 %v5404
    %5512 = vmatpush.msra.mxu0 %v5402
    %5513 = vmatpush.msra.mxu0 %v5400
    %5514 = vmatpush.msra.mxu0 %v5398
    %5515 = vmatpush.msra.mxu0 %v5396
    %5516 = vmatpush.msra.mxu0 %v5394
    %5517 = vmatpush.msra.mxu0 %v5392
    %5518 = vmatpush.msra.mxu0 %v5390
    %5519 = vmatpush.msra.mxu0 %v5388
    %5520 = vmatmul.f32.gmra.mxu0 %v5353
    %v5521 = vpop.f32.mrf.mxu0
    %v5522 = vadd.f32 %v5502, %v5521
    %5523 = vdwg.mxu0
    %5524 = vmatpush.msra.mxu0 %v5450
    %5525 = vmatpush.msra.mxu0 %v5448
    %5526 = vmatpush.msra.mxu0 %v5446
    %5527 = vmatpush.msra.mxu0 %v5444
    %5528 = vmatpush.msra.mxu0 %v5442
    %5529 = vmatpush.msra.mxu0 %v5440
    %5530 = vmatpush.msra.mxu0 %v5438
    %5531 = vmatpush.msra.mxu0 %v5436
    %5532 = vmatpush.msra.mxu0 %v5434
    %5533 = vmatpush.msra.mxu0 %v5432
    %5534 = vmatpush.msra.mxu0 %v5430
    %5535 = vmatpush.msra.mxu0 %v5428
    %5536 = vmatpush.msra.mxu0 %v5426
    %5537 = vmatpush.msra.mxu0 %v5424
    %5538 = vmatpush.msra.mxu0 %v5422
    %5539 = vmatpush.msra.mxu0 %v5420
    %5540 = vmatmul.f32.gmra.mxu0 %v5354
    %v5541 = vpop.f32.mrf.mxu0
    %v5542 = vadd.f32 %v5522, %v5541
    %5543 = vdwg.mxu0
    %5544 = vmatpush.msra.mxu0 %v5482
    %5545 = vmatpush.msra.mxu0 %v5480
    %5546 = vmatpush.msra.mxu0 %v5478
    %5547 = vmatpush.msra.mxu0 %v5476
    %5548 = vmatpush.msra.mxu0 %v5474
    %5549 = vmatpush.msra.mxu0 %v5472
    %5550 = vmatpush.msra.mxu0 %v5470
    %5551 = vmatpush.msra.mxu0 %v5468
    %5552 = vmatpush.msra.mxu0 %v5466
    %5553 = vmatpush.msra.mxu0 %v5464
    %5554 = vmatpush.msra.mxu0 %v5462
    %5555 = vmatpush.msra.mxu0 %v5460
    %5556 = vmatpush.msra.mxu0 %v5458
    %5557 = vmatpush.msra.mxu0 %v5456
    %5558 = vmatpush.msra.mxu0 %v5454
    %5559 = vmatpush.msra.mxu0 %v5452
    %5560 = vmatmul.f32.gmra.mxu0 %v5355
    %v5561 = vpop.f32.mrf.mxu0
    %v5562 = vadd.f32 %v5542, %v5561
    %5563 = vdwg.mxu0
    %5564 = vmatpush.msra.mxu0 %v5387
    %5565 = vmatpush.msra.mxu0 %v5385
    %5566 = vmatpush.msra.mxu0 %v5383
    %5567 = vmatpush.msra.mxu0 %v5381
    %5568 = vmatpush.msra.mxu0 %v5379
    %5569 = vmatpush.msra.mxu0 %v5377
    %5570 = vmatpush.msra.mxu0 %v5375
    %5571 = vmatpush.msra.mxu0 %v5373
    %5572 = vmatpush.msra.mxu0 %v5371
    %5573 = vmatpush.msra.mxu0 %v5369
    %5574 = vmatpush.msra.mxu0 %v5367
    %5575 = vmatpush.msra.mxu0 %v5365
    %5576 = vmatpush.msra.mxu0 %v5363
    %5577 = vmatpush.msra.mxu0 %v5361
    %5578 = vmatpush.msra.mxu0 %v5359
    %5579 = vmatpush.msra.mxu0 %v5357
    %5580 = vmatmul.f32.gmra.mxu0 %v5352
    %v5581 = vpop.f32.mrf.mxu0
    %v5582 = vadd.f32 0.0, %v5581
    %5583 = vdwg.mxu0
    %5584 = vmatpush.msra.mxu0 %v5419
    %5585 = vmatpush.msra.mxu0 %v5417
    %5586 = vmatpush.msra.mxu0 %v5415
    %5587 = vmatpush.msra.mxu0 %v5413
    %5588 = vmatpush.msra.mxu0 %v5411
    %5589 = vmatpush.msra.mxu0 %v5409
    %5590 = vmatpush.msra.mxu0 %v5407
    %5591 = vmatpush.msra.mxu0 %v5405
    %5592 = vmatpush.msra.mxu0 %v5403
    %5593 = vmatpush.msra.mxu0 %v5401
    %5594 = vmatpush.msra.mxu0 %v5399
    %5595 = vmatpush.msra.mxu0 %v5397
    %5596 = vmatpush.msra.mxu0 %v5395
    %5597 = vmatpush.msra.mxu0 %v5393
    %5598 = vmatpush.msra.mxu0 %v5391
    %5599 = vmatpush.msra.mxu0 %v5389
    %5600 = vmatmul.f32.gmra.mxu0 %v5353
    %v5601 = vpop.f32.mrf.mxu0
    %v5602 = vadd.f32 %v5582, %v5601
    %5603 = vdwg.mxu0
    %5604 = vmatpush.msra.mxu0 %v5451
    %5605 = vmatpush.msra.mxu0 %v5449
    %5606 = vmatpush.msra.mxu0 %v5447
    %5607 = vmatpush.msra.mxu0 %v5445
    %5608 = vmatpush.msra.mxu0 %v5443
    %5609 = vmatpush.msra.mxu0 %v5441
    %5610 = vmatpush.msra.mxu0 %v5439
    %5611 = vmatpush.msra.mxu0 %v5437
    %5612 = vmatpush.msra.mxu0 %v5435
    %5613 = vmatpush.msra.mxu0 %v5433
    %5614 = vmatpush.msra.mxu0 %v5431
    %5615 = vmatpush.msra.mxu0 %v5429
    %5616 = vmatpush.msra.mxu0 %v5427
    %5617 = vmatpush.msra.mxu0 %v5425
    %5618 = vmatpush.msra.mxu0 %v5423
    %5619 = vmatpush.msra.mxu0 %v5421
    %5620 = vmatmul.f32.gmra.mxu0 %v5354
    %v5621 = vpop.f32.mrf.mxu0
    %v5622 = vadd.f32 %v5602, %v5621
    %5623 = vdwg.mxu0
    %5624 = vmatpush.msra.mxu0 %v5483
    %5625 = vmatpush.msra.mxu0 %v5481
    %5626 = vmatpush.msra.mxu0 %v5479
    %5627 = vmatpush.msra.mxu0 %v5477
    %5628 = vmatpush.msra.mxu0 %v5475
    %5629 = vmatpush.msra.mxu0 %v5473
    %5630 = vmatpush.msra.mxu0 %v5471
    %5631 = vmatpush.msra.mxu0 %v5469
    %5632 = vmatpush.msra.mxu0 %v5467
    %5633 = vmatpush.msra.mxu0 %v5465
    %5634 = vmatpush.msra.mxu0 %v5463
    %5635 = vmatpush.msra.mxu0 %v5461
    %5636 = vmatpush.msra.mxu0 %v5459
    %5637 = vmatpush.msra.mxu0 %v5457
    %5638 = vmatpush.msra.mxu0 %v5455
    %5639 = vmatpush.msra.mxu0 %v5453
    %5640 = vmatmul.f32.gmra.mxu0 %v5355
    %v5641 = vpop.f32.mrf.mxu0
    %v5642 = vadd.f32 %v5622, %v5641
    %5643 = vdwg.mxu0
    %v5646 = vrot.slane %v5642, 6
    %v5647 = vsel %vm431, %v5562, %v5646
    %5649 = vst [vmem:[%s65] sm:$0xf] %v5647
    // Predicated region
    $region150: #{generator_forward.1} parent=1 // pred_check
      _
    $region151: #{generator_forward.1} parent=1 // pred_check_branch
      %5651 = sbr.rel (0) target = $region153
    $region152: #{generator_forward.1} parent=1 // pred_region
      _
    $region153: #{generator_forward.1} parent=1 // pred_fallthru
      _
    // Predicated region
    $region154: #{generator_forward.1} parent=1 // pred_check
      _
    $region155: #{generator_forward.1} parent=1 // pred_check_branch
      %5653 = sbr.rel (0) target = $region157
    $region156: #{generator_forward.1} parent=1 // pred_region
      _
    $region157: #{generator_forward.1} parent=1 // pred_fallthru
      _
    %5654 = vsyncpa [#allocation3], 1
    %5655 = vsyncpa [#allocation5], 1
    %5656 = vsyncpa [#allocation8], 1

</llo_original>
